<compile_context>
chip_gen: v7x
topology: tpu7x:2x2x1
jax: 0.10.0
libtpu: 0.0.40
codegen_flags: <defaults>
</compile_context>

<pallas_src>
import math
import numpy as np
import jax
import jax.numpy as jnp
from jax import lax
from jax.experimental import pallas as pl
from jax.experimental.pallas import tpu as pltpu

EPS = 1e-15
LN_EPS = 1e-5


def _make_kernel(layout, N, F, K, H, C):
    Cp1 = C + 1
    inv_sqrt_h = 1.0 / math.sqrt(H)
    inv_sqrt_k = 1.0 / math.sqrt(K)
    f32 = jnp.float32

    def kernel(x_ref, m_ref, adj_ref, prm_ref, out_ref):
        x3 = x_ref[...].astype(f32)       # (BB, N, F)
        m3 = m_ref[...].astype(f32)       # (BB, N, 1)
        adj3 = adj_ref[...].astype(f32)   # (BB, N, N)
        prm = prm_ref[...]                # packed parameter slab (one DMA)

        BB = x3.shape[0]

        def P(name):                      # static slice out of the param slab
            r0, nr, nc = layout[name]
            return prm[r0:r0 + nr, :nc]

        que = P("que")                                        # (K, H) hoisted meta @ Wq + bq
        w0x, w0m, b0 = P("w0x"), P("w0m"), P("b0")
        wkv, bkv = P("wkv"), P("bkv")                         # fused fc_ks | fc_vs
        w1, b1 = P("w1"), P("b1")
        g0, be0, g1, be1 = P("g0"), P("be0"), P("g1"), P("be1")
        w2, b2 = P("w2"), P("b2")
        w3m, w3s, b3 = P("w3m"), P("w3s"), P("b3")
        w4, b4 = P("w4"), P("b4")
        adjm = P("adjm")
        eye_f = P("eye")                                      # precomputed identity (no iota)

        def bdot(a, b, ca, cb):           # genuinely per-graph contractions only
            return lax.dot_general(a, b, (((ca,), (cb,)), ((0,), (0,))),
                                   preferred_element_type=f32)

        def sum12(v):                     # reduce the two minor dims (XLU)
            return jnp.sum(jnp.sum(v, axis=2, keepdims=True), axis=1, keepdims=True)

        def layer_norm(v, g, b):
            mu = jnp.mean(v, axis=-1, keepdims=True)
            var = jnp.mean((v - mu) ** 2, axis=-1, keepdims=True)
            return (v - mu) * lax.rsqrt(var + LN_EPS) * g + b

        def sigmoid(v):                   # exp + approx reciprocal -> both on the EUP
            return pl.reciprocal(1.0 + jnp.exp(-v), approx=True)

        # ---------- batch-invariant layers, folded to (BB*N, .) matmuls ----------
        x_flat = x3.reshape(BB * N, F)
        m_flat = m3.reshape(BB * N, 1)

        # z = relu(fc_0(cat(x, mask)))   (split weight => no concat needed)
        z = jnp.maximum(jnp.dot(x_flat, w0x, preferred_element_type=f32)
                        + m_flat * w0m + b0, 0.0)                               # (BB*N, F)

        kv = jnp.dot(z, wkv, preferred_element_type=f32) + bkv                  # (BB*N, 2H)
        keyz = kv[:, :H]
        valz3 = kv[:, H:].reshape(BB, N, H)

        logits = lax.dot_general(keyz, que, (((1,), (1,)), ((), ())),
                                 preferred_element_type=f32) * inv_sqrt_h
        logits = logits.reshape(BB, N, K)          # [b, n, k] == attention[b, k, n]
        lmax = jnp.max(logits, axis=1, keepdims=True)
        e = jnp.exp(logits - lmax)
        s3 = e / jnp.sum(e, axis=1, keepdims=True)  # exact softmax normalization (S)

        # ---------- per-graph attention readout + prototype MLP (2-D weight matmuls) --
        new_s = bdot(s3, valz3, 1, 1) + que                                     # (BB,K,H)
        new_s = layer_norm(new_s, g0, be0)
        h1 = jnp.dot(new_s.reshape(BB * K, H), w1,
                     preferred_element_type=f32) + b1                           # (BB*K,H)
        new_s = jnp.maximum(h1, 0.0).reshape(BB, K, H) + new_s
        new_s = layer_norm(new_s, g1, be1)
        sfc = (jnp.dot(new_s.reshape(BB * K, H), w2,
                       preferred_element_type=f32) + b2).reshape(BB, K, Cp1)
        x_out = jnp.maximum(sfc[:, :, :C], 0.0)                                 # (BB,K,C)
        mask_out = sigmoid(sfc[:, :, C:])                                       # (BB,K,1)

        # ---------- mask back-projection (fc_3 / fc_4), folded ----------
        # cat(mask_out bcast over N, s) @ W3 == mask_out @ W3[:K] + s @ W3[K:]
        row3 = jnp.dot(mask_out.reshape(BB, K), w3m,
                       preferred_element_type=f32)                              # (BB,K)
        s_w3 = jnp.dot(s3.reshape(BB * N, K), w3s,
                       preferred_element_type=f32).reshape(BB, N, K)
        h3 = jnp.maximum(s_w3 + row3[:, None, :] + b3, 0.0)                     # (BB,N,K)
        pred = sigmoid(jnp.dot(h3.reshape(BB * N, K), w4,
                               preferred_element_type=f32) + b4).reshape(BB, N, 1)
        se = sum12((pred - m3) ** 2)                                            # (BB,1,1) SSE

        # ---------- mincut4A with s = attention^T ----------
        a_s = bdot(adj3, s3, 2, 1)                                              # (BB,N,K) = A S
        out_adj0 = bdot(s3, a_s, 1, 1)                                          # (BB,K,K) = S^T A S

        mincut_num = sum12(out_adj0 * eye_f)                                    # trace
        deg = jnp.sum(adj3, axis=-1, keepdims=True)                             # (BB,N,1) degrees
        mincut_den = sum12(s3 * s3 * deg)
        ratio = mincut_num / mincut_den                                         # (BB,1,1) exact

        ss = bdot(s3, s3, 1, 1)                                                 # (BB,K,K) = S^T S
        diff = ss * lax.rsqrt(sum12(ss * ss)) - eye_f * inv_sqrt_k
        ortho = jnp.sqrt(sum12(diff * diff))                                    # (BB,1,1)

        out_adj_z = out_adj0 * (1.0 - eye_f)                                    # zero diagonal
        rs = jnp.maximum(jnp.sum(out_adj_z, axis=-1, keepdims=True), 0.0)       # (BB,K,1)
        inv_dd = pl.reciprocal(jnp.sqrt(rs) + EPS, approx=True)                 # EUP
        dd_outer = bdot(inv_dd, inv_dd, 2, 2)                                   # (BB,K,K)
        out_adj_f = out_adj_z * dd_outer * adjm

        # ---------- single lane-contiguous output slab per block ----------
        scal = jnp.concatenate([ratio, ortho, se], axis=-1).reshape(BB, 3)
        flat = jnp.concatenate([
            x_out.reshape(BB, K * C),
            out_adj_f.reshape(BB, K * K),
            mask_out.reshape(BB, K),
            scal,
        ], axis=-1)                                                             # (BB, D_out)
        out_ref[...] = flat[:, None, :]

    return kernel


def _pack_params(pieces):
    """Pack (name, 2-D array) pieces into one f32 slab; return slab + static layout."""
    W = max(int(a.shape[1]) for _, a in pieces)
    layout, rows, r = {}, [], 0
    for name, a in pieces:
        a = jnp.asarray(a, jnp.float32)
        nr, nc = int(a.shape[0]), int(a.shape[1])
        if nc < W:
            a = jnp.concatenate([a, jnp.zeros((nr, W - nc), jnp.float32)], axis=1)
        rows.append(a)
        layout[name] = (r, nr, nc)
        r += nr
    return jnp.concatenate(rows, axis=0), layout


def _pick_block_b(B, N, F):
    # Largest divisor of B whose streamed (adj + x + mask) double-buffer stays
    # well under v7x's 64 MiB VMEM (v5e/v6e have 128 MiB, so this is the bound).
    budget = 24 << 20
    block_b = 1
    for bb in range(B, 0, -1):
        if B % bb == 0 and 2 * bb * N * (N + F + 1) * 4 <= budget:
            block_b = bb
            break
    # Keep >= 2 grid steps for v7x's two TensorCores when the folded matmuls
    # stay MXU-friendly after halving; at toy sizes run the whole batch in one step.
    if block_b == B and B % 2 == 0 and (B // 2) * N >= 256:
        block_b = B // 2
    return block_b


def prototype_pooling_pallas(x, mask, adj, params, *, block_b=None, input_dtype=None):
    B, N, F = x.shape
    K = params["meta"].shape[0]
    H = params["wqs"].shape[1]
    Cp1 = params["w2"].shape[1]
    C = Cp1 - 1
    f32 = jnp.float32

    if block_b is None:
        block_b = _pick_block_b(B, N, F)
    assert B % block_b == 0, "batch must be divisible by block_b"
    nblk = B // block_b

    if input_dtype is not None:   # e.g. jnp.bfloat16 on v6e/v7x: halves the adj HBM stream
        x = x.astype(input_dtype)
        mask = mask.astype(input_dtype)
        adj = adj.astype(input_dtype)

    # ---- one-time, batch-invariant parameter prep (outside the kernel) ----
    que = (params["meta"] @ params["wqs"] + params["bqs"]).astype(f32)       # hoisted fc_qs
    pieces = [
        ("que", que),
        ("w0x", params["w0"][:F, :]), ("w0m", params["w0"][F:F + 1, :]), ("b0", params["b0"]),
        ("wkv", jnp.concatenate([params["wks"], params["wvs"]], axis=1)),
        ("bkv", jnp.concatenate([params["bks"], params["bvs"]], axis=1)),
        ("w1", params["w1"]), ("b1", params["b1"]),
        ("g0", params["g0"]), ("be0", params["be0"]),
        ("g1", params["g1"]), ("be1", params["be1"]),
        ("w2", params["w2"]), ("b2", params["b2"]),
        ("w3m", params["w3"][:K, :]), ("w3s", params["w3"][K:2 * K, :]), ("b3", params["b3"]),
        ("w4", params["w4"]), ("b4", params["b4"]),
        ("adjm", params["adjm"]),
        ("eye", jnp.eye(K, dtype=f32)),
    ]
    slab, layout = _pack_params(pieces)

    d_out = K * C + K * K + K + 3    # packed [x_out | out_adj | mask_out | ratio,ortho,sse]

    in_specs = [
        pl.BlockSpec((block_b, N, F), lambda b: (b, 0, 0)),
        pl.BlockSpec((block_b, N, 1), lambda b: (b, 0, 0)),
        pl.BlockSpec((block_b, N, N), lambda b: (b, 0, 0)),
        pl.BlockSpec(slab.shape, lambda b: (0, 0)),          # invariant param slab
    ]
    out_specs = pl.BlockSpec((block_b, 1, d_out), lambda b: (b, 0, 0))
    out_shape = jax.ShapeDtypeStruct((B, 1, d_out), f32)

    # Generation-aware VMEM budget: only raise the scoped limit when needed,
    # and never past v7x's 64 MiB physical VMEM.
    itemsz = jnp.dtype(x.dtype).itemsize
    vmem_est = (2 * block_b * N * (N + F + 1) * itemsz
                + 2 * slab.size * 4 + 2 * block_b * d_out * 4 + (4 << 20))
    vmem_limit = int(min(vmem_est, 64 << 20)) if vmem_est > (32 << 20) else None

    fn = pl.pallas_call(
        _make_kernel(layout, N, F, K, H, C),
        out_shape=out_shape,
        grid_spec=pltpu.PrefetchScalarGridSpec(
            num_scalar_prefetch=0,
            grid=(nblk,),
            in_specs=in_specs,
            out_specs=out_specs,
        ),
        compiler_params=pltpu.CompilerParams(
            dimension_semantics=("parallel",),
            vmem_limit_bytes=vmem_limit,
        ),
    )
    packed = fn(x, mask, adj, slab)[:, 0, :]     # (B, d_out)

    o1 = K * C
    o2 = o1 + K * K
    o3 = o2 + K
    x_out = packed[:, :o1].reshape(B, K, C)
    out_adj = packed[:, o1:o2].reshape(B, K, K)
    mask_out = packed[:, o2:o3].reshape(B, K, 1)
    loss_mincut = -jnp.mean(packed[:, o3])
    loss_ortho = jnp.mean(packed[:, o3 + 1])
    loss_mse = jnp.sum(packed[:, o3 + 2]) / (B * N)
    return x_out, out_adj, mask_out, loss_mincut, loss_ortho, loss_mse


# ----------------- pure-JAX reference (mirrors the PyTorch forward) -----------------
def reference(x, mask, adj, p):
    B, N, F = x.shape
    K = p["meta"].shape[0]
    H = p["wqs"].shape[1]
    xm = jnp.concatenate([x, mask], axis=-1)
    z = jax.nn.relu(xm @ p["w0"] + p["b0"])
    que = jnp.broadcast_to(p["meta"] @ p["wqs"] + p["bqs"], (B, K, H))
    keyz = z @ p["wks"] + p["bks"]
    valz = z @ p["wvs"] + p["bvs"]
    att = jax.nn.softmax(
        jnp.einsum("bkh,bnh->bkn", que, keyz) / math.sqrt(H), axis=-1)
    new_s = jnp.einsum("bkn,bnh->bkh", att, valz) + que

    def ln(v, g, b):
        mu = v.mean(-1, keepdims=True)
        var = ((v - mu) ** 2).mean(-1, keepdims=True)
        return (v - mu) / jnp.sqrt(var + LN_EPS) * g + b

    new_s = ln(new_s, p["g0"], p["be0"])
    new_s = jax.nn.relu(new_s @ p["w1"] + p["b1"]) + new_s
    new_s = ln(new_s, p["g1"], p["be1"])
    sfc = new_s @ p["w2"] + p["b2"]
    x_out = jax.nn.relu(sfc[..., :-1])
    mask_out = jax.nn.sigmoid(sfc[..., -1:])

    s = jnp.swapaxes(att, 1, 2)                                       # (B,N,K)
    mob = jnp.broadcast_to(jnp.swapaxes(mask_out, 1, 2), (B, N, K))
    h3 = jax.nn.relu(jnp.concatenate([mob, s], -1) @ p["w3"] + p["b3"])
    pred = jax.nn.sigmoid(h3 @ p["w4"] + p["b4"])
    loss2 = jnp.mean((pred - mask) ** 2)

    out_adj = jnp.einsum("bnk,bnm,bmj->bkj", s, adj, s)
    mincut_num = jnp.trace(out_adj, axis1=1, axis2=2)
    d = adj.sum(-1)
    mincut_den = jnp.einsum("bn,bnk,bnk->b", d, s, s)
    loss0 = jnp.mean(-(mincut_num / mincut_den))
    ss = jnp.einsum("bnk,bnj->bkj", s, s)
    ssn = jnp.sqrt((ss ** 2).sum((-1, -2), keepdims=True))
    eye = jnp.eye(K, dtype=jnp.float32)
    loss1 = jnp.mean(jnp.sqrt((((ss / ssn) - eye / math.sqrt(K)) ** 2).sum((-1, -2))))
    out_adj = out_adj * (1.0 - eye)
    dd = jnp.sqrt(out_adj.sum(-1)) + EPS
    out_adj = out_adj / dd[:, None, :] / dd[:, :, None]
    out_adj = out_adj * p["adjm"]
    return x_out, out_adj, mask_out, loss0, loss1, loss2


if __name__ == "__main__":
    B, N, F, H, C, K = 8, 16, 4, 32, 8, 4
    Pdim = 2 * F

    key = jax.random.PRNGKey(0)
    keys = jax.random.split(key, 12)

    def linear(k, fi, fo):  # PyTorch-like Linear init, weight stored transposed (in, out)
        kw, kb = jax.random.split(k)
        bound = 1.0 / math.sqrt(fi)
        w = jax.random.uniform(kw, (fi, fo), jnp.float32, -bound, bound)
        b = jax.random.uniform(kb, (1, fo), jnp.float32, -bound, bound)
        return w, b

    w0, b0 = linear(keys[0], F + 1, F)
    wqs, bqs = linear(keys[1], Pdim, H)
    wks, bks = linear(keys[2], F, H)
    wvs, bvs = linear(keys[3], F, H)
    w1, b1 = linear(keys[4], H, H)
    w2, b2 = linear(keys[5], H, C + 1)
    w3, b3 = linear(keys[6], 2 * K, K)
    w4, b4 = linear(keys[7], K, 1)
    xav = math.sqrt(6.0 / (K + Pdim))
    meta = jax.random.uniform(keys[8], (K, Pdim), jnp.float32, -xav, xav)
    adjm = jnp.ones((K, K), jnp.float32) - jnp.eye(K, dtype=jnp.float32)
    g0 = jnp.ones((1, H), jnp.float32)
    be0 = jnp.zeros((1, H), jnp.float32)
    g1 = jnp.ones((1, H), jnp.float32)
    be1 = jnp.zeros((1, H), jnp.float32)

    params = dict(
        meta=meta, adjm=adjm, w0=w0, b0=b0, wqs=wqs, bqs=bqs, wks=wks, bks=bks,
        wvs=wvs, bvs=bvs, w1=w1, b1=b1, g0=g0, be0=be0, g1=g1, be1=be1,
        w2=w2, b2=b2, w3=w3, b3=b3, w4=w4, b4=b4,
    )

    x = jax.random.normal(keys[9], (B, N, F), jnp.float32)
    mask = (jax.random.uniform(keys[10], (B, N, 1)) > 0.3).astype(jnp.float32)
    a = jax.random.uniform(keys[11], (B, N, N), jnp.float32)
    adj = 0.5 * (a + jnp.swapaxes(a, 1, 2))

    # block_b heuristic folds the whole toy batch into one grid step (128 matmul rows);
    # keep f32 inputs here for a tight reference comparison (pass input_dtype=jnp.bfloat16
    # on v6e/v7x for the mem-bound large-N regime).
    fwd = jax.jit(lambda xx, mm, aa: prototype_pooling_pallas(xx, mm, aa, params))
    outs = jax.block_until_ready(fwd(x, mask, adj))
    refs = jax.block_until_ready(reference(x, mask, adj, params))

    names = ["x_out", "out_adj", "mask_out", "loss_mincut", "loss_ortho", "loss_mse"]
    for name, o, r in zip(names, outs, refs):
        np.testing.assert_allclose(np.asarray(o), np.asarray(r), rtol=2e-2, atol=2e-2,
                                   err_msg=name)
    print("KERNEL_OK")
</pallas_src>

<mosaic_0001>
module attributes {stable_mosaic.version = 11 : i64} {
  func.func @kernel(%arg0: i32, %arg1: memref<8x16x4xf32, #tpu.memory_space<vmem>>, %arg2: memref<8x16x1xf32, #tpu.memory_space<vmem>>, %arg3: memref<8x16x16xf32, #tpu.memory_space<vmem>>, %arg4: memref<107x64xf32, #tpu.memory_space<vmem>>, %arg5: memref<8x1x55xf32, #tpu.memory_space<vmem>>) attributes {dimension_semantics = [#tpu.dimension_semantics<parallel>], iteration_bounds = array<i64: 1>, scalar_prefetch = 0 : i64, scratch_operands = 0 : i64, tpu.core_type = #tpu.core_type<tc>, window_params = [{transform_indices = @transform_0, window_bounds = array<i64: 8, 16, 4>}, {transform_indices = @transform_1, window_bounds = array<i64: 8, 16, 1>}, {transform_indices = @transform_2, window_bounds = array<i64: 8, 16, 16>}, {pipeline_mode = #tpu.pipeline_mode<synchronous>, transform_indices = @transform_3, window_bounds = array<i64: 107, 64>}, {transform_indices = @transform_4, window_bounds = array<i64: 8, 1, 55>}]} {
    %c0 = arith.constant 0 : index
    %c0_0 = arith.constant 0 : index
    %c0_1 = arith.constant 0 : index
    %0 = vector.load %arg1[%c0, %c0_0, %c0_1] : memref<8x16x4xf32, #tpu.memory_space<vmem>>, vector<8x16x4xf32>
    %c0_2 = arith.constant 0 : index
    %c0_3 = arith.constant 0 : index
    %c0_4 = arith.constant 0 : index
    %1 = vector.load %arg2[%c0_2, %c0_3, %c0_4] : memref<8x16x1xf32, #tpu.memory_space<vmem>>, vector<8x16x1xf32>
    %c0_5 = arith.constant 0 : index
    %c0_6 = arith.constant 0 : index
    %c0_7 = arith.constant 0 : index
    %2 = vector.load %arg3[%c0_5, %c0_6, %c0_7] : memref<8x16x16xf32, #tpu.memory_space<vmem>>, vector<8x16x16xf32>
    %c0_8 = arith.constant 0 : index
    %c0_9 = arith.constant 0 : index
    %3 = vector.load %arg4[%c0_8, %c0_9] : memref<107x64xf32, #tpu.memory_space<vmem>>, vector<107x64xf32>
    %4 = vector.extract_strided_slice %3 {offsets = [0, 0], sizes = [4, 32], strides = [1, 1]} : vector<107x64xf32> to vector<4x32xf32>
    %5 = vector.extract_strided_slice %3 {offsets = [4, 0], sizes = [4, 4], strides = [1, 1]} : vector<107x64xf32> to vector<4x4xf32>
    %6 = vector.extract_strided_slice %3 {offsets = [8, 0], sizes = [1, 4], strides = [1, 1]} : vector<107x64xf32> to vector<1x4xf32>
    %7 = vector.extract_strided_slice %3 {offsets = [9, 0], sizes = [1, 4], strides = [1, 1]} : vector<107x64xf32> to vector<1x4xf32>
    %8 = vector.extract_strided_slice %3 {offsets = [10, 0], sizes = [4, 64], strides = [1, 1]} : vector<107x64xf32> to vector<4x64xf32>
    %9 = vector.extract_strided_slice %3 {offsets = [14, 0], sizes = [1, 64], strides = [1, 1]} : vector<107x64xf32> to vector<1x64xf32>
    %10 = vector.extract_strided_slice %3 {offsets = [15, 0], sizes = [32, 32], strides = [1, 1]} : vector<107x64xf32> to vector<32x32xf32>
    %11 = vector.extract_strided_slice %3 {offsets = [47, 0], sizes = [1, 32], strides = [1, 1]} : vector<107x64xf32> to vector<1x32xf32>
    %12 = vector.extract_strided_slice %3 {offsets = [48, 0], sizes = [1, 32], strides = [1, 1]} : vector<107x64xf32> to vector<1x32xf32>
    %13 = vector.extract_strided_slice %3 {offsets = [49, 0], sizes = [1, 32], strides = [1, 1]} : vector<107x64xf32> to vector<1x32xf32>
    %14 = vector.extract_strided_slice %3 {offsets = [50, 0], sizes = [1, 32], strides = [1, 1]} : vector<107x64xf32> to vector<1x32xf32>
    %15 = vector.extract_strided_slice %3 {offsets = [51, 0], sizes = [1, 32], strides = [1, 1]} : vector<107x64xf32> to vector<1x32xf32>
    %16 = vector.extract_strided_slice %3 {offsets = [52, 0], sizes = [32, 9], strides = [1, 1]} : vector<107x64xf32> to vector<32x9xf32>
    %17 = vector.extract_strided_slice %3 {offsets = [84, 0], sizes = [1, 9], strides = [1, 1]} : vector<107x64xf32> to vector<1x9xf32>
    %18 = vector.extract_strided_slice %3 {offsets = [85, 0], sizes = [4, 4], strides = [1, 1]} : vector<107x64xf32> to vector<4x4xf32>
    %19 = vector.extract_strided_slice %3 {offsets = [89, 0], sizes = [4, 4], strides = [1, 1]} : vector<107x64xf32> to vector<4x4xf32>
    %20 = vector.extract_strided_slice %3 {offsets = [93, 0], sizes = [1, 4], strides = [1, 1]} : vector<107x64xf32> to vector<1x4xf32>
    %21 = vector.extract_strided_slice %3 {offsets = [94, 0], sizes = [4, 1], strides = [1, 1]} : vector<107x64xf32> to vector<4x1xf32>
    %22 = vector.extract_strided_slice %3 {offsets = [98, 0], sizes = [1, 1], strides = [1, 1]} : vector<107x64xf32> to vector<1x1xf32>
    %23 = vector.extract_strided_slice %3 {offsets = [99, 0], sizes = [4, 4], strides = [1, 1]} : vector<107x64xf32> to vector<4x4xf32>
    %24 = vector.extract_strided_slice %3 {offsets = [103, 0], sizes = [4, 4], strides = [1, 1]} : vector<107x64xf32> to vector<4x4xf32>
    %25 = vector.shape_cast %0 : vector<8x16x4xf32> to vector<128x4xf32>
    %26 = vector.shape_cast %1 : vector<8x16x1xf32> to vector<128x1xf32>
    %cst = arith.constant dense<0.000000e+00> : vector<128x4xf32>
    %27 = tpu.matmul %25, %5, %cst {dimension_numbers = #tpu.dot_dimension_numbers<[1], [0], [0], [1], [0, 0, 1, 1], [], []>} : vector<128x4xf32>, vector<4x4xf32>, vector<128x4xf32> -> vector<128x4xf32>
    %28 = vector.broadcast %26 : vector<128x1xf32> to vector<128x4xf32>
    %29 = vector.broadcast %6 : vector<1x4xf32> to vector<128x4xf32>
    %30 = arith.mulf %28, %29 : vector<128x4xf32>
    %31 = arith.addf %27, %30 : vector<128x4xf32>
    %32 = vector.broadcast %7 : vector<1x4xf32> to vector<128x4xf32>
    %33 = arith.addf %31, %32 : vector<128x4xf32>
    %cst_10 = arith.constant 0.000000e+00 : f32
    %34 = vector.broadcast %cst_10 : f32 to vector<128x4xf32>
    %35 = arith.maximumf %33, %34 : vector<128x4xf32>
    %cst_11 = arith.constant dense<0.000000e+00> : vector<128x64xf32>
    %36 = tpu.matmul %35, %8, %cst_11 {dimension_numbers = #tpu.dot_dimension_numbers<[1], [0], [0], [1], [0, 0, 1, 1], [], []>} : vector<128x4xf32>, vector<4x64xf32>, vector<128x64xf32> -> vector<128x64xf32>
    %37 = vector.broadcast %9 : vector<1x64xf32> to vector<128x64xf32>
    %38 = arith.addf %36, %37 : vector<128x64xf32>
    %39 = vector.extract_strided_slice %38 {offsets = [0, 0], sizes = [128, 32], strides = [1, 1]} : vector<128x64xf32> to vector<128x32xf32>
    %40 = vector.extract_strided_slice %38 {offsets = [0, 32], sizes = [128, 32], strides = [1, 1]} : vector<128x64xf32> to vector<128x32xf32>
    %41 = vector.shape_cast %40 : vector<128x32xf32> to vector<8x16x32xf32>
    %cst_12 = arith.constant dense<0.000000e+00> : vector<128x4xf32>
    %42 = tpu.matmul %39, %4, %cst_12 {dimension_numbers = #tpu.dot_dimension_numbers<[1], [1], [0], [0], [0, 0, 1, 0], [], []>} : vector<128x32xf32>, vector<4x32xf32>, vector<128x4xf32> -> vector<128x4xf32>
    %cst_13 = arith.constant 0.176776692 : f32
    %43 = vector.broadcast %cst_13 : f32 to vector<128x4xf32>
    %44 = arith.mulf %42, %43 : vector<128x4xf32>
    %45 = vector.shape_cast %44 : vector<128x4xf32> to vector<8x16x4xf32>
    %cst_14 = arith.constant dense<0xFF800000> : vector<8x4xf32>
    %46 = vector.multi_reduction <maximumf>, %45, %cst_14 [1] : vector<8x16x4xf32> to vector<8x4xf32>
    %47 = vector.shape_cast %46 : vector<8x4xf32> to vector<8x1x4xf32>
    %48 = vector.broadcast %47 : vector<8x1x4xf32> to vector<8x16x4xf32>
    %49 = arith.subf %45, %48 : vector<8x16x4xf32>
    %50 = math.exp %49 : vector<8x16x4xf32>
    %cst_15 = arith.constant dense<0.000000e+00> : vector<8x4xf32>
    %51 = vector.multi_reduction <add>, %50, %cst_15 [1] : vector<8x16x4xf32> to vector<8x4xf32>
    %52 = vector.shape_cast %51 : vector<8x4xf32> to vector<8x1x4xf32>
    %53 = vector.broadcast %52 : vector<8x1x4xf32> to vector<8x16x4xf32>
    %54 = arith.divf %50, %53 : vector<8x16x4xf32>
    %cst_16 = arith.constant dense<0.000000e+00> : vector<8x4x32xf32>
    %55 = tpu.matmul %54, %41, %cst_16 {dimension_numbers = #tpu.dot_dimension_numbers<[1], [1], [2], [2], [0, 0, 0, 2, 1, 2], [0], [0]>} : vector<8x16x4xf32>, vector<8x16x32xf32>, vector<8x4x32xf32> -> vector<8x4x32xf32>
    %56 = vector.shape_cast %4 : vector<4x32xf32> to vector<1x4x32xf32>
    %57 = vector.broadcast %56 : vector<1x4x32xf32> to vector<8x4x32xf32>
    %58 = arith.addf %55, %57 : vector<8x4x32xf32>
    %cst_17 = arith.constant dense<0.000000e+00> : vector<8x4xf32>
    %59 = vector.multi_reduction <add>, %58, %cst_17 [2] : vector<8x4x32xf32> to vector<8x4xf32>
    %60 = vector.shape_cast %59 : vector<8x4xf32> to vector<8x4x1xf32>
    %cst_18 = arith.constant 3.200000e+01 : f32
    %61 = vector.broadcast %cst_18 : f32 to vector<8x4x1xf32>
    %62 = arith.divf %60, %61 : vector<8x4x1xf32>
    %63 = vector.broadcast %62 : vector<8x4x1xf32> to vector<8x4x32xf32>
    %64 = arith.subf %58, %63 : vector<8x4x32xf32>
    %65 = arith.mulf %64, %64 : vector<8x4x32xf32>
    %cst_19 = arith.constant dense<0.000000e+00> : vector<8x4xf32>
    %66 = vector.multi_reduction <add>, %65, %cst_19 [2] : vector<8x4x32xf32> to vector<8x4xf32>
    %67 = vector.shape_cast %66 : vector<8x4xf32> to vector<8x4x1xf32>
    %cst_20 = arith.constant 3.200000e+01 : f32
    %68 = vector.broadcast %cst_20 : f32 to vector<8x4x1xf32>
    %69 = arith.divf %67, %68 : vector<8x4x1xf32>
    %70 = vector.broadcast %62 : vector<8x4x1xf32> to vector<8x4x32xf32>
    %71 = arith.subf %58, %70 : vector<8x4x32xf32>
    %cst_21 = arith.constant 9.99999974E-6 : f32
    %72 = vector.broadcast %cst_21 : f32 to vector<8x4x1xf32>
    %73 = arith.addf %69, %72 : vector<8x4x1xf32>
    %74 = math.rsqrt %73 : vector<8x4x1xf32>
    %75 = vector.broadcast %74 : vector<8x4x1xf32> to vector<8x4x32xf32>
    %76 = arith.mulf %71, %75 : vector<8x4x32xf32>
    %77 = vector.shape_cast %12 : vector<1x32xf32> to vector<1x1x32xf32>
    %78 = vector.broadcast %77 : vector<1x1x32xf32> to vector<8x4x32xf32>
    %79 = arith.mulf %76, %78 : vector<8x4x32xf32>
    %80 = vector.shape_cast %13 : vector<1x32xf32> to vector<1x1x32xf32>
    %81 = vector.broadcast %80 : vector<1x1x32xf32> to vector<8x4x32xf32>
    %82 = arith.addf %79, %81 : vector<8x4x32xf32>
    %83 = vector.shape_cast %82 : vector<8x4x32xf32> to vector<32x32xf32>
    %cst_22 = arith.constant dense<0.000000e+00> : vector<32x32xf32>
    %84 = tpu.matmul %83, %10, %cst_22 {dimension_numbers = #tpu.dot_dimension_numbers<[1], [0], [0], [1], [0, 0, 1, 1], [], []>} : vector<32x32xf32>, vector<32x32xf32>, vector<32x32xf32> -> vector<32x32xf32>
    %85 = vector.broadcast %11 : vector<1x32xf32> to vector<32x32xf32>
    %86 = arith.addf %84, %85 : vector<32x32xf32>
    %cst_23 = arith.constant 0.000000e+00 : f32
    %87 = vector.broadcast %cst_23 : f32 to vector<32x32xf32>
    %88 = arith.maximumf %86, %87 : vector<32x32xf32>
    %89 = vector.shape_cast %88 : vector<32x32xf32> to vector<8x4x32xf32>
    %90 = arith.addf %89, %82 : vector<8x4x32xf32>
    %cst_24 = arith.constant dense<0.000000e+00> : vector<8x4xf32>
    %91 = vector.multi_reduction <add>, %90, %cst_24 [2] : vector<8x4x32xf32> to vector<8x4xf32>
    %92 = vector.shape_cast %91 : vector<8x4xf32> to vector<8x4x1xf32>
    %cst_25 = arith.constant 3.200000e+01 : f32
    %93 = vector.broadcast %cst_25 : f32 to vector<8x4x1xf32>
    %94 = arith.divf %92, %93 : vector<8x4x1xf32>
    %95 = vector.broadcast %94 : vector<8x4x1xf32> to vector<8x4x32xf32>
    %96 = arith.subf %90, %95 : vector<8x4x32xf32>
    %97 = arith.mulf %96, %96 : vector<8x4x32xf32>
    %cst_26 = arith.constant dense<0.000000e+00> : vector<8x4xf32>
    %98 = vector.multi_reduction <add>, %97, %cst_26 [2] : vector<8x4x32xf32> to vector<8x4xf32>
    %99 = vector.shape_cast %98 : vector<8x4xf32> to vector<8x4x1xf32>
    %cst_27 = arith.constant 3.200000e+01 : f32
    %100 = vector.broadcast %cst_27 : f32 to vector<8x4x1xf32>
    %101 = arith.divf %99, %100 : vector<8x4x1xf32>
    %102 = vector.broadcast %94 : vector<8x4x1xf32> to vector<8x4x32xf32>
    %103 = arith.subf %90, %102 : vector<8x4x32xf32>
    %cst_28 = arith.constant 9.99999974E-6 : f32
    %104 = vector.broadcast %cst_28 : f32 to vector<8x4x1xf32>
    %105 = arith.addf %101, %104 : vector<8x4x1xf32>
    %106 = math.rsqrt %105 : vector<8x4x1xf32>
    %107 = vector.broadcast %106 : vector<8x4x1xf32> to vector<8x4x32xf32>
    %108 = arith.mulf %103, %107 : vector<8x4x32xf32>
    %109 = vector.shape_cast %14 : vector<1x32xf32> to vector<1x1x32xf32>
    %110 = vector.broadcast %109 : vector<1x1x32xf32> to vector<8x4x32xf32>
    %111 = arith.mulf %108, %110 : vector<8x4x32xf32>
    %112 = vector.shape_cast %15 : vector<1x32xf32> to vector<1x1x32xf32>
    %113 = vector.broadcast %112 : vector<1x1x32xf32> to vector<8x4x32xf32>
    %114 = arith.addf %111, %113 : vector<8x4x32xf32>
    %115 = vector.shape_cast %114 : vector<8x4x32xf32> to vector<32x32xf32>
    %cst_29 = arith.constant dense<0.000000e+00> : vector<32x9xf32>
    %116 = tpu.matmul %115, %16, %cst_29 {dimension_numbers = #tpu.dot_dimension_numbers<[1], [0], [0], [1], [0, 0, 1, 1], [], []>} : vector<32x32xf32>, vector<32x9xf32>, vector<32x9xf32> -> vector<32x9xf32>
    %117 = vector.broadcast %17 : vector<1x9xf32> to vector<32x9xf32>
    %118 = arith.addf %116, %117 : vector<32x9xf32>
    %119 = vector.shape_cast %118 : vector<32x9xf32> to vector<8x4x9xf32>
    %120 = vector.extract_strided_slice %119 {offsets = [0, 0, 0], sizes = [8, 4, 8], strides = [1, 1, 1]} : vector<8x4x9xf32> to vector<8x4x8xf32>
    %cst_30 = arith.constant 0.000000e+00 : f32
    %121 = vector.broadcast %cst_30 : f32 to vector<8x4x8xf32>
    %122 = arith.maximumf %120, %121 : vector<8x4x8xf32>
    %123 = vector.extract_strided_slice %119 {offsets = [0, 0, 8], sizes = [8, 4, 1], strides = [1, 1, 1]} : vector<8x4x9xf32> to vector<8x4x1xf32>
    %cst_31 = arith.constant 0.000000e+00 : f32
    %124 = vector.broadcast %cst_31 : f32 to vector<8x4x1xf32>
    %125 = arith.subf %124, %123 : vector<8x4x1xf32>
    %126 = math.exp %125 : vector<8x4x1xf32>
    %cst_32 = arith.constant 1.000000e+00 : f32
    %127 = vector.broadcast %cst_32 : f32 to vector<8x4x1xf32>
    %128 = arith.addf %127, %126 : vector<8x4x1xf32>
    %129 = tpu.reciprocal %128 {approx = true} : vector<8x4x1xf32> -> vector<8x4x1xf32>
    %130 = vector.shape_cast %129 : vector<8x4x1xf32> to vector<8x4xf32>
    %cst_33 = arith.constant dense<0.000000e+00> : vector<8x4xf32>
    %131 = tpu.matmul %130, %18, %cst_33 {dimension_numbers = #tpu.dot_dimension_numbers<[1], [0], [0], [1], [0, 0, 1, 1], [], []>} : vector<8x4xf32>, vector<4x4xf32>, vector<8x4xf32> -> vector<8x4xf32>
    %132 = vector.shape_cast %54 : vector<8x16x4xf32> to vector<128x4xf32>
    %cst_34 = arith.constant dense<0.000000e+00> : vector<128x4xf32>
    %133 = tpu.matmul %132, %19, %cst_34 {dimension_numbers = #tpu.dot_dimension_numbers<[1], [0], [0], [1], [0, 0, 1, 1], [], []>} : vector<128x4xf32>, vector<4x4xf32>, vector<128x4xf32> -> vector<128x4xf32>
    %134 = vector.shape_cast %133 : vector<128x4xf32> to vector<8x16x4xf32>
    %135 = vector.shape_cast %131 : vector<8x4xf32> to vector<8x1x4xf32>
    %136 = vector.broadcast %135 : vector<8x1x4xf32> to vector<8x16x4xf32>
    %137 = arith.addf %134, %136 : vector<8x16x4xf32>
    %138 = vector.shape_cast %20 : vector<1x4xf32> to vector<1x1x4xf32>
    %139 = vector.broadcast %138 : vector<1x1x4xf32> to vector<8x16x4xf32>
    %140 = arith.addf %137, %139 : vector<8x16x4xf32>
    %cst_35 = arith.constant 0.000000e+00 : f32
    %141 = vector.broadcast %cst_35 : f32 to vector<8x16x4xf32>
    %142 = arith.maximumf %140, %141 : vector<8x16x4xf32>
    %143 = vector.shape_cast %142 : vector<8x16x4xf32> to vector<128x4xf32>
    %cst_36 = arith.constant dense<0.000000e+00> : vector<128x1xf32>
    %144 = tpu.matmul %143, %21, %cst_36 {dimension_numbers = #tpu.dot_dimension_numbers<[1], [0], [0], [1], [0, 0, 1, 1], [], []>} : vector<128x4xf32>, vector<4x1xf32>, vector<128x1xf32> -> vector<128x1xf32>
    %145 = vector.broadcast %22 : vector<1x1xf32> to vector<128x1xf32>
    %146 = arith.addf %144, %145 : vector<128x1xf32>
    %cst_37 = arith.constant 0.000000e+00 : f32
    %147 = vector.broadcast %cst_37 : f32 to vector<128x1xf32>
    %148 = arith.subf %147, %146 : vector<128x1xf32>
    %149 = math.exp %148 : vector<128x1xf32>
    %cst_38 = arith.constant 1.000000e+00 : f32
    %150 = vector.broadcast %cst_38 : f32 to vector<128x1xf32>
    %151 = arith.addf %150, %149 : vector<128x1xf32>
    %152 = tpu.reciprocal %151 {approx = true} : vector<128x1xf32> -> vector<128x1xf32>
    %153 = vector.shape_cast %152 : vector<128x1xf32> to vector<8x16x1xf32>
    %154 = arith.subf %153, %1 : vector<8x16x1xf32>
    %155 = arith.mulf %154, %154 : vector<8x16x1xf32>
    %cst_39 = arith.constant dense<0.000000e+00> : vector<8x16xf32>
    %156 = vector.multi_reduction <add>, %155, %cst_39 [2] : vector<8x16x1xf32> to vector<8x16xf32>
    %157 = vector.shape_cast %156 : vector<8x16xf32> to vector<8x16x1xf32>
    %cst_40 = arith.constant dense<0.000000e+00> : vector<8x1xf32>
    %158 = vector.multi_reduction <add>, %157, %cst_40 [1] : vector<8x16x1xf32> to vector<8x1xf32>
    %159 = vector.shape_cast %158 : vector<8x1xf32> to vector<8x1x1xf32>
    %cst_41 = arith.constant dense<0.000000e+00> : vector<8x16x4xf32>
    %160 = tpu.matmul %2, %54, %cst_41 {dimension_numbers = #tpu.dot_dimension_numbers<[2], [1], [1], [2], [0, 0, 0, 1, 1, 2], [0], [0]>} : vector<8x16x16xf32>, vector<8x16x4xf32>, vector<8x16x4xf32> -> vector<8x16x4xf32>
    %cst_42 = arith.constant dense<0.000000e+00> : vector<8x4x4xf32>
    %161 = tpu.matmul %54, %160, %cst_42 {dimension_numbers = #tpu.dot_dimension_numbers<[1], [1], [2], [2], [0, 0, 0, 2, 1, 2], [0], [0]>} : vector<8x16x4xf32>, vector<8x16x4xf32>, vector<8x4x4xf32> -> vector<8x4x4xf32>
    %162 = vector.shape_cast %24 : vector<4x4xf32> to vector<1x4x4xf32>
    %163 = vector.broadcast %162 : vector<1x4x4xf32> to vector<8x4x4xf32>
    %164 = arith.mulf %161, %163 : vector<8x4x4xf32>
    %cst_43 = arith.constant dense<0.000000e+00> : vector<8x4xf32>
    %165 = vector.multi_reduction <add>, %164, %cst_43 [2] : vector<8x4x4xf32> to vector<8x4xf32>
    %166 = vector.shape_cast %165 : vector<8x4xf32> to vector<8x4x1xf32>
    %cst_44 = arith.constant dense<0.000000e+00> : vector<8x1xf32>
    %167 = vector.multi_reduction <add>, %166, %cst_44 [1] : vector<8x4x1xf32> to vector<8x1xf32>
    %168 = vector.shape_cast %167 : vector<8x1xf32> to vector<8x1x1xf32>
    %cst_45 = arith.constant dense<0.000000e+00> : vector<8x16xf32>
    %169 = vector.multi_reduction <add>, %2, %cst_45 [2] : vector<8x16x16xf32> to vector<8x16xf32>
    %170 = vector.shape_cast %169 : vector<8x16xf32> to vector<8x16x1xf32>
    %171 = arith.mulf %54, %54 : vector<8x16x4xf32>
    %172 = vector.broadcast %170 : vector<8x16x1xf32> to vector<8x16x4xf32>
    %173 = arith.mulf %171, %172 : vector<8x16x4xf32>
    %cst_46 = arith.constant dense<0.000000e+00> : vector<8x16xf32>
    %174 = vector.multi_reduction <add>, %173, %cst_46 [2] : vector<8x16x4xf32> to vector<8x16xf32>
    %175 = vector.shape_cast %174 : vector<8x16xf32> to vector<8x16x1xf32>
    %cst_47 = arith.constant dense<0.000000e+00> : vector<8x1xf32>
    %176 = vector.multi_reduction <add>, %175, %cst_47 [1] : vector<8x16x1xf32> to vector<8x1xf32>
    %177 = vector.shape_cast %176 : vector<8x1xf32> to vector<8x1x1xf32>
    %178 = arith.divf %168, %177 : vector<8x1x1xf32>
    %cst_48 = arith.constant dense<0.000000e+00> : vector<8x4x4xf32>
    %179 = tpu.matmul %54, %54, %cst_48 {dimension_numbers = #tpu.dot_dimension_numbers<[1], [1], [2], [2], [0, 0, 0, 2, 1, 2], [0], [0]>} : vector<8x16x4xf32>, vector<8x16x4xf32>, vector<8x4x4xf32> -> vector<8x4x4xf32>
    %180 = arith.mulf %179, %179 : vector<8x4x4xf32>
    %cst_49 = arith.constant dense<0.000000e+00> : vector<8x4xf32>
    %181 = vector.multi_reduction <add>, %180, %cst_49 [2] : vector<8x4x4xf32> to vector<8x4xf32>
    %182 = vector.shape_cast %181 : vector<8x4xf32> to vector<8x4x1xf32>
    %cst_50 = arith.constant dense<0.000000e+00> : vector<8x1xf32>
    %183 = vector.multi_reduction <add>, %182, %cst_50 [1] : vector<8x4x1xf32> to vector<8x1xf32>
    %184 = vector.shape_cast %183 : vector<8x1xf32> to vector<8x1x1xf32>
    %185 = math.rsqrt %184 : vector<8x1x1xf32>
    %186 = vector.broadcast %185 : vector<8x1x1xf32> to vector<8x4x4xf32>
    %187 = arith.mulf %179, %186 : vector<8x4x4xf32>
    %cst_51 = arith.constant 5.000000e-01 : f32
    %188 = vector.broadcast %cst_51 : f32 to vector<4x4xf32>
    %189 = arith.mulf %24, %188 : vector<4x4xf32>
    %190 = vector.shape_cast %189 : vector<4x4xf32> to vector<1x4x4xf32>
    %191 = vector.broadcast %190 : vector<1x4x4xf32> to vector<8x4x4xf32>
    %192 = arith.subf %187, %191 : vector<8x4x4xf32>
    %193 = arith.mulf %192, %192 : vector<8x4x4xf32>
    %cst_52 = arith.constant dense<0.000000e+00> : vector<8x4xf32>
    %194 = vector.multi_reduction <add>, %193, %cst_52 [2] : vector<8x4x4xf32> to vector<8x4xf32>
    %195 = vector.shape_cast %194 : vector<8x4xf32> to vector<8x4x1xf32>
    %cst_53 = arith.constant dense<0.000000e+00> : vector<8x1xf32>
    %196 = vector.multi_reduction <add>, %195, %cst_53 [1] : vector<8x4x1xf32> to vector<8x1xf32>
    %197 = vector.shape_cast %196 : vector<8x1xf32> to vector<8x1x1xf32>
    %198 = math.sqrt %197 : vector<8x1x1xf32>
    %cst_54 = arith.constant 1.000000e+00 : f32
    %199 = vector.broadcast %cst_54 : f32 to vector<4x4xf32>
    %200 = arith.subf %199, %24 : vector<4x4xf32>
    %201 = vector.shape_cast %200 : vector<4x4xf32> to vector<1x4x4xf32>
    %202 = vector.broadcast %201 : vector<1x4x4xf32> to vector<8x4x4xf32>
    %203 = arith.mulf %161, %202 : vector<8x4x4xf32>
    %cst_55 = arith.constant dense<0.000000e+00> : vector<8x4xf32>
    %204 = vector.multi_reduction <add>, %203, %cst_55 [2] : vector<8x4x4xf32> to vector<8x4xf32>
    %205 = vector.shape_cast %204 : vector<8x4xf32> to vector<8x4x1xf32>
    %cst_56 = arith.constant 0.000000e+00 : f32
    %206 = vector.broadcast %cst_56 : f32 to vector<8x4x1xf32>
    %207 = arith.maximumf %205, %206 : vector<8x4x1xf32>
    %208 = math.sqrt %207 : vector<8x4x1xf32>
    %cst_57 = arith.constant 1.000000e-15 : f32
    %209 = vector.broadcast %cst_57 : f32 to vector<8x4x1xf32>
    %210 = arith.addf %208, %209 : vector<8x4x1xf32>
    %211 = tpu.reciprocal %210 {approx = true} : vector<8x4x1xf32> -> vector<8x4x1xf32>
    %cst_58 = arith.constant dense<0.000000e+00> : vector<8x4x4xf32>
    %212 = tpu.matmul %211, %211, %cst_58 {dimension_numbers = #tpu.dot_dimension_numbers<[2], [2], [1], [1], [0, 0, 0, 1, 1, 1], [0], [0]>} : vector<8x4x1xf32>, vector<8x4x1xf32>, vector<8x4x4xf32> -> vector<8x4x4xf32>
    %213 = arith.mulf %203, %212 : vector<8x4x4xf32>
    %214 = vector.shape_cast %23 : vector<4x4xf32> to vector<1x4x4xf32>
    %215 = vector.broadcast %214 : vector<1x4x4xf32> to vector<8x4x4xf32>
    %216 = arith.mulf %213, %215 : vector<8x4x4xf32>
    %217 = tpu.concatenate %178, %198, %159 in 2 : vector<8x1x1xf32>, vector<8x1x1xf32>, vector<8x1x1xf32> -> vector<8x1x3xf32>
    %218 = vector.shape_cast %217 : vector<8x1x3xf32> to vector<8x3xf32>
    %219 = vector.shape_cast %122 : vector<8x4x8xf32> to vector<8x32xf32>
    %220 = vector.shape_cast %216 : vector<8x4x4xf32> to vector<8x16xf32>
    %221 = vector.shape_cast %129 : vector<8x4x1xf32> to vector<8x4xf32>
    %222 = tpu.concatenate %219, %220, %221, %218 in 1 : vector<8x32xf32>, vector<8x16xf32>, vector<8x4xf32>, vector<8x3xf32> -> vector<8x55xf32>
    %223 = vector.shape_cast %222 : vector<8x55xf32> to vector<8x1x55xf32>
    %c0_59 = arith.constant 0 : index
    %c0_60 = arith.constant 0 : index
    %c0_61 = arith.constant 0 : index
    %224 = vector.load %arg5[%c0_59, %c0_60, %c0_61] : memref<8x1x55xf32, #tpu.memory_space<vmem>>, vector<8x1x55xf32>
    tpu.vector_store %arg5[%c0_59, %c0_60, %c0_61], %223 {strides = array<i32>} : memref<8x1x55xf32, #tpu.memory_space<vmem>>, vector<8x1x55xf32>,
    return
  }
  func.func @transform_0(%arg0: i32) -> (i32, i32, i32) {
    %c0_i32 = arith.constant 0 : i32
    %c0_i32_0 = arith.constant 0 : i32
    %c0_i32_1 = arith.constant 0 : i32
    return %arg0, %c0_i32, %c0_i32_0 : i32, i32, i32
  }
  func.func @transform_1(%arg0: i32) -> (i32, i32, i32) {
    %c0_i32 = arith.constant 0 : i32
    %c0_i32_0 = arith.constant 0 : i32
    %c0_i32_1 = arith.constant 0 : i32
    return %arg0, %c0_i32, %c0_i32_0 : i32, i32, i32
  }
  func.func @transform_2(%arg0: i32) -> (i32, i32, i32) {
    %c0_i32 = arith.constant 0 : i32
    %c0_i32_0 = arith.constant 0 : i32
    %c0_i32_1 = arith.constant 0 : i32
    return %arg0, %c0_i32, %c0_i32_0 : i32, i32, i32
  }
  func.func @transform_3(%arg0: i32) -> (i32, i32) {
    %c0_i32 = arith.constant 0 : i32
    %c0_i32_0 = arith.constant 0 : i32
    %c0_i32_1 = arith.constant 0 : i32
    return %c0_i32, %c0_i32_0 : i32, i32
  }
  func.func @transform_4(%arg0: i32) -> (i32, i32, i32) {
    %c0_i32 = arith.constant 0 : i32
    %c0_i32_0 = arith.constant 0 : i32
    %c0_i32_1 = arith.constant 0 : i32
    return %arg0, %c0_i32, %c0_i32_0 : i32, i32, i32
  }
}

</mosaic_0001>

<llo_original>
// kernel: _lambda_.1
$region0: #{_lambda_.1}
  #allocation0 [shape = 'u32[]', space=smem, size = 0x4, offset = 0x4, fixed_abs, tag = 'smem constant byte address 0x4 - core index']
  #allocation1 [shape = 'u32[144,128]{1,0:T(1,128)}', space=vmem, size = 0x12000, scoped, tag = 'internal scratch']
  %s0 = inlined_call_operand.vmem [shape: f32[8,16,4], index: 0, kind: input, shape index: {}]
  %s1 = inlined_call_operand.vmem [shape: f32[8,16,1], index: 1, kind: input, shape index: {}]
  %s2 = inlined_call_operand.vmem [shape: f32[8,16,16], index: 2, kind: input, shape index: {}]
  %s3 = inlined_call_operand.vmem [shape: f32[107,64], index: 3, kind: input, shape index: {}]
  %s4 = inlined_call_operand.vmem [shape: f32[8,1,55], index: 4, kind: output, shape index: {}]
  %s5 = sld [smem:[#allocation0]]
  $region26: #{_lambda_.1} parent=0
    _
  %s7 = ssub.s32 1, %s5
  %s8 = scalar_select 0, %s7, %s5
  // Predicated region
  $region2: #{_lambda_.1} parent=0 // pred_check
    _
  $region3: #{_lambda_.1} parent=0 // pred_check_branch
    %10 = sbr.rel (0) target = $region5
  $region4: #{_lambda_.1} parent=0 // pred_region
    _
  $region5: #{_lambda_.1} parent=0 // pred_fallthru
    _
  // Predicated region
  $region6: #{_lambda_.1} parent=0 // pred_check
    _
  $region7: #{_lambda_.1} parent=0 // pred_check_branch
    %12 = sbr.rel (0) target = $region9
  $region8: #{_lambda_.1} parent=0 // pred_region
    _
  $region9: #{_lambda_.1} parent=0 // pred_fallthru
    _
  // Predicated region
  $region10: #{_lambda_.1} parent=0 // pred_check
    _
  $region11: #{_lambda_.1} parent=0 // pred_check_branch
    %14 = sbr.rel (0) target = $region13
  $region12: #{_lambda_.1} parent=0 // pred_region
    _
  $region13: #{_lambda_.1} parent=0 // pred_fallthru
    _
  // Predicated region
  $region14: #{_lambda_.1} parent=0 // pred_check
    _
  $region15: #{_lambda_.1} parent=0 // pred_check_branch
    %16 = sbr.rel (0) target = $region17
  $region16: #{_lambda_.1} parent=0 // pred_region
    _
  $region17: #{_lambda_.1} parent=0 // pred_fallthru
    _
  %v17 = vld [vmem:[%s0] sm:$0xff]
  %v18 = vld [vmem:[%s0 + $0x8] sm:$0xff]
  %v19 = vld [vmem:[%s0 + $0x10] sm:$0xff]
  %v20 = vld [vmem:[%s0 + $0x18] sm:$0xff]
  %v21 = vld [vmem:[%s0 + $0x20] sm:$0xff]
  %v22 = vld [vmem:[%s0 + $0x28] sm:$0xff]
  %v23 = vld [vmem:[%s0 + $0x30] sm:$0xff]
  %v24 = vld [vmem:[%s0 + $0x38] sm:$0xff]
  %v25 = vld [vmem:[%s0 + $0x40] sm:$0xff]
  %v26 = vld [vmem:[%s0 + $0x48] sm:$0xff]
  %v27 = vld [vmem:[%s0 + $0x50] sm:$0xff]
  %v28 = vld [vmem:[%s0 + $0x58] sm:$0xff]
  %v29 = vld [vmem:[%s0 + $0x60] sm:$0xff]
  %v30 = vld [vmem:[%s0 + $0x68] sm:$0xff]
  %v31 = vld [vmem:[%s0 + $0x70] sm:$0xff]
  %v32 = vld [vmem:[%s0 + $0x78] sm:$0xff]
  %v33 = vld [vmem:[%s1] sm:$0xff]
  %v34 = vld [vmem:[%s1 + $0x8] sm:$0xff]
  %v35 = vld [vmem:[%s1 + $0x10] sm:$0xff]
  %v36 = vld [vmem:[%s1 + $0x18] sm:$0xff]
  %v37 = vld [vmem:[%s1 + $0x20] sm:$0xff]
  %v38 = vld [vmem:[%s1 + $0x28] sm:$0xff]
  %v39 = vld [vmem:[%s1 + $0x30] sm:$0xff]
  %v40 = vld [vmem:[%s1 + $0x38] sm:$0xff]
  %v41 = vld [vmem:[%s1 + $0x40] sm:$0xff]
  %v42 = vld [vmem:[%s1 + $0x48] sm:$0xff]
  %v43 = vld [vmem:[%s1 + $0x50] sm:$0xff]
  %v44 = vld [vmem:[%s1 + $0x58] sm:$0xff]
  %v45 = vld [vmem:[%s1 + $0x60] sm:$0xff]
  %v46 = vld [vmem:[%s1 + $0x68] sm:$0xff]
  %v47 = vld [vmem:[%s1 + $0x70] sm:$0xff]
  %v48 = vld [vmem:[%s1 + $0x78] sm:$0xff]
  %v49 = vld [vmem:[%s2] sm:$0xff]
  %v50 = vld [vmem:[%s2 + $0x8] sm:$0xff]
  %v51 = vld [vmem:[%s2 + $0x10] sm:$0xff]
  %v52 = vld [vmem:[%s2 + $0x18] sm:$0xff]
  %v53 = vld [vmem:[%s2 + $0x20] sm:$0xff]
  %v54 = vld [vmem:[%s2 + $0x28] sm:$0xff]
  %v55 = vld [vmem:[%s2 + $0x30] sm:$0xff]
  %v56 = vld [vmem:[%s2 + $0x38] sm:$0xff]
  %v57 = vld [vmem:[%s2 + $0x40] sm:$0xff]
  %v58 = vld [vmem:[%s2 + $0x48] sm:$0xff]
  %v59 = vld [vmem:[%s2 + $0x50] sm:$0xff]
  %v60 = vld [vmem:[%s2 + $0x58] sm:$0xff]
  %v61 = vld [vmem:[%s2 + $0x60] sm:$0xff]
  %v62 = vld [vmem:[%s2 + $0x68] sm:$0xff]
  %v63 = vld [vmem:[%s2 + $0x70] sm:$0xff]
  %v64 = vld [vmem:[%s2 + $0x78] sm:$0xff]
  %v65 = vld [vmem:[%s3] sm:$0xff]
  %v66 = vld [vmem:[%s3 + $0x8] sm:$0xff]
  %v67 = vld [vmem:[%s3 + $0x10] sm:$0xff]
  %v68 = vld [vmem:[%s3 + $0x18] sm:$0xff]
  %v69 = vld [vmem:[%s3 + $0x20] sm:$0xff]
  %v70 = vld [vmem:[%s3 + $0x28] sm:$0xff]
  %v71 = vld [vmem:[%s3 + $0x30] sm:$0xff]
  %v72 = vld [vmem:[%s3 + $0x38] sm:$0xff]
  %v73 = vld [vmem:[%s3 + $0x40] sm:$0xff]
  %v74 = vld [vmem:[%s3 + $0x48] sm:$0xff]
  %v75 = vld [vmem:[%s3 + $0x50] sm:$0xff]
  %v76 = vld [vmem:[%s3 + $0x58] sm:$0xff]
  %v77 = vld [vmem:[%s3 + $0x60] sm:$0xff]
  %v78 = vld [vmem:[%s3 + $0x68] sm:$0x7]
  %80 = vset.pattern.permute.xlu0 0
  %81 = vperm.xlu0 %80, %v33
  %v82 = vpop.permute.xlu0 %81
  %85 = vset.pattern.permute.xlu0 0
  %86 = vperm.xlu0 %85, %v34
  %v87 = vpop.permute.xlu0 %86
  %90 = vset.pattern.permute.xlu0 0
  %91 = vperm.xlu0 %90, %v35
  %v92 = vpop.permute.xlu0 %91
  %95 = vset.pattern.permute.xlu0 0
  %96 = vperm.xlu0 %95, %v36
  %v97 = vpop.permute.xlu0 %96
  %100 = vset.pattern.permute.xlu0 0
  %101 = vperm.xlu0 %100, %v37
  %v102 = vpop.permute.xlu0 %101
  %105 = vset.pattern.permute.xlu0 0
  %106 = vperm.xlu0 %105, %v38
  %v107 = vpop.permute.xlu0 %106
  %110 = vset.pattern.permute.xlu0 0
  %111 = vperm.xlu0 %110, %v39
  %v112 = vpop.permute.xlu0 %111
  %115 = vset.pattern.permute.xlu0 0
  %116 = vperm.xlu0 %115, %v40
  %v117 = vpop.permute.xlu0 %116
  %120 = vset.pattern.permute.xlu0 0
  %121 = vperm.xlu0 %120, %v41
  %v122 = vpop.permute.xlu0 %121
  %125 = vset.pattern.permute.xlu0 0
  %126 = vperm.xlu0 %125, %v42
  %v127 = vpop.permute.xlu0 %126
  %130 = vset.pattern.permute.xlu0 0
  %131 = vperm.xlu0 %130, %v43
  %v132 = vpop.permute.xlu0 %131
  %135 = vset.pattern.permute.xlu0 0
  %136 = vperm.xlu0 %135, %v44
  %v137 = vpop.permute.xlu0 %136
  %140 = vset.pattern.permute.xlu0 0
  %141 = vperm.xlu0 %140, %v45
  %v142 = vpop.permute.xlu0 %141
  %145 = vset.pattern.permute.xlu0 0
  %146 = vperm.xlu0 %145, %v46
  %v147 = vpop.permute.xlu0 %146
  %150 = vset.pattern.permute.xlu0 0
  %151 = vperm.xlu0 %150, %v47
  %v152 = vpop.permute.xlu0 %151
  %155 = vset.pattern.permute.xlu0 0
  %156 = vperm.xlu0 %155, %v48
  %v157 = vpop.permute.xlu0 %156
  %v159 = vlaneseq
  %v160 = vshrl.u32 %v159, 7
  %v161 = vsub.s32 0, %v160
  %v162 = vrot.slane %v66, %v161
  %v163 = vmul.f32 %v82, %v162
  %v164 = vmul.f32 %v87, %v162
  %v165 = vmul.f32 %v92, %v162
  %v166 = vmul.f32 %v97, %v162
  %v167 = vmul.f32 %v102, %v162
  %v168 = vmul.f32 %v107, %v162
  %v169 = vmul.f32 %v112, %v162
  %v170 = vmul.f32 %v117, %v162
  %v171 = vmul.f32 %v122, %v162
  %v172 = vmul.f32 %v127, %v162
  %v173 = vmul.f32 %v132, %v162
  %v174 = vmul.f32 %v137, %v162
  %v175 = vmul.f32 %v142, %v162
  %v176 = vmul.f32 %v147, %v162
  %v177 = vmul.f32 %v152, %v162
  %v178 = vmul.f32 %v157, %v162
  %v180 = vrot.slane %v65, 4
  %vm181 = vcmask 31744
  %v183 = vsel %vm181, %v17, 0
  %v186 = vsel %vm181, %v18, 0
  %v189 = vsel %vm181, %v19, 0
  %v192 = vsel %vm181, %v20, 0
  %v195 = vsel %vm181, %v21, 0
  %v198 = vsel %vm181, %v22, 0
  %v201 = vsel %vm181, %v23, 0
  %v204 = vsel %vm181, %v24, 0
  %v207 = vsel %vm181, %v25, 0
  %v210 = vsel %vm181, %v26, 0
  %v213 = vsel %vm181, %v27, 0
  %v216 = vsel %vm181, %v28, 0
  %v219 = vsel %vm181, %v29, 0
  %v222 = vsel %vm181, %v30, 0
  %v225 = vsel %vm181, %v31, 0
  %v228 = vsel %vm181, %v32, 0
  %vm230 = vcmask 1043456
  %v231 = vsel %vm230, %v180, 0
  %233 = vmatprep.subr.mxu0 0.0
  %234 = vmatpush1.msra.mxu0 %v231
  %235 = vmatprep.subr.mxu0 0.0
  %236 = vmatpush1.msra.mxu0 0.0
  %237 = vmatprep.subr.mxu0 0.0
  %238 = vmatpush1.msra.mxu0 0.0
  %239 = vmatprep.subr.mxu0 0.0
  %240 = vmatpush1.msra.mxu0 0.0
  %241 = vmatprep.subr.mxu0 0.0
  %242 = vmatpush1.msra.mxu0 0.0
  %243 = vmatprep.subr.mxu0 0.0
  %244 = vmatpush1.msra.mxu0 0.0
  %245 = vmatprep.subr.mxu0 0.0
  %246 = vmatpush1.msra.mxu0 0.0
  %247 = vmatprep.subr.mxu0 0.0
  %248 = vmatpush1.msra.mxu0 0.0
  %249 = vmatprep.subr.mxu0 0.0
  %250 = vmatpush1.msra.mxu0 0.0
  %251 = vmatprep.subr.mxu0 0.0
  %252 = vmatpush1.msra.mxu0 0.0
  %253 = vmatprep.subr.mxu0 0.0
  %254 = vmatpush1.msra.mxu0 0.0
  %255 = vmatprep.subr.mxu0 0.0
  %256 = vmatpush1.msra.mxu0 0.0
  %257 = vmatprep.subr.mxu0 0.0
  %258 = vmatpush1.msra.mxu0 0.0
  %259 = vmatprep.subr.mxu0 0.0
  %260 = vmatpush1.msra.mxu0 0.0
  %261 = vmatprep.subr.mxu0 0.0
  %262 = vmatpush1.msra.mxu0 0.0
  %263 = vmatprep.subr.mxu0 0.0
  %264 = vmatpush1.msra.mxu0 0.0
  %265 = vmatprep.subr.mxu0 0.0
  %266 = vmatpush1.msra.mxu0 0.0
  %267 = vmatprep.subr.mxu0 0.0
  %268 = vmatpush1.msra.mxu0 0.0
  %269 = vmatprep.subr.mxu0 0.0
  %270 = vmatpush1.msra.mxu0 0.0
  %271 = vmatprep.subr.mxu0 0.0
  %272 = vmatpush1.msra.mxu0 0.0
  %273 = vmatprep.subr.mxu0 0.0
  %274 = vmatpush1.msra.mxu0 0.0
  %275 = vmatprep.subr.mxu0 0.0
  %276 = vmatpush1.msra.mxu0 0.0
  %277 = vmatprep.subr.mxu0 0.0
  %278 = vmatpush1.msra.mxu0 0.0
  %279 = vmatprep.subr.mxu0 0.0
  %280 = vmatpush1.msra.mxu0 0.0
  %281 = vmatprep.subr.mxu0 0.0
  %282 = vmatpush1.msra.mxu0 0.0
  %283 = vmatprep.subr.mxu0 0.0
  %284 = vmatpush1.msra.mxu0 0.0
  %285 = vmatprep.subr.mxu0 0.0
  %286 = vmatpush1.msra.mxu0 0.0
  %287 = vmatprep.subr.mxu0 0.0
  %288 = vmatpush1.msra.mxu0 0.0
  %289 = vmatprep.subr.mxu0 0.0
  %290 = vmatpush1.msra.mxu0 0.0
  %291 = vmatprep.subr.mxu0 0.0
  %292 = vmatpush1.msra.mxu0 0.0
  %293 = vmatprep.subr.mxu0 0.0
  %294 = vmatpush1.msra.mxu0 0.0
  %295 = vmatprep.subr.mxu0 0.0
  %296 = vmatpush1.msra.mxu0 0.0
  %297 = vmatprep.mubr.f32.mxu0 0.0
  %298 = vmatmul.mubr.f32.gmra.mrb[0].mxu0 %v183
  %v299 = vpop.f32.mrb[0].mxu0
  %v300 = vadd.f32 %v163, %v299
  %v301 = vpop.f32.mrb[0].mxu0
  %302 = vmatprep.mubr.f32.mxu0 0.0
  %303 = vmatmul.mubr.f32.gmra.mrb[0].mxu0 %v186
  %v304 = vpop.f32.mrb[0].mxu0
  %v305 = vadd.f32 %v164, %v304
  %v306 = vpop.f32.mrb[0].mxu0
  %307 = vmatprep.mubr.f32.mxu0 0.0
  %308 = vmatmul.mubr.f32.gmra.mrb[0].mxu0 %v189
  %v309 = vpop.f32.mrb[0].mxu0
  %v310 = vadd.f32 %v165, %v309
  %v311 = vpop.f32.mrb[0].mxu0
  %312 = vmatprep.mubr.f32.mxu0 0.0
  %313 = vmatmul.mubr.f32.gmra.mrb[0].mxu0 %v192
  %v314 = vpop.f32.mrb[0].mxu0
  %v315 = vadd.f32 %v166, %v314
  %v316 = vpop.f32.mrb[0].mxu0
  %317 = vmatprep.mubr.f32.mxu0 0.0
  %318 = vmatmul.mubr.f32.gmra.mrb[0].mxu0 %v195
  %v319 = vpop.f32.mrb[0].mxu0
  %v320 = vadd.f32 %v167, %v319
  %v321 = vpop.f32.mrb[0].mxu0
  %322 = vmatprep.mubr.f32.mxu0 0.0
  %323 = vmatmul.mubr.f32.gmra.mrb[0].mxu0 %v198
  %v324 = vpop.f32.mrb[0].mxu0
  %v325 = vadd.f32 %v168, %v324
  %v326 = vpop.f32.mrb[0].mxu0
  %327 = vmatprep.mubr.f32.mxu0 0.0
  %328 = vmatmul.mubr.f32.gmra.mrb[0].mxu0 %v201
  %v329 = vpop.f32.mrb[0].mxu0
  %v330 = vadd.f32 %v169, %v329
  %v331 = vpop.f32.mrb[0].mxu0
  %332 = vmatprep.mubr.f32.mxu0 0.0
  %333 = vmatmul.mubr.f32.gmra.mrb[0].mxu0 %v204
  %v334 = vpop.f32.mrb[0].mxu0
  %v335 = vadd.f32 %v170, %v334
  %v336 = vpop.f32.mrb[0].mxu0
  %337 = vmatprep.mubr.f32.mxu0 0.0
  %338 = vmatmul.mubr.f32.gmra.mrb[0].mxu0 %v207
  %v339 = vpop.f32.mrb[0].mxu0
  %v340 = vadd.f32 %v171, %v339
  %v341 = vpop.f32.mrb[0].mxu0
  %342 = vmatprep.mubr.f32.mxu0 0.0
  %343 = vmatmul.mubr.f32.gmra.mrb[0].mxu0 %v210
  %v344 = vpop.f32.mrb[0].mxu0
  %v345 = vadd.f32 %v172, %v344
  %v346 = vpop.f32.mrb[0].mxu0
  %347 = vmatprep.mubr.f32.mxu0 0.0
  %348 = vmatmul.mubr.f32.gmra.mrb[0].mxu0 %v213
  %v349 = vpop.f32.mrb[0].mxu0
  %v350 = vadd.f32 %v173, %v349
  %v351 = vpop.f32.mrb[0].mxu0
  %352 = vmatprep.mubr.f32.mxu0 0.0
  %353 = vmatmul.mubr.f32.gmra.mrb[0].mxu0 %v216
  %v354 = vpop.f32.mrb[0].mxu0
  %v355 = vadd.f32 %v174, %v354
  %v356 = vpop.f32.mrb[0].mxu0
  %357 = vmatprep.mubr.f32.mxu0 0.0
  %358 = vmatmul.mubr.f32.gmra.mrb[0].mxu0 %v219
  %v359 = vpop.f32.mrb[0].mxu0
  %v360 = vadd.f32 %v175, %v359
  %v361 = vpop.f32.mrb[0].mxu0
  %362 = vmatprep.mubr.f32.mxu0 0.0
  %363 = vmatmul.mubr.f32.gmra.mrb[0].mxu0 %v222
  %v364 = vpop.f32.mrb[0].mxu0
  %v365 = vadd.f32 %v176, %v364
  %v366 = vpop.f32.mrb[0].mxu0
  %367 = vmatprep.mubr.f32.mxu0 0.0
  %368 = vmatmul.mubr.f32.gmra.mrb[0].mxu0 %v225
  %v369 = vpop.f32.mrb[0].mxu0
  %v370 = vadd.f32 %v177, %v369
  %v371 = vpop.f32.mrb[0].mxu0
  %372 = vmatprep.mubr.f32.mxu0 0.0
  %373 = vmatmul.mubr.f32.gmra.mrb[0].mxu0 %v228
  %v374 = vpop.f32.mrb[0].mxu0
  %v375 = vadd.f32 %v178, %v374
  %v376 = vpop.f32.mrb[0].mxu0
  %377 = vdwg.mxu0
  %v378 = vlaneseq
  %v379 = vshrl.u32 %v378, 7
  %v380 = vsub.s32 1, %v379
  %v381 = vrot.slane %v66, %v380
  %v382 = vadd.f32 %v300, %v381
  %v383 = vadd.f32 %v305, %v381
  %v384 = vadd.f32 %v310, %v381
  %v385 = vadd.f32 %v315, %v381
  %v386 = vadd.f32 %v320, %v381
  %v387 = vadd.f32 %v325, %v381
  %v388 = vadd.f32 %v330, %v381
  %v389 = vadd.f32 %v335, %v381
  %v390 = vadd.f32 %v340, %v381
  %v391 = vadd.f32 %v345, %v381
  %v392 = vadd.f32 %v350, %v381
  %v393 = vadd.f32 %v355, %v381
  %v394 = vadd.f32 %v360, %v381
  %v395 = vadd.f32 %v365, %v381
  %v396 = vadd.f32 %v370, %v381
  %v397 = vadd.f32 %v375, %v381
  %v398 = vmax.f32 %v382, 0.0
  %v399 = vmax.f32 %v383, 0.0
  %v400 = vmax.f32 %v384, 0.0
  %v401 = vmax.f32 %v385, 0.0
  %v402 = vmax.f32 %v386, 0.0
  %v403 = vmax.f32 %v387, 0.0
  %v404 = vmax.f32 %v388, 0.0
  %v405 = vmax.f32 %v389, 0.0
  %v406 = vmax.f32 %v390, 0.0
  %v407 = vmax.f32 %v391, 0.0
  %v408 = vmax.f32 %v392, 0.0
  %v409 = vmax.f32 %v393, 0.0
  %v410 = vmax.f32 %v394, 0.0
  %v411 = vmax.f32 %v395, 0.0
  %v412 = vmax.f32 %v396, 0.0
  %v413 = vmax.f32 %v397, 0.0
  %v414 = vlaneseq
  %v415 = vshrl.u32 %v414, 7
  %v416 = vsub.s32 6, %v415
  %v417 = vrot.slane %v66, %v416
  %v419 = vrot.slane %v66, 2
  %v421 = vsel %vm181, %v398, 0
  %v424 = vsel %vm181, %v399, 0
  %v427 = vsel %vm181, %v400, 0
  %v430 = vsel %vm181, %v401, 0
  %v433 = vsel %vm181, %v402, 0
  %v436 = vsel %vm181, %v403, 0
  %v439 = vsel %vm181, %v404, 0
  %v442 = vsel %vm181, %v405, 0
  %v445 = vsel %vm181, %v406, 0
  %v448 = vsel %vm181, %v407, 0
  %v451 = vsel %vm181, %v408, 0
  %v454 = vsel %vm181, %v409, 0
  %v457 = vsel %vm181, %v410, 0
  %v460 = vsel %vm181, %v411, 0
  %v463 = vsel %vm181, %v412, 0
  %v466 = vsel %vm181, %v413, 0
  %v468 = vsel %vm230, %v419, 0
  %470 = vmatprep.subr.mxu0 0.0
  %471 = vmatpush1.msra.mxu0 %v468
  %472 = vmatprep.subr.mxu0 0.0
  %473 = vmatpush1.msra.mxu0 0.0
  %474 = vmatprep.subr.mxu0 0.0
  %475 = vmatpush1.msra.mxu0 0.0
  %476 = vmatprep.subr.mxu0 0.0
  %477 = vmatpush1.msra.mxu0 0.0
  %478 = vmatprep.subr.mxu0 0.0
  %479 = vmatpush1.msra.mxu0 0.0
  %480 = vmatprep.subr.mxu0 0.0
  %481 = vmatpush1.msra.mxu0 0.0
  %482 = vmatprep.subr.mxu0 0.0
  %483 = vmatpush1.msra.mxu0 0.0
  %484 = vmatprep.subr.mxu0 0.0
  %485 = vmatpush1.msra.mxu0 0.0
  %486 = vmatprep.subr.mxu0 0.0
  %487 = vmatpush1.msra.mxu0 0.0
  %488 = vmatprep.subr.mxu0 0.0
  %489 = vmatpush1.msra.mxu0 0.0
  %490 = vmatprep.subr.mxu0 0.0
  %491 = vmatpush1.msra.mxu0 0.0
  %492 = vmatprep.subr.mxu0 0.0
  %493 = vmatpush1.msra.mxu0 0.0
  %494 = vmatprep.subr.mxu0 0.0
  %495 = vmatpush1.msra.mxu0 0.0
  %496 = vmatprep.subr.mxu0 0.0
  %497 = vmatpush1.msra.mxu0 0.0
  %498 = vmatprep.subr.mxu0 0.0
  %499 = vmatpush1.msra.mxu0 0.0
  %500 = vmatprep.subr.mxu0 0.0
  %501 = vmatpush1.msra.mxu0 0.0
  %502 = vmatprep.subr.mxu0 0.0
  %503 = vmatpush1.msra.mxu0 0.0
  %504 = vmatprep.subr.mxu0 0.0
  %505 = vmatpush1.msra.mxu0 0.0
  %506 = vmatprep.subr.mxu0 0.0
  %507 = vmatpush1.msra.mxu0 0.0
  %508 = vmatprep.subr.mxu0 0.0
  %509 = vmatpush1.msra.mxu0 0.0
  %510 = vmatprep.subr.mxu0 0.0
  %511 = vmatpush1.msra.mxu0 0.0
  %512 = vmatprep.subr.mxu0 0.0
  %513 = vmatpush1.msra.mxu0 0.0
  %514 = vmatprep.subr.mxu0 0.0
  %515 = vmatpush1.msra.mxu0 0.0
  %516 = vmatprep.subr.mxu0 0.0
  %517 = vmatpush1.msra.mxu0 0.0
  %518 = vmatprep.subr.mxu0 0.0
  %519 = vmatpush1.msra.mxu0 0.0
  %520 = vmatprep.subr.mxu0 0.0
  %521 = vmatpush1.msra.mxu0 0.0
  %522 = vmatprep.subr.mxu0 0.0
  %523 = vmatpush1.msra.mxu0 0.0
  %524 = vmatprep.subr.mxu0 0.0
  %525 = vmatpush1.msra.mxu0 0.0
  %526 = vmatprep.subr.mxu0 0.0
  %527 = vmatpush1.msra.mxu0 0.0
  %528 = vmatprep.subr.mxu0 0.0
  %529 = vmatpush1.msra.mxu0 0.0
  %530 = vmatprep.subr.mxu0 0.0
  %531 = vmatpush1.msra.mxu0 0.0
  %532 = vmatprep.subr.mxu0 0.0
  %533 = vmatpush1.msra.mxu0 0.0
  %534 = vmatprep.mubr.f32.mxu0 0.0
  %535 = vmatmul.mubr.f32.gmra.mrb[0].mxu0 %v421
  %v536 = vpop.f32.mrb[0].mxu0
  %v537 = vadd.f32 %v417, %v536
  %v538 = vpop.f32.mrb[0].mxu0
  %539 = vmatprep.mubr.f32.mxu0 0.0
  %540 = vmatmul.mubr.f32.gmra.mrb[0].mxu0 %v424
  %v541 = vpop.f32.mrb[0].mxu0
  %v542 = vadd.f32 %v417, %v541
  %v543 = vpop.f32.mrb[0].mxu0
  %544 = vmatprep.mubr.f32.mxu0 0.0
  %545 = vmatmul.mubr.f32.gmra.mrb[0].mxu0 %v427
  %v546 = vpop.f32.mrb[0].mxu0
  %v547 = vadd.f32 %v417, %v546
  %v548 = vpop.f32.mrb[0].mxu0
  %549 = vmatprep.mubr.f32.mxu0 0.0
  %550 = vmatmul.mubr.f32.gmra.mrb[0].mxu0 %v430
  %v551 = vpop.f32.mrb[0].mxu0
  %v552 = vadd.f32 %v417, %v551
  %v553 = vpop.f32.mrb[0].mxu0
  %554 = vmatprep.mubr.f32.mxu0 0.0
  %555 = vmatmul.mubr.f32.gmra.mrb[0].mxu0 %v433
  %v556 = vpop.f32.mrb[0].mxu0
  %v557 = vadd.f32 %v417, %v556
  %v558 = vpop.f32.mrb[0].mxu0
  %559 = vmatprep.mubr.f32.mxu0 0.0
  %560 = vmatmul.mubr.f32.gmra.mrb[0].mxu0 %v436
  %v561 = vpop.f32.mrb[0].mxu0
  %v562 = vadd.f32 %v417, %v561
  %v563 = vpop.f32.mrb[0].mxu0
  %564 = vmatprep.mubr.f32.mxu0 0.0
  %565 = vmatmul.mubr.f32.gmra.mrb[0].mxu0 %v439
  %v566 = vpop.f32.mrb[0].mxu0
  %v567 = vadd.f32 %v417, %v566
  %v568 = vpop.f32.mrb[0].mxu0
  %569 = vmatprep.mubr.f32.mxu0 0.0
  %570 = vmatmul.mubr.f32.gmra.mrb[0].mxu0 %v442
  %v571 = vpop.f32.mrb[0].mxu0
  %v572 = vadd.f32 %v417, %v571
  %v573 = vpop.f32.mrb[0].mxu0
  %574 = vmatprep.mubr.f32.mxu0 0.0
  %575 = vmatmul.mubr.f32.gmra.mrb[0].mxu0 %v445
  %v576 = vpop.f32.mrb[0].mxu0
  %v577 = vadd.f32 %v417, %v576
  %v578 = vpop.f32.mrb[0].mxu0
  %579 = vmatprep.mubr.f32.mxu0 0.0
  %580 = vmatmul.mubr.f32.gmra.mrb[0].mxu0 %v448
  %v581 = vpop.f32.mrb[0].mxu0
  %v582 = vadd.f32 %v417, %v581
  %v583 = vpop.f32.mrb[0].mxu0
  %584 = vmatprep.mubr.f32.mxu0 0.0
  %585 = vmatmul.mubr.f32.gmra.mrb[0].mxu0 %v451
  %v586 = vpop.f32.mrb[0].mxu0
  %v587 = vadd.f32 %v417, %v586
  %v588 = vpop.f32.mrb[0].mxu0
  %589 = vmatprep.mubr.f32.mxu0 0.0
  %590 = vmatmul.mubr.f32.gmra.mrb[0].mxu0 %v454
  %v591 = vpop.f32.mrb[0].mxu0
  %v592 = vadd.f32 %v417, %v591
  %v593 = vpop.f32.mrb[0].mxu0
  %594 = vmatprep.mubr.f32.mxu0 0.0
  %595 = vmatmul.mubr.f32.gmra.mrb[0].mxu0 %v457
  %v596 = vpop.f32.mrb[0].mxu0
  %v597 = vadd.f32 %v417, %v596
  %v598 = vpop.f32.mrb[0].mxu0
  %599 = vmatprep.mubr.f32.mxu0 0.0
  %600 = vmatmul.mubr.f32.gmra.mrb[0].mxu0 %v460
  %v601 = vpop.f32.mrb[0].mxu0
  %v602 = vadd.f32 %v417, %v601
  %v603 = vpop.f32.mrb[0].mxu0
  %604 = vmatprep.mubr.f32.mxu0 0.0
  %605 = vmatmul.mubr.f32.gmra.mrb[0].mxu0 %v463
  %v606 = vpop.f32.mrb[0].mxu0
  %v607 = vadd.f32 %v417, %v606
  %v608 = vpop.f32.mrb[0].mxu0
  %609 = vmatprep.mubr.f32.mxu0 0.0
  %610 = vmatmul.mubr.f32.gmra.mrb[0].mxu0 %v466
  %v611 = vpop.f32.mrb[0].mxu0
  %v612 = vadd.f32 %v417, %v611
  %v613 = vpop.f32.mrb[0].mxu0
  %614 = vdwg.mxu0
  %vm615 = vcmask 261120
  %v617 = vsel %vm615, %v537, 0
  %v620 = vsel %vm615, %v542, 0
  %v623 = vsel %vm615, %v547, 0
  %v626 = vsel %vm615, %v552, 0
  %v629 = vsel %vm615, %v557, 0
  %v632 = vsel %vm615, %v562, 0
  %v635 = vsel %vm615, %v567, 0
  %v638 = vsel %vm615, %v572, 0
  %v641 = vsel %vm615, %v577, 0
  %v644 = vsel %vm615, %v582, 0
  %v647 = vsel %vm615, %v587, 0
  %v650 = vsel %vm615, %v592, 0
  %v653 = vsel %vm615, %v597, 0
  %v656 = vsel %vm615, %v602, 0
  %v659 = vsel %vm615, %v607, 0
  %v662 = vsel %vm615, %v612, 0
  %v664 = vsel %vm615, %v65, 0
  %666 = vmatprep.subr.mxu0 0.0
  %667 = vmatpush1.xpose.msra.mxu0 %v664
  %668 = vmatprep.subr.mxu0 0.0
  %669 = vmatpush1.xpose.msra.mxu0 0.0
  %670 = vmatprep.subr.mxu0 0.0
  %671 = vmatpush1.xpose.msra.mxu0 0.0
  %672 = vmatprep.subr.mxu0 0.0
  %673 = vmatpush1.xpose.msra.mxu0 0.0
  %674 = vmatprep.subr.mxu0 0.0
  %675 = vmatpush1.xpose.msra.mxu0 0.0
  %676 = vmatprep.subr.mxu0 0.0
  %677 = vmatpush1.xpose.msra.mxu0 0.0
  %678 = vmatprep.subr.mxu0 0.0
  %679 = vmatpush1.xpose.msra.mxu0 0.0
  %680 = vmatprep.subr.mxu0 0.0
  %681 = vmatpush1.xpose.msra.mxu0 0.0
  %682 = vmatprep.subr.mxu0 0.0
  %683 = vmatpush1.xpose.msra.mxu0 0.0
  %684 = vmatprep.subr.mxu0 0.0
  %685 = vmatpush1.xpose.msra.mxu0 0.0
  %686 = vmatprep.subr.mxu0 0.0
  %687 = vmatpush1.xpose.msra.mxu0 0.0
  %688 = vmatprep.subr.mxu0 0.0
  %689 = vmatpush1.xpose.msra.mxu0 0.0
  %690 = vmatprep.subr.mxu0 0.0
  %691 = vmatpush1.xpose.msra.mxu0 0.0
  %692 = vmatprep.subr.mxu0 0.0
  %693 = vmatpush1.xpose.msra.mxu0 0.0
  %694 = vmatprep.subr.mxu0 0.0
  %695 = vmatpush1.xpose.msra.mxu0 0.0
  %696 = vmatprep.subr.mxu0 0.0
  %697 = vmatpush1.xpose.msra.mxu0 0.0
  %698 = vmatprep.subr.mxu0 0.0
  %699 = vmatpush1.xpose.msra.mxu0 0.0
  %700 = vmatprep.subr.mxu0 0.0
  %701 = vmatpush1.xpose.msra.mxu0 0.0
  %702 = vmatprep.subr.mxu0 0.0
  %703 = vmatpush1.xpose.msra.mxu0 0.0
  %704 = vmatprep.subr.mxu0 0.0
  %705 = vmatpush1.xpose.msra.mxu0 0.0
  %706 = vmatprep.subr.mxu0 0.0
  %707 = vmatpush1.xpose.msra.mxu0 0.0
  %708 = vmatprep.subr.mxu0 0.0
  %709 = vmatpush1.xpose.msra.mxu0 0.0
  %710 = vmatprep.subr.mxu0 0.0
  %711 = vmatpush1.xpose.msra.mxu0 0.0
  %712 = vmatprep.subr.mxu0 0.0
  %713 = vmatpush1.xpose.msra.mxu0 0.0
  %714 = vmatprep.subr.mxu0 0.0
  %715 = vmatpush1.xpose.msra.mxu0 0.0
  %716 = vmatprep.subr.mxu0 0.0
  %717 = vmatpush1.xpose.msra.mxu0 0.0
  %718 = vmatprep.subr.mxu0 0.0
  %719 = vmatpush1.xpose.msra.mxu0 0.0
  %720 = vmatprep.subr.mxu0 0.0
  %721 = vmatpush1.xpose.msra.mxu0 0.0
  %722 = vmatprep.subr.mxu0 0.0
  %723 = vmatpush1.xpose.msra.mxu0 0.0
  %724 = vmatprep.subr.mxu0 0.0
  %725 = vmatpush1.xpose.msra.mxu0 0.0
  %726 = vmatprep.subr.mxu0 0.0
  %727 = vmatpush1.xpose.msra.mxu0 0.0
  %728 = vmatprep.subr.mxu0 0.0
  %729 = vmatpush1.xpose.msra.mxu0 0.0
  %730 = vmatprep.mubr.f32.mxu0 0.0
  %731 = vmatmul.mubr.f32.gmra.mrb[0].mxu0 %v617
  %v732 = vpop.f32.mrb[0].mxu0
  %v733 = vadd.f32 0.0, %v732
  %v734 = vpop.f32.mrb[0].mxu0
  %735 = vmatprep.mubr.f32.mxu0 0.0
  %736 = vmatmul.mubr.f32.gmra.mrb[0].mxu0 %v620
  %v737 = vpop.f32.mrb[0].mxu0
  %v738 = vadd.f32 0.0, %v737
  %v739 = vpop.f32.mrb[0].mxu0
  %740 = vmatprep.mubr.f32.mxu0 0.0
  %741 = vmatmul.mubr.f32.gmra.mrb[0].mxu0 %v623
  %v742 = vpop.f32.mrb[0].mxu0
  %v743 = vadd.f32 0.0, %v742
  %v744 = vpop.f32.mrb[0].mxu0
  %745 = vmatprep.mubr.f32.mxu0 0.0
  %746 = vmatmul.mubr.f32.gmra.mrb[0].mxu0 %v626
  %v747 = vpop.f32.mrb[0].mxu0
  %v748 = vadd.f32 0.0, %v747
  %v749 = vpop.f32.mrb[0].mxu0
  %750 = vmatprep.mubr.f32.mxu0 0.0
  %751 = vmatmul.mubr.f32.gmra.mrb[0].mxu0 %v629
  %v752 = vpop.f32.mrb[0].mxu0
  %v753 = vadd.f32 0.0, %v752
  %v754 = vpop.f32.mrb[0].mxu0
  %755 = vmatprep.mubr.f32.mxu0 0.0
  %756 = vmatmul.mubr.f32.gmra.mrb[0].mxu0 %v632
  %v757 = vpop.f32.mrb[0].mxu0
  %v758 = vadd.f32 0.0, %v757
  %v759 = vpop.f32.mrb[0].mxu0
  %760 = vmatprep.mubr.f32.mxu0 0.0
  %761 = vmatmul.mubr.f32.gmra.mrb[0].mxu0 %v635
  %v762 = vpop.f32.mrb[0].mxu0
  %v763 = vadd.f32 0.0, %v762
  %v764 = vpop.f32.mrb[0].mxu0
  %765 = vmatprep.mubr.f32.mxu0 0.0
  %766 = vmatmul.mubr.f32.gmra.mrb[0].mxu0 %v638
  %v767 = vpop.f32.mrb[0].mxu0
  %v768 = vadd.f32 0.0, %v767
  %v769 = vpop.f32.mrb[0].mxu0
  %770 = vmatprep.mubr.f32.mxu0 0.0
  %771 = vmatmul.mubr.f32.gmra.mrb[0].mxu0 %v641
  %v772 = vpop.f32.mrb[0].mxu0
  %v773 = vadd.f32 0.0, %v772
  %v774 = vpop.f32.mrb[0].mxu0
  %775 = vmatprep.mubr.f32.mxu0 0.0
  %776 = vmatmul.mubr.f32.gmra.mrb[0].mxu0 %v644
  %v777 = vpop.f32.mrb[0].mxu0
  %v778 = vadd.f32 0.0, %v777
  %v779 = vpop.f32.mrb[0].mxu0
  %780 = vmatprep.mubr.f32.mxu0 0.0
  %781 = vmatmul.mubr.f32.gmra.mrb[0].mxu0 %v647
  %v782 = vpop.f32.mrb[0].mxu0
  %v783 = vadd.f32 0.0, %v782
  %v784 = vpop.f32.mrb[0].mxu0
  %785 = vmatprep.mubr.f32.mxu0 0.0
  %786 = vmatmul.mubr.f32.gmra.mrb[0].mxu0 %v650
  %v787 = vpop.f32.mrb[0].mxu0
  %v788 = vadd.f32 0.0, %v787
  %v789 = vpop.f32.mrb[0].mxu0
  %790 = vmatprep.mubr.f32.mxu0 0.0
  %791 = vmatmul.mubr.f32.gmra.mrb[0].mxu0 %v653
  %v792 = vpop.f32.mrb[0].mxu0
  %v793 = vadd.f32 0.0, %v792
  %v794 = vpop.f32.mrb[0].mxu0
  %795 = vmatprep.mubr.f32.mxu0 0.0
  %796 = vmatmul.mubr.f32.gmra.mrb[0].mxu0 %v656
  %v797 = vpop.f32.mrb[0].mxu0
  %v798 = vadd.f32 0.0, %v797
  %v799 = vpop.f32.mrb[0].mxu0
  %800 = vmatprep.mubr.f32.mxu0 0.0
  %801 = vmatmul.mubr.f32.gmra.mrb[0].mxu0 %v659
  %v802 = vpop.f32.mrb[0].mxu0
  %v803 = vadd.f32 0.0, %v802
  %v804 = vpop.f32.mrb[0].mxu0
  %805 = vmatprep.mubr.f32.mxu0 0.0
  %806 = vmatmul.mubr.f32.gmra.mrb[0].mxu0 %v662
  %v807 = vpop.f32.mrb[0].mxu0
  %v808 = vadd.f32 0.0, %v807
  %v809 = vpop.f32.mrb[0].mxu0
  %810 = vdwg.mxu0
  %v811 = vmul.f32 %v733, 0.17677669
  %v812 = vmul.f32 %v738, 0.17677669
  %v813 = vmul.f32 %v743, 0.17677669
  %v814 = vmul.f32 %v748, 0.17677669
  %v815 = vmul.f32 %v753, 0.17677669
  %v816 = vmul.f32 %v758, 0.17677669
  %v817 = vmul.f32 %v763, 0.17677669
  %v818 = vmul.f32 %v768, 0.17677669
  %v819 = vmul.f32 %v773, 0.17677669
  %v820 = vmul.f32 %v778, 0.17677669
  %v821 = vmul.f32 %v783, 0.17677669
  %v822 = vmul.f32 %v788, 0.17677669
  %v823 = vmul.f32 %v793, 0.17677669
  %v824 = vmul.f32 %v798, 0.17677669
  %v825 = vmul.f32 %v803, 0.17677669
  %v826 = vmul.f32 %v808, 0.17677669
  %v827 = vsel %vm181, %v811, -inf
  %v828 = vsel %vm181, %v812, -inf
  %v829 = vmax.f32 %v827, %v828
  %v830 = vrot.slane %v829, 4
  %v831 = vmax.f32 %v829, %v830
  %v832 = vrot.slane %v831, 2
  %v833 = vmax.f32 %v831, %v832
  %v834 = vrot.slane %v833, 1
  %v835 = vmax.f32 %v833, %v834
  %v836 = vsel %vm181, %v813, -inf
  %v837 = vsel %vm181, %v814, -inf
  %v838 = vmax.f32 %v836, %v837
  %v839 = vrot.slane %v838, 4
  %v840 = vmax.f32 %v838, %v839
  %v841 = vrot.slane %v840, 2
  %v842 = vmax.f32 %v840, %v841
  %v843 = vrot.slane %v842, 1
  %v844 = vmax.f32 %v842, %v843
  %v845 = vsel %vm181, %v815, -inf
  %v846 = vsel %vm181, %v816, -inf
  %v847 = vmax.f32 %v845, %v846
  %v848 = vrot.slane %v847, 4
  %v849 = vmax.f32 %v847, %v848
  %v850 = vrot.slane %v849, 2
  %v851 = vmax.f32 %v849, %v850
  %v852 = vrot.slane %v851, 1
  %v853 = vmax.f32 %v851, %v852
  %v854 = vsel %vm181, %v817, -inf
  %v855 = vsel %vm181, %v818, -inf
  %v856 = vmax.f32 %v854, %v855
  %v857 = vrot.slane %v856, 4
  %v858 = vmax.f32 %v856, %v857
  %v859 = vrot.slane %v858, 2
  %v860 = vmax.f32 %v858, %v859
  %v861 = vrot.slane %v860, 1
  %v862 = vmax.f32 %v860, %v861
  %v863 = vsel %vm181, %v819, -inf
  %v864 = vsel %vm181, %v820, -inf
  %v865 = vmax.f32 %v863, %v864
  %v866 = vrot.slane %v865, 4
  %v867 = vmax.f32 %v865, %v866
  %v868 = vrot.slane %v867, 2
  %v869 = vmax.f32 %v867, %v868
  %v870 = vrot.slane %v869, 1
  %v871 = vmax.f32 %v869, %v870
  %v872 = vsel %vm181, %v821, -inf
  %v873 = vsel %vm181, %v822, -inf
  %v874 = vmax.f32 %v872, %v873
  %v875 = vrot.slane %v874, 4
  %v876 = vmax.f32 %v874, %v875
  %v877 = vrot.slane %v876, 2
  %v878 = vmax.f32 %v876, %v877
  %v879 = vrot.slane %v878, 1
  %v880 = vmax.f32 %v878, %v879
  %v881 = vsel %vm181, %v823, -inf
  %v882 = vsel %vm181, %v824, -inf
  %v883 = vmax.f32 %v881, %v882
  %v884 = vrot.slane %v883, 4
  %v885 = vmax.f32 %v883, %v884
  %v886 = vrot.slane %v885, 2
  %v887 = vmax.f32 %v885, %v886
  %v888 = vrot.slane %v887, 1
  %v889 = vmax.f32 %v887, %v888
  %v890 = vsel %vm181, %v825, -inf
  %v891 = vsel %vm181, %v826, -inf
  %v892 = vmax.f32 %v890, %v891
  %v893 = vrot.slane %v892, 4
  %v894 = vmax.f32 %v892, %v893
  %v895 = vrot.slane %v894, 2
  %v896 = vmax.f32 %v894, %v895
  %v897 = vrot.slane %v896, 1
  %v898 = vmax.f32 %v896, %v897
  %v899 = vsub.f32 %v811, %v835
  %v900 = vsub.f32 %v812, %v835
  %v901 = vsub.f32 %v813, %v844
  %v902 = vsub.f32 %v814, %v844
  %v903 = vsub.f32 %v815, %v853
  %v904 = vsub.f32 %v816, %v853
  %v905 = vsub.f32 %v817, %v862
  %v906 = vsub.f32 %v818, %v862
  %v907 = vsub.f32 %v819, %v871
  %v908 = vsub.f32 %v820, %v871
  %v909 = vsub.f32 %v821, %v880
  %v910 = vsub.f32 %v822, %v880
  %v911 = vsub.f32 %v823, %v889
  %v912 = vsub.f32 %v824, %v889
  %v913 = vsub.f32 %v825, %v898
  %v914 = vsub.f32 %v826, %v898
  %v915 = vmul.f32 %v899, 1.442695
  %v916 = vpow.pop %v915
  %v917 = vmul.f32 %v900, 1.442695
  %v918 = vpow.pop %v917
  %v919 = vmul.f32 %v901, 1.442695
  %v920 = vpow.pop %v919
  %v921 = vmul.f32 %v902, 1.442695
  %v922 = vpow.pop %v921
  %v923 = vmul.f32 %v903, 1.442695
  %v924 = vpow.pop %v923
  %v925 = vmul.f32 %v904, 1.442695
  %v926 = vpow.pop %v925
  %v927 = vmul.f32 %v905, 1.442695
  %v928 = vpow.pop %v927
  %v929 = vmul.f32 %v906, 1.442695
  %v930 = vpow.pop %v929
  %v931 = vmul.f32 %v907, 1.442695
  %v932 = vpow.pop %v931
  %v933 = vmul.f32 %v908, 1.442695
  %v934 = vpow.pop %v933
  %v935 = vmul.f32 %v909, 1.442695
  %v936 = vpow.pop %v935
  %v937 = vmul.f32 %v910, 1.442695
  %v938 = vpow.pop %v937
  %v939 = vmul.f32 %v911, 1.442695
  %v940 = vpow.pop %v939
  %v941 = vmul.f32 %v912, 1.442695
  %v942 = vpow.pop %v941
  %v943 = vmul.f32 %v913, 1.442695
  %v944 = vpow.pop %v943
  %v945 = vmul.f32 %v914, 1.442695
  %v946 = vpow.pop %v945
  %v947 = vsel %vm181, %v916, 0.0
  %v948 = vsel %vm181, %v918, 0.0
  %v949 = vadd.f32 %v947, %v948
  %v950 = vrot.slane %v949, 4
  %v951 = vadd.f32 %v949, %v950
  %v952 = vrot.slane %v951, 2
  %v953 = vadd.f32 %v951, %v952
  %v954 = vrot.slane %v953, 1
  %v955 = vadd.f32 %v953, %v954
  %v956 = vsel %vm181, %v920, 0.0
  %v957 = vsel %vm181, %v922, 0.0
  %v958 = vadd.f32 %v956, %v957
  %v959 = vrot.slane %v958, 4
  %v960 = vadd.f32 %v958, %v959
  %v961 = vrot.slane %v960, 2
  %v962 = vadd.f32 %v960, %v961
  %v963 = vrot.slane %v962, 1
  %v964 = vadd.f32 %v962, %v963
  %v965 = vsel %vm181, %v924, 0.0
  %v966 = vsel %vm181, %v926, 0.0
  %v967 = vadd.f32 %v965, %v966
  %v968 = vrot.slane %v967, 4
  %v969 = vadd.f32 %v967, %v968
  %v970 = vrot.slane %v969, 2
  %v971 = vadd.f32 %v969, %v970
  %v972 = vrot.slane %v971, 1
  %v973 = vadd.f32 %v971, %v972
  %v974 = vsel %vm181, %v928, 0.0
  %v975 = vsel %vm181, %v930, 0.0
  %v976 = vadd.f32 %v974, %v975
  %v977 = vrot.slane %v976, 4
  %v978 = vadd.f32 %v976, %v977
  %v979 = vrot.slane %v978, 2
  %v980 = vadd.f32 %v978, %v979
  %v981 = vrot.slane %v980, 1
  %v982 = vadd.f32 %v980, %v981
  %v983 = vsel %vm181, %v932, 0.0
  %v984 = vsel %vm181, %v934, 0.0
  %v985 = vadd.f32 %v983, %v984
  %v986 = vrot.slane %v985, 4
  %v987 = vadd.f32 %v985, %v986
  %v988 = vrot.slane %v987, 2
  %v989 = vadd.f32 %v987, %v988
  %v990 = vrot.slane %v989, 1
  %v991 = vadd.f32 %v989, %v990
  %v992 = vsel %vm181, %v936, 0.0
  %v993 = vsel %vm181, %v938, 0.0
  %v994 = vadd.f32 %v992, %v993
  %v995 = vrot.slane %v994, 4
  %v996 = vadd.f32 %v994, %v995
  %v997 = vrot.slane %v996, 2
  %v998 = vadd.f32 %v996, %v997
  %v999 = vrot.slane %v998, 1
  %v1000 = vadd.f32 %v998, %v999
  %v1001 = vsel %vm181, %v940, 0.0
  %v1002 = vsel %vm181, %v942, 0.0
  %v1003 = vadd.f32 %v1001, %v1002
  %v1004 = vrot.slane %v1003, 4
  %v1005 = vadd.f32 %v1003, %v1004
  %v1006 = vrot.slane %v1005, 2
  %v1007 = vadd.f32 %v1005, %v1006
  %v1008 = vrot.slane %v1007, 1
  %v1009 = vadd.f32 %v1007, %v1008
  %v1010 = vsel %vm181, %v944, 0.0
  %v1011 = vsel %vm181, %v946, 0.0
  %v1012 = vadd.f32 %v1010, %v1011
  %v1013 = vrot.slane %v1012, 4
  %v1014 = vadd.f32 %v1012, %v1013
  %v1015 = vrot.slane %v1014, 2
  %v1016 = vadd.f32 %v1014, %v1015
  %v1017 = vrot.slane %v1016, 1
  %v1018 = vadd.f32 %v1016, %v1017
  %v1019 = vrcp.pop %v955
  %v1020 = vmul.f32 %v916, %v1019
  %v1021 = vmul.f32 %v918, %v1019
  %v1022 = vrcp.pop %v964
  %v1023 = vmul.f32 %v920, %v1022
  %v1024 = vmul.f32 %v922, %v1022
  %v1025 = vrcp.pop %v973
  %v1026 = vmul.f32 %v924, %v1025
  %v1027 = vmul.f32 %v926, %v1025
  %v1028 = vrcp.pop %v982
  %v1029 = vmul.f32 %v928, %v1028
  %v1030 = vmul.f32 %v930, %v1028
  %v1031 = vrcp.pop %v991
  %v1032 = vmul.f32 %v932, %v1031
  %v1033 = vmul.f32 %v934, %v1031
  %v1034 = vrcp.pop %v1000
  %v1035 = vmul.f32 %v936, %v1034
  %v1036 = vmul.f32 %v938, %v1034
  %v1037 = vrcp.pop %v1009
  %v1038 = vmul.f32 %v940, %v1037
  %v1039 = vmul.f32 %v942, %v1037
  %v1040 = vrcp.pop %v1018
  %v1041 = vmul.f32 %v944, %v1040
  %v1042 = vmul.f32 %v946, %v1040
  %1043 = vxpose.xlu0.b32.start [1/16] %v1020, 128
  %1044 = vxpose.xlu0.b32.cont [2/16] %v1021, 128
  %1045 = vxpose.xlu0.b32.cont [3/16] 0.0, 128
  %1046 = vxpose.xlu0.b32.cont [4/16] 0.0, 128
  %1047 = vxpose.xlu0.b32.cont [5/16] 0.0, 128
  %1048 = vxpose.xlu0.b32.cont [6/16] 0.0, 128
  %1049 = vxpose.xlu0.b32.cont [7/16] 0.0, 128
  %1050 = vxpose.xlu0.b32.cont [8/16] 0.0, 128
  %1051 = vxpose.xlu0.b32.cont [9/16] 0.0, 128
  %1052 = vxpose.xlu0.b32.cont [10/16] 0.0, 128
  %1053 = vxpose.xlu0.b32.cont [11/16] 0.0, 128
  %1054 = vxpose.xlu0.b32.cont [12/16] 0.0, 128
  %1055 = vxpose.xlu0.b32.cont [13/16] 0.0, 128
  %1056 = vxpose.xlu0.b32.cont [14/16] 0.0, 128
  %1057 = vxpose.xlu0.b32.cont [15/16] 0.0, 128
  %1058 = vxpose.xlu0.b32.end [16/16] 0.0, 128
  %v1059 = vpop.trf.xlu0
  %v1060 = vpop.trf.xlu0
  %v1061 = vpop.trf.xlu0
  %v1062 = vpop.trf.xlu0
  %v1063 = vpop.trf.xlu0
  %v1064 = vpop.trf.xlu0
  %v1065 = vpop.trf.xlu0
  %v1066 = vpop.trf.xlu0
  %v1067 = vpop.trf.xlu0
  %v1068 = vpop.trf.xlu0
  %v1069 = vpop.trf.xlu0
  %v1070 = vpop.trf.xlu0
  %v1071 = vpop.trf.xlu0
  %v1072 = vpop.trf.xlu0
  %v1073 = vpop.trf.xlu0
  %v1074 = vpop.trf.xlu0
  %1075 = vrot.lane.b32.xlu0 %v537, 96
  %v1076 = vpop.permute.xlu0 %1075
  %1077 = vrot.lane.b32.xlu0 %v542, 96
  %v1078 = vpop.permute.xlu0 %1077
  %vm1081 = vcmask 130048
  %v1083 = vsel %vm1081, %v1059, 0
  %1085 = vmatprep.subr.mxu0 0.0
  %1086 = vmatpush1.msra.mxu0 %v1076
  %1087 = vmatprep.subr.mxu0 0.0
  %1088 = vmatpush1.msra.mxu0 %v1078
  %1089 = vmatprep.subr.mxu0 0.0
  %1090 = vmatpush1.msra.mxu0 0.0
  %1091 = vmatprep.subr.mxu0 0.0
  %1092 = vmatpush1.msra.mxu0 0.0
  %1093 = vmatprep.subr.mxu0 0.0
  %1094 = vmatpush1.msra.mxu0 0.0
  %1095 = vmatprep.subr.mxu0 0.0
  %1096 = vmatpush1.msra.mxu0 0.0
  %1097 = vmatprep.subr.mxu0 0.0
  %1098 = vmatpush1.msra.mxu0 0.0
  %1099 = vmatprep.subr.mxu0 0.0
  %1100 = vmatpush1.msra.mxu0 0.0
  %1101 = vmatprep.subr.mxu0 0.0
  %1102 = vmatpush1.msra.mxu0 0.0
  %1103 = vmatprep.subr.mxu0 0.0
  %1104 = vmatpush1.msra.mxu0 0.0
  %1105 = vmatprep.subr.mxu0 0.0
  %1106 = vmatpush1.msra.mxu0 0.0
  %1107 = vmatprep.subr.mxu0 0.0
  %1108 = vmatpush1.msra.mxu0 0.0
  %1109 = vmatprep.subr.mxu0 0.0
  %1110 = vmatpush1.msra.mxu0 0.0
  %1111 = vmatprep.subr.mxu0 0.0
  %1112 = vmatpush1.msra.mxu0 0.0
  %1113 = vmatprep.subr.mxu0 0.0
  %1114 = vmatpush1.msra.mxu0 0.0
  %1115 = vmatprep.subr.mxu0 0.0
  %1116 = vmatpush1.msra.mxu0 0.0
  %1117 = vmatprep.subr.mxu0 0.0
  %1118 = vmatpush1.msra.mxu0 0.0
  %1119 = vmatprep.subr.mxu0 0.0
  %1120 = vmatpush1.msra.mxu0 0.0
  %1121 = vmatprep.subr.mxu0 0.0
  %1122 = vmatpush1.msra.mxu0 0.0
  %1123 = vmatprep.subr.mxu0 0.0
  %1124 = vmatpush1.msra.mxu0 0.0
  %1125 = vmatprep.subr.mxu0 0.0
  %1126 = vmatpush1.msra.mxu0 0.0
  %1127 = vmatprep.subr.mxu0 0.0
  %1128 = vmatpush1.msra.mxu0 0.0
  %1129 = vmatprep.subr.mxu0 0.0
  %1130 = vmatpush1.msra.mxu0 0.0
  %1131 = vmatprep.subr.mxu0 0.0
  %1132 = vmatpush1.msra.mxu0 0.0
  %1133 = vmatprep.subr.mxu0 0.0
  %1134 = vmatpush1.msra.mxu0 0.0
  %1135 = vmatprep.subr.mxu0 0.0
  %1136 = vmatpush1.msra.mxu0 0.0
  %1137 = vmatprep.subr.mxu0 0.0
  %1138 = vmatpush1.msra.mxu0 0.0
  %1139 = vmatprep.subr.mxu0 0.0
  %1140 = vmatpush1.msra.mxu0 0.0
  %1141 = vmatprep.subr.mxu0 0.0
  %1142 = vmatpush1.msra.mxu0 0.0
  %1143 = vmatprep.subr.mxu0 0.0
  %1144 = vmatpush1.msra.mxu0 0.0
  %1145 = vmatprep.subr.mxu0 0.0
  %1146 = vmatpush1.msra.mxu0 0.0
  %1147 = vmatprep.subr.mxu0 0.0
  %1148 = vmatpush1.msra.mxu0 0.0
  %1149 = vmatprep.mubr.f32.mxu0 0.0
  %1150 = vmatmul.mubr.f32.gmra.mrb[0].mxu0 %v1083
  %v1151 = vpop.f32.mrb[0].mxu0
  %v1152 = vadd.f32 %v65, %v1151
  %v1153 = vpop.f32.mrb[0].mxu0
  %1154 = vdwg.mxu0
  %1155 = vxpose.xlu0.b32.start [1/16] %v1023, 128
  %1156 = vxpose.xlu0.b32.cont [2/16] %v1024, 128
  %1157 = vxpose.xlu0.b32.cont [3/16] 0.0, 128
  %1158 = vxpose.xlu0.b32.cont [4/16] 0.0, 128
  %1159 = vxpose.xlu0.b32.cont [5/16] 0.0, 128
  %1160 = vxpose.xlu0.b32.cont [6/16] 0.0, 128
  %1161 = vxpose.xlu0.b32.cont [7/16] 0.0, 128
  %1162 = vxpose.xlu0.b32.cont [8/16] 0.0, 128
  %1163 = vxpose.xlu0.b32.cont [9/16] 0.0, 128
  %1164 = vxpose.xlu0.b32.cont [10/16] 0.0, 128
  %1165 = vxpose.xlu0.b32.cont [11/16] 0.0, 128
  %1166 = vxpose.xlu0.b32.cont [12/16] 0.0, 128
  %1167 = vxpose.xlu0.b32.cont [13/16] 0.0, 128
  %1168 = vxpose.xlu0.b32.cont [14/16] 0.0, 128
  %1169 = vxpose.xlu0.b32.cont [15/16] 0.0, 128
  %1170 = vxpose.xlu0.b32.end [16/16] 0.0, 128
  %v1171 = vpop.trf.xlu0
  %v1172 = vpop.trf.xlu0
  %v1173 = vpop.trf.xlu0
  %v1174 = vpop.trf.xlu0
  %v1175 = vpop.trf.xlu0
  %v1176 = vpop.trf.xlu0
  %v1177 = vpop.trf.xlu0
  %v1178 = vpop.trf.xlu0
  %v1179 = vpop.trf.xlu0
  %v1180 = vpop.trf.xlu0
  %v1181 = vpop.trf.xlu0
  %v1182 = vpop.trf.xlu0
  %v1183 = vpop.trf.xlu0
  %v1184 = vpop.trf.xlu0
  %v1185 = vpop.trf.xlu0
  %v1186 = vpop.trf.xlu0
  %1187 = vrot.lane.b32.xlu0 %v547, 96
  %v1188 = vpop.permute.xlu0 %1187
  %1189 = vrot.lane.b32.xlu0 %v552, 96
  %v1190 = vpop.permute.xlu0 %1189
  %v1194 = vsel %vm1081, %v1171, 0
  %1196 = vmatprep.subr.mxu0 0.0
  %1197 = vmatpush1.msra.mxu0 %v1188
  %1198 = vmatprep.subr.mxu0 0.0
  %1199 = vmatpush1.msra.mxu0 %v1190
  %1200 = vmatprep.subr.mxu0 0.0
  %1201 = vmatpush1.msra.mxu0 0.0
  %1202 = vmatprep.subr.mxu0 0.0
  %1203 = vmatpush1.msra.mxu0 0.0
  %1204 = vmatprep.subr.mxu0 0.0
  %1205 = vmatpush1.msra.mxu0 0.0
  %1206 = vmatprep.subr.mxu0 0.0
  %1207 = vmatpush1.msra.mxu0 0.0
  %1208 = vmatprep.subr.mxu0 0.0
  %1209 = vmatpush1.msra.mxu0 0.0
  %1210 = vmatprep.subr.mxu0 0.0
  %1211 = vmatpush1.msra.mxu0 0.0
  %1212 = vmatprep.subr.mxu0 0.0
  %1213 = vmatpush1.msra.mxu0 0.0
  %1214 = vmatprep.subr.mxu0 0.0
  %1215 = vmatpush1.msra.mxu0 0.0
  %1216 = vmatprep.subr.mxu0 0.0
  %1217 = vmatpush1.msra.mxu0 0.0
  %1218 = vmatprep.subr.mxu0 0.0
  %1219 = vmatpush1.msra.mxu0 0.0
  %1220 = vmatprep.subr.mxu0 0.0
  %1221 = vmatpush1.msra.mxu0 0.0
  %1222 = vmatprep.subr.mxu0 0.0
  %1223 = vmatpush1.msra.mxu0 0.0
  %1224 = vmatprep.subr.mxu0 0.0
  %1225 = vmatpush1.msra.mxu0 0.0
  %1226 = vmatprep.subr.mxu0 0.0
  %1227 = vmatpush1.msra.mxu0 0.0
  %1228 = vmatprep.subr.mxu0 0.0
  %1229 = vmatpush1.msra.mxu0 0.0
  %1230 = vmatprep.subr.mxu0 0.0
  %1231 = vmatpush1.msra.mxu0 0.0
  %1232 = vmatprep.subr.mxu0 0.0
  %1233 = vmatpush1.msra.mxu0 0.0
  %1234 = vmatprep.subr.mxu0 0.0
  %1235 = vmatpush1.msra.mxu0 0.0
  %1236 = vmatprep.subr.mxu0 0.0
  %1237 = vmatpush1.msra.mxu0 0.0
  %1238 = vmatprep.subr.mxu0 0.0
  %1239 = vmatpush1.msra.mxu0 0.0
  %1240 = vmatprep.subr.mxu0 0.0
  %1241 = vmatpush1.msra.mxu0 0.0
  %1242 = vmatprep.subr.mxu0 0.0
  %1243 = vmatpush1.msra.mxu0 0.0
  %1244 = vmatprep.subr.mxu0 0.0
  %1245 = vmatpush1.msra.mxu0 0.0
  %1246 = vmatprep.subr.mxu0 0.0
  %1247 = vmatpush1.msra.mxu0 0.0
  %1248 = vmatprep.subr.mxu0 0.0
  %1249 = vmatpush1.msra.mxu0 0.0
  %1250 = vmatprep.subr.mxu0 0.0
  %1251 = vmatpush1.msra.mxu0 0.0
  %1252 = vmatprep.subr.mxu0 0.0
  %1253 = vmatpush1.msra.mxu0 0.0
  %1254 = vmatprep.subr.mxu0 0.0
  %1255 = vmatpush1.msra.mxu0 0.0
  %1256 = vmatprep.subr.mxu0 0.0
  %1257 = vmatpush1.msra.mxu0 0.0
  %1258 = vmatprep.subr.mxu0 0.0
  %1259 = vmatpush1.msra.mxu0 0.0
  %1260 = vmatprep.mubr.f32.mxu0 0.0
  %1261 = vmatmul.mubr.f32.gmra.mrb[0].mxu0 %v1194
  %v1262 = vpop.f32.mrb[0].mxu0
  %v1263 = vadd.f32 %v65, %v1262
  %v1264 = vpop.f32.mrb[0].mxu0
  %1265 = vdwg.mxu0
  %1266 = vxpose.xlu0.b32.start [1/16] %v1026, 128
  %1267 = vxpose.xlu0.b32.cont [2/16] %v1027, 128
  %1268 = vxpose.xlu0.b32.cont [3/16] 0.0, 128
  %1269 = vxpose.xlu0.b32.cont [4/16] 0.0, 128
  %1270 = vxpose.xlu0.b32.cont [5/16] 0.0, 128
  %1271 = vxpose.xlu0.b32.cont [6/16] 0.0, 128
  %1272 = vxpose.xlu0.b32.cont [7/16] 0.0, 128
  %1273 = vxpose.xlu0.b32.cont [8/16] 0.0, 128
  %1274 = vxpose.xlu0.b32.cont [9/16] 0.0, 128
  %1275 = vxpose.xlu0.b32.cont [10/16] 0.0, 128
  %1276 = vxpose.xlu0.b32.cont [11/16] 0.0, 128
  %1277 = vxpose.xlu0.b32.cont [12/16] 0.0, 128
  %1278 = vxpose.xlu0.b32.cont [13/16] 0.0, 128
  %1279 = vxpose.xlu0.b32.cont [14/16] 0.0, 128
  %1280 = vxpose.xlu0.b32.cont [15/16] 0.0, 128
  %1281 = vxpose.xlu0.b32.end [16/16] 0.0, 128
  %v1282 = vpop.trf.xlu0
  %v1283 = vpop.trf.xlu0
  %v1284 = vpop.trf.xlu0
  %v1285 = vpop.trf.xlu0
  %v1286 = vpop.trf.xlu0
  %v1287 = vpop.trf.xlu0
  %v1288 = vpop.trf.xlu0
  %v1289 = vpop.trf.xlu0
  %v1290 = vpop.trf.xlu0
  %v1291 = vpop.trf.xlu0
  %v1292 = vpop.trf.xlu0
  %v1293 = vpop.trf.xlu0
  %v1294 = vpop.trf.xlu0
  %v1295 = vpop.trf.xlu0
  %v1296 = vpop.trf.xlu0
  %v1297 = vpop.trf.xlu0
  %1298 = vrot.lane.b32.xlu0 %v557, 96
  %v1299 = vpop.permute.xlu0 %1298
  %1300 = vrot.lane.b32.xlu0 %v562, 96
  %v1301 = vpop.permute.xlu0 %1300
  %v1305 = vsel %vm1081, %v1282, 0
  %1307 = vmatprep.subr.mxu0 0.0
  %1308 = vmatpush1.msra.mxu0 %v1299
  %1309 = vmatprep.subr.mxu0 0.0
  %1310 = vmatpush1.msra.mxu0 %v1301
  %1311 = vmatprep.subr.mxu0 0.0
  %1312 = vmatpush1.msra.mxu0 0.0
  %1313 = vmatprep.subr.mxu0 0.0
  %1314 = vmatpush1.msra.mxu0 0.0
  %1315 = vmatprep.subr.mxu0 0.0
  %1316 = vmatpush1.msra.mxu0 0.0
  %1317 = vmatprep.subr.mxu0 0.0
  %1318 = vmatpush1.msra.mxu0 0.0
  %1319 = vmatprep.subr.mxu0 0.0
  %1320 = vmatpush1.msra.mxu0 0.0
  %1321 = vmatprep.subr.mxu0 0.0
  %1322 = vmatpush1.msra.mxu0 0.0
  %1323 = vmatprep.subr.mxu0 0.0
  %1324 = vmatpush1.msra.mxu0 0.0
  %1325 = vmatprep.subr.mxu0 0.0
  %1326 = vmatpush1.msra.mxu0 0.0
  %1327 = vmatprep.subr.mxu0 0.0
  %1328 = vmatpush1.msra.mxu0 0.0
  %1329 = vmatprep.subr.mxu0 0.0
  %1330 = vmatpush1.msra.mxu0 0.0
  %1331 = vmatprep.subr.mxu0 0.0
  %1332 = vmatpush1.msra.mxu0 0.0
  %1333 = vmatprep.subr.mxu0 0.0
  %1334 = vmatpush1.msra.mxu0 0.0
  %1335 = vmatprep.subr.mxu0 0.0
  %1336 = vmatpush1.msra.mxu0 0.0
  %1337 = vmatprep.subr.mxu0 0.0
  %1338 = vmatpush1.msra.mxu0 0.0
  %1339 = vmatprep.subr.mxu0 0.0
  %1340 = vmatpush1.msra.mxu0 0.0
  %1341 = vmatprep.subr.mxu0 0.0
  %1342 = vmatpush1.msra.mxu0 0.0
  %1343 = vmatprep.subr.mxu0 0.0
  %1344 = vmatpush1.msra.mxu0 0.0
  %1345 = vmatprep.subr.mxu0 0.0
  %1346 = vmatpush1.msra.mxu0 0.0
  %1347 = vmatprep.subr.mxu0 0.0
  %1348 = vmatpush1.msra.mxu0 0.0
  %1349 = vmatprep.subr.mxu0 0.0
  %1350 = vmatpush1.msra.mxu0 0.0
  %1351 = vmatprep.subr.mxu0 0.0
  %1352 = vmatpush1.msra.mxu0 0.0
  %1353 = vmatprep.subr.mxu0 0.0
  %1354 = vmatpush1.msra.mxu0 0.0
  %1355 = vmatprep.subr.mxu0 0.0
  %1356 = vmatpush1.msra.mxu0 0.0
  %1357 = vmatprep.subr.mxu0 0.0
  %1358 = vmatpush1.msra.mxu0 0.0
  %1359 = vmatprep.subr.mxu0 0.0
  %1360 = vmatpush1.msra.mxu0 0.0
  %1361 = vmatprep.subr.mxu0 0.0
  %1362 = vmatpush1.msra.mxu0 0.0
  %1363 = vmatprep.subr.mxu0 0.0
  %1364 = vmatpush1.msra.mxu0 0.0
  %1365 = vmatprep.subr.mxu0 0.0
  %1366 = vmatpush1.msra.mxu0 0.0
  %1367 = vmatprep.subr.mxu0 0.0
  %1368 = vmatpush1.msra.mxu0 0.0
  %1369 = vmatprep.subr.mxu0 0.0
  %1370 = vmatpush1.msra.mxu0 0.0
  %1371 = vmatprep.mubr.f32.mxu0 0.0
  %1372 = vmatmul.mubr.f32.gmra.mrb[0].mxu0 %v1305
  %v1373 = vpop.f32.mrb[0].mxu0
  %v1374 = vadd.f32 %v65, %v1373
  %v1375 = vpop.f32.mrb[0].mxu0
  %1376 = vdwg.mxu0
  %1377 = vxpose.xlu0.b32.start [1/16] %v1029, 128
  %1378 = vxpose.xlu0.b32.cont [2/16] %v1030, 128
  %1379 = vxpose.xlu0.b32.cont [3/16] 0.0, 128
  %1380 = vxpose.xlu0.b32.cont [4/16] 0.0, 128
  %1381 = vxpose.xlu0.b32.cont [5/16] 0.0, 128
  %1382 = vxpose.xlu0.b32.cont [6/16] 0.0, 128
  %1383 = vxpose.xlu0.b32.cont [7/16] 0.0, 128
  %1384 = vxpose.xlu0.b32.cont [8/16] 0.0, 128
  %1385 = vxpose.xlu0.b32.cont [9/16] 0.0, 128
  %1386 = vxpose.xlu0.b32.cont [10/16] 0.0, 128
  %1387 = vxpose.xlu0.b32.cont [11/16] 0.0, 128
  %1388 = vxpose.xlu0.b32.cont [12/16] 0.0, 128
  %1389 = vxpose.xlu0.b32.cont [13/16] 0.0, 128
  %1390 = vxpose.xlu0.b32.cont [14/16] 0.0, 128
  %1391 = vxpose.xlu0.b32.cont [15/16] 0.0, 128
  %1392 = vxpose.xlu0.b32.end [16/16] 0.0, 128
  %v1393 = vpop.trf.xlu0
  %v1394 = vpop.trf.xlu0
  %v1395 = vpop.trf.xlu0
  %v1396 = vpop.trf.xlu0
  %v1397 = vpop.trf.xlu0
  %v1398 = vpop.trf.xlu0
  %v1399 = vpop.trf.xlu0
  %v1400 = vpop.trf.xlu0
  %v1401 = vpop.trf.xlu0
  %v1402 = vpop.trf.xlu0
  %v1403 = vpop.trf.xlu0
  %v1404 = vpop.trf.xlu0
  %v1405 = vpop.trf.xlu0
  %v1406 = vpop.trf.xlu0
  %v1407 = vpop.trf.xlu0
  %v1408 = vpop.trf.xlu0
  %1409 = vrot.lane.b32.xlu0 %v567, 96
  %v1410 = vpop.permute.xlu0 %1409
  %1411 = vrot.lane.b32.xlu0 %v572, 96
  %v1412 = vpop.permute.xlu0 %1411
  %v1416 = vsel %vm1081, %v1393, 0
  %1418 = vmatprep.subr.mxu0 0.0
  %1419 = vmatpush1.msra.mxu0 %v1410
  %1420 = vmatprep.subr.mxu0 0.0
  %1421 = vmatpush1.msra.mxu0 %v1412
  %1422 = vmatprep.subr.mxu0 0.0
  %1423 = vmatpush1.msra.mxu0 0.0
  %1424 = vmatprep.subr.mxu0 0.0
  %1425 = vmatpush1.msra.mxu0 0.0
  %1426 = vmatprep.subr.mxu0 0.0
  %1427 = vmatpush1.msra.mxu0 0.0
  %1428 = vmatprep.subr.mxu0 0.0
  %1429 = vmatpush1.msra.mxu0 0.0
  %1430 = vmatprep.subr.mxu0 0.0
  %1431 = vmatpush1.msra.mxu0 0.0
  %1432 = vmatprep.subr.mxu0 0.0
  %1433 = vmatpush1.msra.mxu0 0.0
  %1434 = vmatprep.subr.mxu0 0.0
  %1435 = vmatpush1.msra.mxu0 0.0
  %1436 = vmatprep.subr.mxu0 0.0
  %1437 = vmatpush1.msra.mxu0 0.0
  %1438 = vmatprep.subr.mxu0 0.0
  %1439 = vmatpush1.msra.mxu0 0.0
  %1440 = vmatprep.subr.mxu0 0.0
  %1441 = vmatpush1.msra.mxu0 0.0
  %1442 = vmatprep.subr.mxu0 0.0
  %1443 = vmatpush1.msra.mxu0 0.0
  %1444 = vmatprep.subr.mxu0 0.0
  %1445 = vmatpush1.msra.mxu0 0.0
  %1446 = vmatprep.subr.mxu0 0.0
  %1447 = vmatpush1.msra.mxu0 0.0
  %1448 = vmatprep.subr.mxu0 0.0
  %1449 = vmatpush1.msra.mxu0 0.0
  %1450 = vmatprep.subr.mxu0 0.0
  %1451 = vmatpush1.msra.mxu0 0.0
  %1452 = vmatprep.subr.mxu0 0.0
  %1453 = vmatpush1.msra.mxu0 0.0
  %1454 = vmatprep.subr.mxu0 0.0
  %1455 = vmatpush1.msra.mxu0 0.0
  %1456 = vmatprep.subr.mxu0 0.0
  %1457 = vmatpush1.msra.mxu0 0.0
  %1458 = vmatprep.subr.mxu0 0.0
  %1459 = vmatpush1.msra.mxu0 0.0
  %1460 = vmatprep.subr.mxu0 0.0
  %1461 = vmatpush1.msra.mxu0 0.0
  %1462 = vmatprep.subr.mxu0 0.0
  %1463 = vmatpush1.msra.mxu0 0.0
  %1464 = vmatprep.subr.mxu0 0.0
  %1465 = vmatpush1.msra.mxu0 0.0
  %1466 = vmatprep.subr.mxu0 0.0
  %1467 = vmatpush1.msra.mxu0 0.0
  %1468 = vmatprep.subr.mxu0 0.0
  %1469 = vmatpush1.msra.mxu0 0.0
  %1470 = vmatprep.subr.mxu0 0.0
  %1471 = vmatpush1.msra.mxu0 0.0
  %1472 = vmatprep.subr.mxu0 0.0
  %1473 = vmatpush1.msra.mxu0 0.0
  %1474 = vmatprep.subr.mxu0 0.0
  %1475 = vmatpush1.msra.mxu0 0.0
  %1476 = vmatprep.subr.mxu0 0.0
  %1477 = vmatpush1.msra.mxu0 0.0
  %1478 = vmatprep.subr.mxu0 0.0
  %1479 = vmatpush1.msra.mxu0 0.0
  %1480 = vmatprep.subr.mxu0 0.0
  %1481 = vmatpush1.msra.mxu0 0.0
  %1482 = vmatprep.mubr.f32.mxu0 0.0
  %1483 = vmatmul.mubr.f32.gmra.mrb[0].mxu0 %v1416
  %v1484 = vpop.f32.mrb[0].mxu0
  %v1485 = vadd.f32 %v65, %v1484
  %v1486 = vpop.f32.mrb[0].mxu0
  %1487 = vdwg.mxu0
  %1488 = vxpose.xlu0.b32.start [1/16] %v1032, 128
  %1489 = vxpose.xlu0.b32.cont [2/16] %v1033, 128
  %1490 = vxpose.xlu0.b32.cont [3/16] 0.0, 128
  %1491 = vxpose.xlu0.b32.cont [4/16] 0.0, 128
  %1492 = vxpose.xlu0.b32.cont [5/16] 0.0, 128
  %1493 = vxpose.xlu0.b32.cont [6/16] 0.0, 128
  %1494 = vxpose.xlu0.b32.cont [7/16] 0.0, 128
  %1495 = vxpose.xlu0.b32.cont [8/16] 0.0, 128
  %1496 = vxpose.xlu0.b32.cont [9/16] 0.0, 128
  %1497 = vxpose.xlu0.b32.cont [10/16] 0.0, 128
  %1498 = vxpose.xlu0.b32.cont [11/16] 0.0, 128
  %1499 = vxpose.xlu0.b32.cont [12/16] 0.0, 128
  %1500 = vxpose.xlu0.b32.cont [13/16] 0.0, 128
  %1501 = vxpose.xlu0.b32.cont [14/16] 0.0, 128
  %1502 = vxpose.xlu0.b32.cont [15/16] 0.0, 128
  %1503 = vxpose.xlu0.b32.end [16/16] 0.0, 128
  %v1504 = vpop.trf.xlu0
  %v1505 = vpop.trf.xlu0
  %v1506 = vpop.trf.xlu0
  %v1507 = vpop.trf.xlu0
  %v1508 = vpop.trf.xlu0
  %v1509 = vpop.trf.xlu0
  %v1510 = vpop.trf.xlu0
  %v1511 = vpop.trf.xlu0
  %v1512 = vpop.trf.xlu0
  %v1513 = vpop.trf.xlu0
  %v1514 = vpop.trf.xlu0
  %v1515 = vpop.trf.xlu0
  %v1516 = vpop.trf.xlu0
  %v1517 = vpop.trf.xlu0
  %v1518 = vpop.trf.xlu0
  %v1519 = vpop.trf.xlu0
  %1520 = vrot.lane.b32.xlu0 %v577, 96
  %v1521 = vpop.permute.xlu0 %1520
  %1522 = vrot.lane.b32.xlu0 %v582, 96
  %v1523 = vpop.permute.xlu0 %1522
  %v1527 = vsel %vm1081, %v1504, 0
  %1529 = vmatprep.subr.mxu0 0.0
  %1530 = vmatpush1.msra.mxu0 %v1521
  %1531 = vmatprep.subr.mxu0 0.0
  %1532 = vmatpush1.msra.mxu0 %v1523
  %1533 = vmatprep.subr.mxu0 0.0
  %1534 = vmatpush1.msra.mxu0 0.0
  %1535 = vmatprep.subr.mxu0 0.0
  %1536 = vmatpush1.msra.mxu0 0.0
  %1537 = vmatprep.subr.mxu0 0.0
  %1538 = vmatpush1.msra.mxu0 0.0
  %1539 = vmatprep.subr.mxu0 0.0
  %1540 = vmatpush1.msra.mxu0 0.0
  %1541 = vmatprep.subr.mxu0 0.0
  %1542 = vmatpush1.msra.mxu0 0.0
  %1543 = vmatprep.subr.mxu0 0.0
  %1544 = vmatpush1.msra.mxu0 0.0
  %1545 = vmatprep.subr.mxu0 0.0
  %1546 = vmatpush1.msra.mxu0 0.0
  %1547 = vmatprep.subr.mxu0 0.0
  %1548 = vmatpush1.msra.mxu0 0.0
  %1549 = vmatprep.subr.mxu0 0.0
  %1550 = vmatpush1.msra.mxu0 0.0
  %1551 = vmatprep.subr.mxu0 0.0
  %1552 = vmatpush1.msra.mxu0 0.0
  %1553 = vmatprep.subr.mxu0 0.0
  %1554 = vmatpush1.msra.mxu0 0.0
  %1555 = vmatprep.subr.mxu0 0.0
  %1556 = vmatpush1.msra.mxu0 0.0
  %1557 = vmatprep.subr.mxu0 0.0
  %1558 = vmatpush1.msra.mxu0 0.0
  %1559 = vmatprep.subr.mxu0 0.0
  %1560 = vmatpush1.msra.mxu0 0.0
  %1561 = vmatprep.subr.mxu0 0.0
  %1562 = vmatpush1.msra.mxu0 0.0
  %1563 = vmatprep.subr.mxu0 0.0
  %1564 = vmatpush1.msra.mxu0 0.0
  %1565 = vmatprep.subr.mxu0 0.0
  %1566 = vmatpush1.msra.mxu0 0.0
  %1567 = vmatprep.subr.mxu0 0.0
  %1568 = vmatpush1.msra.mxu0 0.0
  %1569 = vmatprep.subr.mxu0 0.0
  %1570 = vmatpush1.msra.mxu0 0.0
  %1571 = vmatprep.subr.mxu0 0.0
  %1572 = vmatpush1.msra.mxu0 0.0
  %1573 = vmatprep.subr.mxu0 0.0
  %1574 = vmatpush1.msra.mxu0 0.0
  %1575 = vmatprep.subr.mxu0 0.0
  %1576 = vmatpush1.msra.mxu0 0.0
  %1577 = vmatprep.subr.mxu0 0.0
  %1578 = vmatpush1.msra.mxu0 0.0
  %1579 = vmatprep.subr.mxu0 0.0
  %1580 = vmatpush1.msra.mxu0 0.0
  %1581 = vmatprep.subr.mxu0 0.0
  %1582 = vmatpush1.msra.mxu0 0.0
  %1583 = vmatprep.subr.mxu0 0.0
  %1584 = vmatpush1.msra.mxu0 0.0
  %1585 = vmatprep.subr.mxu0 0.0
  %1586 = vmatpush1.msra.mxu0 0.0
  %1587 = vmatprep.subr.mxu0 0.0
  %1588 = vmatpush1.msra.mxu0 0.0
  %1589 = vmatprep.subr.mxu0 0.0
  %1590 = vmatpush1.msra.mxu0 0.0
  %1591 = vmatprep.subr.mxu0 0.0
  %1592 = vmatpush1.msra.mxu0 0.0
  %1593 = vmatprep.mubr.f32.mxu0 0.0
  %1594 = vmatmul.mubr.f32.gmra.mrb[0].mxu0 %v1527
  %v1595 = vpop.f32.mrb[0].mxu0
  %v1596 = vadd.f32 %v65, %v1595
  %v1597 = vpop.f32.mrb[0].mxu0
  %1598 = vdwg.mxu0
  %1599 = vxpose.xlu0.b32.start [1/16] %v1035, 128
  %1600 = vxpose.xlu0.b32.cont [2/16] %v1036, 128
  %1601 = vxpose.xlu0.b32.cont [3/16] 0.0, 128
  %1602 = vxpose.xlu0.b32.cont [4/16] 0.0, 128
  %1603 = vxpose.xlu0.b32.cont [5/16] 0.0, 128
  %1604 = vxpose.xlu0.b32.cont [6/16] 0.0, 128
  %1605 = vxpose.xlu0.b32.cont [7/16] 0.0, 128
  %1606 = vxpose.xlu0.b32.cont [8/16] 0.0, 128
  %1607 = vxpose.xlu0.b32.cont [9/16] 0.0, 128
  %1608 = vxpose.xlu0.b32.cont [10/16] 0.0, 128
  %1609 = vxpose.xlu0.b32.cont [11/16] 0.0, 128
  %1610 = vxpose.xlu0.b32.cont [12/16] 0.0, 128
  %1611 = vxpose.xlu0.b32.cont [13/16] 0.0, 128
  %1612 = vxpose.xlu0.b32.cont [14/16] 0.0, 128
  %1613 = vxpose.xlu0.b32.cont [15/16] 0.0, 128
  %1614 = vxpose.xlu0.b32.end [16/16] 0.0, 128
  %v1615 = vpop.trf.xlu0
  %v1616 = vpop.trf.xlu0
  %v1617 = vpop.trf.xlu0
  %v1618 = vpop.trf.xlu0
  %v1619 = vpop.trf.xlu0
  %v1620 = vpop.trf.xlu0
  %v1621 = vpop.trf.xlu0
  %v1622 = vpop.trf.xlu0
  %v1623 = vpop.trf.xlu0
  %v1624 = vpop.trf.xlu0
  %v1625 = vpop.trf.xlu0
  %v1626 = vpop.trf.xlu0
  %v1627 = vpop.trf.xlu0
  %v1628 = vpop.trf.xlu0
  %v1629 = vpop.trf.xlu0
  %v1630 = vpop.trf.xlu0
  %1631 = vrot.lane.b32.xlu0 %v587, 96
  %v1632 = vpop.permute.xlu0 %1631
  %1633 = vrot.lane.b32.xlu0 %v592, 96
  %v1634 = vpop.permute.xlu0 %1633
  %v1638 = vsel %vm1081, %v1615, 0
  %1640 = vmatprep.subr.mxu0 0.0
  %1641 = vmatpush1.msra.mxu0 %v1632
  %1642 = vmatprep.subr.mxu0 0.0
  %1643 = vmatpush1.msra.mxu0 %v1634
  %1644 = vmatprep.subr.mxu0 0.0
  %1645 = vmatpush1.msra.mxu0 0.0
  %1646 = vmatprep.subr.mxu0 0.0
  %1647 = vmatpush1.msra.mxu0 0.0
  %1648 = vmatprep.subr.mxu0 0.0
  %1649 = vmatpush1.msra.mxu0 0.0
  %1650 = vmatprep.subr.mxu0 0.0
  %1651 = vmatpush1.msra.mxu0 0.0
  %1652 = vmatprep.subr.mxu0 0.0
  %1653 = vmatpush1.msra.mxu0 0.0
  %1654 = vmatprep.subr.mxu0 0.0
  %1655 = vmatpush1.msra.mxu0 0.0
  %1656 = vmatprep.subr.mxu0 0.0
  %1657 = vmatpush1.msra.mxu0 0.0
  %1658 = vmatprep.subr.mxu0 0.0
  %1659 = vmatpush1.msra.mxu0 0.0
  %1660 = vmatprep.subr.mxu0 0.0
  %1661 = vmatpush1.msra.mxu0 0.0
  %1662 = vmatprep.subr.mxu0 0.0
  %1663 = vmatpush1.msra.mxu0 0.0
  %1664 = vmatprep.subr.mxu0 0.0
  %1665 = vmatpush1.msra.mxu0 0.0
  %1666 = vmatprep.subr.mxu0 0.0
  %1667 = vmatpush1.msra.mxu0 0.0
  %1668 = vmatprep.subr.mxu0 0.0
  %1669 = vmatpush1.msra.mxu0 0.0
  %1670 = vmatprep.subr.mxu0 0.0
  %1671 = vmatpush1.msra.mxu0 0.0
  %1672 = vmatprep.subr.mxu0 0.0
  %1673 = vmatpush1.msra.mxu0 0.0
  %1674 = vmatprep.subr.mxu0 0.0
  %1675 = vmatpush1.msra.mxu0 0.0
  %1676 = vmatprep.subr.mxu0 0.0
  %1677 = vmatpush1.msra.mxu0 0.0
  %1678 = vmatprep.subr.mxu0 0.0
  %1679 = vmatpush1.msra.mxu0 0.0
  %1680 = vmatprep.subr.mxu0 0.0
  %1681 = vmatpush1.msra.mxu0 0.0
  %1682 = vmatprep.subr.mxu0 0.0
  %1683 = vmatpush1.msra.mxu0 0.0
  %1684 = vmatprep.subr.mxu0 0.0
  %1685 = vmatpush1.msra.mxu0 0.0
  %1686 = vmatprep.subr.mxu0 0.0
  %1687 = vmatpush1.msra.mxu0 0.0
  %1688 = vmatprep.subr.mxu0 0.0
  %1689 = vmatpush1.msra.mxu0 0.0
  %1690 = vmatprep.subr.mxu0 0.0
  %1691 = vmatpush1.msra.mxu0 0.0
  %1692 = vmatprep.subr.mxu0 0.0
  %1693 = vmatpush1.msra.mxu0 0.0
  %1694 = vmatprep.subr.mxu0 0.0
  %1695 = vmatpush1.msra.mxu0 0.0
  %1696 = vmatprep.subr.mxu0 0.0
  %1697 = vmatpush1.msra.mxu0 0.0
  %1698 = vmatprep.subr.mxu0 0.0
  %1699 = vmatpush1.msra.mxu0 0.0
  %1700 = vmatprep.subr.mxu0 0.0
  %1701 = vmatpush1.msra.mxu0 0.0
  %1702 = vmatprep.subr.mxu0 0.0
  %1703 = vmatpush1.msra.mxu0 0.0
  %1704 = vmatprep.mubr.f32.mxu0 0.0
  %1705 = vmatmul.mubr.f32.gmra.mrb[0].mxu0 %v1638
  %v1706 = vpop.f32.mrb[0].mxu0
  %v1707 = vadd.f32 %v65, %v1706
  %v1708 = vpop.f32.mrb[0].mxu0
  %1709 = vdwg.mxu0
  %1710 = vxpose.xlu0.b32.start [1/16] %v1038, 128
  %1711 = vxpose.xlu0.b32.cont [2/16] %v1039, 128
  %1712 = vxpose.xlu0.b32.cont [3/16] 0.0, 128
  %1713 = vxpose.xlu0.b32.cont [4/16] 0.0, 128
  %1714 = vxpose.xlu0.b32.cont [5/16] 0.0, 128
  %1715 = vxpose.xlu0.b32.cont [6/16] 0.0, 128
  %1716 = vxpose.xlu0.b32.cont [7/16] 0.0, 128
  %1717 = vxpose.xlu0.b32.cont [8/16] 0.0, 128
  %1718 = vxpose.xlu0.b32.cont [9/16] 0.0, 128
  %1719 = vxpose.xlu0.b32.cont [10/16] 0.0, 128
  %1720 = vxpose.xlu0.b32.cont [11/16] 0.0, 128
  %1721 = vxpose.xlu0.b32.cont [12/16] 0.0, 128
  %1722 = vxpose.xlu0.b32.cont [13/16] 0.0, 128
  %1723 = vxpose.xlu0.b32.cont [14/16] 0.0, 128
  %1724 = vxpose.xlu0.b32.cont [15/16] 0.0, 128
  %1725 = vxpose.xlu0.b32.end [16/16] 0.0, 128
  %v1726 = vpop.trf.xlu0
  %v1727 = vpop.trf.xlu0
  %v1728 = vpop.trf.xlu0
  %v1729 = vpop.trf.xlu0
  %v1730 = vpop.trf.xlu0
  %v1731 = vpop.trf.xlu0
  %v1732 = vpop.trf.xlu0
  %v1733 = vpop.trf.xlu0
  %v1734 = vpop.trf.xlu0
  %v1735 = vpop.trf.xlu0
  %v1736 = vpop.trf.xlu0
  %v1737 = vpop.trf.xlu0
  %v1738 = vpop.trf.xlu0
  %v1739 = vpop.trf.xlu0
  %v1740 = vpop.trf.xlu0
  %v1741 = vpop.trf.xlu0
  %1742 = vrot.lane.b32.xlu0 %v597, 96
  %v1743 = vpop.permute.xlu0 %1742
  %1744 = vrot.lane.b32.xlu0 %v602, 96
  %v1745 = vpop.permute.xlu0 %1744
  %v1749 = vsel %vm1081, %v1726, 0
  %1751 = vmatprep.subr.mxu0 0.0
  %1752 = vmatpush1.msra.mxu0 %v1743
  %1753 = vmatprep.subr.mxu0 0.0
  %1754 = vmatpush1.msra.mxu0 %v1745
  %1755 = vmatprep.subr.mxu0 0.0
  %1756 = vmatpush1.msra.mxu0 0.0
  %1757 = vmatprep.subr.mxu0 0.0
  %1758 = vmatpush1.msra.mxu0 0.0
  %1759 = vmatprep.subr.mxu0 0.0
  %1760 = vmatpush1.msra.mxu0 0.0
  %1761 = vmatprep.subr.mxu0 0.0
  %1762 = vmatpush1.msra.mxu0 0.0
  %1763 = vmatprep.subr.mxu0 0.0
  %1764 = vmatpush1.msra.mxu0 0.0
  %1765 = vmatprep.subr.mxu0 0.0
  %1766 = vmatpush1.msra.mxu0 0.0
  %1767 = vmatprep.subr.mxu0 0.0
  %1768 = vmatpush1.msra.mxu0 0.0
  %1769 = vmatprep.subr.mxu0 0.0
  %1770 = vmatpush1.msra.mxu0 0.0
  %1771 = vmatprep.subr.mxu0 0.0
  %1772 = vmatpush1.msra.mxu0 0.0
  %1773 = vmatprep.subr.mxu0 0.0
  %1774 = vmatpush1.msra.mxu0 0.0
  %1775 = vmatprep.subr.mxu0 0.0
  %1776 = vmatpush1.msra.mxu0 0.0
  %1777 = vmatprep.subr.mxu0 0.0
  %1778 = vmatpush1.msra.mxu0 0.0
  %1779 = vmatprep.subr.mxu0 0.0
  %1780 = vmatpush1.msra.mxu0 0.0
  %1781 = vmatprep.subr.mxu0 0.0
  %1782 = vmatpush1.msra.mxu0 0.0
  %1783 = vmatprep.subr.mxu0 0.0
  %1784 = vmatpush1.msra.mxu0 0.0
  %1785 = vmatprep.subr.mxu0 0.0
  %1786 = vmatpush1.msra.mxu0 0.0
  %1787 = vmatprep.subr.mxu0 0.0
  %1788 = vmatpush1.msra.mxu0 0.0
  %1789 = vmatprep.subr.mxu0 0.0
  %1790 = vmatpush1.msra.mxu0 0.0
  %1791 = vmatprep.subr.mxu0 0.0
  %1792 = vmatpush1.msra.mxu0 0.0
  %1793 = vmatprep.subr.mxu0 0.0
  %1794 = vmatpush1.msra.mxu0 0.0
  %1795 = vmatprep.subr.mxu0 0.0
  %1796 = vmatpush1.msra.mxu0 0.0
  %1797 = vmatprep.subr.mxu0 0.0
  %1798 = vmatpush1.msra.mxu0 0.0
  %1799 = vmatprep.subr.mxu0 0.0
  %1800 = vmatpush1.msra.mxu0 0.0
  %1801 = vmatprep.subr.mxu0 0.0
  %1802 = vmatpush1.msra.mxu0 0.0
  %1803 = vmatprep.subr.mxu0 0.0
  %1804 = vmatpush1.msra.mxu0 0.0
  %1805 = vmatprep.subr.mxu0 0.0
  %1806 = vmatpush1.msra.mxu0 0.0
  %1807 = vmatprep.subr.mxu0 0.0
  %1808 = vmatpush1.msra.mxu0 0.0
  %1809 = vmatprep.subr.mxu0 0.0
  %1810 = vmatpush1.msra.mxu0 0.0
  %1811 = vmatprep.subr.mxu0 0.0
  %1812 = vmatpush1.msra.mxu0 0.0
  %1813 = vmatprep.subr.mxu0 0.0
  %1814 = vmatpush1.msra.mxu0 0.0
  %1815 = vmatprep.mubr.f32.mxu0 0.0
  %1816 = vmatmul.mubr.f32.gmra.mrb[0].mxu0 %v1749
  %v1817 = vpop.f32.mrb[0].mxu0
  %v1818 = vadd.f32 %v65, %v1817
  %v1819 = vpop.f32.mrb[0].mxu0
  %1820 = vdwg.mxu0
  %1821 = vxpose.xlu0.b32.start [1/16] %v1041, 128
  %1822 = vxpose.xlu0.b32.cont [2/16] %v1042, 128
  %1823 = vxpose.xlu0.b32.cont [3/16] 0.0, 128
  %1824 = vxpose.xlu0.b32.cont [4/16] 0.0, 128
  %1825 = vxpose.xlu0.b32.cont [5/16] 0.0, 128
  %1826 = vxpose.xlu0.b32.cont [6/16] 0.0, 128
  %1827 = vxpose.xlu0.b32.cont [7/16] 0.0, 128
  %1828 = vxpose.xlu0.b32.cont [8/16] 0.0, 128
  %1829 = vxpose.xlu0.b32.cont [9/16] 0.0, 128
  %1830 = vxpose.xlu0.b32.cont [10/16] 0.0, 128
  %1831 = vxpose.xlu0.b32.cont [11/16] 0.0, 128
  %1832 = vxpose.xlu0.b32.cont [12/16] 0.0, 128
  %1833 = vxpose.xlu0.b32.cont [13/16] 0.0, 128
  %1834 = vxpose.xlu0.b32.cont [14/16] 0.0, 128
  %1835 = vxpose.xlu0.b32.cont [15/16] 0.0, 128
  %1836 = vxpose.xlu0.b32.end [16/16] 0.0, 128
  %v1837 = vpop.trf.xlu0
  %v1838 = vpop.trf.xlu0
  %v1839 = vpop.trf.xlu0
  %v1840 = vpop.trf.xlu0
  %v1841 = vpop.trf.xlu0
  %v1842 = vpop.trf.xlu0
  %v1843 = vpop.trf.xlu0
  %v1844 = vpop.trf.xlu0
  %v1845 = vpop.trf.xlu0
  %v1846 = vpop.trf.xlu0
  %v1847 = vpop.trf.xlu0
  %v1848 = vpop.trf.xlu0
  %v1849 = vpop.trf.xlu0
  %v1850 = vpop.trf.xlu0
  %v1851 = vpop.trf.xlu0
  %v1852 = vpop.trf.xlu0
  %1853 = vrot.lane.b32.xlu0 %v607, 96
  %v1854 = vpop.permute.xlu0 %1853
  %1855 = vrot.lane.b32.xlu0 %v612, 96
  %v1856 = vpop.permute.xlu0 %1855
  %v1860 = vsel %vm1081, %v1837, 0
  %1862 = vmatprep.subr.mxu0 0.0
  %1863 = vmatpush1.msra.mxu0 %v1854
  %1864 = vmatprep.subr.mxu0 0.0
  %1865 = vmatpush1.msra.mxu0 %v1856
  %1866 = vmatprep.subr.mxu0 0.0
  %1867 = vmatpush1.msra.mxu0 0.0
  %1868 = vmatprep.subr.mxu0 0.0
  %1869 = vmatpush1.msra.mxu0 0.0
  %1870 = vmatprep.subr.mxu0 0.0
  %1871 = vmatpush1.msra.mxu0 0.0
  %1872 = vmatprep.subr.mxu0 0.0
  %1873 = vmatpush1.msra.mxu0 0.0
  %1874 = vmatprep.subr.mxu0 0.0
  %1875 = vmatpush1.msra.mxu0 0.0
  %1876 = vmatprep.subr.mxu0 0.0
  %1877 = vmatpush1.msra.mxu0 0.0
  %1878 = vmatprep.subr.mxu0 0.0
  %1879 = vmatpush1.msra.mxu0 0.0
  %1880 = vmatprep.subr.mxu0 0.0
  %1881 = vmatpush1.msra.mxu0 0.0
  %1882 = vmatprep.subr.mxu0 0.0
  %1883 = vmatpush1.msra.mxu0 0.0
  %1884 = vmatprep.subr.mxu0 0.0
  %1885 = vmatpush1.msra.mxu0 0.0
  %1886 = vmatprep.subr.mxu0 0.0
  %1887 = vmatpush1.msra.mxu0 0.0
  %1888 = vmatprep.subr.mxu0 0.0
  %1889 = vmatpush1.msra.mxu0 0.0
  %1890 = vmatprep.subr.mxu0 0.0
  %1891 = vmatpush1.msra.mxu0 0.0
  %1892 = vmatprep.subr.mxu0 0.0
  %1893 = vmatpush1.msra.mxu0 0.0
  %1894 = vmatprep.subr.mxu0 0.0
  %1895 = vmatpush1.msra.mxu0 0.0
  %1896 = vmatprep.subr.mxu0 0.0
  %1897 = vmatpush1.msra.mxu0 0.0
  %1898 = vmatprep.subr.mxu0 0.0
  %1899 = vmatpush1.msra.mxu0 0.0
  %1900 = vmatprep.subr.mxu0 0.0
  %1901 = vmatpush1.msra.mxu0 0.0
  %1902 = vmatprep.subr.mxu0 0.0
  %1903 = vmatpush1.msra.mxu0 0.0
  %1904 = vmatprep.subr.mxu0 0.0
  %1905 = vmatpush1.msra.mxu0 0.0
  %1906 = vmatprep.subr.mxu0 0.0
  %1907 = vmatpush1.msra.mxu0 0.0
  %1908 = vmatprep.subr.mxu0 0.0
  %1909 = vmatpush1.msra.mxu0 0.0
  %1910 = vmatprep.subr.mxu0 0.0
  %1911 = vmatpush1.msra.mxu0 0.0
  %1912 = vmatprep.subr.mxu0 0.0
  %1913 = vmatpush1.msra.mxu0 0.0
  %1914 = vmatprep.subr.mxu0 0.0
  %1915 = vmatpush1.msra.mxu0 0.0
  %1916 = vmatprep.subr.mxu0 0.0
  %1917 = vmatpush1.msra.mxu0 0.0
  %1918 = vmatprep.subr.mxu0 0.0
  %1919 = vmatpush1.msra.mxu0 0.0
  %1920 = vmatprep.subr.mxu0 0.0
  %1921 = vmatpush1.msra.mxu0 0.0
  %1922 = vmatprep.subr.mxu0 0.0
  %1923 = vmatpush1.msra.mxu0 0.0
  %1924 = vmatprep.subr.mxu0 0.0
  %1925 = vmatpush1.msra.mxu0 0.0
  %1926 = vmatprep.mubr.f32.mxu0 0.0
  %1927 = vmatmul.mubr.f32.gmra.mrb[0].mxu0 %v1860
  %v1928 = vpop.f32.mrb[0].mxu0
  %v1929 = vadd.f32 %v65, %v1928
  %v1930 = vpop.f32.mrb[0].mxu0
  %1931 = vdwg.mxu0
  %vm1932 = vcmask 257024
  %v1933 = vsel %vm1932, %v1152, 0.0
  %1934 = vadd.xlane.f32.xlu0 %v1933
  %v1935 = vpop.xlane.xlu0 %1934
  %v1936 = vsel %vm1932, %v1263, 0.0
  %1937 = vadd.xlane.f32.xlu0 %v1936
  %v1938 = vpop.xlane.xlu0 %1937
  %v1939 = vsel %vm1932, %v1374, 0.0
  %1940 = vadd.xlane.f32.xlu0 %v1939
  %v1941 = vpop.xlane.xlu0 %1940
  %v1942 = vsel %vm1932, %v1485, 0.0
  %1943 = vadd.xlane.f32.xlu0 %v1942
  %v1944 = vpop.xlane.xlu0 %1943
  %v1945 = vsel %vm1932, %v1596, 0.0
  %1946 = vadd.xlane.f32.xlu0 %v1945
  %v1947 = vpop.xlane.xlu0 %1946
  %v1948 = vsel %vm1932, %v1707, 0.0
  %1949 = vadd.xlane.f32.xlu0 %v1948
  %v1950 = vpop.xlane.xlu0 %1949
  %v1951 = vsel %vm1932, %v1818, 0.0
  %1952 = vadd.xlane.f32.xlu0 %v1951
  %v1953 = vpop.xlane.xlu0 %1952
  %v1954 = vsel %vm1932, %v1929, 0.0
  %1955 = vadd.xlane.f32.xlu0 %v1954
  %v1956 = vpop.xlane.xlu0 %1955
  %v1957 = vrcp.pop 32.0
  %v1958 = vmul.f32 %v1935, %v1957
  %v1959 = vmul.f32 %v1938, %v1957
  %v1960 = vmul.f32 %v1941, %v1957
  %v1961 = vmul.f32 %v1944, %v1957
  %v1962 = vmul.f32 %v1947, %v1957
  %v1963 = vmul.f32 %v1950, %v1957
  %v1964 = vmul.f32 %v1953, %v1957
  %v1965 = vmul.f32 %v1956, %v1957
  %v1966 = vsub.f32 %v1152, %v1958
  %v1967 = vsub.f32 %v1263, %v1959
  %v1968 = vsub.f32 %v1374, %v1960
  %v1969 = vsub.f32 %v1485, %v1961
  %v1970 = vsub.f32 %v1596, %v1962
  %v1971 = vsub.f32 %v1707, %v1963
  %v1972 = vsub.f32 %v1818, %v1964
  %v1973 = vsub.f32 %v1929, %v1965
  %v1974 = vmul.f32 %v1966, %v1966
  %v1975 = vmul.f32 %v1967, %v1967
  %v1976 = vmul.f32 %v1968, %v1968
  %v1977 = vmul.f32 %v1969, %v1969
  %v1978 = vmul.f32 %v1970, %v1970
  %v1979 = vmul.f32 %v1971, %v1971
  %v1980 = vmul.f32 %v1972, %v1972
  %v1981 = vmul.f32 %v1973, %v1973
  %v1982 = vsel %vm1932, %v1974, 0.0
  %1983 = vadd.xlane.f32.xlu0 %v1982
  %v1984 = vpop.xlane.xlu0 %1983
  %v1985 = vsel %vm1932, %v1975, 0.0
  %1986 = vadd.xlane.f32.xlu0 %v1985
  %v1987 = vpop.xlane.xlu0 %1986
  %v1988 = vsel %vm1932, %v1976, 0.0
  %1989 = vadd.xlane.f32.xlu0 %v1988
  %v1990 = vpop.xlane.xlu0 %1989
  %v1991 = vsel %vm1932, %v1977, 0.0
  %1992 = vadd.xlane.f32.xlu0 %v1991
  %v1993 = vpop.xlane.xlu0 %1992
  %v1994 = vsel %vm1932, %v1978, 0.0
  %1995 = vadd.xlane.f32.xlu0 %v1994
  %v1996 = vpop.xlane.xlu0 %1995
  %v1997 = vsel %vm1932, %v1979, 0.0
  %1998 = vadd.xlane.f32.xlu0 %v1997
  %v1999 = vpop.xlane.xlu0 %1998
  %v2000 = vsel %vm1932, %v1980, 0.0
  %2001 = vadd.xlane.f32.xlu0 %v2000
  %v2002 = vpop.xlane.xlu0 %2001
  %v2003 = vsel %vm1932, %v1981, 0.0
  %2004 = vadd.xlane.f32.xlu0 %v2003
  %v2005 = vpop.xlane.xlu0 %2004
  %v2006 = vmul.f32 %v1984, %v1957
  %v2007 = vmul.f32 %v1987, %v1957
  %v2008 = vmul.f32 %v1990, %v1957
  %v2009 = vmul.f32 %v1993, %v1957
  %v2010 = vmul.f32 %v1996, %v1957
  %v2011 = vmul.f32 %v1999, %v1957
  %v2012 = vmul.f32 %v2002, %v1957
  %v2013 = vmul.f32 %v2005, %v1957
  %v2014 = vadd.f32 %v2006, 1e-05
  %v2015 = vadd.f32 %v2007, 1e-05
  %v2016 = vadd.f32 %v2008, 1e-05
  %v2017 = vadd.f32 %v2009, 1e-05
  %v2018 = vadd.f32 %v2010, 1e-05
  %v2019 = vadd.f32 %v2011, 1e-05
  %v2020 = vadd.f32 %v2012, 1e-05
  %v2021 = vadd.f32 %v2013, 1e-05
  %v2022 = vrsqrt.pop %v2014
  %v2023 = vrsqrt.pop %v2015
  %v2024 = vrsqrt.pop %v2016
  %v2025 = vrsqrt.pop %v2017
  %v2026 = vrsqrt.pop %v2018
  %v2027 = vrsqrt.pop %v2019
  %v2028 = vrsqrt.pop %v2020
  %v2029 = vrsqrt.pop %v2021
  %v2030 = vmul.f32 %v1966, %v2022
  %v2031 = vmul.f32 %v1967, %v2023
  %v2032 = vmul.f32 %v1968, %v2024
  %v2033 = vmul.f32 %v1969, %v2025
  %v2034 = vmul.f32 %v1970, %v2026
  %v2035 = vmul.f32 %v1971, %v2027
  %v2036 = vmul.f32 %v1972, %v2028
  %v2037 = vmul.f32 %v1973, %v2029
  %v2038 = vlaneseq
  %v2039 = vshrl.u32 %v2038, 7
  %v2040 = vsub.s32 0, %v2039
  %v2041 = vrot.slane %v71, %v2040
  %v2042 = vmul.f32 %v2030, %v2041
  %v2043 = vmul.f32 %v2031, %v2041
  %v2044 = vmul.f32 %v2032, %v2041
  %v2045 = vmul.f32 %v2033, %v2041
  %v2046 = vmul.f32 %v2034, %v2041
  %v2047 = vmul.f32 %v2035, %v2041
  %v2048 = vmul.f32 %v2036, %v2041
  %v2049 = vmul.f32 %v2037, %v2041
  %v2050 = vlaneseq
  %v2051 = vshrl.u32 %v2050, 7
  %v2052 = vsub.s32 1, %v2051
  %v2053 = vrot.slane %v71, %v2052
  %v2054 = vadd.f32 %v2042, %v2053
  %v2055 = vadd.f32 %v2043, %v2053
  %v2056 = vadd.f32 %v2044, %v2053
  %v2057 = vadd.f32 %v2045, %v2053
  %v2058 = vadd.f32 %v2046, %v2053
  %v2059 = vadd.f32 %v2047, %v2053
  %v2060 = vadd.f32 %v2048, %v2053
  %v2061 = vadd.f32 %v2049, %v2053
  %v2062 = vlaneseq
  %v2063 = vshrl.u32 %v2062, 7
  %v2064 = vsub.s32 7, %v2063
  %v2065 = vrot.slane %v70, %v2064
  %v2074 = vcombine.low %v2054, %v2055
  %v2075 = vcombine.low %v2056, %v2057
  %v2076 = vcombine.low %v2058, %v2059
  %v2077 = vcombine.low %v2060, %v2061
  %vm2082 = vcmask 1040384
  %v2083 = vrot.slane %v66, 7
  %v2084 = vrot.slane %v67, 7
  %v2085 = vsel %vm2082, %v2083, %v2084
  %v2086 = vrot.slane %v68, 7
  %v2087 = vsel %vm2082, %v2084, %v2086
  %v2088 = vrot.slane %v69, 7
  %v2089 = vsel %vm2082, %v2086, %v2088
  %v2090 = vrot.slane %v70, 7
  %v2091 = vsel %vm2082, %v2088, %v2090
  %v2096 = vsel %vm615, %v2074, 0
  %v2098 = vsel %vm615, %v2075, 0
  %v2100 = vsel %vm615, %v2076, 0
  %v2102 = vsel %vm615, %v2077, 0
  %2104 = vmatprep.subr.mxu0 0.0
  %2105 = vmatpush1.msra.mxu0 %v2085
  %2106 = vmatprep.subr.mxu0 0.0
  %2107 = vmatpush1.msra.mxu0 %v2087
  %2108 = vmatprep.subr.mxu0 0.0
  %2109 = vmatpush1.msra.mxu0 %v2089
  %2110 = vmatprep.subr.mxu0 0.0
  %2111 = vmatpush1.msra.mxu0 %v2091
  %2112 = vmatprep.subr.mxu0 0.0
  %2113 = vmatpush1.msra.mxu0 0.0
  %2114 = vmatprep.subr.mxu0 0.0
  %2115 = vmatpush1.msra.mxu0 0.0
  %2116 = vmatprep.subr.mxu0 0.0
  %2117 = vmatpush1.msra.mxu0 0.0
  %2118 = vmatprep.subr.mxu0 0.0
  %2119 = vmatpush1.msra.mxu0 0.0
  %2120 = vmatprep.subr.mxu0 0.0
  %2121 = vmatpush1.msra.mxu0 0.0
  %2122 = vmatprep.subr.mxu0 0.0
  %2123 = vmatpush1.msra.mxu0 0.0
  %2124 = vmatprep.subr.mxu0 0.0
  %2125 = vmatpush1.msra.mxu0 0.0
  %2126 = vmatprep.subr.mxu0 0.0
  %2127 = vmatpush1.msra.mxu0 0.0
  %2128 = vmatprep.subr.mxu0 0.0
  %2129 = vmatpush1.msra.mxu0 0.0
  %2130 = vmatprep.subr.mxu0 0.0
  %2131 = vmatpush1.msra.mxu0 0.0
  %2132 = vmatprep.subr.mxu0 0.0
  %2133 = vmatpush1.msra.mxu0 0.0
  %2134 = vmatprep.subr.mxu0 0.0
  %2135 = vmatpush1.msra.mxu0 0.0
  %2136 = vmatprep.subr.mxu0 0.0
  %2137 = vmatpush1.msra.mxu0 0.0
  %2138 = vmatprep.subr.mxu0 0.0
  %2139 = vmatpush1.msra.mxu0 0.0
  %2140 = vmatprep.subr.mxu0 0.0
  %2141 = vmatpush1.msra.mxu0 0.0
  %2142 = vmatprep.subr.mxu0 0.0
  %2143 = vmatpush1.msra.mxu0 0.0
  %2144 = vmatprep.subr.mxu0 0.0
  %2145 = vmatpush1.msra.mxu0 0.0
  %2146 = vmatprep.subr.mxu0 0.0
  %2147 = vmatpush1.msra.mxu0 0.0
  %2148 = vmatprep.subr.mxu0 0.0
  %2149 = vmatpush1.msra.mxu0 0.0
  %2150 = vmatprep.subr.mxu0 0.0
  %2151 = vmatpush1.msra.mxu0 0.0
  %2152 = vmatprep.subr.mxu0 0.0
  %2153 = vmatpush1.msra.mxu0 0.0
  %2154 = vmatprep.subr.mxu0 0.0
  %2155 = vmatpush1.msra.mxu0 0.0
  %2156 = vmatprep.subr.mxu0 0.0
  %2157 = vmatpush1.msra.mxu0 0.0
  %2158 = vmatprep.subr.mxu0 0.0
  %2159 = vmatpush1.msra.mxu0 0.0
  %2160 = vmatprep.subr.mxu0 0.0
  %2161 = vmatpush1.msra.mxu0 0.0
  %2162 = vmatprep.subr.mxu0 0.0
  %2163 = vmatpush1.msra.mxu0 0.0
  %2164 = vmatprep.subr.mxu0 0.0
  %2165 = vmatpush1.msra.mxu0 0.0
  %2166 = vmatprep.subr.mxu0 0.0
  %2167 = vmatpush1.msra.mxu0 0.0
  %2168 = vmatprep.mubr.f32.mxu0 0.0
  %2169 = vmatmul.mubr.f32.gmra.mrb[0].mxu0 %v2096
  %v2170 = vpop.f32.mrb[0].mxu0
  %v2171 = vadd.f32 %v2065, %v2170
  %v2172 = vpop.f32.mrb[0].mxu0
  %2173 = vmatprep.mubr.f32.mxu0 0.0
  %2174 = vmatmul.mubr.f32.gmra.mrb[0].mxu0 %v2098
  %v2175 = vpop.f32.mrb[0].mxu0
  %v2176 = vadd.f32 %v2065, %v2175
  %v2177 = vpop.f32.mrb[0].mxu0
  %2178 = vmatprep.mubr.f32.mxu0 0.0
  %2179 = vmatmul.mubr.f32.gmra.mrb[0].mxu0 %v2100
  %v2180 = vpop.f32.mrb[0].mxu0
  %v2181 = vadd.f32 %v2065, %v2180
  %v2182 = vpop.f32.mrb[0].mxu0
  %2183 = vmatprep.mubr.f32.mxu0 0.0
  %2184 = vmatmul.mubr.f32.gmra.mrb[0].mxu0 %v2102
  %v2185 = vpop.f32.mrb[0].mxu0
  %v2186 = vadd.f32 %v2065, %v2185
  %v2187 = vpop.f32.mrb[0].mxu0
  %2188 = vdwg.mxu0
  %v2189 = vmax.f32 %v2171, 0.0
  %v2190 = vmax.f32 %v2176, 0.0
  %v2191 = vmax.f32 %v2181, 0.0
  %v2192 = vmax.f32 %v2186, 0.0
  %v2197 = vcombine.high %v2189, %v2189
  %v2198 = vcombine.high %v2190, %v2190
  %v2199 = vcombine.high %v2191, %v2191
  %v2200 = vcombine.high %v2192, %v2192
  %v2205 = vadd.f32 %v2189, %v2054
  %v2206 = vadd.f32 %v2197, %v2055
  %v2207 = vadd.f32 %v2190, %v2056
  %v2208 = vadd.f32 %v2198, %v2057
  %v2209 = vadd.f32 %v2191, %v2058
  %v2210 = vadd.f32 %v2199, %v2059
  %v2211 = vadd.f32 %v2192, %v2060
  %v2212 = vadd.f32 %v2200, %v2061
  %v2213 = vsel %vm1932, %v2205, 0.0
  %2214 = vadd.xlane.f32.xlu0 %v2213
  %v2215 = vpop.xlane.xlu0 %2214
  %v2216 = vsel %vm1932, %v2206, 0.0
  %2217 = vadd.xlane.f32.xlu0 %v2216
  %v2218 = vpop.xlane.xlu0 %2217
  %v2219 = vsel %vm1932, %v2207, 0.0
  %2220 = vadd.xlane.f32.xlu0 %v2219
  %v2221 = vpop.xlane.xlu0 %2220
  %v2222 = vsel %vm1932, %v2208, 0.0
  %2223 = vadd.xlane.f32.xlu0 %v2222
  %v2224 = vpop.xlane.xlu0 %2223
  %v2225 = vsel %vm1932, %v2209, 0.0
  %2226 = vadd.xlane.f32.xlu0 %v2225
  %v2227 = vpop.xlane.xlu0 %2226
  %v2228 = vsel %vm1932, %v2210, 0.0
  %2229 = vadd.xlane.f32.xlu0 %v2228
  %v2230 = vpop.xlane.xlu0 %2229
  %v2231 = vsel %vm1932, %v2211, 0.0
  %2232 = vadd.xlane.f32.xlu0 %v2231
  %v2233 = vpop.xlane.xlu0 %2232
  %v2234 = vsel %vm1932, %v2212, 0.0
  %2235 = vadd.xlane.f32.xlu0 %v2234
  %v2236 = vpop.xlane.xlu0 %2235
  %v2237 = vmul.f32 %v2215, %v1957
  %v2238 = vmul.f32 %v2218, %v1957
  %v2239 = vmul.f32 %v2221, %v1957
  %v2240 = vmul.f32 %v2224, %v1957
  %v2241 = vmul.f32 %v2227, %v1957
  %v2242 = vmul.f32 %v2230, %v1957
  %v2243 = vmul.f32 %v2233, %v1957
  %v2244 = vmul.f32 %v2236, %v1957
  %v2245 = vsub.f32 %v2205, %v2237
  %v2246 = vsub.f32 %v2206, %v2238
  %v2247 = vsub.f32 %v2207, %v2239
  %v2248 = vsub.f32 %v2208, %v2240
  %v2249 = vsub.f32 %v2209, %v2241
  %v2250 = vsub.f32 %v2210, %v2242
  %v2251 = vsub.f32 %v2211, %v2243
  %v2252 = vsub.f32 %v2212, %v2244
  %v2253 = vmul.f32 %v2245, %v2245
  %v2254 = vmul.f32 %v2246, %v2246
  %v2255 = vmul.f32 %v2247, %v2247
  %v2256 = vmul.f32 %v2248, %v2248
  %v2257 = vmul.f32 %v2249, %v2249
  %v2258 = vmul.f32 %v2250, %v2250
  %v2259 = vmul.f32 %v2251, %v2251
  %v2260 = vmul.f32 %v2252, %v2252
  %v2261 = vsel %vm1932, %v2253, 0.0
  %2262 = vadd.xlane.f32.xlu0 %v2261
  %v2263 = vpop.xlane.xlu0 %2262
  %v2264 = vsel %vm1932, %v2254, 0.0
  %2265 = vadd.xlane.f32.xlu0 %v2264
  %v2266 = vpop.xlane.xlu0 %2265
  %v2267 = vsel %vm1932, %v2255, 0.0
  %2268 = vadd.xlane.f32.xlu0 %v2267
  %v2269 = vpop.xlane.xlu0 %2268
  %v2270 = vsel %vm1932, %v2256, 0.0
  %2271 = vadd.xlane.f32.xlu0 %v2270
  %v2272 = vpop.xlane.xlu0 %2271
  %v2273 = vsel %vm1932, %v2257, 0.0
  %2274 = vadd.xlane.f32.xlu0 %v2273
  %v2275 = vpop.xlane.xlu0 %2274
  %v2276 = vsel %vm1932, %v2258, 0.0
  %2277 = vadd.xlane.f32.xlu0 %v2276
  %v2278 = vpop.xlane.xlu0 %2277
  %v2279 = vsel %vm1932, %v2259, 0.0
  %2280 = vadd.xlane.f32.xlu0 %v2279
  %v2281 = vpop.xlane.xlu0 %2280
  %v2282 = vsel %vm1932, %v2260, 0.0
  %2283 = vadd.xlane.f32.xlu0 %v2282
  %v2284 = vpop.xlane.xlu0 %2283
  %v2285 = vmul.f32 %v2263, %v1957
  %v2286 = vmul.f32 %v2266, %v1957
  %v2287 = vmul.f32 %v2269, %v1957
  %v2288 = vmul.f32 %v2272, %v1957
  %v2289 = vmul.f32 %v2275, %v1957
  %v2290 = vmul.f32 %v2278, %v1957
  %v2291 = vmul.f32 %v2281, %v1957
  %v2292 = vmul.f32 %v2284, %v1957
  %v2293 = vadd.f32 %v2285, 1e-05
  %v2294 = vadd.f32 %v2286, 1e-05
  %v2295 = vadd.f32 %v2287, 1e-05
  %v2296 = vadd.f32 %v2288, 1e-05
  %v2297 = vadd.f32 %v2289, 1e-05
  %v2298 = vadd.f32 %v2290, 1e-05
  %v2299 = vadd.f32 %v2291, 1e-05
  %v2300 = vadd.f32 %v2292, 1e-05
  %v2301 = vrsqrt.pop %v2293
  %v2302 = vrsqrt.pop %v2294
  %v2303 = vrsqrt.pop %v2295
  %v2304 = vrsqrt.pop %v2296
  %v2305 = vrsqrt.pop %v2297
  %v2306 = vrsqrt.pop %v2298
  %v2307 = vrsqrt.pop %v2299
  %v2308 = vrsqrt.pop %v2300
  %v2309 = vmul.f32 %v2245, %v2301
  %v2310 = vmul.f32 %v2246, %v2302
  %v2311 = vmul.f32 %v2247, %v2303
  %v2312 = vmul.f32 %v2248, %v2304
  %v2313 = vmul.f32 %v2249, %v2305
  %v2314 = vmul.f32 %v2250, %v2306
  %v2315 = vmul.f32 %v2251, %v2307
  %v2316 = vmul.f32 %v2252, %v2308
  %v2317 = vlaneseq
  %v2318 = vshrl.u32 %v2317, 7
  %v2319 = vsub.s32 2, %v2318
  %v2320 = vrot.slane %v71, %v2319
  %v2321 = vmul.f32 %v2309, %v2320
  %v2322 = vmul.f32 %v2310, %v2320
  %v2323 = vmul.f32 %v2311, %v2320
  %v2324 = vmul.f32 %v2312, %v2320
  %v2325 = vmul.f32 %v2313, %v2320
  %v2326 = vmul.f32 %v2314, %v2320
  %v2327 = vmul.f32 %v2315, %v2320
  %v2328 = vmul.f32 %v2316, %v2320
  %v2329 = vlaneseq
  %v2330 = vshrl.u32 %v2329, 7
  %v2331 = vsub.s32 3, %v2330
  %v2332 = vrot.slane %v71, %v2331
  %v2333 = vadd.f32 %v2321, %v2332
  %v2334 = vadd.f32 %v2322, %v2332
  %v2335 = vadd.f32 %v2323, %v2332
  %v2336 = vadd.f32 %v2324, %v2332
  %v2337 = vadd.f32 %v2325, %v2332
  %v2338 = vadd.f32 %v2326, %v2332
  %v2339 = vadd.f32 %v2327, %v2332
  %v2340 = vadd.f32 %v2328, %v2332
  %v2341 = vlaneseq
  %v2342 = vshrl.u32 %v2341, 7
  %v2343 = vsub.s32 4, %v2342
  %v2344 = vrot.slane %v75, %v2343
  %v2353 = vcombine.low %v2333, %v2334
  %v2354 = vcombine.low %v2335, %v2336
  %v2355 = vcombine.low %v2337, %v2338
  %v2356 = vcombine.low %v2339, %v2340
  %v2362 = vrot.slane %v71, 4
  %v2363 = vrot.slane %v72, 4
  %v2364 = vsel %vm230, %v2362, %v2363
  %v2365 = vrot.slane %v73, 4
  %v2366 = vsel %vm230, %v2363, %v2365
  %v2367 = vrot.slane %v74, 4
  %v2368 = vsel %vm230, %v2365, %v2367
  %v2369 = vrot.slane %v75, 4
  %v2370 = vsel %vm230, %v2367, %v2369
  %v2375 = vsel %vm615, %v2353, 0
  %v2377 = vsel %vm615, %v2354, 0
  %v2379 = vsel %vm615, %v2355, 0
  %v2381 = vsel %vm615, %v2356, 0
  %2383 = vmatprep.subr.mxu0 0.0
  %2384 = vmatpush1.msra.mxu0 %v2364
  %2385 = vmatprep.subr.mxu0 0.0
  %2386 = vmatpush1.msra.mxu0 %v2366
  %2387 = vmatprep.subr.mxu0 0.0
  %2388 = vmatpush1.msra.mxu0 %v2368
  %2389 = vmatprep.subr.mxu0 0.0
  %2390 = vmatpush1.msra.mxu0 %v2370
  %2391 = vmatprep.subr.mxu0 0.0
  %2392 = vmatpush1.msra.mxu0 0.0
  %2393 = vmatprep.subr.mxu0 0.0
  %2394 = vmatpush1.msra.mxu0 0.0
  %2395 = vmatprep.subr.mxu0 0.0
  %2396 = vmatpush1.msra.mxu0 0.0
  %2397 = vmatprep.subr.mxu0 0.0
  %2398 = vmatpush1.msra.mxu0 0.0
  %2399 = vmatprep.subr.mxu0 0.0
  %2400 = vmatpush1.msra.mxu0 0.0
  %2401 = vmatprep.subr.mxu0 0.0
  %2402 = vmatpush1.msra.mxu0 0.0
  %2403 = vmatprep.subr.mxu0 0.0
  %2404 = vmatpush1.msra.mxu0 0.0
  %2405 = vmatprep.subr.mxu0 0.0
  %2406 = vmatpush1.msra.mxu0 0.0
  %2407 = vmatprep.subr.mxu0 0.0
  %2408 = vmatpush1.msra.mxu0 0.0
  %2409 = vmatprep.subr.mxu0 0.0
  %2410 = vmatpush1.msra.mxu0 0.0
  %2411 = vmatprep.subr.mxu0 0.0
  %2412 = vmatpush1.msra.mxu0 0.0
  %2413 = vmatprep.subr.mxu0 0.0
  %2414 = vmatpush1.msra.mxu0 0.0
  %2415 = vmatprep.subr.mxu0 0.0
  %2416 = vmatpush1.msra.mxu0 0.0
  %2417 = vmatprep.subr.mxu0 0.0
  %2418 = vmatpush1.msra.mxu0 0.0
  %2419 = vmatprep.subr.mxu0 0.0
  %2420 = vmatpush1.msra.mxu0 0.0
  %2421 = vmatprep.subr.mxu0 0.0
  %2422 = vmatpush1.msra.mxu0 0.0
  %2423 = vmatprep.subr.mxu0 0.0
  %2424 = vmatpush1.msra.mxu0 0.0
  %2425 = vmatprep.subr.mxu0 0.0
  %2426 = vmatpush1.msra.mxu0 0.0
  %2427 = vmatprep.subr.mxu0 0.0
  %2428 = vmatpush1.msra.mxu0 0.0
  %2429 = vmatprep.subr.mxu0 0.0
  %2430 = vmatpush1.msra.mxu0 0.0
  %2431 = vmatprep.subr.mxu0 0.0
  %2432 = vmatpush1.msra.mxu0 0.0
  %2433 = vmatprep.subr.mxu0 0.0
  %2434 = vmatpush1.msra.mxu0 0.0
  %2435 = vmatprep.subr.mxu0 0.0
  %2436 = vmatpush1.msra.mxu0 0.0
  %2437 = vmatprep.subr.mxu0 0.0
  %2438 = vmatpush1.msra.mxu0 0.0
  %2439 = vmatprep.subr.mxu0 0.0
  %2440 = vmatpush1.msra.mxu0 0.0
  %2441 = vmatprep.subr.mxu0 0.0
  %2442 = vmatpush1.msra.mxu0 0.0
  %2443 = vmatprep.subr.mxu0 0.0
  %2444 = vmatpush1.msra.mxu0 0.0
  %2445 = vmatprep.subr.mxu0 0.0
  %2446 = vmatpush1.msra.mxu0 0.0
  %2447 = vmatprep.mubr.f32.mxu0 0.0
  %2448 = vmatmul.mubr.f32.gmra.mrb[0].mxu0 %v2375
  %v2449 = vpop.f32.mrb[0].mxu0
  %v2450 = vadd.f32 %v2344, %v2449
  %v2451 = vpop.f32.mrb[0].mxu0
  %2452 = vmatprep.mubr.f32.mxu0 0.0
  %2453 = vmatmul.mubr.f32.gmra.mrb[0].mxu0 %v2377
  %v2454 = vpop.f32.mrb[0].mxu0
  %v2455 = vadd.f32 %v2344, %v2454
  %v2456 = vpop.f32.mrb[0].mxu0
  %2457 = vmatprep.mubr.f32.mxu0 0.0
  %2458 = vmatmul.mubr.f32.gmra.mrb[0].mxu0 %v2379
  %v2459 = vpop.f32.mrb[0].mxu0
  %v2460 = vadd.f32 %v2344, %v2459
  %v2461 = vpop.f32.mrb[0].mxu0
  %2462 = vmatprep.mubr.f32.mxu0 0.0
  %2463 = vmatmul.mubr.f32.gmra.mrb[0].mxu0 %v2381
  %v2464 = vpop.f32.mrb[0].mxu0
  %v2465 = vadd.f32 %v2344, %v2464
  %v2466 = vpop.f32.mrb[0].mxu0
  %2467 = vdwg.mxu0
  %v2472 = vcombine.high %v2450, %v2450
  %v2473 = vcombine.high %v2455, %v2455
  %v2474 = vcombine.high %v2460, %v2460
  %v2475 = vcombine.high %v2465, %v2465
  %v2480 = vmax.f32 %v2450, 0.0
  %v2481 = vmax.f32 %v2472, 0.0
  %v2482 = vmax.f32 %v2455, 0.0
  %v2483 = vmax.f32 %v2473, 0.0
  %v2484 = vmax.f32 %v2460, 0.0
  %v2485 = vmax.f32 %v2474, 0.0
  %v2486 = vmax.f32 %v2465, 0.0
  %v2487 = vmax.f32 %v2475, 0.0
  %v2488 = vsub.f32 0.0, %v2450
  %v2489 = vsub.f32 0.0, %v2472
  %v2490 = vsub.f32 0.0, %v2455
  %v2491 = vsub.f32 0.0, %v2473
  %v2492 = vsub.f32 0.0, %v2460
  %v2493 = vsub.f32 0.0, %v2474
  %v2494 = vsub.f32 0.0, %v2465
  %v2495 = vsub.f32 0.0, %v2475
  %v2496 = vmul.f32 %v2488, 1.442695
  %v2497 = vpow.pop %v2496
  %v2498 = vmul.f32 %v2489, 1.442695
  %v2499 = vpow.pop %v2498
  %v2500 = vmul.f32 %v2490, 1.442695
  %v2501 = vpow.pop %v2500
  %v2502 = vmul.f32 %v2491, 1.442695
  %v2503 = vpow.pop %v2502
  %v2504 = vmul.f32 %v2492, 1.442695
  %v2505 = vpow.pop %v2504
  %v2506 = vmul.f32 %v2493, 1.442695
  %v2507 = vpow.pop %v2506
  %v2508 = vmul.f32 %v2494, 1.442695
  %v2509 = vpow.pop %v2508
  %v2510 = vmul.f32 %v2495, 1.442695
  %v2511 = vpow.pop %v2510
  %v2512 = vadd.f32 %v2497, 1.0
  %v2513 = vadd.f32 %v2499, 1.0
  %v2514 = vadd.f32 %v2501, 1.0
  %v2515 = vadd.f32 %v2503, 1.0
  %v2516 = vadd.f32 %v2505, 1.0
  %v2517 = vadd.f32 %v2507, 1.0
  %v2518 = vadd.f32 %v2509, 1.0
  %v2519 = vadd.f32 %v2511, 1.0
  %v2520 = vrcp.pop %v2512
  %v2521 = vrcp.pop %v2513
  %v2522 = vrcp.pop %v2514
  %v2523 = vrcp.pop %v2515
  %v2524 = vrcp.pop %v2516
  %v2525 = vrcp.pop %v2517
  %v2526 = vrcp.pop %v2518
  %v2527 = vrcp.pop %v2519
  %2536 = vset.pattern.permute.xlu0 8
  %2537 = vperm.xlu0 %2536, %v2520
  %v2538 = vpop.permute.xlu0 %2537
  %2539 = vset.pattern.permute.xlu0 8
  %2540 = vperm.xlu0 %2539, %v2521
  %v2541 = vpop.permute.xlu0 %2540
  %2542 = vset.pattern.permute.xlu0 8
  %2543 = vperm.xlu0 %2542, %v2522
  %v2544 = vpop.permute.xlu0 %2543
  %2545 = vset.pattern.permute.xlu0 8
  %2546 = vperm.xlu0 %2545, %v2523
  %v2547 = vpop.permute.xlu0 %2546
  %2548 = vset.pattern.permute.xlu0 8
  %2549 = vperm.xlu0 %2548, %v2524
  %v2550 = vpop.permute.xlu0 %2549
  %2551 = vset.pattern.permute.xlu0 8
  %2552 = vperm.xlu0 %2551, %v2525
  %v2553 = vpop.permute.xlu0 %2552
  %2554 = vset.pattern.permute.xlu0 8
  %2555 = vperm.xlu0 %2554, %v2526
  %v2556 = vpop.permute.xlu0 %2555
  %2557 = vset.pattern.permute.xlu0 8
  %2558 = vperm.xlu0 %2557, %v2527
  %v2559 = vpop.permute.xlu0 %2558
  %v2560 = vlaneseq
  %v2561 = vand.u32 %v2560, 127
  %v2562 = vlaneseq
  %v2563 = vshrl.u32 %v2562, 7
  %v2564 = vsub.s32 %v2561, %v2563
  %v2565 = vrot.slane %v2538, %v2564
  %v2566 = vlaneseq
  %v2567 = vshrl.u32 %v2566, 7
  %v2568 = vsub.s32 %v2561, %v2567
  %v2569 = vrot.slane %v2541, %v2568
  %v2570 = vlaneseq
  %v2571 = vshrl.u32 %v2570, 7
  %v2572 = vsub.s32 %v2561, %v2571
  %v2573 = vrot.slane %v2544, %v2572
  %v2574 = vlaneseq
  %v2575 = vshrl.u32 %v2574, 7
  %v2576 = vsub.s32 %v2561, %v2575
  %v2577 = vrot.slane %v2547, %v2576
  %v2578 = vlaneseq
  %v2579 = vshrl.u32 %v2578, 7
  %v2580 = vsub.s32 %v2561, %v2579
  %v2581 = vrot.slane %v2550, %v2580
  %v2582 = vlaneseq
  %v2583 = vshrl.u32 %v2582, 7
  %v2584 = vsub.s32 %v2561, %v2583
  %v2585 = vrot.slane %v2553, %v2584
  %v2586 = vlaneseq
  %v2587 = vshrl.u32 %v2586, 7
  %v2588 = vsub.s32 %v2561, %v2587
  %v2589 = vrot.slane %v2556, %v2588
  %v2590 = vlaneseq
  %v2591 = vshrl.u32 %v2590, 7
  %v2592 = vsub.s32 %v2561, %v2591
  %v2593 = vrot.slane %v2559, %v2592
  %vm2594 = vcmask 1041409
  %v2595 = vsel %vm2594, %v2569, %v2565
  %vm2596 = vcmask 1042434
  %v2597 = vsel %vm2596, %v2573, %v2595
  %vm2598 = vcmask 1043459
  %v2599 = vsel %vm2598, %v2577, %v2597
  %vm2600 = vcmask 1044484
  %v2601 = vsel %vm2600, %v2581, %v2599
  %vm2602 = vcmask 1045509
  %v2603 = vsel %vm2602, %v2585, %v2601
  %vm2604 = vcmask 1046534
  %v2605 = vsel %vm2604, %v2589, %v2603
  %vm2606 = vcmask 1047559
  %v2607 = vsel %vm2606, %v2593, %v2605
  %vm2609 = vcmask 1042432
  %v2610 = vrot.slane %v75, 5
  %v2611 = vrot.slane %v76, 5
  %v2612 = vsel %vm2609, %v2610, %v2611
  %v2613 = vsel %vm181, %v2607, 0
  %v2615 = vsel %vm230, %v2612, 0
  %2617 = vmatprep.subr.mxu0 0.0
  %2618 = vmatpush1.msra.mxu0 %v2615
  %2619 = vmatprep.subr.mxu0 0.0
  %2620 = vmatpush1.msra.mxu0 0.0
  %2621 = vmatprep.subr.mxu0 0.0
  %2622 = vmatpush1.msra.mxu0 0.0
  %2623 = vmatprep.subr.mxu0 0.0
  %2624 = vmatpush1.msra.mxu0 0.0
  %2625 = vmatprep.subr.mxu0 0.0
  %2626 = vmatpush1.msra.mxu0 0.0
  %2627 = vmatprep.subr.mxu0 0.0
  %2628 = vmatpush1.msra.mxu0 0.0
  %2629 = vmatprep.subr.mxu0 0.0
  %2630 = vmatpush1.msra.mxu0 0.0
  %2631 = vmatprep.subr.mxu0 0.0
  %2632 = vmatpush1.msra.mxu0 0.0
  %2633 = vmatprep.subr.mxu0 0.0
  %2634 = vmatpush1.msra.mxu0 0.0
  %2635 = vmatprep.subr.mxu0 0.0
  %2636 = vmatpush1.msra.mxu0 0.0
  %2637 = vmatprep.subr.mxu0 0.0
  %2638 = vmatpush1.msra.mxu0 0.0
  %2639 = vmatprep.subr.mxu0 0.0
  %2640 = vmatpush1.msra.mxu0 0.0
  %2641 = vmatprep.subr.mxu0 0.0
  %2642 = vmatpush1.msra.mxu0 0.0
  %2643 = vmatprep.subr.mxu0 0.0
  %2644 = vmatpush1.msra.mxu0 0.0
  %2645 = vmatprep.subr.mxu0 0.0
  %2646 = vmatpush1.msra.mxu0 0.0
  %2647 = vmatprep.subr.mxu0 0.0
  %2648 = vmatpush1.msra.mxu0 0.0
  %2649 = vmatprep.subr.mxu0 0.0
  %2650 = vmatpush1.msra.mxu0 0.0
  %2651 = vmatprep.subr.mxu0 0.0
  %2652 = vmatpush1.msra.mxu0 0.0
  %2653 = vmatprep.subr.mxu0 0.0
  %2654 = vmatpush1.msra.mxu0 0.0
  %2655 = vmatprep.subr.mxu0 0.0
  %2656 = vmatpush1.msra.mxu0 0.0
  %2657 = vmatprep.subr.mxu0 0.0
  %2658 = vmatpush1.msra.mxu0 0.0
  %2659 = vmatprep.subr.mxu0 0.0
  %2660 = vmatpush1.msra.mxu0 0.0
  %2661 = vmatprep.subr.mxu0 0.0
  %2662 = vmatpush1.msra.mxu0 0.0
  %2663 = vmatprep.subr.mxu0 0.0
  %2664 = vmatpush1.msra.mxu0 0.0
  %2665 = vmatprep.subr.mxu0 0.0
  %2666 = vmatpush1.msra.mxu0 0.0
  %2667 = vmatprep.subr.mxu0 0.0
  %2668 = vmatpush1.msra.mxu0 0.0
  %2669 = vmatprep.subr.mxu0 0.0
  %2670 = vmatpush1.msra.mxu0 0.0
  %2671 = vmatprep.subr.mxu0 0.0
  %2672 = vmatpush1.msra.mxu0 0.0
  %2673 = vmatprep.subr.mxu0 0.0
  %2674 = vmatpush1.msra.mxu0 0.0
  %2675 = vmatprep.subr.mxu0 0.0
  %2676 = vmatpush1.msra.mxu0 0.0
  %2677 = vmatprep.subr.mxu0 0.0
  %2678 = vmatpush1.msra.mxu0 0.0
  %2679 = vmatprep.subr.mxu0 0.0
  %2680 = vmatpush1.msra.mxu0 0.0
  %2681 = vmatprep.mubr.f32.mxu0 0.0
  %2682 = vmatmul.mubr.f32.gmra.mrb[0].mxu0 %v2613
  %v2683 = vpop.f32.mrb[0].mxu0
  %v2684 = vadd.f32 0.0, %v2683
  %v2685 = vpop.f32.mrb[0].mxu0
  %2686 = vdwg.mxu0
  %v2687 = vrot.slane %v76, 1
  %v2689 = vsel %vm181, %v1020, 0
  %v2692 = vsel %vm181, %v1021, 0
  %v2695 = vsel %vm181, %v1023, 0
  %v2698 = vsel %vm181, %v1024, 0
  %v2701 = vsel %vm181, %v1026, 0
  %v2704 = vsel %vm181, %v1027, 0
  %v2707 = vsel %vm181, %v1029, 0
  %v2710 = vsel %vm181, %v1030, 0
  %v2713 = vsel %vm181, %v1032, 0
  %v2716 = vsel %vm181, %v1033, 0
  %v2719 = vsel %vm181, %v1035, 0
  %v2722 = vsel %vm181, %v1036, 0
  %v2725 = vsel %vm181, %v1038, 0
  %v2728 = vsel %vm181, %v1039, 0
  %v2731 = vsel %vm181, %v1041, 0
  %v2734 = vsel %vm181, %v1042, 0
  %v2736 = vsel %vm230, %v2687, 0
  %2738 = vmatprep.subr.mxu0 0.0
  %2739 = vmatpush1.msra.mxu0 %v2736
  %2740 = vmatprep.subr.mxu0 0.0
  %2741 = vmatpush1.msra.mxu0 0.0
  %2742 = vmatprep.subr.mxu0 0.0
  %2743 = vmatpush1.msra.mxu0 0.0
  %2744 = vmatprep.subr.mxu0 0.0
  %2745 = vmatpush1.msra.mxu0 0.0
  %2746 = vmatprep.subr.mxu0 0.0
  %2747 = vmatpush1.msra.mxu0 0.0
  %2748 = vmatprep.subr.mxu0 0.0
  %2749 = vmatpush1.msra.mxu0 0.0
  %2750 = vmatprep.subr.mxu0 0.0
  %2751 = vmatpush1.msra.mxu0 0.0
  %2752 = vmatprep.subr.mxu0 0.0
  %2753 = vmatpush1.msra.mxu0 0.0
  %2754 = vmatprep.subr.mxu0 0.0
  %2755 = vmatpush1.msra.mxu0 0.0
  %2756 = vmatprep.subr.mxu0 0.0
  %2757 = vmatpush1.msra.mxu0 0.0
  %2758 = vmatprep.subr.mxu0 0.0
  %2759 = vmatpush1.msra.mxu0 0.0
  %2760 = vmatprep.subr.mxu0 0.0
  %2761 = vmatpush1.msra.mxu0 0.0
  %2762 = vmatprep.subr.mxu0 0.0
  %2763 = vmatpush1.msra.mxu0 0.0
  %2764 = vmatprep.subr.mxu0 0.0
  %2765 = vmatpush1.msra.mxu0 0.0
  %2766 = vmatprep.subr.mxu0 0.0
  %2767 = vmatpush1.msra.mxu0 0.0
  %2768 = vmatprep.subr.mxu0 0.0
  %2769 = vmatpush1.msra.mxu0 0.0
  %2770 = vmatprep.subr.mxu0 0.0
  %2771 = vmatpush1.msra.mxu0 0.0
  %2772 = vmatprep.subr.mxu0 0.0
  %2773 = vmatpush1.msra.mxu0 0.0
  %2774 = vmatprep.subr.mxu0 0.0
  %2775 = vmatpush1.msra.mxu0 0.0
  %2776 = vmatprep.subr.mxu0 0.0
  %2777 = vmatpush1.msra.mxu0 0.0
  %2778 = vmatprep.subr.mxu0 0.0
  %2779 = vmatpush1.msra.mxu0 0.0
  %2780 = vmatprep.subr.mxu0 0.0
  %2781 = vmatpush1.msra.mxu0 0.0
  %2782 = vmatprep.subr.mxu0 0.0
  %2783 = vmatpush1.msra.mxu0 0.0
  %2784 = vmatprep.subr.mxu0 0.0
  %2785 = vmatpush1.msra.mxu0 0.0
  %2786 = vmatprep.subr.mxu0 0.0
  %2787 = vmatpush1.msra.mxu0 0.0
  %2788 = vmatprep.subr.mxu0 0.0
  %2789 = vmatpush1.msra.mxu0 0.0
  %2790 = vmatprep.subr.mxu0 0.0
  %2791 = vmatpush1.msra.mxu0 0.0
  %2792 = vmatprep.subr.mxu0 0.0
  %2793 = vmatpush1.msra.mxu0 0.0
  %2794 = vmatprep.subr.mxu0 0.0
  %2795 = vmatpush1.msra.mxu0 0.0
  %2796 = vmatprep.subr.mxu0 0.0
  %2797 = vmatpush1.msra.mxu0 0.0
  %2798 = vmatprep.subr.mxu0 0.0
  %2799 = vmatpush1.msra.mxu0 0.0
  %2800 = vmatprep.subr.mxu0 0.0
  %2801 = vmatpush1.msra.mxu0 0.0
  %2802 = vmatprep.mubr.f32.mxu0 0.0
  %2803 = vmatmul.mubr.f32.gmra.mrb[0].mxu0 %v2689
  %v2804 = vpop.f32.mrb[0].mxu0
  %v2805 = vadd.f32 0.0, %v2804
  %v2806 = vpop.f32.mrb[0].mxu0
  %2807 = vmatprep.mubr.f32.mxu0 0.0
  %2808 = vmatmul.mubr.f32.gmra.mrb[0].mxu0 %v2692
  %v2809 = vpop.f32.mrb[0].mxu0
  %v2810 = vadd.f32 0.0, %v2809
  %v2811 = vpop.f32.mrb[0].mxu0
  %2812 = vmatprep.mubr.f32.mxu0 0.0
  %2813 = vmatmul.mubr.f32.gmra.mrb[0].mxu0 %v2695
  %v2814 = vpop.f32.mrb[0].mxu0
  %v2815 = vadd.f32 0.0, %v2814
  %v2816 = vpop.f32.mrb[0].mxu0
  %2817 = vmatprep.mubr.f32.mxu0 0.0
  %2818 = vmatmul.mubr.f32.gmra.mrb[0].mxu0 %v2698
  %v2819 = vpop.f32.mrb[0].mxu0
  %v2820 = vadd.f32 0.0, %v2819
  %v2821 = vpop.f32.mrb[0].mxu0
  %2822 = vmatprep.mubr.f32.mxu0 0.0
  %2823 = vmatmul.mubr.f32.gmra.mrb[0].mxu0 %v2701
  %v2824 = vpop.f32.mrb[0].mxu0
  %v2825 = vadd.f32 0.0, %v2824
  %v2826 = vpop.f32.mrb[0].mxu0
  %2827 = vmatprep.mubr.f32.mxu0 0.0
  %2828 = vmatmul.mubr.f32.gmra.mrb[0].mxu0 %v2704
  %v2829 = vpop.f32.mrb[0].mxu0
  %v2830 = vadd.f32 0.0, %v2829
  %v2831 = vpop.f32.mrb[0].mxu0
  %2832 = vmatprep.mubr.f32.mxu0 0.0
  %2833 = vmatmul.mubr.f32.gmra.mrb[0].mxu0 %v2707
  %v2834 = vpop.f32.mrb[0].mxu0
  %v2835 = vadd.f32 0.0, %v2834
  %v2836 = vpop.f32.mrb[0].mxu0
  %2837 = vmatprep.mubr.f32.mxu0 0.0
  %2838 = vmatmul.mubr.f32.gmra.mrb[0].mxu0 %v2710
  %v2839 = vpop.f32.mrb[0].mxu0
  %v2840 = vadd.f32 0.0, %v2839
  %v2841 = vpop.f32.mrb[0].mxu0
  %2842 = vmatprep.mubr.f32.mxu0 0.0
  %2843 = vmatmul.mubr.f32.gmra.mrb[0].mxu0 %v2713
  %v2844 = vpop.f32.mrb[0].mxu0
  %v2845 = vadd.f32 0.0, %v2844
  %v2846 = vpop.f32.mrb[0].mxu0
  %2847 = vmatprep.mubr.f32.mxu0 0.0
  %2848 = vmatmul.mubr.f32.gmra.mrb[0].mxu0 %v2716
  %v2849 = vpop.f32.mrb[0].mxu0
  %v2850 = vadd.f32 0.0, %v2849
  %v2851 = vpop.f32.mrb[0].mxu0
  %2852 = vmatprep.mubr.f32.mxu0 0.0
  %2853 = vmatmul.mubr.f32.gmra.mrb[0].mxu0 %v2719
  %v2854 = vpop.f32.mrb[0].mxu0
  %v2855 = vadd.f32 0.0, %v2854
  %v2856 = vpop.f32.mrb[0].mxu0
  %2857 = vmatprep.mubr.f32.mxu0 0.0
  %2858 = vmatmul.mubr.f32.gmra.mrb[0].mxu0 %v2722
  %v2859 = vpop.f32.mrb[0].mxu0
  %v2860 = vadd.f32 0.0, %v2859
  %v2861 = vpop.f32.mrb[0].mxu0
  %2862 = vmatprep.mubr.f32.mxu0 0.0
  %2863 = vmatmul.mubr.f32.gmra.mrb[0].mxu0 %v2725
  %v2864 = vpop.f32.mrb[0].mxu0
  %v2865 = vadd.f32 0.0, %v2864
  %v2866 = vpop.f32.mrb[0].mxu0
  %2867 = vmatprep.mubr.f32.mxu0 0.0
  %2868 = vmatmul.mubr.f32.gmra.mrb[0].mxu0 %v2728
  %v2869 = vpop.f32.mrb[0].mxu0
  %v2870 = vadd.f32 0.0, %v2869
  %v2871 = vpop.f32.mrb[0].mxu0
  %2872 = vmatprep.mubr.f32.mxu0 0.0
  %2873 = vmatmul.mubr.f32.gmra.mrb[0].mxu0 %v2731
  %v2874 = vpop.f32.mrb[0].mxu0
  %v2875 = vadd.f32 0.0, %v2874
  %v2876 = vpop.f32.mrb[0].mxu0
  %2877 = vmatprep.mubr.f32.mxu0 0.0
  %2878 = vmatmul.mubr.f32.gmra.mrb[0].mxu0 %v2734
  %v2879 = vpop.f32.mrb[0].mxu0
  %v2880 = vadd.f32 0.0, %v2879
  %v2881 = vpop.f32.mrb[0].mxu0
  %2882 = vdwg.mxu0
  %v2884 = vcombine.high %v2684, %v2684
  %v2886 = vunpack.c.l.s4 1966171168
  %v2887 = vunpack.c.0.s8 %v2886
  %v2888 = vlaneseq
  %v2889 = vshrl.u32 %v2888, 7
  %v2890 = vsub.s32 %v2887, %v2889
  %v2891 = vrot.slane %v2684, %v2890
  %v2893 = vunpack.c.l.s4 1966171168
  %v2894 = vunpack.c.0.s8 %v2893
  %v2895 = vlaneseq
  %v2896 = vshrl.u32 %v2895, 7
  %v2897 = vsub.s32 %v2894, %v2896
  %v2898 = vrot.slane %v2884, %v2897
  %v2899 = vcombine.high %v2891, %v2891
  %v2900 = vcombine.high %v2898, %v2898
  %v2902 = vunpack.c.l.s4 1966171168
  %v2903 = vunpack.c.0.s8 %v2902
  %v2904 = vlaneseq
  %v2905 = vshrl.u32 %v2904, 7
  %v2906 = vsub.s32 %v2903, %v2905
  %v2907 = vrot.slane %v2891, %v2906
  %v2909 = vunpack.c.l.s4 1966171168
  %v2910 = vunpack.c.0.s8 %v2909
  %v2911 = vlaneseq
  %v2912 = vshrl.u32 %v2911, 7
  %v2913 = vsub.s32 %v2910, %v2912
  %v2914 = vrot.slane %v2898, %v2913
  %v2916 = vunpack.c.l.s4 1966171168
  %v2917 = vunpack.c.0.s8 %v2916
  %v2918 = vlaneseq
  %v2919 = vshrl.u32 %v2918, 7
  %v2920 = vsub.s32 %v2917, %v2919
  %v2921 = vrot.slane %v2899, %v2920
  %v2923 = vunpack.c.l.s4 1966171168
  %v2924 = vunpack.c.0.s8 %v2923
  %v2925 = vlaneseq
  %v2926 = vshrl.u32 %v2925, 7
  %v2927 = vsub.s32 %v2924, %v2926
  %v2928 = vrot.slane %v2900, %v2927
  %v2929 = vcombine.high %v2907, %v2907
  %v2930 = vcombine.high %v2914, %v2914
  %v2931 = vcombine.high %v2921, %v2921
  %v2932 = vcombine.high %v2928, %v2928
  %v2933 = vlaneseq
  %v2934 = vshrl.u32 %v2933, 7
  %v2935 = vsub.s32 0, %v2934
  %v2936 = vrot.slane %v2907, %v2935
  %v2937 = vlaneseq
  %v2938 = vshrl.u32 %v2937, 7
  %v2939 = vsub.s32 0, %v2938
  %v2940 = vrot.slane %v2921, %v2939
  %v2941 = vlaneseq
  %v2942 = vshrl.u32 %v2941, 7
  %v2943 = vsub.s32 0, %v2942
  %v2944 = vrot.slane %v2929, %v2943
  %v2945 = vlaneseq
  %v2946 = vshrl.u32 %v2945, 7
  %v2947 = vsub.s32 0, %v2946
  %v2948 = vrot.slane %v2931, %v2947
  %v2949 = vlaneseq
  %v2950 = vshrl.u32 %v2949, 7
  %v2951 = vsub.s32 0, %v2950
  %v2952 = vrot.slane %v2914, %v2951
  %v2953 = vlaneseq
  %v2954 = vshrl.u32 %v2953, 7
  %v2955 = vsub.s32 0, %v2954
  %v2956 = vrot.slane %v2928, %v2955
  %v2957 = vlaneseq
  %v2958 = vshrl.u32 %v2957, 7
  %v2959 = vsub.s32 0, %v2958
  %v2960 = vrot.slane %v2930, %v2959
  %v2961 = vlaneseq
  %v2962 = vshrl.u32 %v2961, 7
  %v2963 = vsub.s32 0, %v2962
  %v2964 = vrot.slane %v2932, %v2963
  %v2973 = vadd.f32 %v2805, %v2936
  %v2974 = vadd.f32 %v2810, %v2936
  %v2975 = vadd.f32 %v2815, %v2940
  %v2976 = vadd.f32 %v2820, %v2940
  %v2977 = vadd.f32 %v2825, %v2944
  %v2978 = vadd.f32 %v2830, %v2944
  %v2979 = vadd.f32 %v2835, %v2948
  %v2980 = vadd.f32 %v2840, %v2948
  %v2981 = vadd.f32 %v2845, %v2952
  %v2982 = vadd.f32 %v2850, %v2952
  %v2983 = vadd.f32 %v2855, %v2956
  %v2984 = vadd.f32 %v2860, %v2956
  %v2985 = vadd.f32 %v2865, %v2960
  %v2986 = vadd.f32 %v2870, %v2960
  %v2987 = vadd.f32 %v2875, %v2964
  %v2988 = vadd.f32 %v2880, %v2964
  %v2989 = vlaneseq
  %v2990 = vshrl.u32 %v2989, 7
  %v2991 = vsub.s32 5, %v2990
  %v2992 = vrot.slane %v76, %v2991
  %v2993 = vadd.f32 %v2973, %v2992
  %v2994 = vadd.f32 %v2974, %v2992
  %v2995 = vadd.f32 %v2975, %v2992
  %v2996 = vadd.f32 %v2976, %v2992
  %v2997 = vadd.f32 %v2977, %v2992
  %v2998 = vadd.f32 %v2978, %v2992
  %v2999 = vadd.f32 %v2979, %v2992
  %v3000 = vadd.f32 %v2980, %v2992
  %v3001 = vadd.f32 %v2981, %v2992
  %v3002 = vadd.f32 %v2982, %v2992
  %v3003 = vadd.f32 %v2983, %v2992
  %v3004 = vadd.f32 %v2984, %v2992
  %v3005 = vadd.f32 %v2985, %v2992
  %v3006 = vadd.f32 %v2986, %v2992
  %v3007 = vadd.f32 %v2987, %v2992
  %v3008 = vadd.f32 %v2988, %v2992
  %v3009 = vmax.f32 %v2993, 0.0
  %v3010 = vmax.f32 %v2994, 0.0
  %v3011 = vmax.f32 %v2995, 0.0
  %v3012 = vmax.f32 %v2996, 0.0
  %v3013 = vmax.f32 %v2997, 0.0
  %v3014 = vmax.f32 %v2998, 0.0
  %v3015 = vmax.f32 %v2999, 0.0
  %v3016 = vmax.f32 %v3000, 0.0
  %v3017 = vmax.f32 %v3001, 0.0
  %v3018 = vmax.f32 %v3002, 0.0
  %v3019 = vmax.f32 %v3003, 0.0
  %v3020 = vmax.f32 %v3004, 0.0
  %v3021 = vmax.f32 %v3005, 0.0
  %v3022 = vmax.f32 %v3006, 0.0
  %v3023 = vmax.f32 %v3007, 0.0
  %v3024 = vmax.f32 %v3008, 0.0
  %v3025 = vlaneseq
  %v3026 = vshrl.u32 %v3025, 7
  %v3027 = vsub.s32 2, %v3026
  %v3028 = vrot.slane %v77, %v3027
  %vm3030 = vcmask 1041408
  %v3031 = vrot.slane %v76, 6
  %v3032 = vrot.slane %v77, 6
  %v3033 = vsel %vm3030, %v3031, %v3032
  %v3035 = vsel %vm181, %v3009, 0
  %v3038 = vsel %vm181, %v3010, 0
  %v3041 = vsel %vm181, %v3011, 0
  %v3044 = vsel %vm181, %v3012, 0
  %v3047 = vsel %vm181, %v3013, 0
  %v3050 = vsel %vm181, %v3014, 0
  %v3053 = vsel %vm181, %v3015, 0
  %v3056 = vsel %vm181, %v3016, 0
  %v3059 = vsel %vm181, %v3017, 0
  %v3062 = vsel %vm181, %v3018, 0
  %v3065 = vsel %vm181, %v3019, 0
  %v3068 = vsel %vm181, %v3020, 0
  %v3071 = vsel %vm181, %v3021, 0
  %v3074 = vsel %vm181, %v3022, 0
  %v3077 = vsel %vm181, %v3023, 0
  %v3080 = vsel %vm181, %v3024, 0
  %v3082 = vsel %vm230, %v3033, 0
  %3084 = vmatprep.subr.mxu0 0.0
  %3085 = vmatpush1.msra.mxu0 %v3082
  %3086 = vmatprep.subr.mxu0 0.0
  %3087 = vmatpush1.msra.mxu0 0.0
  %3088 = vmatprep.subr.mxu0 0.0
  %3089 = vmatpush1.msra.mxu0 0.0
  %3090 = vmatprep.subr.mxu0 0.0
  %3091 = vmatpush1.msra.mxu0 0.0
  %3092 = vmatprep.subr.mxu0 0.0
  %3093 = vmatpush1.msra.mxu0 0.0
  %3094 = vmatprep.subr.mxu0 0.0
  %3095 = vmatpush1.msra.mxu0 0.0
  %3096 = vmatprep.subr.mxu0 0.0
  %3097 = vmatpush1.msra.mxu0 0.0
  %3098 = vmatprep.subr.mxu0 0.0
  %3099 = vmatpush1.msra.mxu0 0.0
  %3100 = vmatprep.subr.mxu0 0.0
  %3101 = vmatpush1.msra.mxu0 0.0
  %3102 = vmatprep.subr.mxu0 0.0
  %3103 = vmatpush1.msra.mxu0 0.0
  %3104 = vmatprep.subr.mxu0 0.0
  %3105 = vmatpush1.msra.mxu0 0.0
  %3106 = vmatprep.subr.mxu0 0.0
  %3107 = vmatpush1.msra.mxu0 0.0
  %3108 = vmatprep.subr.mxu0 0.0
  %3109 = vmatpush1.msra.mxu0 0.0
  %3110 = vmatprep.subr.mxu0 0.0
  %3111 = vmatpush1.msra.mxu0 0.0
  %3112 = vmatprep.subr.mxu0 0.0
  %3113 = vmatpush1.msra.mxu0 0.0
  %3114 = vmatprep.subr.mxu0 0.0
  %3115 = vmatpush1.msra.mxu0 0.0
  %3116 = vmatprep.subr.mxu0 0.0
  %3117 = vmatpush1.msra.mxu0 0.0
  %3118 = vmatprep.subr.mxu0 0.0
  %3119 = vmatpush1.msra.mxu0 0.0
  %3120 = vmatprep.subr.mxu0 0.0
  %3121 = vmatpush1.msra.mxu0 0.0
  %3122 = vmatprep.subr.mxu0 0.0
  %3123 = vmatpush1.msra.mxu0 0.0
  %3124 = vmatprep.subr.mxu0 0.0
  %3125 = vmatpush1.msra.mxu0 0.0
  %3126 = vmatprep.subr.mxu0 0.0
  %3127 = vmatpush1.msra.mxu0 0.0
  %3128 = vmatprep.subr.mxu0 0.0
  %3129 = vmatpush1.msra.mxu0 0.0
  %3130 = vmatprep.subr.mxu0 0.0
  %3131 = vmatpush1.msra.mxu0 0.0
  %3132 = vmatprep.subr.mxu0 0.0
  %3133 = vmatpush1.msra.mxu0 0.0
  %3134 = vmatprep.subr.mxu0 0.0
  %3135 = vmatpush1.msra.mxu0 0.0
  %3136 = vmatprep.subr.mxu0 0.0
  %3137 = vmatpush1.msra.mxu0 0.0
  %3138 = vmatprep.subr.mxu0 0.0
  %3139 = vmatpush1.msra.mxu0 0.0
  %3140 = vmatprep.subr.mxu0 0.0
  %3141 = vmatpush1.msra.mxu0 0.0
  %3142 = vmatprep.subr.mxu0 0.0
  %3143 = vmatpush1.msra.mxu0 0.0
  %3144 = vmatprep.subr.mxu0 0.0
  %3145 = vmatpush1.msra.mxu0 0.0
  %3146 = vmatprep.subr.mxu0 0.0
  %3147 = vmatpush1.msra.mxu0 0.0
  %3148 = vmatprep.mubr.f32.mxu0 0.0
  %3149 = vmatmul.mubr.f32.gmra.mrb[0].mxu0 %v3035
  %v3150 = vpop.f32.mrb[0].mxu0
  %v3151 = vadd.f32 %v3028, %v3150
  %v3152 = vpop.f32.mrb[0].mxu0
  %3153 = vmatprep.mubr.f32.mxu0 0.0
  %3154 = vmatmul.mubr.f32.gmra.mrb[0].mxu0 %v3038
  %v3155 = vpop.f32.mrb[0].mxu0
  %v3156 = vadd.f32 %v3028, %v3155
  %v3157 = vpop.f32.mrb[0].mxu0
  %3158 = vmatprep.mubr.f32.mxu0 0.0
  %3159 = vmatmul.mubr.f32.gmra.mrb[0].mxu0 %v3041
  %v3160 = vpop.f32.mrb[0].mxu0
  %v3161 = vadd.f32 %v3028, %v3160
  %v3162 = vpop.f32.mrb[0].mxu0
  %3163 = vmatprep.mubr.f32.mxu0 0.0
  %3164 = vmatmul.mubr.f32.gmra.mrb[0].mxu0 %v3044
  %v3165 = vpop.f32.mrb[0].mxu0
  %v3166 = vadd.f32 %v3028, %v3165
  %v3167 = vpop.f32.mrb[0].mxu0
  %3168 = vmatprep.mubr.f32.mxu0 0.0
  %3169 = vmatmul.mubr.f32.gmra.mrb[0].mxu0 %v3047
  %v3170 = vpop.f32.mrb[0].mxu0
  %v3171 = vadd.f32 %v3028, %v3170
  %v3172 = vpop.f32.mrb[0].mxu0
  %3173 = vmatprep.mubr.f32.mxu0 0.0
  %3174 = vmatmul.mubr.f32.gmra.mrb[0].mxu0 %v3050
  %v3175 = vpop.f32.mrb[0].mxu0
  %v3176 = vadd.f32 %v3028, %v3175
  %v3177 = vpop.f32.mrb[0].mxu0
  %3178 = vmatprep.mubr.f32.mxu0 0.0
  %3179 = vmatmul.mubr.f32.gmra.mrb[0].mxu0 %v3053
  %v3180 = vpop.f32.mrb[0].mxu0
  %v3181 = vadd.f32 %v3028, %v3180
  %v3182 = vpop.f32.mrb[0].mxu0
  %3183 = vmatprep.mubr.f32.mxu0 0.0
  %3184 = vmatmul.mubr.f32.gmra.mrb[0].mxu0 %v3056
  %v3185 = vpop.f32.mrb[0].mxu0
  %v3186 = vadd.f32 %v3028, %v3185
  %v3187 = vpop.f32.mrb[0].mxu0
  %3188 = vmatprep.mubr.f32.mxu0 0.0
  %3189 = vmatmul.mubr.f32.gmra.mrb[0].mxu0 %v3059
  %v3190 = vpop.f32.mrb[0].mxu0
  %v3191 = vadd.f32 %v3028, %v3190
  %v3192 = vpop.f32.mrb[0].mxu0
  %3193 = vmatprep.mubr.f32.mxu0 0.0
  %3194 = vmatmul.mubr.f32.gmra.mrb[0].mxu0 %v3062
  %v3195 = vpop.f32.mrb[0].mxu0
  %v3196 = vadd.f32 %v3028, %v3195
  %v3197 = vpop.f32.mrb[0].mxu0
  %3198 = vmatprep.mubr.f32.mxu0 0.0
  %3199 = vmatmul.mubr.f32.gmra.mrb[0].mxu0 %v3065
  %v3200 = vpop.f32.mrb[0].mxu0
  %v3201 = vadd.f32 %v3028, %v3200
  %v3202 = vpop.f32.mrb[0].mxu0
  %3203 = vmatprep.mubr.f32.mxu0 0.0
  %3204 = vmatmul.mubr.f32.gmra.mrb[0].mxu0 %v3068
  %v3205 = vpop.f32.mrb[0].mxu0
  %v3206 = vadd.f32 %v3028, %v3205
  %v3207 = vpop.f32.mrb[0].mxu0
  %3208 = vmatprep.mubr.f32.mxu0 0.0
  %3209 = vmatmul.mubr.f32.gmra.mrb[0].mxu0 %v3071
  %v3210 = vpop.f32.mrb[0].mxu0
  %v3211 = vadd.f32 %v3028, %v3210
  %v3212 = vpop.f32.mrb[0].mxu0
  %3213 = vmatprep.mubr.f32.mxu0 0.0
  %3214 = vmatmul.mubr.f32.gmra.mrb[0].mxu0 %v3074
  %v3215 = vpop.f32.mrb[0].mxu0
  %v3216 = vadd.f32 %v3028, %v3215
  %v3217 = vpop.f32.mrb[0].mxu0
  %3218 = vmatprep.mubr.f32.mxu0 0.0
  %3219 = vmatmul.mubr.f32.gmra.mrb[0].mxu0 %v3077
  %v3220 = vpop.f32.mrb[0].mxu0
  %v3221 = vadd.f32 %v3028, %v3220
  %v3222 = vpop.f32.mrb[0].mxu0
  %3223 = vmatprep.mubr.f32.mxu0 0.0
  %3224 = vmatmul.mubr.f32.gmra.mrb[0].mxu0 %v3080
  %v3225 = vpop.f32.mrb[0].mxu0
  %v3226 = vadd.f32 %v3028, %v3225
  %v3227 = vpop.f32.mrb[0].mxu0
  %3228 = vdwg.mxu0
  %v3229 = vsub.f32 0.0, %v3151
  %v3230 = vsub.f32 0.0, %v3156
  %v3231 = vsub.f32 0.0, %v3161
  %v3232 = vsub.f32 0.0, %v3166
  %v3233 = vsub.f32 0.0, %v3171
  %v3234 = vsub.f32 0.0, %v3176
  %v3235 = vsub.f32 0.0, %v3181
  %v3236 = vsub.f32 0.0, %v3186
  %v3237 = vsub.f32 0.0, %v3191
  %v3238 = vsub.f32 0.0, %v3196
  %v3239 = vsub.f32 0.0, %v3201
  %v3240 = vsub.f32 0.0, %v3206
  %v3241 = vsub.f32 0.0, %v3211
  %v3242 = vsub.f32 0.0, %v3216
  %v3243 = vsub.f32 0.0, %v3221
  %v3244 = vsub.f32 0.0, %v3226
  %v3245 = vmul.f32 %v3229, 1.442695
  %v3246 = vpow.pop %v3245
  %v3247 = vmul.f32 %v3230, 1.442695
  %v3248 = vpow.pop %v3247
  %v3249 = vmul.f32 %v3231, 1.442695
  %v3250 = vpow.pop %v3249
  %v3251 = vmul.f32 %v3232, 1.442695
  %v3252 = vpow.pop %v3251
  %v3253 = vmul.f32 %v3233, 1.442695
  %v3254 = vpow.pop %v3253
  %v3255 = vmul.f32 %v3234, 1.442695
  %v3256 = vpow.pop %v3255
  %v3257 = vmul.f32 %v3235, 1.442695
  %v3258 = vpow.pop %v3257
  %v3259 = vmul.f32 %v3236, 1.442695
  %v3260 = vpow.pop %v3259
  %v3261 = vmul.f32 %v3237, 1.442695
  %v3262 = vpow.pop %v3261
  %v3263 = vmul.f32 %v3238, 1.442695
  %v3264 = vpow.pop %v3263
  %v3265 = vmul.f32 %v3239, 1.442695
  %v3266 = vpow.pop %v3265
  %v3267 = vmul.f32 %v3240, 1.442695
  %v3268 = vpow.pop %v3267
  %v3269 = vmul.f32 %v3241, 1.442695
  %v3270 = vpow.pop %v3269
  %v3271 = vmul.f32 %v3242, 1.442695
  %v3272 = vpow.pop %v3271
  %v3273 = vmul.f32 %v3243, 1.442695
  %v3274 = vpow.pop %v3273
  %v3275 = vmul.f32 %v3244, 1.442695
  %v3276 = vpow.pop %v3275
  %v3277 = vadd.f32 %v3246, 1.0
  %v3278 = vadd.f32 %v3248, 1.0
  %v3279 = vadd.f32 %v3250, 1.0
  %v3280 = vadd.f32 %v3252, 1.0
  %v3281 = vadd.f32 %v3254, 1.0
  %v3282 = vadd.f32 %v3256, 1.0
  %v3283 = vadd.f32 %v3258, 1.0
  %v3284 = vadd.f32 %v3260, 1.0
  %v3285 = vadd.f32 %v3262, 1.0
  %v3286 = vadd.f32 %v3264, 1.0
  %v3287 = vadd.f32 %v3266, 1.0
  %v3288 = vadd.f32 %v3268, 1.0
  %v3289 = vadd.f32 %v3270, 1.0
  %v3290 = vadd.f32 %v3272, 1.0
  %v3291 = vadd.f32 %v3274, 1.0
  %v3292 = vadd.f32 %v3276, 1.0
  %v3293 = vrcp.pop %v3277
  %v3294 = vrcp.pop %v3278
  %v3295 = vrcp.pop %v3279
  %v3296 = vrcp.pop %v3280
  %v3297 = vrcp.pop %v3281
  %v3298 = vrcp.pop %v3282
  %v3299 = vrcp.pop %v3283
  %v3300 = vrcp.pop %v3284
  %v3301 = vrcp.pop %v3285
  %v3302 = vrcp.pop %v3286
  %v3303 = vrcp.pop %v3287
  %v3304 = vrcp.pop %v3288
  %v3305 = vrcp.pop %v3289
  %v3306 = vrcp.pop %v3290
  %v3307 = vrcp.pop %v3291
  %v3308 = vrcp.pop %v3292
  %v3309 = vsub.f32 %v3293, %v33
  %v3310 = vsub.f32 %v3294, %v34
  %v3311 = vsub.f32 %v3295, %v35
  %v3312 = vsub.f32 %v3296, %v36
  %v3313 = vsub.f32 %v3297, %v37
  %v3314 = vsub.f32 %v3298, %v38
  %v3315 = vsub.f32 %v3299, %v39
  %v3316 = vsub.f32 %v3300, %v40
  %v3317 = vsub.f32 %v3301, %v41
  %v3318 = vsub.f32 %v3302, %v42
  %v3319 = vsub.f32 %v3303, %v43
  %v3320 = vsub.f32 %v3304, %v44
  %v3321 = vsub.f32 %v3305, %v45
  %v3322 = vsub.f32 %v3306, %v46
  %v3323 = vsub.f32 %v3307, %v47
  %v3324 = vsub.f32 %v3308, %v48
  %v3325 = vmul.f32 %v3309, %v3309
  %v3326 = vmul.f32 %v3310, %v3310
  %v3327 = vmul.f32 %v3311, %v3311
  %v3328 = vmul.f32 %v3312, %v3312
  %v3329 = vmul.f32 %v3313, %v3313
  %v3330 = vmul.f32 %v3314, %v3314
  %v3331 = vmul.f32 %v3315, %v3315
  %v3332 = vmul.f32 %v3316, %v3316
  %v3333 = vmul.f32 %v3317, %v3317
  %v3334 = vmul.f32 %v3318, %v3318
  %v3335 = vmul.f32 %v3319, %v3319
  %v3336 = vmul.f32 %v3320, %v3320
  %v3337 = vmul.f32 %v3321, %v3321
  %v3338 = vmul.f32 %v3322, %v3322
  %v3339 = vmul.f32 %v3323, %v3323
  %v3340 = vmul.f32 %v3324, %v3324
  %v3341 = vadd.f32 %v3325, 0.0
  %v3342 = vadd.f32 %v3326, 0.0
  %v3343 = vadd.f32 %v3327, 0.0
  %v3344 = vadd.f32 %v3328, 0.0
  %v3345 = vadd.f32 %v3329, 0.0
  %v3346 = vadd.f32 %v3330, 0.0
  %v3347 = vadd.f32 %v3331, 0.0
  %v3348 = vadd.f32 %v3332, 0.0
  %v3349 = vadd.f32 %v3333, 0.0
  %v3350 = vadd.f32 %v3334, 0.0
  %v3351 = vadd.f32 %v3335, 0.0
  %v3352 = vadd.f32 %v3336, 0.0
  %v3353 = vadd.f32 %v3337, 0.0
  %v3354 = vadd.f32 %v3338, 0.0
  %v3355 = vadd.f32 %v3339, 0.0
  %v3356 = vadd.f32 %v3340, 0.0
  %vm3357 = vcmask 7168
  %v3358 = vsel %vm3357, %v3341, 0.0
  %v3359 = vsel %vm3357, %v3342, 0.0
  %v3360 = vadd.f32 %v3358, %v3359
  %v3361 = vrot.slane %v3360, 4
  %v3362 = vadd.f32 %v3360, %v3361
  %v3363 = vrot.slane %v3362, 2
  %v3364 = vadd.f32 %v3362, %v3363
  %v3365 = vrot.slane %v3364, 1
  %v3366 = vadd.f32 %v3364, %v3365
  %v3367 = vsel %vm3357, %v3343, 0.0
  %v3368 = vsel %vm3357, %v3344, 0.0
  %v3369 = vadd.f32 %v3367, %v3368
  %v3370 = vrot.slane %v3369, 4
  %v3371 = vadd.f32 %v3369, %v3370
  %v3372 = vrot.slane %v3371, 2
  %v3373 = vadd.f32 %v3371, %v3372
  %v3374 = vrot.slane %v3373, 1
  %v3375 = vadd.f32 %v3373, %v3374
  %v3376 = vsel %vm3357, %v3345, 0.0
  %v3377 = vsel %vm3357, %v3346, 0.0
  %v3378 = vadd.f32 %v3376, %v3377
  %v3379 = vrot.slane %v3378, 4
  %v3380 = vadd.f32 %v3378, %v3379
  %v3381 = vrot.slane %v3380, 2
  %v3382 = vadd.f32 %v3380, %v3381
  %v3383 = vrot.slane %v3382, 1
  %v3384 = vadd.f32 %v3382, %v3383
  %v3385 = vsel %vm3357, %v3347, 0.0
  %v3386 = vsel %vm3357, %v3348, 0.0
  %v3387 = vadd.f32 %v3385, %v3386
  %v3388 = vrot.slane %v3387, 4
  %v3389 = vadd.f32 %v3387, %v3388
  %v3390 = vrot.slane %v3389, 2
  %v3391 = vadd.f32 %v3389, %v3390
  %v3392 = vrot.slane %v3391, 1
  %v3393 = vadd.f32 %v3391, %v3392
  %v3394 = vsel %vm3357, %v3349, 0.0
  %v3395 = vsel %vm3357, %v3350, 0.0
  %v3396 = vadd.f32 %v3394, %v3395
  %v3397 = vrot.slane %v3396, 4
  %v3398 = vadd.f32 %v3396, %v3397
  %v3399 = vrot.slane %v3398, 2
  %v3400 = vadd.f32 %v3398, %v3399
  %v3401 = vrot.slane %v3400, 1
  %v3402 = vadd.f32 %v3400, %v3401
  %v3403 = vsel %vm3357, %v3351, 0.0
  %v3404 = vsel %vm3357, %v3352, 0.0
  %v3405 = vadd.f32 %v3403, %v3404
  %v3406 = vrot.slane %v3405, 4
  %v3407 = vadd.f32 %v3405, %v3406
  %v3408 = vrot.slane %v3407, 2
  %v3409 = vadd.f32 %v3407, %v3408
  %v3410 = vrot.slane %v3409, 1
  %v3411 = vadd.f32 %v3409, %v3410
  %v3412 = vsel %vm3357, %v3353, 0.0
  %v3413 = vsel %vm3357, %v3354, 0.0
  %v3414 = vadd.f32 %v3412, %v3413
  %v3415 = vrot.slane %v3414, 4
  %v3416 = vadd.f32 %v3414, %v3415
  %v3417 = vrot.slane %v3416, 2
  %v3418 = vadd.f32 %v3416, %v3417
  %v3419 = vrot.slane %v3418, 1
  %v3420 = vadd.f32 %v3418, %v3419
  %v3421 = vsel %vm3357, %v3355, 0.0
  %v3422 = vsel %vm3357, %v3356, 0.0
  %v3423 = vadd.f32 %v3421, %v3422
  %v3424 = vrot.slane %v3423, 4
  %v3425 = vadd.f32 %v3423, %v3424
  %v3426 = vrot.slane %v3425, 2
  %v3427 = vadd.f32 %v3425, %v3426
  %v3428 = vrot.slane %v3427, 1
  %v3429 = vadd.f32 %v3427, %v3428
  %v3431 = vsel %vm1081, %v49, 0
  %v3434 = vsel %vm1081, %v50, 0
  %3436 = vmatprep.subr.mxu0 0.0
  %3437 = vmatpush1.msra.mxu0 %v1020
  %3438 = vmatprep.subr.mxu0 0.0
  %3439 = vmatpush1.msra.mxu0 %v1021
  %3440 = vmatprep.subr.mxu0 0.0
  %3441 = vmatpush1.msra.mxu0 0.0
  %3442 = vmatprep.subr.mxu0 0.0
  %3443 = vmatpush1.msra.mxu0 0.0
  %3444 = vmatprep.subr.mxu0 0.0
  %3445 = vmatpush1.msra.mxu0 0.0
  %3446 = vmatprep.subr.mxu0 0.0
  %3447 = vmatpush1.msra.mxu0 0.0
  %3448 = vmatprep.subr.mxu0 0.0
  %3449 = vmatpush1.msra.mxu0 0.0
  %3450 = vmatprep.subr.mxu0 0.0
  %3451 = vmatpush1.msra.mxu0 0.0
  %3452 = vmatprep.subr.mxu0 0.0
  %3453 = vmatpush1.msra.mxu0 0.0
  %3454 = vmatprep.subr.mxu0 0.0
  %3455 = vmatpush1.msra.mxu0 0.0
  %3456 = vmatprep.subr.mxu0 0.0
  %3457 = vmatpush1.msra.mxu0 0.0
  %3458 = vmatprep.subr.mxu0 0.0
  %3459 = vmatpush1.msra.mxu0 0.0
  %3460 = vmatprep.subr.mxu0 0.0
  %3461 = vmatpush1.msra.mxu0 0.0
  %3462 = vmatprep.subr.mxu0 0.0
  %3463 = vmatpush1.msra.mxu0 0.0
  %3464 = vmatprep.subr.mxu0 0.0
  %3465 = vmatpush1.msra.mxu0 0.0
  %3466 = vmatprep.subr.mxu0 0.0
  %3467 = vmatpush1.msra.mxu0 0.0
  %3468 = vmatprep.subr.mxu0 0.0
  %3469 = vmatpush1.msra.mxu0 0.0
  %3470 = vmatprep.subr.mxu0 0.0
  %3471 = vmatpush1.msra.mxu0 0.0
  %3472 = vmatprep.subr.mxu0 0.0
  %3473 = vmatpush1.msra.mxu0 0.0
  %3474 = vmatprep.subr.mxu0 0.0
  %3475 = vmatpush1.msra.mxu0 0.0
  %3476 = vmatprep.subr.mxu0 0.0
  %3477 = vmatpush1.msra.mxu0 0.0
  %3478 = vmatprep.subr.mxu0 0.0
  %3479 = vmatpush1.msra.mxu0 0.0
  %3480 = vmatprep.subr.mxu0 0.0
  %3481 = vmatpush1.msra.mxu0 0.0
  %3482 = vmatprep.subr.mxu0 0.0
  %3483 = vmatpush1.msra.mxu0 0.0
  %3484 = vmatprep.subr.mxu0 0.0
  %3485 = vmatpush1.msra.mxu0 0.0
  %3486 = vmatprep.subr.mxu0 0.0
  %3487 = vmatpush1.msra.mxu0 0.0
  %3488 = vmatprep.subr.mxu0 0.0
  %3489 = vmatpush1.msra.mxu0 0.0
  %3490 = vmatprep.subr.mxu0 0.0
  %3491 = vmatpush1.msra.mxu0 0.0
  %3492 = vmatprep.subr.mxu0 0.0
  %3493 = vmatpush1.msra.mxu0 0.0
  %3494 = vmatprep.subr.mxu0 0.0
  %3495 = vmatpush1.msra.mxu0 0.0
  %3496 = vmatprep.subr.mxu0 0.0
  %3497 = vmatpush1.msra.mxu0 0.0
  %3498 = vmatprep.subr.mxu0 0.0
  %3499 = vmatpush1.msra.mxu0 0.0
  %3500 = vmatprep.mubr.f32.mxu0 0.0
  %3501 = vmatmul.mubr.f32.gmra.mrb[0].mxu0 %v3431
  %v3502 = vpop.f32.mrb[0].mxu0
  %v3503 = vadd.f32 0.0, %v3502
  %v3504 = vpop.f32.mrb[0].mxu0
  %3505 = vmatprep.mubr.f32.mxu0 0.0
  %3506 = vmatmul.mubr.f32.gmra.mrb[0].mxu0 %v3434
  %v3507 = vpop.f32.mrb[0].mxu0
  %v3508 = vadd.f32 0.0, %v3507
  %v3509 = vpop.f32.mrb[0].mxu0
  %3510 = vdwg.mxu0
  %v3512 = vsel %vm1081, %v51, 0
  %v3515 = vsel %vm1081, %v52, 0
  %3517 = vmatprep.subr.mxu0 0.0
  %3518 = vmatpush1.msra.mxu0 %v1023
  %3519 = vmatprep.subr.mxu0 0.0
  %3520 = vmatpush1.msra.mxu0 %v1024
  %3521 = vmatprep.subr.mxu0 0.0
  %3522 = vmatpush1.msra.mxu0 0.0
  %3523 = vmatprep.subr.mxu0 0.0
  %3524 = vmatpush1.msra.mxu0 0.0
  %3525 = vmatprep.subr.mxu0 0.0
  %3526 = vmatpush1.msra.mxu0 0.0
  %3527 = vmatprep.subr.mxu0 0.0
  %3528 = vmatpush1.msra.mxu0 0.0
  %3529 = vmatprep.subr.mxu0 0.0
  %3530 = vmatpush1.msra.mxu0 0.0
  %3531 = vmatprep.subr.mxu0 0.0
  %3532 = vmatpush1.msra.mxu0 0.0
  %3533 = vmatprep.subr.mxu0 0.0
  %3534 = vmatpush1.msra.mxu0 0.0
  %3535 = vmatprep.subr.mxu0 0.0
  %3536 = vmatpush1.msra.mxu0 0.0
  %3537 = vmatprep.subr.mxu0 0.0
  %3538 = vmatpush1.msra.mxu0 0.0
  %3539 = vmatprep.subr.mxu0 0.0
  %3540 = vmatpush1.msra.mxu0 0.0
  %3541 = vmatprep.subr.mxu0 0.0
  %3542 = vmatpush1.msra.mxu0 0.0
  %3543 = vmatprep.subr.mxu0 0.0
  %3544 = vmatpush1.msra.mxu0 0.0
  %3545 = vmatprep.subr.mxu0 0.0
  %3546 = vmatpush1.msra.mxu0 0.0
  %3547 = vmatprep.subr.mxu0 0.0
  %3548 = vmatpush1.msra.mxu0 0.0
  %3549 = vmatprep.subr.mxu0 0.0
  %3550 = vmatpush1.msra.mxu0 0.0
  %3551 = vmatprep.subr.mxu0 0.0
  %3552 = vmatpush1.msra.mxu0 0.0
  %3553 = vmatprep.subr.mxu0 0.0
  %3554 = vmatpush1.msra.mxu0 0.0
  %3555 = vmatprep.subr.mxu0 0.0
  %3556 = vmatpush1.msra.mxu0 0.0
  %3557 = vmatprep.subr.mxu0 0.0
  %3558 = vmatpush1.msra.mxu0 0.0
  %3559 = vmatprep.subr.mxu0 0.0
  %3560 = vmatpush1.msra.mxu0 0.0
  %3561 = vmatprep.subr.mxu0 0.0
  %3562 = vmatpush1.msra.mxu0 0.0
  %3563 = vmatprep.subr.mxu0 0.0
  %3564 = vmatpush1.msra.mxu0 0.0
  %3565 = vmatprep.subr.mxu0 0.0
  %3566 = vmatpush1.msra.mxu0 0.0
  %3567 = vmatprep.subr.mxu0 0.0
  %3568 = vmatpush1.msra.mxu0 0.0
  %3569 = vmatprep.subr.mxu0 0.0
  %3570 = vmatpush1.msra.mxu0 0.0
  %3571 = vmatprep.subr.mxu0 0.0
  %3572 = vmatpush1.msra.mxu0 0.0
  %3573 = vmatprep.subr.mxu0 0.0
  %3574 = vmatpush1.msra.mxu0 0.0
  %3575 = vmatprep.subr.mxu0 0.0
  %3576 = vmatpush1.msra.mxu0 0.0
  %3577 = vmatprep.subr.mxu0 0.0
  %3578 = vmatpush1.msra.mxu0 0.0
  %3579 = vmatprep.subr.mxu0 0.0
  %3580 = vmatpush1.msra.mxu0 0.0
  %3581 = vmatprep.mubr.f32.mxu0 0.0
  %3582 = vmatmul.mubr.f32.gmra.mrb[0].mxu0 %v3512
  %v3583 = vpop.f32.mrb[0].mxu0
  %v3584 = vadd.f32 0.0, %v3583
  %v3585 = vpop.f32.mrb[0].mxu0
  %3586 = vmatprep.mubr.f32.mxu0 0.0
  %3587 = vmatmul.mubr.f32.gmra.mrb[0].mxu0 %v3515
  %v3588 = vpop.f32.mrb[0].mxu0
  %v3589 = vadd.f32 0.0, %v3588
  %v3590 = vpop.f32.mrb[0].mxu0
  %3591 = vdwg.mxu0
  %v3593 = vsel %vm1081, %v53, 0
  %v3596 = vsel %vm1081, %v54, 0
  %3598 = vmatprep.subr.mxu0 0.0
  %3599 = vmatpush1.msra.mxu0 %v1026
  %3600 = vmatprep.subr.mxu0 0.0
  %3601 = vmatpush1.msra.mxu0 %v1027
  %3602 = vmatprep.subr.mxu0 0.0
  %3603 = vmatpush1.msra.mxu0 0.0
  %3604 = vmatprep.subr.mxu0 0.0
  %3605 = vmatpush1.msra.mxu0 0.0
  %3606 = vmatprep.subr.mxu0 0.0
  %3607 = vmatpush1.msra.mxu0 0.0
  %3608 = vmatprep.subr.mxu0 0.0
  %3609 = vmatpush1.msra.mxu0 0.0
  %3610 = vmatprep.subr.mxu0 0.0
  %3611 = vmatpush1.msra.mxu0 0.0
  %3612 = vmatprep.subr.mxu0 0.0
  %3613 = vmatpush1.msra.mxu0 0.0
  %3614 = vmatprep.subr.mxu0 0.0
  %3615 = vmatpush1.msra.mxu0 0.0
  %3616 = vmatprep.subr.mxu0 0.0
  %3617 = vmatpush1.msra.mxu0 0.0
  %3618 = vmatprep.subr.mxu0 0.0
  %3619 = vmatpush1.msra.mxu0 0.0
  %3620 = vmatprep.subr.mxu0 0.0
  %3621 = vmatpush1.msra.mxu0 0.0
  %3622 = vmatprep.subr.mxu0 0.0
  %3623 = vmatpush1.msra.mxu0 0.0
  %3624 = vmatprep.subr.mxu0 0.0
  %3625 = vmatpush1.msra.mxu0 0.0
  %3626 = vmatprep.subr.mxu0 0.0
  %3627 = vmatpush1.msra.mxu0 0.0
  %3628 = vmatprep.subr.mxu0 0.0
  %3629 = vmatpush1.msra.mxu0 0.0
  %3630 = vmatprep.subr.mxu0 0.0
  %3631 = vmatpush1.msra.mxu0 0.0
  %3632 = vmatprep.subr.mxu0 0.0
  %3633 = vmatpush1.msra.mxu0 0.0
  %3634 = vmatprep.subr.mxu0 0.0
  %3635 = vmatpush1.msra.mxu0 0.0
  %3636 = vmatprep.subr.mxu0 0.0
  %3637 = vmatpush1.msra.mxu0 0.0
  %3638 = vmatprep.subr.mxu0 0.0
  %3639 = vmatpush1.msra.mxu0 0.0
  %3640 = vmatprep.subr.mxu0 0.0
  %3641 = vmatpush1.msra.mxu0 0.0
  %3642 = vmatprep.subr.mxu0 0.0
  %3643 = vmatpush1.msra.mxu0 0.0
  %3644 = vmatprep.subr.mxu0 0.0
  %3645 = vmatpush1.msra.mxu0 0.0
  %3646 = vmatprep.subr.mxu0 0.0
  %3647 = vmatpush1.msra.mxu0 0.0
  %3648 = vmatprep.subr.mxu0 0.0
  %3649 = vmatpush1.msra.mxu0 0.0
  %3650 = vmatprep.subr.mxu0 0.0
  %3651 = vmatpush1.msra.mxu0 0.0
  %3652 = vmatprep.subr.mxu0 0.0
  %3653 = vmatpush1.msra.mxu0 0.0
  %3654 = vmatprep.subr.mxu0 0.0
  %3655 = vmatpush1.msra.mxu0 0.0
  %3656 = vmatprep.subr.mxu0 0.0
  %3657 = vmatpush1.msra.mxu0 0.0
  %3658 = vmatprep.subr.mxu0 0.0
  %3659 = vmatpush1.msra.mxu0 0.0
  %3660 = vmatprep.subr.mxu0 0.0
  %3661 = vmatpush1.msra.mxu0 0.0
  %3662 = vmatprep.mubr.f32.mxu0 0.0
  %3663 = vmatmul.mubr.f32.gmra.mrb[0].mxu0 %v3593
  %v3664 = vpop.f32.mrb[0].mxu0
  %v3665 = vadd.f32 0.0, %v3664
  %v3666 = vpop.f32.mrb[0].mxu0
  %3667 = vmatprep.mubr.f32.mxu0 0.0
  %3668 = vmatmul.mubr.f32.gmra.mrb[0].mxu0 %v3596
  %v3669 = vpop.f32.mrb[0].mxu0
  %v3670 = vadd.f32 0.0, %v3669
  %v3671 = vpop.f32.mrb[0].mxu0
  %3672 = vdwg.mxu0
  %v3674 = vsel %vm1081, %v55, 0
  %v3677 = vsel %vm1081, %v56, 0
  %3679 = vmatprep.subr.mxu0 0.0
  %3680 = vmatpush1.msra.mxu0 %v1029
  %3681 = vmatprep.subr.mxu0 0.0
  %3682 = vmatpush1.msra.mxu0 %v1030
  %3683 = vmatprep.subr.mxu0 0.0
  %3684 = vmatpush1.msra.mxu0 0.0
  %3685 = vmatprep.subr.mxu0 0.0
  %3686 = vmatpush1.msra.mxu0 0.0
  %3687 = vmatprep.subr.mxu0 0.0
  %3688 = vmatpush1.msra.mxu0 0.0
  %3689 = vmatprep.subr.mxu0 0.0
  %3690 = vmatpush1.msra.mxu0 0.0
  %3691 = vmatprep.subr.mxu0 0.0
  %3692 = vmatpush1.msra.mxu0 0.0
  %3693 = vmatprep.subr.mxu0 0.0
  %3694 = vmatpush1.msra.mxu0 0.0
  %3695 = vmatprep.subr.mxu0 0.0
  %3696 = vmatpush1.msra.mxu0 0.0
  %3697 = vmatprep.subr.mxu0 0.0
  %3698 = vmatpush1.msra.mxu0 0.0
  %3699 = vmatprep.subr.mxu0 0.0
  %3700 = vmatpush1.msra.mxu0 0.0
  %3701 = vmatprep.subr.mxu0 0.0
  %3702 = vmatpush1.msra.mxu0 0.0
  %3703 = vmatprep.subr.mxu0 0.0
  %3704 = vmatpush1.msra.mxu0 0.0
  %3705 = vmatprep.subr.mxu0 0.0
  %3706 = vmatpush1.msra.mxu0 0.0
  %3707 = vmatprep.subr.mxu0 0.0
  %3708 = vmatpush1.msra.mxu0 0.0
  %3709 = vmatprep.subr.mxu0 0.0
  %3710 = vmatpush1.msra.mxu0 0.0
  %3711 = vmatprep.subr.mxu0 0.0
  %3712 = vmatpush1.msra.mxu0 0.0
  %3713 = vmatprep.subr.mxu0 0.0
  %3714 = vmatpush1.msra.mxu0 0.0
  %3715 = vmatprep.subr.mxu0 0.0
  %3716 = vmatpush1.msra.mxu0 0.0
  %3717 = vmatprep.subr.mxu0 0.0
  %3718 = vmatpush1.msra.mxu0 0.0
  %3719 = vmatprep.subr.mxu0 0.0
  %3720 = vmatpush1.msra.mxu0 0.0
  %3721 = vmatprep.subr.mxu0 0.0
  %3722 = vmatpush1.msra.mxu0 0.0
  %3723 = vmatprep.subr.mxu0 0.0
  %3724 = vmatpush1.msra.mxu0 0.0
  %3725 = vmatprep.subr.mxu0 0.0
  %3726 = vmatpush1.msra.mxu0 0.0
  %3727 = vmatprep.subr.mxu0 0.0
  %3728 = vmatpush1.msra.mxu0 0.0
  %3729 = vmatprep.subr.mxu0 0.0
  %3730 = vmatpush1.msra.mxu0 0.0
  %3731 = vmatprep.subr.mxu0 0.0
  %3732 = vmatpush1.msra.mxu0 0.0
  %3733 = vmatprep.subr.mxu0 0.0
  %3734 = vmatpush1.msra.mxu0 0.0
  %3735 = vmatprep.subr.mxu0 0.0
  %3736 = vmatpush1.msra.mxu0 0.0
  %3737 = vmatprep.subr.mxu0 0.0
  %3738 = vmatpush1.msra.mxu0 0.0
  %3739 = vmatprep.subr.mxu0 0.0
  %3740 = vmatpush1.msra.mxu0 0.0
  %3741 = vmatprep.subr.mxu0 0.0
  %3742 = vmatpush1.msra.mxu0 0.0
  %3743 = vmatprep.mubr.f32.mxu0 0.0
  %3744 = vmatmul.mubr.f32.gmra.mrb[0].mxu0 %v3674
  %v3745 = vpop.f32.mrb[0].mxu0
  %v3746 = vadd.f32 0.0, %v3745
  %v3747 = vpop.f32.mrb[0].mxu0
  %3748 = vmatprep.mubr.f32.mxu0 0.0
  %3749 = vmatmul.mubr.f32.gmra.mrb[0].mxu0 %v3677
  %v3750 = vpop.f32.mrb[0].mxu0
  %v3751 = vadd.f32 0.0, %v3750
  %v3752 = vpop.f32.mrb[0].mxu0
  %3753 = vdwg.mxu0
  %v3755 = vsel %vm1081, %v57, 0
  %v3758 = vsel %vm1081, %v58, 0
  %3760 = vmatprep.subr.mxu0 0.0
  %3761 = vmatpush1.msra.mxu0 %v1032
  %3762 = vmatprep.subr.mxu0 0.0
  %3763 = vmatpush1.msra.mxu0 %v1033
  %3764 = vmatprep.subr.mxu0 0.0
  %3765 = vmatpush1.msra.mxu0 0.0
  %3766 = vmatprep.subr.mxu0 0.0
  %3767 = vmatpush1.msra.mxu0 0.0
  %3768 = vmatprep.subr.mxu0 0.0
  %3769 = vmatpush1.msra.mxu0 0.0
  %3770 = vmatprep.subr.mxu0 0.0
  %3771 = vmatpush1.msra.mxu0 0.0
  %3772 = vmatprep.subr.mxu0 0.0
  %3773 = vmatpush1.msra.mxu0 0.0
  %3774 = vmatprep.subr.mxu0 0.0
  %3775 = vmatpush1.msra.mxu0 0.0
  %3776 = vmatprep.subr.mxu0 0.0
  %3777 = vmatpush1.msra.mxu0 0.0
  %3778 = vmatprep.subr.mxu0 0.0
  %3779 = vmatpush1.msra.mxu0 0.0
  %3780 = vmatprep.subr.mxu0 0.0
  %3781 = vmatpush1.msra.mxu0 0.0
  %3782 = vmatprep.subr.mxu0 0.0
  %3783 = vmatpush1.msra.mxu0 0.0
  %3784 = vmatprep.subr.mxu0 0.0
  %3785 = vmatpush1.msra.mxu0 0.0
  %3786 = vmatprep.subr.mxu0 0.0
  %3787 = vmatpush1.msra.mxu0 0.0
  %3788 = vmatprep.subr.mxu0 0.0
  %3789 = vmatpush1.msra.mxu0 0.0
  %3790 = vmatprep.subr.mxu0 0.0
  %3791 = vmatpush1.msra.mxu0 0.0
  %3792 = vmatprep.subr.mxu0 0.0
  %3793 = vmatpush1.msra.mxu0 0.0
  %3794 = vmatprep.subr.mxu0 0.0
  %3795 = vmatpush1.msra.mxu0 0.0
  %3796 = vmatprep.subr.mxu0 0.0
  %3797 = vmatpush1.msra.mxu0 0.0
  %3798 = vmatprep.subr.mxu0 0.0
  %3799 = vmatpush1.msra.mxu0 0.0
  %3800 = vmatprep.subr.mxu0 0.0
  %3801 = vmatpush1.msra.mxu0 0.0
  %3802 = vmatprep.subr.mxu0 0.0
  %3803 = vmatpush1.msra.mxu0 0.0
  %3804 = vmatprep.subr.mxu0 0.0
  %3805 = vmatpush1.msra.mxu0 0.0
  %3806 = vmatprep.subr.mxu0 0.0
  %3807 = vmatpush1.msra.mxu0 0.0
  %3808 = vmatprep.subr.mxu0 0.0
  %3809 = vmatpush1.msra.mxu0 0.0
  %3810 = vmatprep.subr.mxu0 0.0
  %3811 = vmatpush1.msra.mxu0 0.0
  %3812 = vmatprep.subr.mxu0 0.0
  %3813 = vmatpush1.msra.mxu0 0.0
  %3814 = vmatprep.subr.mxu0 0.0
  %3815 = vmatpush1.msra.mxu0 0.0
  %3816 = vmatprep.subr.mxu0 0.0
  %3817 = vmatpush1.msra.mxu0 0.0
  %3818 = vmatprep.subr.mxu0 0.0
  %3819 = vmatpush1.msra.mxu0 0.0
  %3820 = vmatprep.subr.mxu0 0.0
  %3821 = vmatpush1.msra.mxu0 0.0
  %3822 = vmatprep.subr.mxu0 0.0
  %3823 = vmatpush1.msra.mxu0 0.0
  %3824 = vmatprep.mubr.f32.mxu0 0.0
  %3825 = vmatmul.mubr.f32.gmra.mrb[0].mxu0 %v3755
  %v3826 = vpop.f32.mrb[0].mxu0
  %v3827 = vadd.f32 0.0, %v3826
  %v3828 = vpop.f32.mrb[0].mxu0
  %3829 = vmatprep.mubr.f32.mxu0 0.0
  %3830 = vmatmul.mubr.f32.gmra.mrb[0].mxu0 %v3758
  %v3831 = vpop.f32.mrb[0].mxu0
  %v3832 = vadd.f32 0.0, %v3831
  %v3833 = vpop.f32.mrb[0].mxu0
  %3834 = vdwg.mxu0
  %v3836 = vsel %vm1081, %v59, 0
  %v3839 = vsel %vm1081, %v60, 0
  %3841 = vmatprep.subr.mxu0 0.0
  %3842 = vmatpush1.msra.mxu0 %v1035
  %3843 = vmatprep.subr.mxu0 0.0
  %3844 = vmatpush1.msra.mxu0 %v1036
  %3845 = vmatprep.subr.mxu0 0.0
  %3846 = vmatpush1.msra.mxu0 0.0
  %3847 = vmatprep.subr.mxu0 0.0
  %3848 = vmatpush1.msra.mxu0 0.0
  %3849 = vmatprep.subr.mxu0 0.0
  %3850 = vmatpush1.msra.mxu0 0.0
  %3851 = vmatprep.subr.mxu0 0.0
  %3852 = vmatpush1.msra.mxu0 0.0
  %3853 = vmatprep.subr.mxu0 0.0
  %3854 = vmatpush1.msra.mxu0 0.0
  %3855 = vmatprep.subr.mxu0 0.0
  %3856 = vmatpush1.msra.mxu0 0.0
  %3857 = vmatprep.subr.mxu0 0.0
  %3858 = vmatpush1.msra.mxu0 0.0
  %3859 = vmatprep.subr.mxu0 0.0
  %3860 = vmatpush1.msra.mxu0 0.0
  %3861 = vmatprep.subr.mxu0 0.0
  %3862 = vmatpush1.msra.mxu0 0.0
  %3863 = vmatprep.subr.mxu0 0.0
  %3864 = vmatpush1.msra.mxu0 0.0
  %3865 = vmatprep.subr.mxu0 0.0
  %3866 = vmatpush1.msra.mxu0 0.0
  %3867 = vmatprep.subr.mxu0 0.0
  %3868 = vmatpush1.msra.mxu0 0.0
  %3869 = vmatprep.subr.mxu0 0.0
  %3870 = vmatpush1.msra.mxu0 0.0
  %3871 = vmatprep.subr.mxu0 0.0
  %3872 = vmatpush1.msra.mxu0 0.0
  %3873 = vmatprep.subr.mxu0 0.0
  %3874 = vmatpush1.msra.mxu0 0.0
  %3875 = vmatprep.subr.mxu0 0.0
  %3876 = vmatpush1.msra.mxu0 0.0
  %3877 = vmatprep.subr.mxu0 0.0
  %3878 = vmatpush1.msra.mxu0 0.0
  %3879 = vmatprep.subr.mxu0 0.0
  %3880 = vmatpush1.msra.mxu0 0.0
  %3881 = vmatprep.subr.mxu0 0.0
  %3882 = vmatpush1.msra.mxu0 0.0
  %3883 = vmatprep.subr.mxu0 0.0
  %3884 = vmatpush1.msra.mxu0 0.0
  %3885 = vmatprep.subr.mxu0 0.0
  %3886 = vmatpush1.msra.mxu0 0.0
  %3887 = vmatprep.subr.mxu0 0.0
  %3888 = vmatpush1.msra.mxu0 0.0
  %3889 = vmatprep.subr.mxu0 0.0
  %3890 = vmatpush1.msra.mxu0 0.0
  %3891 = vmatprep.subr.mxu0 0.0
  %3892 = vmatpush1.msra.mxu0 0.0
  %3893 = vmatprep.subr.mxu0 0.0
  %3894 = vmatpush1.msra.mxu0 0.0
  %3895 = vmatprep.subr.mxu0 0.0
  %3896 = vmatpush1.msra.mxu0 0.0
  %3897 = vmatprep.subr.mxu0 0.0
  %3898 = vmatpush1.msra.mxu0 0.0
  %3899 = vmatprep.subr.mxu0 0.0
  %3900 = vmatpush1.msra.mxu0 0.0
  %3901 = vmatprep.subr.mxu0 0.0
  %3902 = vmatpush1.msra.mxu0 0.0
  %3903 = vmatprep.subr.mxu0 0.0
  %3904 = vmatpush1.msra.mxu0 0.0
  %3905 = vmatprep.mubr.f32.mxu0 0.0
  %3906 = vmatmul.mubr.f32.gmra.mrb[0].mxu0 %v3836
  %v3907 = vpop.f32.mrb[0].mxu0
  %v3908 = vadd.f32 0.0, %v3907
  %v3909 = vpop.f32.mrb[0].mxu0
  %3910 = vmatprep.mubr.f32.mxu0 0.0
  %3911 = vmatmul.mubr.f32.gmra.mrb[0].mxu0 %v3839
  %v3912 = vpop.f32.mrb[0].mxu0
  %v3913 = vadd.f32 0.0, %v3912
  %v3914 = vpop.f32.mrb[0].mxu0
  %3915 = vdwg.mxu0
  %v3917 = vsel %vm1081, %v61, 0
  %v3920 = vsel %vm1081, %v62, 0
  %3922 = vmatprep.subr.mxu0 0.0
  %3923 = vmatpush1.msra.mxu0 %v1038
  %3924 = vmatprep.subr.mxu0 0.0
  %3925 = vmatpush1.msra.mxu0 %v1039
  %3926 = vmatprep.subr.mxu0 0.0
  %3927 = vmatpush1.msra.mxu0 0.0
  %3928 = vmatprep.subr.mxu0 0.0
  %3929 = vmatpush1.msra.mxu0 0.0
  %3930 = vmatprep.subr.mxu0 0.0
  %3931 = vmatpush1.msra.mxu0 0.0
  %3932 = vmatprep.subr.mxu0 0.0
  %3933 = vmatpush1.msra.mxu0 0.0
  %3934 = vmatprep.subr.mxu0 0.0
  %3935 = vmatpush1.msra.mxu0 0.0
  %3936 = vmatprep.subr.mxu0 0.0
  %3937 = vmatpush1.msra.mxu0 0.0
  %3938 = vmatprep.subr.mxu0 0.0
  %3939 = vmatpush1.msra.mxu0 0.0
  %3940 = vmatprep.subr.mxu0 0.0
  %3941 = vmatpush1.msra.mxu0 0.0
  %3942 = vmatprep.subr.mxu0 0.0
  %3943 = vmatpush1.msra.mxu0 0.0
  %3944 = vmatprep.subr.mxu0 0.0
  %3945 = vmatpush1.msra.mxu0 0.0
  %3946 = vmatprep.subr.mxu0 0.0
  %3947 = vmatpush1.msra.mxu0 0.0
  %3948 = vmatprep.subr.mxu0 0.0
  %3949 = vmatpush1.msra.mxu0 0.0
  %3950 = vmatprep.subr.mxu0 0.0
  %3951 = vmatpush1.msra.mxu0 0.0
  %3952 = vmatprep.subr.mxu0 0.0
  %3953 = vmatpush1.msra.mxu0 0.0
  %3954 = vmatprep.subr.mxu0 0.0
  %3955 = vmatpush1.msra.mxu0 0.0
  %3956 = vmatprep.subr.mxu0 0.0
  %3957 = vmatpush1.msra.mxu0 0.0
  %3958 = vmatprep.subr.mxu0 0.0
  %3959 = vmatpush1.msra.mxu0 0.0
  %3960 = vmatprep.subr.mxu0 0.0
  %3961 = vmatpush1.msra.mxu0 0.0
  %3962 = vmatprep.subr.mxu0 0.0
  %3963 = vmatpush1.msra.mxu0 0.0
  %3964 = vmatprep.subr.mxu0 0.0
  %3965 = vmatpush1.msra.mxu0 0.0
  %3966 = vmatprep.subr.mxu0 0.0
  %3967 = vmatpush1.msra.mxu0 0.0
  %3968 = vmatprep.subr.mxu0 0.0
  %3969 = vmatpush1.msra.mxu0 0.0
  %3970 = vmatprep.subr.mxu0 0.0
  %3971 = vmatpush1.msra.mxu0 0.0
  %3972 = vmatprep.subr.mxu0 0.0
  %3973 = vmatpush1.msra.mxu0 0.0
  %3974 = vmatprep.subr.mxu0 0.0
  %3975 = vmatpush1.msra.mxu0 0.0
  %3976 = vmatprep.subr.mxu0 0.0
  %3977 = vmatpush1.msra.mxu0 0.0
  %3978 = vmatprep.subr.mxu0 0.0
  %3979 = vmatpush1.msra.mxu0 0.0
  %3980 = vmatprep.subr.mxu0 0.0
  %3981 = vmatpush1.msra.mxu0 0.0
  %3982 = vmatprep.subr.mxu0 0.0
  %3983 = vmatpush1.msra.mxu0 0.0
  %3984 = vmatprep.subr.mxu0 0.0
  %3985 = vmatpush1.msra.mxu0 0.0
  %3986 = vmatprep.mubr.f32.mxu0 0.0
  %3987 = vmatmul.mubr.f32.gmra.mrb[0].mxu0 %v3917
  %v3988 = vpop.f32.mrb[0].mxu0
  %v3989 = vadd.f32 0.0, %v3988
  %v3990 = vpop.f32.mrb[0].mxu0
  %3991 = vmatprep.mubr.f32.mxu0 0.0
  %3992 = vmatmul.mubr.f32.gmra.mrb[0].mxu0 %v3920
  %v3993 = vpop.f32.mrb[0].mxu0
  %v3994 = vadd.f32 0.0, %v3993
  %v3995 = vpop.f32.mrb[0].mxu0
  %3996 = vdwg.mxu0
  %v3998 = vsel %vm1081, %v63, 0
  %v4001 = vsel %vm1081, %v64, 0
  %4003 = vmatprep.subr.mxu0 0.0
  %4004 = vmatpush1.msra.mxu0 %v1041
  %4005 = vmatprep.subr.mxu0 0.0
  %4006 = vmatpush1.msra.mxu0 %v1042
  %4007 = vmatprep.subr.mxu0 0.0
  %4008 = vmatpush1.msra.mxu0 0.0
  %4009 = vmatprep.subr.mxu0 0.0
  %4010 = vmatpush1.msra.mxu0 0.0
  %4011 = vmatprep.subr.mxu0 0.0
  %4012 = vmatpush1.msra.mxu0 0.0
  %4013 = vmatprep.subr.mxu0 0.0
  %4014 = vmatpush1.msra.mxu0 0.0
  %4015 = vmatprep.subr.mxu0 0.0
  %4016 = vmatpush1.msra.mxu0 0.0
  %4017 = vmatprep.subr.mxu0 0.0
  %4018 = vmatpush1.msra.mxu0 0.0
  %4019 = vmatprep.subr.mxu0 0.0
  %4020 = vmatpush1.msra.mxu0 0.0
  %4021 = vmatprep.subr.mxu0 0.0
  %4022 = vmatpush1.msra.mxu0 0.0
  %4023 = vmatprep.subr.mxu0 0.0
  %4024 = vmatpush1.msra.mxu0 0.0
  %4025 = vmatprep.subr.mxu0 0.0
  %4026 = vmatpush1.msra.mxu0 0.0
  %4027 = vmatprep.subr.mxu0 0.0
  %4028 = vmatpush1.msra.mxu0 0.0
  %4029 = vmatprep.subr.mxu0 0.0
  %4030 = vmatpush1.msra.mxu0 0.0
  %4031 = vmatprep.subr.mxu0 0.0
  %4032 = vmatpush1.msra.mxu0 0.0
  %4033 = vmatprep.subr.mxu0 0.0
  %4034 = vmatpush1.msra.mxu0 0.0
  %4035 = vmatprep.subr.mxu0 0.0
  %4036 = vmatpush1.msra.mxu0 0.0
  %4037 = vmatprep.subr.mxu0 0.0
  %4038 = vmatpush1.msra.mxu0 0.0
  %4039 = vmatprep.subr.mxu0 0.0
  %4040 = vmatpush1.msra.mxu0 0.0
  %4041 = vmatprep.subr.mxu0 0.0
  %4042 = vmatpush1.msra.mxu0 0.0
  %4043 = vmatprep.subr.mxu0 0.0
  %4044 = vmatpush1.msra.mxu0 0.0
  %4045 = vmatprep.subr.mxu0 0.0
  %4046 = vmatpush1.msra.mxu0 0.0
  %4047 = vmatprep.subr.mxu0 0.0
  %4048 = vmatpush1.msra.mxu0 0.0
  %4049 = vmatprep.subr.mxu0 0.0
  %4050 = vmatpush1.msra.mxu0 0.0
  %4051 = vmatprep.subr.mxu0 0.0
  %4052 = vmatpush1.msra.mxu0 0.0
  %4053 = vmatprep.subr.mxu0 0.0
  %4054 = vmatpush1.msra.mxu0 0.0
  %4055 = vmatprep.subr.mxu0 0.0
  %4056 = vmatpush1.msra.mxu0 0.0
  %4057 = vmatprep.subr.mxu0 0.0
  %4058 = vmatpush1.msra.mxu0 0.0
  %4059 = vmatprep.subr.mxu0 0.0
  %4060 = vmatpush1.msra.mxu0 0.0
  %4061 = vmatprep.subr.mxu0 0.0
  %4062 = vmatpush1.msra.mxu0 0.0
  %4063 = vmatprep.subr.mxu0 0.0
  %4064 = vmatpush1.msra.mxu0 0.0
  %4065 = vmatprep.subr.mxu0 0.0
  %4066 = vmatpush1.msra.mxu0 0.0
  %4067 = vmatprep.mubr.f32.mxu0 0.0
  %4068 = vmatmul.mubr.f32.gmra.mrb[0].mxu0 %v3998
  %v4069 = vpop.f32.mrb[0].mxu0
  %v4070 = vadd.f32 0.0, %v4069
  %v4071 = vpop.f32.mrb[0].mxu0
  %4072 = vmatprep.mubr.f32.mxu0 0.0
  %4073 = vmatmul.mubr.f32.gmra.mrb[0].mxu0 %v4001
  %v4074 = vpop.f32.mrb[0].mxu0
  %v4075 = vadd.f32 0.0, %v4074
  %v4076 = vpop.f32.mrb[0].mxu0
  %4077 = vdwg.mxu0
  %4078 = vmatprep.subr.mxu0 0.0
  %4079 = vmatpush1.msra.mxu0 %v3503
  %4080 = vmatprep.subr.mxu0 0.0
  %4081 = vmatpush1.msra.mxu0 %v3508
  %4082 = vmatprep.subr.mxu0 0.0
  %4083 = vmatpush1.msra.mxu0 0.0
  %4084 = vmatprep.subr.mxu0 0.0
  %4085 = vmatpush1.msra.mxu0 0.0
  %4086 = vmatprep.subr.mxu0 0.0
  %4087 = vmatpush1.msra.mxu0 0.0
  %4088 = vmatprep.subr.mxu0 0.0
  %4089 = vmatpush1.msra.mxu0 0.0
  %4090 = vmatprep.subr.mxu0 0.0
  %4091 = vmatpush1.msra.mxu0 0.0
  %4092 = vmatprep.subr.mxu0 0.0
  %4093 = vmatpush1.msra.mxu0 0.0
  %4094 = vmatprep.subr.mxu0 0.0
  %4095 = vmatpush1.msra.mxu0 0.0
  %4096 = vmatprep.subr.mxu0 0.0
  %4097 = vmatpush1.msra.mxu0 0.0
  %4098 = vmatprep.subr.mxu0 0.0
  %4099 = vmatpush1.msra.mxu0 0.0
  %4100 = vmatprep.subr.mxu0 0.0
  %4101 = vmatpush1.msra.mxu0 0.0
  %4102 = vmatprep.subr.mxu0 0.0
  %4103 = vmatpush1.msra.mxu0 0.0
  %4104 = vmatprep.subr.mxu0 0.0
  %4105 = vmatpush1.msra.mxu0 0.0
  %4106 = vmatprep.subr.mxu0 0.0
  %4107 = vmatpush1.msra.mxu0 0.0
  %4108 = vmatprep.subr.mxu0 0.0
  %4109 = vmatpush1.msra.mxu0 0.0
  %4110 = vmatprep.subr.mxu0 0.0
  %4111 = vmatpush1.msra.mxu0 0.0
  %4112 = vmatprep.subr.mxu0 0.0
  %4113 = vmatpush1.msra.mxu0 0.0
  %4114 = vmatprep.subr.mxu0 0.0
  %4115 = vmatpush1.msra.mxu0 0.0
  %4116 = vmatprep.subr.mxu0 0.0
  %4117 = vmatpush1.msra.mxu0 0.0
  %4118 = vmatprep.subr.mxu0 0.0
  %4119 = vmatpush1.msra.mxu0 0.0
  %4120 = vmatprep.subr.mxu0 0.0
  %4121 = vmatpush1.msra.mxu0 0.0
  %4122 = vmatprep.subr.mxu0 0.0
  %4123 = vmatpush1.msra.mxu0 0.0
  %4124 = vmatprep.subr.mxu0 0.0
  %4125 = vmatpush1.msra.mxu0 0.0
  %4126 = vmatprep.subr.mxu0 0.0
  %4127 = vmatpush1.msra.mxu0 0.0
  %4128 = vmatprep.subr.mxu0 0.0
  %4129 = vmatpush1.msra.mxu0 0.0
  %4130 = vmatprep.subr.mxu0 0.0
  %4131 = vmatpush1.msra.mxu0 0.0
  %4132 = vmatprep.subr.mxu0 0.0
  %4133 = vmatpush1.msra.mxu0 0.0
  %4134 = vmatprep.subr.mxu0 0.0
  %4135 = vmatpush1.msra.mxu0 0.0
  %4136 = vmatprep.subr.mxu0 0.0
  %4137 = vmatpush1.msra.mxu0 0.0
  %4138 = vmatprep.subr.mxu0 0.0
  %4139 = vmatpush1.msra.mxu0 0.0
  %4140 = vmatprep.subr.mxu0 0.0
  %4141 = vmatpush1.msra.mxu0 0.0
  %4142 = vmatprep.mubr.f32.mxu0 0.0
  %4143 = vmatmul.mubr.f32.gmra.mrb[0].mxu0 %v1083
  %v4144 = vpop.f32.mrb[0].mxu0
  %v4145 = vadd.f32 0.0, %v4144
  %v4146 = vpop.f32.mrb[0].mxu0
  %4147 = vdwg.mxu0
  %4148 = vmatprep.subr.mxu0 0.0
  %4149 = vmatpush1.msra.mxu0 %v3584
  %4150 = vmatprep.subr.mxu0 0.0
  %4151 = vmatpush1.msra.mxu0 %v3589
  %4152 = vmatprep.subr.mxu0 0.0
  %4153 = vmatpush1.msra.mxu0 0.0
  %4154 = vmatprep.subr.mxu0 0.0
  %4155 = vmatpush1.msra.mxu0 0.0
  %4156 = vmatprep.subr.mxu0 0.0
  %4157 = vmatpush1.msra.mxu0 0.0
  %4158 = vmatprep.subr.mxu0 0.0
  %4159 = vmatpush1.msra.mxu0 0.0
  %4160 = vmatprep.subr.mxu0 0.0
  %4161 = vmatpush1.msra.mxu0 0.0
  %4162 = vmatprep.subr.mxu0 0.0
  %4163 = vmatpush1.msra.mxu0 0.0
  %4164 = vmatprep.subr.mxu0 0.0
  %4165 = vmatpush1.msra.mxu0 0.0
  %4166 = vmatprep.subr.mxu0 0.0
  %4167 = vmatpush1.msra.mxu0 0.0
  %4168 = vmatprep.subr.mxu0 0.0
  %4169 = vmatpush1.msra.mxu0 0.0
  %4170 = vmatprep.subr.mxu0 0.0
  %4171 = vmatpush1.msra.mxu0 0.0
  %4172 = vmatprep.subr.mxu0 0.0
  %4173 = vmatpush1.msra.mxu0 0.0
  %4174 = vmatprep.subr.mxu0 0.0
  %4175 = vmatpush1.msra.mxu0 0.0
  %4176 = vmatprep.subr.mxu0 0.0
  %4177 = vmatpush1.msra.mxu0 0.0
  %4178 = vmatprep.subr.mxu0 0.0
  %4179 = vmatpush1.msra.mxu0 0.0
  %4180 = vmatprep.subr.mxu0 0.0
  %4181 = vmatpush1.msra.mxu0 0.0
  %4182 = vmatprep.subr.mxu0 0.0
  %4183 = vmatpush1.msra.mxu0 0.0
  %4184 = vmatprep.subr.mxu0 0.0
  %4185 = vmatpush1.msra.mxu0 0.0
  %4186 = vmatprep.subr.mxu0 0.0
  %4187 = vmatpush1.msra.mxu0 0.0
  %4188 = vmatprep.subr.mxu0 0.0
  %4189 = vmatpush1.msra.mxu0 0.0
  %4190 = vmatprep.subr.mxu0 0.0
  %4191 = vmatpush1.msra.mxu0 0.0
  %4192 = vmatprep.subr.mxu0 0.0
  %4193 = vmatpush1.msra.mxu0 0.0
  %4194 = vmatprep.subr.mxu0 0.0
  %4195 = vmatpush1.msra.mxu0 0.0
  %4196 = vmatprep.subr.mxu0 0.0
  %4197 = vmatpush1.msra.mxu0 0.0
  %4198 = vmatprep.subr.mxu0 0.0
  %4199 = vmatpush1.msra.mxu0 0.0
  %4200 = vmatprep.subr.mxu0 0.0
  %4201 = vmatpush1.msra.mxu0 0.0
  %4202 = vmatprep.subr.mxu0 0.0
  %4203 = vmatpush1.msra.mxu0 0.0
  %4204 = vmatprep.subr.mxu0 0.0
  %4205 = vmatpush1.msra.mxu0 0.0
  %4206 = vmatprep.subr.mxu0 0.0
  %4207 = vmatpush1.msra.mxu0 0.0
  %4208 = vmatprep.subr.mxu0 0.0
  %4209 = vmatpush1.msra.mxu0 0.0
  %4210 = vmatprep.subr.mxu0 0.0
  %4211 = vmatpush1.msra.mxu0 0.0
  %4212 = vmatprep.mubr.f32.mxu0 0.0
  %4213 = vmatmul.mubr.f32.gmra.mrb[0].mxu0 %v1194
  %v4214 = vpop.f32.mrb[0].mxu0
  %v4215 = vadd.f32 0.0, %v4214
  %v4216 = vpop.f32.mrb[0].mxu0
  %4217 = vdwg.mxu0
  %4218 = vmatprep.subr.mxu0 0.0
  %4219 = vmatpush1.msra.mxu0 %v3665
  %4220 = vmatprep.subr.mxu0 0.0
  %4221 = vmatpush1.msra.mxu0 %v3670
  %4222 = vmatprep.subr.mxu0 0.0
  %4223 = vmatpush1.msra.mxu0 0.0
  %4224 = vmatprep.subr.mxu0 0.0
  %4225 = vmatpush1.msra.mxu0 0.0
  %4226 = vmatprep.subr.mxu0 0.0
  %4227 = vmatpush1.msra.mxu0 0.0
  %4228 = vmatprep.subr.mxu0 0.0
  %4229 = vmatpush1.msra.mxu0 0.0
  %4230 = vmatprep.subr.mxu0 0.0
  %4231 = vmatpush1.msra.mxu0 0.0
  %4232 = vmatprep.subr.mxu0 0.0
  %4233 = vmatpush1.msra.mxu0 0.0
  %4234 = vmatprep.subr.mxu0 0.0
  %4235 = vmatpush1.msra.mxu0 0.0
  %4236 = vmatprep.subr.mxu0 0.0
  %4237 = vmatpush1.msra.mxu0 0.0
  %4238 = vmatprep.subr.mxu0 0.0
  %4239 = vmatpush1.msra.mxu0 0.0
  %4240 = vmatprep.subr.mxu0 0.0
  %4241 = vmatpush1.msra.mxu0 0.0
  %4242 = vmatprep.subr.mxu0 0.0
  %4243 = vmatpush1.msra.mxu0 0.0
  %4244 = vmatprep.subr.mxu0 0.0
  %4245 = vmatpush1.msra.mxu0 0.0
  %4246 = vmatprep.subr.mxu0 0.0
  %4247 = vmatpush1.msra.mxu0 0.0
  %4248 = vmatprep.subr.mxu0 0.0
  %4249 = vmatpush1.msra.mxu0 0.0
  %4250 = vmatprep.subr.mxu0 0.0
  %4251 = vmatpush1.msra.mxu0 0.0
  %4252 = vmatprep.subr.mxu0 0.0
  %4253 = vmatpush1.msra.mxu0 0.0
  %4254 = vmatprep.subr.mxu0 0.0
  %4255 = vmatpush1.msra.mxu0 0.0
  %4256 = vmatprep.subr.mxu0 0.0
  %4257 = vmatpush1.msra.mxu0 0.0
  %4258 = vmatprep.subr.mxu0 0.0
  %4259 = vmatpush1.msra.mxu0 0.0
  %4260 = vmatprep.subr.mxu0 0.0
  %4261 = vmatpush1.msra.mxu0 0.0
  %4262 = vmatprep.subr.mxu0 0.0
  %4263 = vmatpush1.msra.mxu0 0.0
  %4264 = vmatprep.subr.mxu0 0.0
  %4265 = vmatpush1.msra.mxu0 0.0
  %4266 = vmatprep.subr.mxu0 0.0
  %4267 = vmatpush1.msra.mxu0 0.0
  %4268 = vmatprep.subr.mxu0 0.0
  %4269 = vmatpush1.msra.mxu0 0.0
  %4270 = vmatprep.subr.mxu0 0.0
  %4271 = vmatpush1.msra.mxu0 0.0
  %4272 = vmatprep.subr.mxu0 0.0
  %4273 = vmatpush1.msra.mxu0 0.0
  %4274 = vmatprep.subr.mxu0 0.0
  %4275 = vmatpush1.msra.mxu0 0.0
  %4276 = vmatprep.subr.mxu0 0.0
  %4277 = vmatpush1.msra.mxu0 0.0
  %4278 = vmatprep.subr.mxu0 0.0
  %4279 = vmatpush1.msra.mxu0 0.0
  %4280 = vmatprep.subr.mxu0 0.0
  %4281 = vmatpush1.msra.mxu0 0.0
  %4282 = vmatprep.mubr.f32.mxu0 0.0
  %4283 = vmatmul.mubr.f32.gmra.mrb[0].mxu0 %v1305
  %v4284 = vpop.f32.mrb[0].mxu0
  %v4285 = vadd.f32 0.0, %v4284
  %v4286 = vpop.f32.mrb[0].mxu0
  %4287 = vdwg.mxu0
  %4288 = vmatprep.subr.mxu0 0.0
  %4289 = vmatpush1.msra.mxu0 %v3746
  %4290 = vmatprep.subr.mxu0 0.0
  %4291 = vmatpush1.msra.mxu0 %v3751
  %4292 = vmatprep.subr.mxu0 0.0
  %4293 = vmatpush1.msra.mxu0 0.0
  %4294 = vmatprep.subr.mxu0 0.0
  %4295 = vmatpush1.msra.mxu0 0.0
  %4296 = vmatprep.subr.mxu0 0.0
  %4297 = vmatpush1.msra.mxu0 0.0
  %4298 = vmatprep.subr.mxu0 0.0
  %4299 = vmatpush1.msra.mxu0 0.0
  %4300 = vmatprep.subr.mxu0 0.0
  %4301 = vmatpush1.msra.mxu0 0.0
  %4302 = vmatprep.subr.mxu0 0.0
  %4303 = vmatpush1.msra.mxu0 0.0
  %4304 = vmatprep.subr.mxu0 0.0
  %4305 = vmatpush1.msra.mxu0 0.0
  %4306 = vmatprep.subr.mxu0 0.0
  %4307 = vmatpush1.msra.mxu0 0.0
  %4308 = vmatprep.subr.mxu0 0.0
  %4309 = vmatpush1.msra.mxu0 0.0
  %4310 = vmatprep.subr.mxu0 0.0
  %4311 = vmatpush1.msra.mxu0 0.0
  %4312 = vmatprep.subr.mxu0 0.0
  %4313 = vmatpush1.msra.mxu0 0.0
  %4314 = vmatprep.subr.mxu0 0.0
  %4315 = vmatpush1.msra.mxu0 0.0
  %4316 = vmatprep.subr.mxu0 0.0
  %4317 = vmatpush1.msra.mxu0 0.0
  %4318 = vmatprep.subr.mxu0 0.0
  %4319 = vmatpush1.msra.mxu0 0.0
  %4320 = vmatprep.subr.mxu0 0.0
  %4321 = vmatpush1.msra.mxu0 0.0
  %4322 = vmatprep.subr.mxu0 0.0
  %4323 = vmatpush1.msra.mxu0 0.0
  %4324 = vmatprep.subr.mxu0 0.0
  %4325 = vmatpush1.msra.mxu0 0.0
  %4326 = vmatprep.subr.mxu0 0.0
  %4327 = vmatpush1.msra.mxu0 0.0
  %4328 = vmatprep.subr.mxu0 0.0
  %4329 = vmatpush1.msra.mxu0 0.0
  %4330 = vmatprep.subr.mxu0 0.0
  %4331 = vmatpush1.msra.mxu0 0.0
  %4332 = vmatprep.subr.mxu0 0.0
  %4333 = vmatpush1.msra.mxu0 0.0
  %4334 = vmatprep.subr.mxu0 0.0
  %4335 = vmatpush1.msra.mxu0 0.0
  %4336 = vmatprep.subr.mxu0 0.0
  %4337 = vmatpush1.msra.mxu0 0.0
  %4338 = vmatprep.subr.mxu0 0.0
  %4339 = vmatpush1.msra.mxu0 0.0
  %4340 = vmatprep.subr.mxu0 0.0
  %4341 = vmatpush1.msra.mxu0 0.0
  %4342 = vmatprep.subr.mxu0 0.0
  %4343 = vmatpush1.msra.mxu0 0.0
  %4344 = vmatprep.subr.mxu0 0.0
  %4345 = vmatpush1.msra.mxu0 0.0
  %4346 = vmatprep.subr.mxu0 0.0
  %4347 = vmatpush1.msra.mxu0 0.0
  %4348 = vmatprep.subr.mxu0 0.0
  %4349 = vmatpush1.msra.mxu0 0.0
  %4350 = vmatprep.subr.mxu0 0.0
  %4351 = vmatpush1.msra.mxu0 0.0
  %4352 = vmatprep.mubr.f32.mxu0 0.0
  %4353 = vmatmul.mubr.f32.gmra.mrb[0].mxu0 %v1416
  %v4354 = vpop.f32.mrb[0].mxu0
  %v4355 = vadd.f32 0.0, %v4354
  %v4356 = vpop.f32.mrb[0].mxu0
  %4357 = vdwg.mxu0
  %4358 = vmatprep.subr.mxu0 0.0
  %4359 = vmatpush1.msra.mxu0 %v3827
  %4360 = vmatprep.subr.mxu0 0.0
  %4361 = vmatpush1.msra.mxu0 %v3832
  %4362 = vmatprep.subr.mxu0 0.0
  %4363 = vmatpush1.msra.mxu0 0.0
  %4364 = vmatprep.subr.mxu0 0.0
  %4365 = vmatpush1.msra.mxu0 0.0
  %4366 = vmatprep.subr.mxu0 0.0
  %4367 = vmatpush1.msra.mxu0 0.0
  %4368 = vmatprep.subr.mxu0 0.0
  %4369 = vmatpush1.msra.mxu0 0.0
  %4370 = vmatprep.subr.mxu0 0.0
  %4371 = vmatpush1.msra.mxu0 0.0
  %4372 = vmatprep.subr.mxu0 0.0
  %4373 = vmatpush1.msra.mxu0 0.0
  %4374 = vmatprep.subr.mxu0 0.0
  %4375 = vmatpush1.msra.mxu0 0.0
  %4376 = vmatprep.subr.mxu0 0.0
  %4377 = vmatpush1.msra.mxu0 0.0
  %4378 = vmatprep.subr.mxu0 0.0
  %4379 = vmatpush1.msra.mxu0 0.0
  %4380 = vmatprep.subr.mxu0 0.0
  %4381 = vmatpush1.msra.mxu0 0.0
  %4382 = vmatprep.subr.mxu0 0.0
  %4383 = vmatpush1.msra.mxu0 0.0
  %4384 = vmatprep.subr.mxu0 0.0
  %4385 = vmatpush1.msra.mxu0 0.0
  %4386 = vmatprep.subr.mxu0 0.0
  %4387 = vmatpush1.msra.mxu0 0.0
  %4388 = vmatprep.subr.mxu0 0.0
  %4389 = vmatpush1.msra.mxu0 0.0
  %4390 = vmatprep.subr.mxu0 0.0
  %4391 = vmatpush1.msra.mxu0 0.0
  %4392 = vmatprep.subr.mxu0 0.0
  %4393 = vmatpush1.msra.mxu0 0.0
  %4394 = vmatprep.subr.mxu0 0.0
  %4395 = vmatpush1.msra.mxu0 0.0
  %4396 = vmatprep.subr.mxu0 0.0
  %4397 = vmatpush1.msra.mxu0 0.0
  %4398 = vmatprep.subr.mxu0 0.0
  %4399 = vmatpush1.msra.mxu0 0.0
  %4400 = vmatprep.subr.mxu0 0.0
  %4401 = vmatpush1.msra.mxu0 0.0
  %4402 = vmatprep.subr.mxu0 0.0
  %4403 = vmatpush1.msra.mxu0 0.0
  %4404 = vmatprep.subr.mxu0 0.0
  %4405 = vmatpush1.msra.mxu0 0.0
  %4406 = vmatprep.subr.mxu0 0.0
  %4407 = vmatpush1.msra.mxu0 0.0
  %4408 = vmatprep.subr.mxu0 0.0
  %4409 = vmatpush1.msra.mxu0 0.0
  %4410 = vmatprep.subr.mxu0 0.0
  %4411 = vmatpush1.msra.mxu0 0.0
  %4412 = vmatprep.subr.mxu0 0.0
  %4413 = vmatpush1.msra.mxu0 0.0
  %4414 = vmatprep.subr.mxu0 0.0
  %4415 = vmatpush1.msra.mxu0 0.0
  %4416 = vmatprep.subr.mxu0 0.0
  %4417 = vmatpush1.msra.mxu0 0.0
  %4418 = vmatprep.subr.mxu0 0.0
  %4419 = vmatpush1.msra.mxu0 0.0
  %4420 = vmatprep.subr.mxu0 0.0
  %4421 = vmatpush1.msra.mxu0 0.0
  %4422 = vmatprep.mubr.f32.mxu0 0.0
  %4423 = vmatmul.mubr.f32.gmra.mrb[0].mxu0 %v1527
  %v4424 = vpop.f32.mrb[0].mxu0
  %v4425 = vadd.f32 0.0, %v4424
  %v4426 = vpop.f32.mrb[0].mxu0
  %4427 = vdwg.mxu0
  %4428 = vmatprep.subr.mxu0 0.0
  %4429 = vmatpush1.msra.mxu0 %v3908
  %4430 = vmatprep.subr.mxu0 0.0
  %4431 = vmatpush1.msra.mxu0 %v3913
  %4432 = vmatprep.subr.mxu0 0.0
  %4433 = vmatpush1.msra.mxu0 0.0
  %4434 = vmatprep.subr.mxu0 0.0
  %4435 = vmatpush1.msra.mxu0 0.0
  %4436 = vmatprep.subr.mxu0 0.0
  %4437 = vmatpush1.msra.mxu0 0.0
  %4438 = vmatprep.subr.mxu0 0.0
  %4439 = vmatpush1.msra.mxu0 0.0
  %4440 = vmatprep.subr.mxu0 0.0
  %4441 = vmatpush1.msra.mxu0 0.0
  %4442 = vmatprep.subr.mxu0 0.0
  %4443 = vmatpush1.msra.mxu0 0.0
  %4444 = vmatprep.subr.mxu0 0.0
  %4445 = vmatpush1.msra.mxu0 0.0
  %4446 = vmatprep.subr.mxu0 0.0
  %4447 = vmatpush1.msra.mxu0 0.0
  %4448 = vmatprep.subr.mxu0 0.0
  %4449 = vmatpush1.msra.mxu0 0.0
  %4450 = vmatprep.subr.mxu0 0.0
  %4451 = vmatpush1.msra.mxu0 0.0
  %4452 = vmatprep.subr.mxu0 0.0
  %4453 = vmatpush1.msra.mxu0 0.0
  %4454 = vmatprep.subr.mxu0 0.0
  %4455 = vmatpush1.msra.mxu0 0.0
  %4456 = vmatprep.subr.mxu0 0.0
  %4457 = vmatpush1.msra.mxu0 0.0
  %4458 = vmatprep.subr.mxu0 0.0
  %4459 = vmatpush1.msra.mxu0 0.0
  %4460 = vmatprep.subr.mxu0 0.0
  %4461 = vmatpush1.msra.mxu0 0.0
  %4462 = vmatprep.subr.mxu0 0.0
  %4463 = vmatpush1.msra.mxu0 0.0
  %4464 = vmatprep.subr.mxu0 0.0
  %4465 = vmatpush1.msra.mxu0 0.0
  %4466 = vmatprep.subr.mxu0 0.0
  %4467 = vmatpush1.msra.mxu0 0.0
  %4468 = vmatprep.subr.mxu0 0.0
  %4469 = vmatpush1.msra.mxu0 0.0
  %4470 = vmatprep.subr.mxu0 0.0
  %4471 = vmatpush1.msra.mxu0 0.0
  %4472 = vmatprep.subr.mxu0 0.0
  %4473 = vmatpush1.msra.mxu0 0.0
  %4474 = vmatprep.subr.mxu0 0.0
  %4475 = vmatpush1.msra.mxu0 0.0
  %4476 = vmatprep.subr.mxu0 0.0
  %4477 = vmatpush1.msra.mxu0 0.0
  %4478 = vmatprep.subr.mxu0 0.0
  %4479 = vmatpush1.msra.mxu0 0.0
  %4480 = vmatprep.subr.mxu0 0.0
  %4481 = vmatpush1.msra.mxu0 0.0
  %4482 = vmatprep.subr.mxu0 0.0
  %4483 = vmatpush1.msra.mxu0 0.0
  %4484 = vmatprep.subr.mxu0 0.0
  %4485 = vmatpush1.msra.mxu0 0.0
  %4486 = vmatprep.subr.mxu0 0.0
  %4487 = vmatpush1.msra.mxu0 0.0
  %4488 = vmatprep.subr.mxu0 0.0
  %4489 = vmatpush1.msra.mxu0 0.0
  %4490 = vmatprep.subr.mxu0 0.0
  %4491 = vmatpush1.msra.mxu0 0.0
  %4492 = vmatprep.mubr.f32.mxu0 0.0
  %4493 = vmatmul.mubr.f32.gmra.mrb[0].mxu0 %v1638
  %v4494 = vpop.f32.mrb[0].mxu0
  %v4495 = vadd.f32 0.0, %v4494
  %v4496 = vpop.f32.mrb[0].mxu0
  %4497 = vdwg.mxu0
  %4498 = vmatprep.subr.mxu0 0.0
  %4499 = vmatpush1.msra.mxu0 %v3989
  %4500 = vmatprep.subr.mxu0 0.0
  %4501 = vmatpush1.msra.mxu0 %v3994
  %4502 = vmatprep.subr.mxu0 0.0
  %4503 = vmatpush1.msra.mxu0 0.0
  %4504 = vmatprep.subr.mxu0 0.0
  %4505 = vmatpush1.msra.mxu0 0.0
  %4506 = vmatprep.subr.mxu0 0.0
  %4507 = vmatpush1.msra.mxu0 0.0
  %4508 = vmatprep.subr.mxu0 0.0
  %4509 = vmatpush1.msra.mxu0 0.0
  %4510 = vmatprep.subr.mxu0 0.0
  %4511 = vmatpush1.msra.mxu0 0.0
  %4512 = vmatprep.subr.mxu0 0.0
  %4513 = vmatpush1.msra.mxu0 0.0
  %4514 = vmatprep.subr.mxu0 0.0
  %4515 = vmatpush1.msra.mxu0 0.0
  %4516 = vmatprep.subr.mxu0 0.0
  %4517 = vmatpush1.msra.mxu0 0.0
  %4518 = vmatprep.subr.mxu0 0.0
  %4519 = vmatpush1.msra.mxu0 0.0
  %4520 = vmatprep.subr.mxu0 0.0
  %4521 = vmatpush1.msra.mxu0 0.0
  %4522 = vmatprep.subr.mxu0 0.0
  %4523 = vmatpush1.msra.mxu0 0.0
  %4524 = vmatprep.subr.mxu0 0.0
  %4525 = vmatpush1.msra.mxu0 0.0
  %4526 = vmatprep.subr.mxu0 0.0
  %4527 = vmatpush1.msra.mxu0 0.0
  %4528 = vmatprep.subr.mxu0 0.0
  %4529 = vmatpush1.msra.mxu0 0.0
  %4530 = vmatprep.subr.mxu0 0.0
  %4531 = vmatpush1.msra.mxu0 0.0
  %4532 = vmatprep.subr.mxu0 0.0
  %4533 = vmatpush1.msra.mxu0 0.0
  %4534 = vmatprep.subr.mxu0 0.0
  %4535 = vmatpush1.msra.mxu0 0.0
  %4536 = vmatprep.subr.mxu0 0.0
  %4537 = vmatpush1.msra.mxu0 0.0
  %4538 = vmatprep.subr.mxu0 0.0
  %4539 = vmatpush1.msra.mxu0 0.0
  %4540 = vmatprep.subr.mxu0 0.0
  %4541 = vmatpush1.msra.mxu0 0.0
  %4542 = vmatprep.subr.mxu0 0.0
  %4543 = vmatpush1.msra.mxu0 0.0
  %4544 = vmatprep.subr.mxu0 0.0
  %4545 = vmatpush1.msra.mxu0 0.0
  %4546 = vmatprep.subr.mxu0 0.0
  %4547 = vmatpush1.msra.mxu0 0.0
  %4548 = vmatprep.subr.mxu0 0.0
  %4549 = vmatpush1.msra.mxu0 0.0
  %4550 = vmatprep.subr.mxu0 0.0
  %4551 = vmatpush1.msra.mxu0 0.0
  %4552 = vmatprep.subr.mxu0 0.0
  %4553 = vmatpush1.msra.mxu0 0.0
  %4554 = vmatprep.subr.mxu0 0.0
  %4555 = vmatpush1.msra.mxu0 0.0
  %4556 = vmatprep.subr.mxu0 0.0
  %4557 = vmatpush1.msra.mxu0 0.0
  %4558 = vmatprep.subr.mxu0 0.0
  %4559 = vmatpush1.msra.mxu0 0.0
  %4560 = vmatprep.subr.mxu0 0.0
  %4561 = vmatpush1.msra.mxu0 0.0
  %4562 = vmatprep.mubr.f32.mxu0 0.0
  %4563 = vmatmul.mubr.f32.gmra.mrb[0].mxu0 %v1749
  %v4564 = vpop.f32.mrb[0].mxu0
  %v4565 = vadd.f32 0.0, %v4564
  %v4566 = vpop.f32.mrb[0].mxu0
  %4567 = vdwg.mxu0
  %4568 = vmatprep.subr.mxu0 0.0
  %4569 = vmatpush1.msra.mxu0 %v4070
  %4570 = vmatprep.subr.mxu0 0.0
  %4571 = vmatpush1.msra.mxu0 %v4075
  %4572 = vmatprep.subr.mxu0 0.0
  %4573 = vmatpush1.msra.mxu0 0.0
  %4574 = vmatprep.subr.mxu0 0.0
  %4575 = vmatpush1.msra.mxu0 0.0
  %4576 = vmatprep.subr.mxu0 0.0
  %4577 = vmatpush1.msra.mxu0 0.0
  %4578 = vmatprep.subr.mxu0 0.0
  %4579 = vmatpush1.msra.mxu0 0.0
  %4580 = vmatprep.subr.mxu0 0.0
  %4581 = vmatpush1.msra.mxu0 0.0
  %4582 = vmatprep.subr.mxu0 0.0
  %4583 = vmatpush1.msra.mxu0 0.0
  %4584 = vmatprep.subr.mxu0 0.0
  %4585 = vmatpush1.msra.mxu0 0.0
  %4586 = vmatprep.subr.mxu0 0.0
  %4587 = vmatpush1.msra.mxu0 0.0
  %4588 = vmatprep.subr.mxu0 0.0
  %4589 = vmatpush1.msra.mxu0 0.0
  %4590 = vmatprep.subr.mxu0 0.0
  %4591 = vmatpush1.msra.mxu0 0.0
  %4592 = vmatprep.subr.mxu0 0.0
  %4593 = vmatpush1.msra.mxu0 0.0
  %4594 = vmatprep.subr.mxu0 0.0
  %4595 = vmatpush1.msra.mxu0 0.0
  %4596 = vmatprep.subr.mxu0 0.0
  %4597 = vmatpush1.msra.mxu0 0.0
  %4598 = vmatprep.subr.mxu0 0.0
  %4599 = vmatpush1.msra.mxu0 0.0
  %4600 = vmatprep.subr.mxu0 0.0
  %4601 = vmatpush1.msra.mxu0 0.0
  %4602 = vmatprep.subr.mxu0 0.0
  %4603 = vmatpush1.msra.mxu0 0.0
  %4604 = vmatprep.subr.mxu0 0.0
  %4605 = vmatpush1.msra.mxu0 0.0
  %4606 = vmatprep.subr.mxu0 0.0
  %4607 = vmatpush1.msra.mxu0 0.0
  %4608 = vmatprep.subr.mxu0 0.0
  %4609 = vmatpush1.msra.mxu0 0.0
  %4610 = vmatprep.subr.mxu0 0.0
  %4611 = vmatpush1.msra.mxu0 0.0
  %4612 = vmatprep.subr.mxu0 0.0
  %4613 = vmatpush1.msra.mxu0 0.0
  %4614 = vmatprep.subr.mxu0 0.0
  %4615 = vmatpush1.msra.mxu0 0.0
  %4616 = vmatprep.subr.mxu0 0.0
  %4617 = vmatpush1.msra.mxu0 0.0
  %4618 = vmatprep.subr.mxu0 0.0
  %4619 = vmatpush1.msra.mxu0 0.0
  %4620 = vmatprep.subr.mxu0 0.0
  %4621 = vmatpush1.msra.mxu0 0.0
  %4622 = vmatprep.subr.mxu0 0.0
  %4623 = vmatpush1.msra.mxu0 0.0
  %4624 = vmatprep.subr.mxu0 0.0
  %4625 = vmatpush1.msra.mxu0 0.0
  %4626 = vmatprep.subr.mxu0 0.0
  %4627 = vmatpush1.msra.mxu0 0.0
  %4628 = vmatprep.subr.mxu0 0.0
  %4629 = vmatpush1.msra.mxu0 0.0
  %4630 = vmatprep.subr.mxu0 0.0
  %4631 = vmatpush1.msra.mxu0 0.0
  %4632 = vmatprep.mubr.f32.mxu0 0.0
  %4633 = vmatmul.mubr.f32.gmra.mrb[0].mxu0 %v1860
  %v4634 = vpop.f32.mrb[0].mxu0
  %v4635 = vadd.f32 0.0, %v4634
  %v4636 = vpop.f32.mrb[0].mxu0
  %4637 = vdwg.mxu0
  %v4639 = vrot.slane %v77, 7
  %v4640 = vrot.slane %v78, 7
  %v4641 = vsel %vm2082, %v4639, %v4640
  %v4643 = vmul.f32 %v4145, %v4641
  %v4644 = vmul.f32 %v4215, %v4641
  %v4645 = vmul.f32 %v4285, %v4641
  %v4646 = vmul.f32 %v4355, %v4641
  %v4647 = vmul.f32 %v4425, %v4641
  %v4648 = vmul.f32 %v4495, %v4641
  %v4649 = vmul.f32 %v4565, %v4641
  %v4650 = vmul.f32 %v4635, %v4641
  %vm4651 = vcmask 27648
  %v4652 = vsel %vm4651, %v4643, 0.0
  %4653 = vadd.xlane.f32.xlu0 %v4652
  %v4654 = vpop.xlane.xlu0 %4653
  %v4655 = vsel %vm4651, %v4644, 0.0
  %4656 = vadd.xlane.f32.xlu0 %v4655
  %v4657 = vpop.xlane.xlu0 %4656
  %v4658 = vsel %vm4651, %v4645, 0.0
  %4659 = vadd.xlane.f32.xlu0 %v4658
  %v4660 = vpop.xlane.xlu0 %4659
  %v4661 = vsel %vm4651, %v4646, 0.0
  %4662 = vadd.xlane.f32.xlu0 %v4661
  %v4663 = vpop.xlane.xlu0 %4662
  %v4664 = vsel %vm4651, %v4647, 0.0
  %4665 = vadd.xlane.f32.xlu0 %v4664
  %v4666 = vpop.xlane.xlu0 %4665
  %v4667 = vsel %vm4651, %v4648, 0.0
  %4668 = vadd.xlane.f32.xlu0 %v4667
  %v4669 = vpop.xlane.xlu0 %4668
  %v4670 = vsel %vm4651, %v4649, 0.0
  %4671 = vadd.xlane.f32.xlu0 %v4670
  %v4672 = vpop.xlane.xlu0 %4671
  %v4673 = vsel %vm4651, %v4650, 0.0
  %4674 = vadd.xlane.f32.xlu0 %v4673
  %v4675 = vpop.xlane.xlu0 %4674
  %v4676 = vsel %vm230, %v4654, 0.0
  %v4677 = vrot.slane %v4676, 4
  %v4678 = vadd.f32 %v4676, %v4677
  %v4679 = vrot.slane %v4678, 2
  %v4680 = vadd.f32 %v4678, %v4679
  %v4681 = vrot.slane %v4680, 1
  %v4682 = vadd.f32 %v4680, %v4681
  %v4683 = vsel %vm230, %v4657, 0.0
  %v4684 = vrot.slane %v4683, 4
  %v4685 = vadd.f32 %v4683, %v4684
  %v4686 = vrot.slane %v4685, 2
  %v4687 = vadd.f32 %v4685, %v4686
  %v4688 = vrot.slane %v4687, 1
  %v4689 = vadd.f32 %v4687, %v4688
  %v4690 = vsel %vm230, %v4660, 0.0
  %v4691 = vrot.slane %v4690, 4
  %v4692 = vadd.f32 %v4690, %v4691
  %v4693 = vrot.slane %v4692, 2
  %v4694 = vadd.f32 %v4692, %v4693
  %v4695 = vrot.slane %v4694, 1
  %v4696 = vadd.f32 %v4694, %v4695
  %v4697 = vsel %vm230, %v4663, 0.0
  %v4698 = vrot.slane %v4697, 4
  %v4699 = vadd.f32 %v4697, %v4698
  %v4700 = vrot.slane %v4699, 2
  %v4701 = vadd.f32 %v4699, %v4700
  %v4702 = vrot.slane %v4701, 1
  %v4703 = vadd.f32 %v4701, %v4702
  %v4704 = vsel %vm230, %v4666, 0.0
  %v4705 = vrot.slane %v4704, 4
  %v4706 = vadd.f32 %v4704, %v4705
  %v4707 = vrot.slane %v4706, 2
  %v4708 = vadd.f32 %v4706, %v4707
  %v4709 = vrot.slane %v4708, 1
  %v4710 = vadd.f32 %v4708, %v4709
  %v4711 = vsel %vm230, %v4669, 0.0
  %v4712 = vrot.slane %v4711, 4
  %v4713 = vadd.f32 %v4711, %v4712
  %v4714 = vrot.slane %v4713, 2
  %v4715 = vadd.f32 %v4713, %v4714
  %v4716 = vrot.slane %v4715, 1
  %v4717 = vadd.f32 %v4715, %v4716
  %v4718 = vsel %vm230, %v4672, 0.0
  %v4719 = vrot.slane %v4718, 4
  %v4720 = vadd.f32 %v4718, %v4719
  %v4721 = vrot.slane %v4720, 2
  %v4722 = vadd.f32 %v4720, %v4721
  %v4723 = vrot.slane %v4722, 1
  %v4724 = vadd.f32 %v4722, %v4723
  %v4725 = vsel %vm230, %v4675, 0.0
  %v4726 = vrot.slane %v4725, 4
  %v4727 = vadd.f32 %v4725, %v4726
  %v4728 = vrot.slane %v4727, 2
  %v4729 = vadd.f32 %v4727, %v4728
  %v4730 = vrot.slane %v4729, 1
  %v4731 = vadd.f32 %v4729, %v4730
  %v4732 = vsel %vm1081, %v49, 0.0
  %4733 = vadd.xlane.f32.xlu0 %v4732
  %v4734 = vpop.xlane.xlu0 %4733
  %v4735 = vsel %vm1081, %v50, 0.0
  %4736 = vadd.xlane.f32.xlu0 %v4735
  %v4737 = vpop.xlane.xlu0 %4736
  %v4738 = vsel %vm1081, %v51, 0.0
  %4739 = vadd.xlane.f32.xlu0 %v4738
  %v4740 = vpop.xlane.xlu0 %4739
  %v4741 = vsel %vm1081, %v52, 0.0
  %4742 = vadd.xlane.f32.xlu0 %v4741
  %v4743 = vpop.xlane.xlu0 %4742
  %v4744 = vsel %vm1081, %v53, 0.0
  %4745 = vadd.xlane.f32.xlu0 %v4744
  %v4746 = vpop.xlane.xlu0 %4745
  %v4747 = vsel %vm1081, %v54, 0.0
  %4748 = vadd.xlane.f32.xlu0 %v4747
  %v4749 = vpop.xlane.xlu0 %4748
  %v4750 = vsel %vm1081, %v55, 0.0
  %4751 = vadd.xlane.f32.xlu0 %v4750
  %v4752 = vpop.xlane.xlu0 %4751
  %v4753 = vsel %vm1081, %v56, 0.0
  %4754 = vadd.xlane.f32.xlu0 %v4753
  %v4755 = vpop.xlane.xlu0 %4754
  %v4756 = vsel %vm1081, %v57, 0.0
  %4757 = vadd.xlane.f32.xlu0 %v4756
  %v4758 = vpop.xlane.xlu0 %4757
  %v4759 = vsel %vm1081, %v58, 0.0
  %4760 = vadd.xlane.f32.xlu0 %v4759
  %v4761 = vpop.xlane.xlu0 %4760
  %v4762 = vsel %vm1081, %v59, 0.0
  %4763 = vadd.xlane.f32.xlu0 %v4762
  %v4764 = vpop.xlane.xlu0 %4763
  %v4765 = vsel %vm1081, %v60, 0.0
  %4766 = vadd.xlane.f32.xlu0 %v4765
  %v4767 = vpop.xlane.xlu0 %4766
  %v4768 = vsel %vm1081, %v61, 0.0
  %4769 = vadd.xlane.f32.xlu0 %v4768
  %v4770 = vpop.xlane.xlu0 %4769
  %v4771 = vsel %vm1081, %v62, 0.0
  %4772 = vadd.xlane.f32.xlu0 %v4771
  %v4773 = vpop.xlane.xlu0 %4772
  %v4774 = vsel %vm1081, %v63, 0.0
  %4775 = vadd.xlane.f32.xlu0 %v4774
  %v4776 = vpop.xlane.xlu0 %4775
  %v4777 = vsel %vm1081, %v64, 0.0
  %4778 = vadd.xlane.f32.xlu0 %v4777
  %v4779 = vpop.xlane.xlu0 %4778
  %v4780 = vmul.f32 %v1020, %v1020
  %v4781 = vmul.f32 %v1021, %v1021
  %v4782 = vmul.f32 %v1023, %v1023
  %v4783 = vmul.f32 %v1024, %v1024
  %v4784 = vmul.f32 %v1026, %v1026
  %v4785 = vmul.f32 %v1027, %v1027
  %v4786 = vmul.f32 %v1029, %v1029
  %v4787 = vmul.f32 %v1030, %v1030
  %v4788 = vmul.f32 %v1032, %v1032
  %v4789 = vmul.f32 %v1033, %v1033
  %v4790 = vmul.f32 %v1035, %v1035
  %v4791 = vmul.f32 %v1036, %v1036
  %v4792 = vmul.f32 %v1038, %v1038
  %v4793 = vmul.f32 %v1039, %v1039
  %v4794 = vmul.f32 %v1041, %v1041
  %v4795 = vmul.f32 %v1042, %v1042
  %v4796 = vmul.f32 %v4780, %v4734
  %v4797 = vmul.f32 %v4781, %v4737
  %v4798 = vmul.f32 %v4782, %v4740
  %v4799 = vmul.f32 %v4783, %v4743
  %v4800 = vmul.f32 %v4784, %v4746
  %v4801 = vmul.f32 %v4785, %v4749
  %v4802 = vmul.f32 %v4786, %v4752
  %v4803 = vmul.f32 %v4787, %v4755
  %v4804 = vmul.f32 %v4788, %v4758
  %v4805 = vmul.f32 %v4789, %v4761
  %v4806 = vmul.f32 %v4790, %v4764
  %v4807 = vmul.f32 %v4791, %v4767
  %v4808 = vmul.f32 %v4792, %v4770
  %v4809 = vmul.f32 %v4793, %v4773
  %v4810 = vmul.f32 %v4794, %v4776
  %v4811 = vmul.f32 %v4795, %v4779
  %v4812 = vsel %vm181, %v4796, 0.0
  %4813 = vadd.xlane.f32.xlu0 %v4812
  %v4814 = vpop.xlane.xlu0 %4813
  %v4815 = vsel %vm181, %v4797, 0.0
  %4816 = vadd.xlane.f32.xlu0 %v4815
  %v4817 = vpop.xlane.xlu0 %4816
  %v4818 = vsel %vm181, %v4798, 0.0
  %4819 = vadd.xlane.f32.xlu0 %v4818
  %v4820 = vpop.xlane.xlu0 %4819
  %v4821 = vsel %vm181, %v4799, 0.0
  %4822 = vadd.xlane.f32.xlu0 %v4821
  %v4823 = vpop.xlane.xlu0 %4822
  %v4824 = vsel %vm181, %v4800, 0.0
  %4825 = vadd.xlane.f32.xlu0 %v4824
  %v4826 = vpop.xlane.xlu0 %4825
  %v4827 = vsel %vm181, %v4801, 0.0
  %4828 = vadd.xlane.f32.xlu0 %v4827
  %v4829 = vpop.xlane.xlu0 %4828
  %v4830 = vsel %vm181, %v4802, 0.0
  %4831 = vadd.xlane.f32.xlu0 %v4830
  %v4832 = vpop.xlane.xlu0 %4831
  %v4833 = vsel %vm181, %v4803, 0.0
  %4834 = vadd.xlane.f32.xlu0 %v4833
  %v4835 = vpop.xlane.xlu0 %4834
  %v4836 = vsel %vm181, %v4804, 0.0
  %4837 = vadd.xlane.f32.xlu0 %v4836
  %v4838 = vpop.xlane.xlu0 %4837
  %v4839 = vsel %vm181, %v4805, 0.0
  %4840 = vadd.xlane.f32.xlu0 %v4839
  %v4841 = vpop.xlane.xlu0 %4840
  %v4842 = vsel %vm181, %v4806, 0.0
  %4843 = vadd.xlane.f32.xlu0 %v4842
  %v4844 = vpop.xlane.xlu0 %4843
  %v4845 = vsel %vm181, %v4807, 0.0
  %4846 = vadd.xlane.f32.xlu0 %v4845
  %v4847 = vpop.xlane.xlu0 %4846
  %v4848 = vsel %vm181, %v4808, 0.0
  %4849 = vadd.xlane.f32.xlu0 %v4848
  %v4850 = vpop.xlane.xlu0 %4849
  %v4851 = vsel %vm181, %v4809, 0.0
  %4852 = vadd.xlane.f32.xlu0 %v4851
  %v4853 = vpop.xlane.xlu0 %4852
  %v4854 = vsel %vm181, %v4810, 0.0
  %4855 = vadd.xlane.f32.xlu0 %v4854
  %v4856 = vpop.xlane.xlu0 %4855
  %v4857 = vsel %vm181, %v4811, 0.0
  %4858 = vadd.xlane.f32.xlu0 %v4857
  %v4859 = vpop.xlane.xlu0 %4858
  %v4860 = vadd.f32 %v4814, %v4817
  %v4861 = vrot.slane %v4860, 4
  %v4862 = vadd.f32 %v4860, %v4861
  %v4863 = vrot.slane %v4862, 2
  %v4864 = vadd.f32 %v4862, %v4863
  %v4865 = vrot.slane %v4864, 1
  %v4866 = vadd.f32 %v4864, %v4865
  %v4867 = vadd.f32 %v4820, %v4823
  %v4868 = vrot.slane %v4867, 4
  %v4869 = vadd.f32 %v4867, %v4868
  %v4870 = vrot.slane %v4869, 2
  %v4871 = vadd.f32 %v4869, %v4870
  %v4872 = vrot.slane %v4871, 1
  %v4873 = vadd.f32 %v4871, %v4872
  %v4874 = vadd.f32 %v4826, %v4829
  %v4875 = vrot.slane %v4874, 4
  %v4876 = vadd.f32 %v4874, %v4875
  %v4877 = vrot.slane %v4876, 2
  %v4878 = vadd.f32 %v4876, %v4877
  %v4879 = vrot.slane %v4878, 1
  %v4880 = vadd.f32 %v4878, %v4879
  %v4881 = vadd.f32 %v4832, %v4835
  %v4882 = vrot.slane %v4881, 4
  %v4883 = vadd.f32 %v4881, %v4882
  %v4884 = vrot.slane %v4883, 2
  %v4885 = vadd.f32 %v4883, %v4884
  %v4886 = vrot.slane %v4885, 1
  %v4887 = vadd.f32 %v4885, %v4886
  %v4888 = vadd.f32 %v4838, %v4841
  %v4889 = vrot.slane %v4888, 4
  %v4890 = vadd.f32 %v4888, %v4889
  %v4891 = vrot.slane %v4890, 2
  %v4892 = vadd.f32 %v4890, %v4891
  %v4893 = vrot.slane %v4892, 1
  %v4894 = vadd.f32 %v4892, %v4893
  %v4895 = vadd.f32 %v4844, %v4847
  %v4896 = vrot.slane %v4895, 4
  %v4897 = vadd.f32 %v4895, %v4896
  %v4898 = vrot.slane %v4897, 2
  %v4899 = vadd.f32 %v4897, %v4898
  %v4900 = vrot.slane %v4899, 1
  %v4901 = vadd.f32 %v4899, %v4900
  %v4902 = vadd.f32 %v4850, %v4853
  %v4903 = vrot.slane %v4902, 4
  %v4904 = vadd.f32 %v4902, %v4903
  %v4905 = vrot.slane %v4904, 2
  %v4906 = vadd.f32 %v4904, %v4905
  %v4907 = vrot.slane %v4906, 1
  %v4908 = vadd.f32 %v4906, %v4907
  %v4909 = vadd.f32 %v4856, %v4859
  %v4910 = vrot.slane %v4909, 4
  %v4911 = vadd.f32 %v4909, %v4910
  %v4912 = vrot.slane %v4911, 2
  %v4913 = vadd.f32 %v4911, %v4912
  %v4914 = vrot.slane %v4913, 1
  %v4915 = vadd.f32 %v4913, %v4914
  %v4916 = vrcp.pop %v4866
  %v4917 = vmul.f32 %v4682, %v4916
  %v4918 = vrcp.pop %v4873
  %v4919 = vmul.f32 %v4689, %v4918
  %v4920 = vrcp.pop %v4880
  %v4921 = vmul.f32 %v4696, %v4920
  %v4922 = vrcp.pop %v4887
  %v4923 = vmul.f32 %v4703, %v4922
  %v4924 = vrcp.pop %v4894
  %v4925 = vmul.f32 %v4710, %v4924
  %v4926 = vrcp.pop %v4901
  %v4927 = vmul.f32 %v4717, %v4926
  %v4928 = vrcp.pop %v4908
  %v4929 = vmul.f32 %v4724, %v4928
  %v4930 = vrcp.pop %v4915
  %v4931 = vmul.f32 %v4731, %v4930
  %4932 = vmatprep.subr.mxu0 0.0
  %4933 = vmatpush1.msra.mxu0 %v1020
  %4934 = vmatprep.subr.mxu0 0.0
  %4935 = vmatpush1.msra.mxu0 %v1021
  %4936 = vmatprep.subr.mxu0 0.0
  %4937 = vmatpush1.msra.mxu0 0.0
  %4938 = vmatprep.subr.mxu0 0.0
  %4939 = vmatpush1.msra.mxu0 0.0
  %4940 = vmatprep.subr.mxu0 0.0
  %4941 = vmatpush1.msra.mxu0 0.0
  %4942 = vmatprep.subr.mxu0 0.0
  %4943 = vmatpush1.msra.mxu0 0.0
  %4944 = vmatprep.subr.mxu0 0.0
  %4945 = vmatpush1.msra.mxu0 0.0
  %4946 = vmatprep.subr.mxu0 0.0
  %4947 = vmatpush1.msra.mxu0 0.0
  %4948 = vmatprep.subr.mxu0 0.0
  %4949 = vmatpush1.msra.mxu0 0.0
  %4950 = vmatprep.subr.mxu0 0.0
  %4951 = vmatpush1.msra.mxu0 0.0
  %4952 = vmatprep.subr.mxu0 0.0
  %4953 = vmatpush1.msra.mxu0 0.0
  %4954 = vmatprep.subr.mxu0 0.0
  %4955 = vmatpush1.msra.mxu0 0.0
  %4956 = vmatprep.subr.mxu0 0.0
  %4957 = vmatpush1.msra.mxu0 0.0
  %4958 = vmatprep.subr.mxu0 0.0
  %4959 = vmatpush1.msra.mxu0 0.0
  %4960 = vmatprep.subr.mxu0 0.0
  %4961 = vmatpush1.msra.mxu0 0.0
  %4962 = vmatprep.subr.mxu0 0.0
  %4963 = vmatpush1.msra.mxu0 0.0
  %4964 = vmatprep.subr.mxu0 0.0
  %4965 = vmatpush1.msra.mxu0 0.0
  %4966 = vmatprep.subr.mxu0 0.0
  %4967 = vmatpush1.msra.mxu0 0.0
  %4968 = vmatprep.subr.mxu0 0.0
  %4969 = vmatpush1.msra.mxu0 0.0
  %4970 = vmatprep.subr.mxu0 0.0
  %4971 = vmatpush1.msra.mxu0 0.0
  %4972 = vmatprep.subr.mxu0 0.0
  %4973 = vmatpush1.msra.mxu0 0.0
  %4974 = vmatprep.subr.mxu0 0.0
  %4975 = vmatpush1.msra.mxu0 0.0
  %4976 = vmatprep.subr.mxu0 0.0
  %4977 = vmatpush1.msra.mxu0 0.0
  %4978 = vmatprep.subr.mxu0 0.0
  %4979 = vmatpush1.msra.mxu0 0.0
  %4980 = vmatprep.subr.mxu0 0.0
  %4981 = vmatpush1.msra.mxu0 0.0
  %4982 = vmatprep.subr.mxu0 0.0
  %4983 = vmatpush1.msra.mxu0 0.0
  %4984 = vmatprep.subr.mxu0 0.0
  %4985 = vmatpush1.msra.mxu0 0.0
  %4986 = vmatprep.subr.mxu0 0.0
  %4987 = vmatpush1.msra.mxu0 0.0
  %4988 = vmatprep.subr.mxu0 0.0
  %4989 = vmatpush1.msra.mxu0 0.0
  %4990 = vmatprep.subr.mxu0 0.0
  %4991 = vmatpush1.msra.mxu0 0.0
  %4992 = vmatprep.subr.mxu0 0.0
  %4993 = vmatpush1.msra.mxu0 0.0
  %4994 = vmatprep.subr.mxu0 0.0
  %4995 = vmatpush1.msra.mxu0 0.0
  %4996 = vmatprep.mubr.f32.mxu0 0.0
  %4997 = vmatmul.mubr.f32.gmra.mrb[0].mxu0 %v1083
  %v4998 = vpop.f32.mrb[0].mxu0
  %v4999 = vadd.f32 0.0, %v4998
  %v5000 = vpop.f32.mrb[0].mxu0
  %5001 = vdwg.mxu0
  %5002 = vmatprep.subr.mxu0 0.0
  %5003 = vmatpush1.msra.mxu0 %v1023
  %5004 = vmatprep.subr.mxu0 0.0
  %5005 = vmatpush1.msra.mxu0 %v1024
  %5006 = vmatprep.subr.mxu0 0.0
  %5007 = vmatpush1.msra.mxu0 0.0
  %5008 = vmatprep.subr.mxu0 0.0
  %5009 = vmatpush1.msra.mxu0 0.0
  %5010 = vmatprep.subr.mxu0 0.0
  %5011 = vmatpush1.msra.mxu0 0.0
  %5012 = vmatprep.subr.mxu0 0.0
  %5013 = vmatpush1.msra.mxu0 0.0
  %5014 = vmatprep.subr.mxu0 0.0
  %5015 = vmatpush1.msra.mxu0 0.0
  %5016 = vmatprep.subr.mxu0 0.0
  %5017 = vmatpush1.msra.mxu0 0.0
  %5018 = vmatprep.subr.mxu0 0.0
  %5019 = vmatpush1.msra.mxu0 0.0
  %5020 = vmatprep.subr.mxu0 0.0
  %5021 = vmatpush1.msra.mxu0 0.0
  %5022 = vmatprep.subr.mxu0 0.0
  %5023 = vmatpush1.msra.mxu0 0.0
  %5024 = vmatprep.subr.mxu0 0.0
  %5025 = vmatpush1.msra.mxu0 0.0
  %5026 = vmatprep.subr.mxu0 0.0
  %5027 = vmatpush1.msra.mxu0 0.0
  %5028 = vmatprep.subr.mxu0 0.0
  %5029 = vmatpush1.msra.mxu0 0.0
  %5030 = vmatprep.subr.mxu0 0.0
  %5031 = vmatpush1.msra.mxu0 0.0
  %5032 = vmatprep.subr.mxu0 0.0
  %5033 = vmatpush1.msra.mxu0 0.0
  %5034 = vmatprep.subr.mxu0 0.0
  %5035 = vmatpush1.msra.mxu0 0.0
  %5036 = vmatprep.subr.mxu0 0.0
  %5037 = vmatpush1.msra.mxu0 0.0
  %5038 = vmatprep.subr.mxu0 0.0
  %5039 = vmatpush1.msra.mxu0 0.0
  %5040 = vmatprep.subr.mxu0 0.0
  %5041 = vmatpush1.msra.mxu0 0.0
  %5042 = vmatprep.subr.mxu0 0.0
  %5043 = vmatpush1.msra.mxu0 0.0
  %5044 = vmatprep.subr.mxu0 0.0
  %5045 = vmatpush1.msra.mxu0 0.0
  %5046 = vmatprep.subr.mxu0 0.0
  %5047 = vmatpush1.msra.mxu0 0.0
  %5048 = vmatprep.subr.mxu0 0.0
  %5049 = vmatpush1.msra.mxu0 0.0
  %5050 = vmatprep.subr.mxu0 0.0
  %5051 = vmatpush1.msra.mxu0 0.0
  %5052 = vmatprep.subr.mxu0 0.0
  %5053 = vmatpush1.msra.mxu0 0.0
  %5054 = vmatprep.subr.mxu0 0.0
  %5055 = vmatpush1.msra.mxu0 0.0
  %5056 = vmatprep.subr.mxu0 0.0
  %5057 = vmatpush1.msra.mxu0 0.0
  %5058 = vmatprep.subr.mxu0 0.0
  %5059 = vmatpush1.msra.mxu0 0.0
  %5060 = vmatprep.subr.mxu0 0.0
  %5061 = vmatpush1.msra.mxu0 0.0
  %5062 = vmatprep.subr.mxu0 0.0
  %5063 = vmatpush1.msra.mxu0 0.0
  %5064 = vmatprep.subr.mxu0 0.0
  %5065 = vmatpush1.msra.mxu0 0.0
  %5066 = vmatprep.mubr.f32.mxu0 0.0
  %5067 = vmatmul.mubr.f32.gmra.mrb[0].mxu0 %v1194
  %v5068 = vpop.f32.mrb[0].mxu0
  %v5069 = vadd.f32 0.0, %v5068
  %v5070 = vpop.f32.mrb[0].mxu0
  %5071 = vdwg.mxu0
  %5072 = vmatprep.subr.mxu0 0.0
  %5073 = vmatpush1.msra.mxu0 %v1026
  %5074 = vmatprep.subr.mxu0 0.0
  %5075 = vmatpush1.msra.mxu0 %v1027
  %5076 = vmatprep.subr.mxu0 0.0
  %5077 = vmatpush1.msra.mxu0 0.0
  %5078 = vmatprep.subr.mxu0 0.0
  %5079 = vmatpush1.msra.mxu0 0.0
  %5080 = vmatprep.subr.mxu0 0.0
  %5081 = vmatpush1.msra.mxu0 0.0
  %5082 = vmatprep.subr.mxu0 0.0
  %5083 = vmatpush1.msra.mxu0 0.0
  %5084 = vmatprep.subr.mxu0 0.0
  %5085 = vmatpush1.msra.mxu0 0.0
  %5086 = vmatprep.subr.mxu0 0.0
  %5087 = vmatpush1.msra.mxu0 0.0
  %5088 = vmatprep.subr.mxu0 0.0
  %5089 = vmatpush1.msra.mxu0 0.0
  %5090 = vmatprep.subr.mxu0 0.0
  %5091 = vmatpush1.msra.mxu0 0.0
  %5092 = vmatprep.subr.mxu0 0.0
  %5093 = vmatpush1.msra.mxu0 0.0
  %5094 = vmatprep.subr.mxu0 0.0
  %5095 = vmatpush1.msra.mxu0 0.0
  %5096 = vmatprep.subr.mxu0 0.0
  %5097 = vmatpush1.msra.mxu0 0.0
  %5098 = vmatprep.subr.mxu0 0.0
  %5099 = vmatpush1.msra.mxu0 0.0
  %5100 = vmatprep.subr.mxu0 0.0
  %5101 = vmatpush1.msra.mxu0 0.0
  %5102 = vmatprep.subr.mxu0 0.0
  %5103 = vmatpush1.msra.mxu0 0.0
  %5104 = vmatprep.subr.mxu0 0.0
  %5105 = vmatpush1.msra.mxu0 0.0
  %5106 = vmatprep.subr.mxu0 0.0
  %5107 = vmatpush1.msra.mxu0 0.0
  %5108 = vmatprep.subr.mxu0 0.0
  %5109 = vmatpush1.msra.mxu0 0.0
  %5110 = vmatprep.subr.mxu0 0.0
  %5111 = vmatpush1.msra.mxu0 0.0
  %5112 = vmatprep.subr.mxu0 0.0
  %5113 = vmatpush1.msra.mxu0 0.0
  %5114 = vmatprep.subr.mxu0 0.0
  %5115 = vmatpush1.msra.mxu0 0.0
  %5116 = vmatprep.subr.mxu0 0.0
  %5117 = vmatpush1.msra.mxu0 0.0
  %5118 = vmatprep.subr.mxu0 0.0
  %5119 = vmatpush1.msra.mxu0 0.0
  %5120 = vmatprep.subr.mxu0 0.0
  %5121 = vmatpush1.msra.mxu0 0.0
  %5122 = vmatprep.subr.mxu0 0.0
  %5123 = vmatpush1.msra.mxu0 0.0
  %5124 = vmatprep.subr.mxu0 0.0
  %5125 = vmatpush1.msra.mxu0 0.0
  %5126 = vmatprep.subr.mxu0 0.0
  %5127 = vmatpush1.msra.mxu0 0.0
  %5128 = vmatprep.subr.mxu0 0.0
  %5129 = vmatpush1.msra.mxu0 0.0
  %5130 = vmatprep.subr.mxu0 0.0
  %5131 = vmatpush1.msra.mxu0 0.0
  %5132 = vmatprep.subr.mxu0 0.0
  %5133 = vmatpush1.msra.mxu0 0.0
  %5134 = vmatprep.subr.mxu0 0.0
  %5135 = vmatpush1.msra.mxu0 0.0
  %5136 = vmatprep.mubr.f32.mxu0 0.0
  %5137 = vmatmul.mubr.f32.gmra.mrb[0].mxu0 %v1305
  %v5138 = vpop.f32.mrb[0].mxu0
  %v5139 = vadd.f32 0.0, %v5138
  %v5140 = vpop.f32.mrb[0].mxu0
  %5141 = vdwg.mxu0
  %5142 = vmatprep.subr.mxu0 0.0
  %5143 = vmatpush1.msra.mxu0 %v1029
  %5144 = vmatprep.subr.mxu0 0.0
  %5145 = vmatpush1.msra.mxu0 %v1030
  %5146 = vmatprep.subr.mxu0 0.0
  %5147 = vmatpush1.msra.mxu0 0.0
  %5148 = vmatprep.subr.mxu0 0.0
  %5149 = vmatpush1.msra.mxu0 0.0
  %5150 = vmatprep.subr.mxu0 0.0
  %5151 = vmatpush1.msra.mxu0 0.0
  %5152 = vmatprep.subr.mxu0 0.0
  %5153 = vmatpush1.msra.mxu0 0.0
  %5154 = vmatprep.subr.mxu0 0.0
  %5155 = vmatpush1.msra.mxu0 0.0
  %5156 = vmatprep.subr.mxu0 0.0
  %5157 = vmatpush1.msra.mxu0 0.0
  %5158 = vmatprep.subr.mxu0 0.0
  %5159 = vmatpush1.msra.mxu0 0.0
  %5160 = vmatprep.subr.mxu0 0.0
  %5161 = vmatpush1.msra.mxu0 0.0
  %5162 = vmatprep.subr.mxu0 0.0
  %5163 = vmatpush1.msra.mxu0 0.0
  %5164 = vmatprep.subr.mxu0 0.0
  %5165 = vmatpush1.msra.mxu0 0.0
  %5166 = vmatprep.subr.mxu0 0.0
  %5167 = vmatpush1.msra.mxu0 0.0
  %5168 = vmatprep.subr.mxu0 0.0
  %5169 = vmatpush1.msra.mxu0 0.0
  %5170 = vmatprep.subr.mxu0 0.0
  %5171 = vmatpush1.msra.mxu0 0.0
  %5172 = vmatprep.subr.mxu0 0.0
  %5173 = vmatpush1.msra.mxu0 0.0
  %5174 = vmatprep.subr.mxu0 0.0
  %5175 = vmatpush1.msra.mxu0 0.0
  %5176 = vmatprep.subr.mxu0 0.0
  %5177 = vmatpush1.msra.mxu0 0.0
  %5178 = vmatprep.subr.mxu0 0.0
  %5179 = vmatpush1.msra.mxu0 0.0
  %5180 = vmatprep.subr.mxu0 0.0
  %5181 = vmatpush1.msra.mxu0 0.0
  %5182 = vmatprep.subr.mxu0 0.0
  %5183 = vmatpush1.msra.mxu0 0.0
  %5184 = vmatprep.subr.mxu0 0.0
  %5185 = vmatpush1.msra.mxu0 0.0
  %5186 = vmatprep.subr.mxu0 0.0
  %5187 = vmatpush1.msra.mxu0 0.0
  %5188 = vmatprep.subr.mxu0 0.0
  %5189 = vmatpush1.msra.mxu0 0.0
  %5190 = vmatprep.subr.mxu0 0.0
  %5191 = vmatpush1.msra.mxu0 0.0
  %5192 = vmatprep.subr.mxu0 0.0
  %5193 = vmatpush1.msra.mxu0 0.0
  %5194 = vmatprep.subr.mxu0 0.0
  %5195 = vmatpush1.msra.mxu0 0.0
  %5196 = vmatprep.subr.mxu0 0.0
  %5197 = vmatpush1.msra.mxu0 0.0
  %5198 = vmatprep.subr.mxu0 0.0
  %5199 = vmatpush1.msra.mxu0 0.0
  %5200 = vmatprep.subr.mxu0 0.0
  %5201 = vmatpush1.msra.mxu0 0.0
  %5202 = vmatprep.subr.mxu0 0.0
  %5203 = vmatpush1.msra.mxu0 0.0
  %5204 = vmatprep.subr.mxu0 0.0
  %5205 = vmatpush1.msra.mxu0 0.0
  %5206 = vmatprep.mubr.f32.mxu0 0.0
  %5207 = vmatmul.mubr.f32.gmra.mrb[0].mxu0 %v1416
  %v5208 = vpop.f32.mrb[0].mxu0
  %v5209 = vadd.f32 0.0, %v5208
  %v5210 = vpop.f32.mrb[0].mxu0
  %5211 = vdwg.mxu0
  %5212 = vmatprep.subr.mxu0 0.0
  %5213 = vmatpush1.msra.mxu0 %v1032
  %5214 = vmatprep.subr.mxu0 0.0
  %5215 = vmatpush1.msra.mxu0 %v1033
  %5216 = vmatprep.subr.mxu0 0.0
  %5217 = vmatpush1.msra.mxu0 0.0
  %5218 = vmatprep.subr.mxu0 0.0
  %5219 = vmatpush1.msra.mxu0 0.0
  %5220 = vmatprep.subr.mxu0 0.0
  %5221 = vmatpush1.msra.mxu0 0.0
  %5222 = vmatprep.subr.mxu0 0.0
  %5223 = vmatpush1.msra.mxu0 0.0
  %5224 = vmatprep.subr.mxu0 0.0
  %5225 = vmatpush1.msra.mxu0 0.0
  %5226 = vmatprep.subr.mxu0 0.0
  %5227 = vmatpush1.msra.mxu0 0.0
  %5228 = vmatprep.subr.mxu0 0.0
  %5229 = vmatpush1.msra.mxu0 0.0
  %5230 = vmatprep.subr.mxu0 0.0
  %5231 = vmatpush1.msra.mxu0 0.0
  %5232 = vmatprep.subr.mxu0 0.0
  %5233 = vmatpush1.msra.mxu0 0.0
  %5234 = vmatprep.subr.mxu0 0.0
  %5235 = vmatpush1.msra.mxu0 0.0
  %5236 = vmatprep.subr.mxu0 0.0
  %5237 = vmatpush1.msra.mxu0 0.0
  %5238 = vmatprep.subr.mxu0 0.0
  %5239 = vmatpush1.msra.mxu0 0.0
  %5240 = vmatprep.subr.mxu0 0.0
  %5241 = vmatpush1.msra.mxu0 0.0
  %5242 = vmatprep.subr.mxu0 0.0
  %5243 = vmatpush1.msra.mxu0 0.0
  %5244 = vmatprep.subr.mxu0 0.0
  %5245 = vmatpush1.msra.mxu0 0.0
  %5246 = vmatprep.subr.mxu0 0.0
  %5247 = vmatpush1.msra.mxu0 0.0
  %5248 = vmatprep.subr.mxu0 0.0
  %5249 = vmatpush1.msra.mxu0 0.0
  %5250 = vmatprep.subr.mxu0 0.0
  %5251 = vmatpush1.msra.mxu0 0.0
  %5252 = vmatprep.subr.mxu0 0.0
  %5253 = vmatpush1.msra.mxu0 0.0
  %5254 = vmatprep.subr.mxu0 0.0
  %5255 = vmatpush1.msra.mxu0 0.0
  %5256 = vmatprep.subr.mxu0 0.0
  %5257 = vmatpush1.msra.mxu0 0.0
  %5258 = vmatprep.subr.mxu0 0.0
  %5259 = vmatpush1.msra.mxu0 0.0
  %5260 = vmatprep.subr.mxu0 0.0
  %5261 = vmatpush1.msra.mxu0 0.0
  %5262 = vmatprep.subr.mxu0 0.0
  %5263 = vmatpush1.msra.mxu0 0.0
  %5264 = vmatprep.subr.mxu0 0.0
  %5265 = vmatpush1.msra.mxu0 0.0
  %5266 = vmatprep.subr.mxu0 0.0
  %5267 = vmatpush1.msra.mxu0 0.0
  %5268 = vmatprep.subr.mxu0 0.0
  %5269 = vmatpush1.msra.mxu0 0.0
  %5270 = vmatprep.subr.mxu0 0.0
  %5271 = vmatpush1.msra.mxu0 0.0
  %5272 = vmatprep.subr.mxu0 0.0
  %5273 = vmatpush1.msra.mxu0 0.0
  %5274 = vmatprep.subr.mxu0 0.0
  %5275 = vmatpush1.msra.mxu0 0.0
  %5276 = vmatprep.mubr.f32.mxu0 0.0
  %5277 = vmatmul.mubr.f32.gmra.mrb[0].mxu0 %v1527
  %v5278 = vpop.f32.mrb[0].mxu0
  %v5279 = vadd.f32 0.0, %v5278
  %v5280 = vpop.f32.mrb[0].mxu0
  %5281 = vdwg.mxu0
  %5282 = vmatprep.subr.mxu0 0.0
  %5283 = vmatpush1.msra.mxu0 %v1035
  %5284 = vmatprep.subr.mxu0 0.0
  %5285 = vmatpush1.msra.mxu0 %v1036
  %5286 = vmatprep.subr.mxu0 0.0
  %5287 = vmatpush1.msra.mxu0 0.0
  %5288 = vmatprep.subr.mxu0 0.0
  %5289 = vmatpush1.msra.mxu0 0.0
  %5290 = vmatprep.subr.mxu0 0.0
  %5291 = vmatpush1.msra.mxu0 0.0
  %5292 = vmatprep.subr.mxu0 0.0
  %5293 = vmatpush1.msra.mxu0 0.0
  %5294 = vmatprep.subr.mxu0 0.0
  %5295 = vmatpush1.msra.mxu0 0.0
  %5296 = vmatprep.subr.mxu0 0.0
  %5297 = vmatpush1.msra.mxu0 0.0
  %5298 = vmatprep.subr.mxu0 0.0
  %5299 = vmatpush1.msra.mxu0 0.0
  %5300 = vmatprep.subr.mxu0 0.0
  %5301 = vmatpush1.msra.mxu0 0.0
  %5302 = vmatprep.subr.mxu0 0.0
  %5303 = vmatpush1.msra.mxu0 0.0
  %5304 = vmatprep.subr.mxu0 0.0
  %5305 = vmatpush1.msra.mxu0 0.0
  %5306 = vmatprep.subr.mxu0 0.0
  %5307 = vmatpush1.msra.mxu0 0.0
  %5308 = vmatprep.subr.mxu0 0.0
  %5309 = vmatpush1.msra.mxu0 0.0
  %5310 = vmatprep.subr.mxu0 0.0
  %5311 = vmatpush1.msra.mxu0 0.0
  %5312 = vmatprep.subr.mxu0 0.0
  %5313 = vmatpush1.msra.mxu0 0.0
  %5314 = vmatprep.subr.mxu0 0.0
  %5315 = vmatpush1.msra.mxu0 0.0
  %5316 = vmatprep.subr.mxu0 0.0
  %5317 = vmatpush1.msra.mxu0 0.0
  %5318 = vmatprep.subr.mxu0 0.0
  %5319 = vmatpush1.msra.mxu0 0.0
  %5320 = vmatprep.subr.mxu0 0.0
  %5321 = vmatpush1.msra.mxu0 0.0
  %5322 = vmatprep.subr.mxu0 0.0
  %5323 = vmatpush1.msra.mxu0 0.0
  %5324 = vmatprep.subr.mxu0 0.0
  %5325 = vmatpush1.msra.mxu0 0.0
  %5326 = vmatprep.subr.mxu0 0.0
  %5327 = vmatpush1.msra.mxu0 0.0
  %5328 = vmatprep.subr.mxu0 0.0
  %5329 = vmatpush1.msra.mxu0 0.0
  %5330 = vmatprep.subr.mxu0 0.0
  %5331 = vmatpush1.msra.mxu0 0.0
  %5332 = vmatprep.subr.mxu0 0.0
  %5333 = vmatpush1.msra.mxu0 0.0
  %5334 = vmatprep.subr.mxu0 0.0
  %5335 = vmatpush1.msra.mxu0 0.0
  %5336 = vmatprep.subr.mxu0 0.0
  %5337 = vmatpush1.msra.mxu0 0.0
  %5338 = vmatprep.subr.mxu0 0.0
  %5339 = vmatpush1.msra.mxu0 0.0
  %5340 = vmatprep.subr.mxu0 0.0
  %5341 = vmatpush1.msra.mxu0 0.0
  %5342 = vmatprep.subr.mxu0 0.0
  %5343 = vmatpush1.msra.mxu0 0.0
  %5344 = vmatprep.subr.mxu0 0.0
  %5345 = vmatpush1.msra.mxu0 0.0
  %5346 = vmatprep.mubr.f32.mxu0 0.0
  %5347 = vmatmul.mubr.f32.gmra.mrb[0].mxu0 %v1638
  %v5348 = vpop.f32.mrb[0].mxu0
  %v5349 = vadd.f32 0.0, %v5348
  %v5350 = vpop.f32.mrb[0].mxu0
  %5351 = vdwg.mxu0
  %5352 = vmatprep.subr.mxu0 0.0
  %5353 = vmatpush1.msra.mxu0 %v1038
  %5354 = vmatprep.subr.mxu0 0.0
  %5355 = vmatpush1.msra.mxu0 %v1039
  %5356 = vmatprep.subr.mxu0 0.0
  %5357 = vmatpush1.msra.mxu0 0.0
  %5358 = vmatprep.subr.mxu0 0.0
  %5359 = vmatpush1.msra.mxu0 0.0
  %5360 = vmatprep.subr.mxu0 0.0
  %5361 = vmatpush1.msra.mxu0 0.0
  %5362 = vmatprep.subr.mxu0 0.0
  %5363 = vmatpush1.msra.mxu0 0.0
  %5364 = vmatprep.subr.mxu0 0.0
  %5365 = vmatpush1.msra.mxu0 0.0
  %5366 = vmatprep.subr.mxu0 0.0
  %5367 = vmatpush1.msra.mxu0 0.0
  %5368 = vmatprep.subr.mxu0 0.0
  %5369 = vmatpush1.msra.mxu0 0.0
  %5370 = vmatprep.subr.mxu0 0.0
  %5371 = vmatpush1.msra.mxu0 0.0
  %5372 = vmatprep.subr.mxu0 0.0
  %5373 = vmatpush1.msra.mxu0 0.0
  %5374 = vmatprep.subr.mxu0 0.0
  %5375 = vmatpush1.msra.mxu0 0.0
  %5376 = vmatprep.subr.mxu0 0.0
  %5377 = vmatpush1.msra.mxu0 0.0
  %5378 = vmatprep.subr.mxu0 0.0
  %5379 = vmatpush1.msra.mxu0 0.0
  %5380 = vmatprep.subr.mxu0 0.0
  %5381 = vmatpush1.msra.mxu0 0.0
  %5382 = vmatprep.subr.mxu0 0.0
  %5383 = vmatpush1.msra.mxu0 0.0
  %5384 = vmatprep.subr.mxu0 0.0
  %5385 = vmatpush1.msra.mxu0 0.0
  %5386 = vmatprep.subr.mxu0 0.0
  %5387 = vmatpush1.msra.mxu0 0.0
  %5388 = vmatprep.subr.mxu0 0.0
  %5389 = vmatpush1.msra.mxu0 0.0
  %5390 = vmatprep.subr.mxu0 0.0
  %5391 = vmatpush1.msra.mxu0 0.0
  %5392 = vmatprep.subr.mxu0 0.0
  %5393 = vmatpush1.msra.mxu0 0.0
  %5394 = vmatprep.subr.mxu0 0.0
  %5395 = vmatpush1.msra.mxu0 0.0
  %5396 = vmatprep.subr.mxu0 0.0
  %5397 = vmatpush1.msra.mxu0 0.0
  %5398 = vmatprep.subr.mxu0 0.0
  %5399 = vmatpush1.msra.mxu0 0.0
  %5400 = vmatprep.subr.mxu0 0.0
  %5401 = vmatpush1.msra.mxu0 0.0
  %5402 = vmatprep.subr.mxu0 0.0
  %5403 = vmatpush1.msra.mxu0 0.0
  %5404 = vmatprep.subr.mxu0 0.0
  %5405 = vmatpush1.msra.mxu0 0.0
  %5406 = vmatprep.subr.mxu0 0.0
  %5407 = vmatpush1.msra.mxu0 0.0
  %5408 = vmatprep.subr.mxu0 0.0
  %5409 = vmatpush1.msra.mxu0 0.0
  %5410 = vmatprep.subr.mxu0 0.0
  %5411 = vmatpush1.msra.mxu0 0.0
  %5412 = vmatprep.subr.mxu0 0.0
  %5413 = vmatpush1.msra.mxu0 0.0
  %5414 = vmatprep.subr.mxu0 0.0
  %5415 = vmatpush1.msra.mxu0 0.0
  %5416 = vmatprep.mubr.f32.mxu0 0.0
  %5417 = vmatmul.mubr.f32.gmra.mrb[0].mxu0 %v1749
  %v5418 = vpop.f32.mrb[0].mxu0
  %v5419 = vadd.f32 0.0, %v5418
  %v5420 = vpop.f32.mrb[0].mxu0
  %5421 = vdwg.mxu0
  %5422 = vmatprep.subr.mxu0 0.0
  %5423 = vmatpush1.msra.mxu0 %v1041
  %5424 = vmatprep.subr.mxu0 0.0
  %5425 = vmatpush1.msra.mxu0 %v1042
  %5426 = vmatprep.subr.mxu0 0.0
  %5427 = vmatpush1.msra.mxu0 0.0
  %5428 = vmatprep.subr.mxu0 0.0
  %5429 = vmatpush1.msra.mxu0 0.0
  %5430 = vmatprep.subr.mxu0 0.0
  %5431 = vmatpush1.msra.mxu0 0.0
  %5432 = vmatprep.subr.mxu0 0.0
  %5433 = vmatpush1.msra.mxu0 0.0
  %5434 = vmatprep.subr.mxu0 0.0
  %5435 = vmatpush1.msra.mxu0 0.0
  %5436 = vmatprep.subr.mxu0 0.0
  %5437 = vmatpush1.msra.mxu0 0.0
  %5438 = vmatprep.subr.mxu0 0.0
  %5439 = vmatpush1.msra.mxu0 0.0
  %5440 = vmatprep.subr.mxu0 0.0
  %5441 = vmatpush1.msra.mxu0 0.0
  %5442 = vmatprep.subr.mxu0 0.0
  %5443 = vmatpush1.msra.mxu0 0.0
  %5444 = vmatprep.subr.mxu0 0.0
  %5445 = vmatpush1.msra.mxu0 0.0
  %5446 = vmatprep.subr.mxu0 0.0
  %5447 = vmatpush1.msra.mxu0 0.0
  %5448 = vmatprep.subr.mxu0 0.0
  %5449 = vmatpush1.msra.mxu0 0.0
  %5450 = vmatprep.subr.mxu0 0.0
  %5451 = vmatpush1.msra.mxu0 0.0
  %5452 = vmatprep.subr.mxu0 0.0
  %5453 = vmatpush1.msra.mxu0 0.0
  %5454 = vmatprep.subr.mxu0 0.0
  %5455 = vmatpush1.msra.mxu0 0.0
  %5456 = vmatprep.subr.mxu0 0.0
  %5457 = vmatpush1.msra.mxu0 0.0
  %5458 = vmatprep.subr.mxu0 0.0
  %5459 = vmatpush1.msra.mxu0 0.0
  %5460 = vmatprep.subr.mxu0 0.0
  %5461 = vmatpush1.msra.mxu0 0.0
  %5462 = vmatprep.subr.mxu0 0.0
  %5463 = vmatpush1.msra.mxu0 0.0
  %5464 = vmatprep.subr.mxu0 0.0
  %5465 = vmatpush1.msra.mxu0 0.0
  %5466 = vmatprep.subr.mxu0 0.0
  %5467 = vmatpush1.msra.mxu0 0.0
  %5468 = vmatprep.subr.mxu0 0.0
  %5469 = vmatpush1.msra.mxu0 0.0
  %5470 = vmatprep.subr.mxu0 0.0
  %5471 = vmatpush1.msra.mxu0 0.0
  %5472 = vmatprep.subr.mxu0 0.0
  %5473 = vmatpush1.msra.mxu0 0.0
  %5474 = vmatprep.subr.mxu0 0.0
  %5475 = vmatpush1.msra.mxu0 0.0
  %5476 = vmatprep.subr.mxu0 0.0
  %5477 = vmatpush1.msra.mxu0 0.0
  %5478 = vmatprep.subr.mxu0 0.0
  %5479 = vmatpush1.msra.mxu0 0.0
  %5480 = vmatprep.subr.mxu0 0.0
  %5481 = vmatpush1.msra.mxu0 0.0
  %5482 = vmatprep.subr.mxu0 0.0
  %5483 = vmatpush1.msra.mxu0 0.0
  %5484 = vmatprep.subr.mxu0 0.0
  %5485 = vmatpush1.msra.mxu0 0.0
  %5486 = vmatprep.mubr.f32.mxu0 0.0
  %5487 = vmatmul.mubr.f32.gmra.mrb[0].mxu0 %v1860
  %v5488 = vpop.f32.mrb[0].mxu0
  %v5489 = vadd.f32 0.0, %v5488
  %v5490 = vpop.f32.mrb[0].mxu0
  %5491 = vdwg.mxu0
  %v5492 = vmul.f32 %v4999, %v4999
  %v5493 = vmul.f32 %v5069, %v5069
  %v5494 = vmul.f32 %v5139, %v5139
  %v5495 = vmul.f32 %v5209, %v5209
  %v5496 = vmul.f32 %v5279, %v5279
  %v5497 = vmul.f32 %v5349, %v5349
  %v5498 = vmul.f32 %v5419, %v5419
  %v5499 = vmul.f32 %v5489, %v5489
  %v5500 = vsel %vm4651, %v5492, 0.0
  %5501 = vadd.xlane.f32.xlu0 %v5500
  %v5502 = vpop.xlane.xlu0 %5501
  %v5503 = vsel %vm4651, %v5493, 0.0
  %5504 = vadd.xlane.f32.xlu0 %v5503
  %v5505 = vpop.xlane.xlu0 %5504
  %v5506 = vsel %vm4651, %v5494, 0.0
  %5507 = vadd.xlane.f32.xlu0 %v5506
  %v5508 = vpop.xlane.xlu0 %5507
  %v5509 = vsel %vm4651, %v5495, 0.0
  %5510 = vadd.xlane.f32.xlu0 %v5509
  %v5511 = vpop.xlane.xlu0 %5510
  %v5512 = vsel %vm4651, %v5496, 0.0
  %5513 = vadd.xlane.f32.xlu0 %v5512
  %v5514 = vpop.xlane.xlu0 %5513
  %v5515 = vsel %vm4651, %v5497, 0.0
  %5516 = vadd.xlane.f32.xlu0 %v5515
  %v5517 = vpop.xlane.xlu0 %5516
  %v5518 = vsel %vm4651, %v5498, 0.0
  %5519 = vadd.xlane.f32.xlu0 %v5518
  %v5520 = vpop.xlane.xlu0 %5519
  %v5521 = vsel %vm4651, %v5499, 0.0
  %5522 = vadd.xlane.f32.xlu0 %v5521
  %v5523 = vpop.xlane.xlu0 %5522
  %v5524 = vsel %vm230, %v5502, 0.0
  %v5525 = vrot.slane %v5524, 4
  %v5526 = vadd.f32 %v5524, %v5525
  %v5527 = vrot.slane %v5526, 2
  %v5528 = vadd.f32 %v5526, %v5527
  %v5529 = vrot.slane %v5528, 1
  %v5530 = vadd.f32 %v5528, %v5529
  %v5531 = vsel %vm230, %v5505, 0.0
  %v5532 = vrot.slane %v5531, 4
  %v5533 = vadd.f32 %v5531, %v5532
  %v5534 = vrot.slane %v5533, 2
  %v5535 = vadd.f32 %v5533, %v5534
  %v5536 = vrot.slane %v5535, 1
  %v5537 = vadd.f32 %v5535, %v5536
  %v5538 = vsel %vm230, %v5508, 0.0
  %v5539 = vrot.slane %v5538, 4
  %v5540 = vadd.f32 %v5538, %v5539
  %v5541 = vrot.slane %v5540, 2
  %v5542 = vadd.f32 %v5540, %v5541
  %v5543 = vrot.slane %v5542, 1
  %v5544 = vadd.f32 %v5542, %v5543
  %v5545 = vsel %vm230, %v5511, 0.0
  %v5546 = vrot.slane %v5545, 4
  %v5547 = vadd.f32 %v5545, %v5546
  %v5548 = vrot.slane %v5547, 2
  %v5549 = vadd.f32 %v5547, %v5548
  %v5550 = vrot.slane %v5549, 1
  %v5551 = vadd.f32 %v5549, %v5550
  %v5552 = vsel %vm230, %v5514, 0.0
  %v5553 = vrot.slane %v5552, 4
  %v5554 = vadd.f32 %v5552, %v5553
  %v5555 = vrot.slane %v5554, 2
  %v5556 = vadd.f32 %v5554, %v5555
  %v5557 = vrot.slane %v5556, 1
  %v5558 = vadd.f32 %v5556, %v5557
  %v5559 = vsel %vm230, %v5517, 0.0
  %v5560 = vrot.slane %v5559, 4
  %v5561 = vadd.f32 %v5559, %v5560
  %v5562 = vrot.slane %v5561, 2
  %v5563 = vadd.f32 %v5561, %v5562
  %v5564 = vrot.slane %v5563, 1
  %v5565 = vadd.f32 %v5563, %v5564
  %v5566 = vsel %vm230, %v5520, 0.0
  %v5567 = vrot.slane %v5566, 4
  %v5568 = vadd.f32 %v5566, %v5567
  %v5569 = vrot.slane %v5568, 2
  %v5570 = vadd.f32 %v5568, %v5569
  %v5571 = vrot.slane %v5570, 1
  %v5572 = vadd.f32 %v5570, %v5571
  %v5573 = vsel %vm230, %v5523, 0.0
  %v5574 = vrot.slane %v5573, 4
  %v5575 = vadd.f32 %v5573, %v5574
  %v5576 = vrot.slane %v5575, 2
  %v5577 = vadd.f32 %v5575, %v5576
  %v5578 = vrot.slane %v5577, 1
  %v5579 = vadd.f32 %v5577, %v5578
  %v5580 = vrsqrt.pop %v5530
  %v5581 = vrsqrt.pop %v5537
  %v5582 = vrsqrt.pop %v5544
  %v5583 = vrsqrt.pop %v5551
  %v5584 = vrsqrt.pop %v5558
  %v5585 = vrsqrt.pop %v5565
  %v5586 = vrsqrt.pop %v5572
  %v5587 = vrsqrt.pop %v5579
  %v5588 = vmul.f32 %v4999, %v5580
  %v5589 = vmul.f32 %v5069, %v5581
  %v5590 = vmul.f32 %v5139, %v5582
  %v5591 = vmul.f32 %v5209, %v5583
  %v5592 = vmul.f32 %v5279, %v5584
  %v5593 = vmul.f32 %v5349, %v5585
  %v5594 = vmul.f32 %v5419, %v5586
  %v5595 = vmul.f32 %v5489, %v5587
  %v5596 = vmul.f32 %v77, 0.5
  %v5597 = vmul.f32 %v78, 0.5
  %v5600 = vrot.slane %v5596, 7
  %v5601 = vrot.slane %v5597, 7
  %v5602 = vsel %vm2082, %v5600, %v5601
  %v5604 = vsub.f32 %v5588, %v5602
  %v5605 = vsub.f32 %v5589, %v5602
  %v5606 = vsub.f32 %v5590, %v5602
  %v5607 = vsub.f32 %v5591, %v5602
  %v5608 = vsub.f32 %v5592, %v5602
  %v5609 = vsub.f32 %v5593, %v5602
  %v5610 = vsub.f32 %v5594, %v5602
  %v5611 = vsub.f32 %v5595, %v5602
  %v5612 = vmul.f32 %v5604, %v5604
  %v5613 = vmul.f32 %v5605, %v5605
  %v5614 = vmul.f32 %v5606, %v5606
  %v5615 = vmul.f32 %v5607, %v5607
  %v5616 = vmul.f32 %v5608, %v5608
  %v5617 = vmul.f32 %v5609, %v5609
  %v5618 = vmul.f32 %v5610, %v5610
  %v5619 = vmul.f32 %v5611, %v5611
  %v5620 = vsel %vm4651, %v5612, 0.0
  %5621 = vadd.xlane.f32.xlu0 %v5620
  %v5622 = vpop.xlane.xlu0 %5621
  %v5623 = vsel %vm4651, %v5613, 0.0
  %5624 = vadd.xlane.f32.xlu0 %v5623
  %v5625 = vpop.xlane.xlu0 %5624
  %v5626 = vsel %vm4651, %v5614, 0.0
  %5627 = vadd.xlane.f32.xlu0 %v5626
  %v5628 = vpop.xlane.xlu0 %5627
  %v5629 = vsel %vm4651, %v5615, 0.0
  %5630 = vadd.xlane.f32.xlu0 %v5629
  %v5631 = vpop.xlane.xlu0 %5630
  %v5632 = vsel %vm4651, %v5616, 0.0
  %5633 = vadd.xlane.f32.xlu0 %v5632
  %v5634 = vpop.xlane.xlu0 %5633
  %v5635 = vsel %vm4651, %v5617, 0.0
  %5636 = vadd.xlane.f32.xlu0 %v5635
  %v5637 = vpop.xlane.xlu0 %5636
  %v5638 = vsel %vm4651, %v5618, 0.0
  %5639 = vadd.xlane.f32.xlu0 %v5638
  %v5640 = vpop.xlane.xlu0 %5639
  %v5641 = vsel %vm4651, %v5619, 0.0
  %5642 = vadd.xlane.f32.xlu0 %v5641
  %v5643 = vpop.xlane.xlu0 %5642
  %v5644 = vsel %vm230, %v5622, 0.0
  %v5645 = vrot.slane %v5644, 4
  %v5646 = vadd.f32 %v5644, %v5645
  %v5647 = vrot.slane %v5646, 2
  %v5648 = vadd.f32 %v5646, %v5647
  %v5649 = vrot.slane %v5648, 1
  %v5650 = vadd.f32 %v5648, %v5649
  %v5651 = vsel %vm230, %v5625, 0.0
  %v5652 = vrot.slane %v5651, 4
  %v5653 = vadd.f32 %v5651, %v5652
  %v5654 = vrot.slane %v5653, 2
  %v5655 = vadd.f32 %v5653, %v5654
  %v5656 = vrot.slane %v5655, 1
  %v5657 = vadd.f32 %v5655, %v5656
  %v5658 = vsel %vm230, %v5628, 0.0
  %v5659 = vrot.slane %v5658, 4
  %v5660 = vadd.f32 %v5658, %v5659
  %v5661 = vrot.slane %v5660, 2
  %v5662 = vadd.f32 %v5660, %v5661
  %v5663 = vrot.slane %v5662, 1
  %v5664 = vadd.f32 %v5662, %v5663
  %v5665 = vsel %vm230, %v5631, 0.0
  %v5666 = vrot.slane %v5665, 4
  %v5667 = vadd.f32 %v5665, %v5666
  %v5668 = vrot.slane %v5667, 2
  %v5669 = vadd.f32 %v5667, %v5668
  %v5670 = vrot.slane %v5669, 1
  %v5671 = vadd.f32 %v5669, %v5670
  %v5672 = vsel %vm230, %v5634, 0.0
  %v5673 = vrot.slane %v5672, 4
  %v5674 = vadd.f32 %v5672, %v5673
  %v5675 = vrot.slane %v5674, 2
  %v5676 = vadd.f32 %v5674, %v5675
  %v5677 = vrot.slane %v5676, 1
  %v5678 = vadd.f32 %v5676, %v5677
  %v5679 = vsel %vm230, %v5637, 0.0
  %v5680 = vrot.slane %v5679, 4
  %v5681 = vadd.f32 %v5679, %v5680
  %v5682 = vrot.slane %v5681, 2
  %v5683 = vadd.f32 %v5681, %v5682
  %v5684 = vrot.slane %v5683, 1
  %v5685 = vadd.f32 %v5683, %v5684
  %v5686 = vsel %vm230, %v5640, 0.0
  %v5687 = vrot.slane %v5686, 4
  %v5688 = vadd.f32 %v5686, %v5687
  %v5689 = vrot.slane %v5688, 2
  %v5690 = vadd.f32 %v5688, %v5689
  %v5691 = vrot.slane %v5690, 1
  %v5692 = vadd.f32 %v5690, %v5691
  %v5693 = vsel %vm230, %v5643, 0.0
  %v5694 = vrot.slane %v5693, 4
  %v5695 = vadd.f32 %v5693, %v5694
  %v5696 = vrot.slane %v5695, 2
  %v5697 = vadd.f32 %v5695, %v5696
  %v5698 = vrot.slane %v5697, 1
  %v5699 = vadd.f32 %v5697, %v5698
  %v5700 = vrsqrt.pop %v5650
  %v5701 = vmul.f32 %v5650, %v5700
  %vm5702 = vcmp.eq.f32.partialorder %v5650, inf
  %v5703 = vsel %vm5702, %v5650, %v5701
  %vm5704 = vcmp.eq.f32.partialorder %v5650, 0.0
  %v5705 = vand.u32 %v5650, 2147483648
  %v5706 = vsel %vm5704, %v5705, %v5703
  %v5707 = vrsqrt.pop %v5657
  %v5708 = vmul.f32 %v5657, %v5707
  %vm5709 = vcmp.eq.f32.partialorder %v5657, inf
  %v5710 = vsel %vm5709, %v5657, %v5708
  %vm5711 = vcmp.eq.f32.partialorder %v5657, 0.0
  %v5712 = vand.u32 %v5657, 2147483648
  %v5713 = vsel %vm5711, %v5712, %v5710
  %v5714 = vrsqrt.pop %v5664
  %v5715 = vmul.f32 %v5664, %v5714
  %vm5716 = vcmp.eq.f32.partialorder %v5664, inf
  %v5717 = vsel %vm5716, %v5664, %v5715
  %vm5718 = vcmp.eq.f32.partialorder %v5664, 0.0
  %v5719 = vand.u32 %v5664, 2147483648
  %v5720 = vsel %vm5718, %v5719, %v5717
  %v5721 = vrsqrt.pop %v5671
  %v5722 = vmul.f32 %v5671, %v5721
  %vm5723 = vcmp.eq.f32.partialorder %v5671, inf
  %v5724 = vsel %vm5723, %v5671, %v5722
  %vm5725 = vcmp.eq.f32.partialorder %v5671, 0.0
  %v5726 = vand.u32 %v5671, 2147483648
  %v5727 = vsel %vm5725, %v5726, %v5724
  %v5728 = vrsqrt.pop %v5678
  %v5729 = vmul.f32 %v5678, %v5728
  %vm5730 = vcmp.eq.f32.partialorder %v5678, inf
  %v5731 = vsel %vm5730, %v5678, %v5729
  %vm5732 = vcmp.eq.f32.partialorder %v5678, 0.0
  %v5733 = vand.u32 %v5678, 2147483648
  %v5734 = vsel %vm5732, %v5733, %v5731
  %v5735 = vrsqrt.pop %v5685
  %v5736 = vmul.f32 %v5685, %v5735
  %vm5737 = vcmp.eq.f32.partialorder %v5685, inf
  %v5738 = vsel %vm5737, %v5685, %v5736
  %vm5739 = vcmp.eq.f32.partialorder %v5685, 0.0
  %v5740 = vand.u32 %v5685, 2147483648
  %v5741 = vsel %vm5739, %v5740, %v5738
  %v5742 = vrsqrt.pop %v5692
  %v5743 = vmul.f32 %v5692, %v5742
  %vm5744 = vcmp.eq.f32.partialorder %v5692, inf
  %v5745 = vsel %vm5744, %v5692, %v5743
  %vm5746 = vcmp.eq.f32.partialorder %v5692, 0.0
  %v5747 = vand.u32 %v5692, 2147483648
  %v5748 = vsel %vm5746, %v5747, %v5745
  %v5749 = vrsqrt.pop %v5699
  %v5750 = vmul.f32 %v5699, %v5749
  %vm5751 = vcmp.eq.f32.partialorder %v5699, inf
  %v5752 = vsel %vm5751, %v5699, %v5750
  %vm5753 = vcmp.eq.f32.partialorder %v5699, 0.0
  %v5754 = vand.u32 %v5699, 2147483648
  %v5755 = vsel %vm5753, %v5754, %v5752
  %v5756 = vsub.f32 1.0, %v77
  %v5757 = vsub.f32 1.0, %v78
  %v5760 = vrot.slane %v5756, 7
  %v5761 = vrot.slane %v5757, 7
  %v5762 = vsel %vm2082, %v5760, %v5761
  %v5764 = vmul.f32 %v4145, %v5762
  %v5765 = vmul.f32 %v4215, %v5762
  %v5766 = vmul.f32 %v4285, %v5762
  %v5767 = vmul.f32 %v4355, %v5762
  %v5768 = vmul.f32 %v4425, %v5762
  %v5769 = vmul.f32 %v4495, %v5762
  %v5770 = vmul.f32 %v4565, %v5762
  %v5771 = vmul.f32 %v4635, %v5762
  %v5772 = vsel %vm4651, %v5764, 0.0
  %5773 = vadd.xlane.f32.xlu0 %v5772
  %v5774 = vpop.xlane.xlu0 %5773
  %v5775 = vsel %vm4651, %v5765, 0.0
  %5776 = vadd.xlane.f32.xlu0 %v5775
  %v5777 = vpop.xlane.xlu0 %5776
  %v5778 = vsel %vm4651, %v5766, 0.0
  %5779 = vadd.xlane.f32.xlu0 %v5778
  %v5780 = vpop.xlane.xlu0 %5779
  %v5781 = vsel %vm4651, %v5767, 0.0
  %5782 = vadd.xlane.f32.xlu0 %v5781
  %v5783 = vpop.xlane.xlu0 %5782
  %v5784 = vsel %vm4651, %v5768, 0.0
  %5785 = vadd.xlane.f32.xlu0 %v5784
  %v5786 = vpop.xlane.xlu0 %5785
  %v5787 = vsel %vm4651, %v5769, 0.0
  %5788 = vadd.xlane.f32.xlu0 %v5787
  %v5789 = vpop.xlane.xlu0 %5788
  %v5790 = vsel %vm4651, %v5770, 0.0
  %5791 = vadd.xlane.f32.xlu0 %v5790
  %v5792 = vpop.xlane.xlu0 %5791
  %v5793 = vsel %vm4651, %v5771, 0.0
  %5794 = vadd.xlane.f32.xlu0 %v5793
  %v5795 = vpop.xlane.xlu0 %5794
  %v5796 = vmax.f32 %v5774, 0.0
  %v5797 = vmax.f32 %v5777, 0.0
  %v5798 = vmax.f32 %v5780, 0.0
  %v5799 = vmax.f32 %v5783, 0.0
  %v5800 = vmax.f32 %v5786, 0.0
  %v5801 = vmax.f32 %v5789, 0.0
  %v5802 = vmax.f32 %v5792, 0.0
  %v5803 = vmax.f32 %v5795, 0.0
  %v5804 = vrsqrt.pop %v5796
  %v5805 = vmul.f32 %v5796, %v5804
  %vm5806 = vcmp.eq.f32.partialorder %v5796, inf
  %v5807 = vsel %vm5806, %v5796, %v5805
  %vm5808 = vcmp.eq.f32.partialorder %v5796, 0.0
  %v5809 = vand.u32 %v5796, 2147483648
  %v5810 = vsel %vm5808, %v5809, %v5807
  %v5811 = vrsqrt.pop %v5797
  %v5812 = vmul.f32 %v5797, %v5811
  %vm5813 = vcmp.eq.f32.partialorder %v5797, inf
  %v5814 = vsel %vm5813, %v5797, %v5812
  %vm5815 = vcmp.eq.f32.partialorder %v5797, 0.0
  %v5816 = vand.u32 %v5797, 2147483648
  %v5817 = vsel %vm5815, %v5816, %v5814
  %v5818 = vrsqrt.pop %v5798
  %v5819 = vmul.f32 %v5798, %v5818
  %vm5820 = vcmp.eq.f32.partialorder %v5798, inf
  %v5821 = vsel %vm5820, %v5798, %v5819
  %vm5822 = vcmp.eq.f32.partialorder %v5798, 0.0
  %v5823 = vand.u32 %v5798, 2147483648
  %v5824 = vsel %vm5822, %v5823, %v5821
  %v5825 = vrsqrt.pop %v5799
  %v5826 = vmul.f32 %v5799, %v5825
  %vm5827 = vcmp.eq.f32.partialorder %v5799, inf
  %v5828 = vsel %vm5827, %v5799, %v5826
  %vm5829 = vcmp.eq.f32.partialorder %v5799, 0.0
  %v5830 = vand.u32 %v5799, 2147483648
  %v5831 = vsel %vm5829, %v5830, %v5828
  %v5832 = vrsqrt.pop %v5800
  %v5833 = vmul.f32 %v5800, %v5832
  %vm5834 = vcmp.eq.f32.partialorder %v5800, inf
  %v5835 = vsel %vm5834, %v5800, %v5833
  %vm5836 = vcmp.eq.f32.partialorder %v5800, 0.0
  %v5837 = vand.u32 %v5800, 2147483648
  %v5838 = vsel %vm5836, %v5837, %v5835
  %v5839 = vrsqrt.pop %v5801
  %v5840 = vmul.f32 %v5801, %v5839
  %vm5841 = vcmp.eq.f32.partialorder %v5801, inf
  %v5842 = vsel %vm5841, %v5801, %v5840
  %vm5843 = vcmp.eq.f32.partialorder %v5801, 0.0
  %v5844 = vand.u32 %v5801, 2147483648
  %v5845 = vsel %vm5843, %v5844, %v5842
  %v5846 = vrsqrt.pop %v5802
  %v5847 = vmul.f32 %v5802, %v5846
  %vm5848 = vcmp.eq.f32.partialorder %v5802, inf
  %v5849 = vsel %vm5848, %v5802, %v5847
  %vm5850 = vcmp.eq.f32.partialorder %v5802, 0.0
  %v5851 = vand.u32 %v5802, 2147483648
  %v5852 = vsel %vm5850, %v5851, %v5849
  %v5853 = vrsqrt.pop %v5803
  %v5854 = vmul.f32 %v5803, %v5853
  %vm5855 = vcmp.eq.f32.partialorder %v5803, inf
  %v5856 = vsel %vm5855, %v5803, %v5854
  %vm5857 = vcmp.eq.f32.partialorder %v5803, 0.0
  %v5858 = vand.u32 %v5803, 2147483648
  %v5859 = vsel %vm5857, %v5858, %v5856
  %v5860 = vadd.f32 %v5810, 1e-15
  %v5861 = vadd.f32 %v5817, 1e-15
  %v5862 = vadd.f32 %v5824, 1e-15
  %v5863 = vadd.f32 %v5831, 1e-15
  %v5864 = vadd.f32 %v5838, 1e-15
  %v5865 = vadd.f32 %v5845, 1e-15
  %v5866 = vadd.f32 %v5852, 1e-15
  %v5867 = vadd.f32 %v5859, 1e-15
  %v5868 = vrcp.pop %v5860
  %v5869 = vrcp.pop %v5861
  %v5870 = vrcp.pop %v5862
  %v5871 = vrcp.pop %v5863
  %v5872 = vrcp.pop %v5864
  %v5873 = vrcp.pop %v5865
  %v5874 = vrcp.pop %v5866
  %v5875 = vrcp.pop %v5867
  %v5877 = vsel %vm3357, %v5868, 0
  %5879 = vmatprep.subr.mxu0 0.0
  %5880 = vmatpush1.xpose.msra.mxu0 %v5877
  %5881 = vmatprep.subr.mxu0 0.0
  %5882 = vmatpush1.xpose.msra.mxu0 0.0
  %5883 = vmatprep.subr.mxu0 0.0
  %5884 = vmatpush1.xpose.msra.mxu0 0.0
  %5885 = vmatprep.subr.mxu0 0.0
  %5886 = vmatpush1.xpose.msra.mxu0 0.0
  %5887 = vmatprep.subr.mxu0 0.0
  %5888 = vmatpush1.xpose.msra.mxu0 0.0
  %5889 = vmatprep.subr.mxu0 0.0
  %5890 = vmatpush1.xpose.msra.mxu0 0.0
  %5891 = vmatprep.subr.mxu0 0.0
  %5892 = vmatpush1.xpose.msra.mxu0 0.0
  %5893 = vmatprep.subr.mxu0 0.0
  %5894 = vmatpush1.xpose.msra.mxu0 0.0
  %5895 = vmatprep.subr.mxu0 0.0
  %5896 = vmatpush1.xpose.msra.mxu0 0.0
  %5897 = vmatprep.subr.mxu0 0.0
  %5898 = vmatpush1.xpose.msra.mxu0 0.0
  %5899 = vmatprep.subr.mxu0 0.0
  %5900 = vmatpush1.xpose.msra.mxu0 0.0
  %5901 = vmatprep.subr.mxu0 0.0
  %5902 = vmatpush1.xpose.msra.mxu0 0.0
  %5903 = vmatprep.subr.mxu0 0.0
  %5904 = vmatpush1.xpose.msra.mxu0 0.0
  %5905 = vmatprep.subr.mxu0 0.0
  %5906 = vmatpush1.xpose.msra.mxu0 0.0
  %5907 = vmatprep.subr.mxu0 0.0
  %5908 = vmatpush1.xpose.msra.mxu0 0.0
  %5909 = vmatprep.subr.mxu0 0.0
  %5910 = vmatpush1.xpose.msra.mxu0 0.0
  %5911 = vmatprep.subr.mxu0 0.0
  %5912 = vmatpush1.xpose.msra.mxu0 0.0
  %5913 = vmatprep.subr.mxu0 0.0
  %5914 = vmatpush1.xpose.msra.mxu0 0.0
  %5915 = vmatprep.subr.mxu0 0.0
  %5916 = vmatpush1.xpose.msra.mxu0 0.0
  %5917 = vmatprep.subr.mxu0 0.0
  %5918 = vmatpush1.xpose.msra.mxu0 0.0
  %5919 = vmatprep.subr.mxu0 0.0
  %5920 = vmatpush1.xpose.msra.mxu0 0.0
  %5921 = vmatprep.subr.mxu0 0.0
  %5922 = vmatpush1.xpose.msra.mxu0 0.0
  %5923 = vmatprep.subr.mxu0 0.0
  %5924 = vmatpush1.xpose.msra.mxu0 0.0
  %5925 = vmatprep.subr.mxu0 0.0
  %5926 = vmatpush1.xpose.msra.mxu0 0.0
  %5927 = vmatprep.subr.mxu0 0.0
  %5928 = vmatpush1.xpose.msra.mxu0 0.0
  %5929 = vmatprep.subr.mxu0 0.0
  %5930 = vmatpush1.xpose.msra.mxu0 0.0
  %5931 = vmatprep.subr.mxu0 0.0
  %5932 = vmatpush1.xpose.msra.mxu0 0.0
  %5933 = vmatprep.subr.mxu0 0.0
  %5934 = vmatpush1.xpose.msra.mxu0 0.0
  %5935 = vmatprep.subr.mxu0 0.0
  %5936 = vmatpush1.xpose.msra.mxu0 0.0
  %5937 = vmatprep.subr.mxu0 0.0
  %5938 = vmatpush1.xpose.msra.mxu0 0.0
  %5939 = vmatprep.subr.mxu0 0.0
  %5940 = vmatpush1.xpose.msra.mxu0 0.0
  %5941 = vmatprep.subr.mxu0 0.0
  %5942 = vmatpush1.xpose.msra.mxu0 0.0
  %5943 = vmatprep.mubr.f32.mxu0 0.0
  %5944 = vmatmul.mubr.f32.gmra.mrb[0].mxu0 %v5877
  %v5945 = vpop.f32.mrb[0].mxu0
  %v5946 = vadd.f32 0.0, %v5945
  %v5947 = vpop.f32.mrb[0].mxu0
  %5948 = vdwg.mxu0
  %v5950 = vsel %vm3357, %v5869, 0
  %5952 = vmatprep.subr.mxu0 0.0
  %5953 = vmatpush1.xpose.msra.mxu0 %v5950
  %5954 = vmatprep.subr.mxu0 0.0
  %5955 = vmatpush1.xpose.msra.mxu0 0.0
  %5956 = vmatprep.subr.mxu0 0.0
  %5957 = vmatpush1.xpose.msra.mxu0 0.0
  %5958 = vmatprep.subr.mxu0 0.0
  %5959 = vmatpush1.xpose.msra.mxu0 0.0
  %5960 = vmatprep.subr.mxu0 0.0
  %5961 = vmatpush1.xpose.msra.mxu0 0.0
  %5962 = vmatprep.subr.mxu0 0.0
  %5963 = vmatpush1.xpose.msra.mxu0 0.0
  %5964 = vmatprep.subr.mxu0 0.0
  %5965 = vmatpush1.xpose.msra.mxu0 0.0
  %5966 = vmatprep.subr.mxu0 0.0
  %5967 = vmatpush1.xpose.msra.mxu0 0.0
  %5968 = vmatprep.subr.mxu0 0.0
  %5969 = vmatpush1.xpose.msra.mxu0 0.0
  %5970 = vmatprep.subr.mxu0 0.0
  %5971 = vmatpush1.xpose.msra.mxu0 0.0
  %5972 = vmatprep.subr.mxu0 0.0
  %5973 = vmatpush1.xpose.msra.mxu0 0.0
  %5974 = vmatprep.subr.mxu0 0.0
  %5975 = vmatpush1.xpose.msra.mxu0 0.0
  %5976 = vmatprep.subr.mxu0 0.0
  %5977 = vmatpush1.xpose.msra.mxu0 0.0
  %5978 = vmatprep.subr.mxu0 0.0
  %5979 = vmatpush1.xpose.msra.mxu0 0.0
  %5980 = vmatprep.subr.mxu0 0.0
  %5981 = vmatpush1.xpose.msra.mxu0 0.0
  %5982 = vmatprep.subr.mxu0 0.0
  %5983 = vmatpush1.xpose.msra.mxu0 0.0
  %5984 = vmatprep.subr.mxu0 0.0
  %5985 = vmatpush1.xpose.msra.mxu0 0.0
  %5986 = vmatprep.subr.mxu0 0.0
  %5987 = vmatpush1.xpose.msra.mxu0 0.0
  %5988 = vmatprep.subr.mxu0 0.0
  %5989 = vmatpush1.xpose.msra.mxu0 0.0
  %5990 = vmatprep.subr.mxu0 0.0
  %5991 = vmatpush1.xpose.msra.mxu0 0.0
  %5992 = vmatprep.subr.mxu0 0.0
  %5993 = vmatpush1.xpose.msra.mxu0 0.0
  %5994 = vmatprep.subr.mxu0 0.0
  %5995 = vmatpush1.xpose.msra.mxu0 0.0
  %5996 = vmatprep.subr.mxu0 0.0
  %5997 = vmatpush1.xpose.msra.mxu0 0.0
  %5998 = vmatprep.subr.mxu0 0.0
  %5999 = vmatpush1.xpose.msra.mxu0 0.0
  %6000 = vmatprep.subr.mxu0 0.0
  %6001 = vmatpush1.xpose.msra.mxu0 0.0
  %6002 = vmatprep.subr.mxu0 0.0
  %6003 = vmatpush1.xpose.msra.mxu0 0.0
  %6004 = vmatprep.subr.mxu0 0.0
  %6005 = vmatpush1.xpose.msra.mxu0 0.0
  %6006 = vmatprep.subr.mxu0 0.0
  %6007 = vmatpush1.xpose.msra.mxu0 0.0
  %6008 = vmatprep.subr.mxu0 0.0
  %6009 = vmatpush1.xpose.msra.mxu0 0.0
  %6010 = vmatprep.subr.mxu0 0.0
  %6011 = vmatpush1.xpose.msra.mxu0 0.0
  %6012 = vmatprep.subr.mxu0 0.0
  %6013 = vmatpush1.xpose.msra.mxu0 0.0
  %6014 = vmatprep.subr.mxu0 0.0
  %6015 = vmatpush1.xpose.msra.mxu0 0.0
  %6016 = vmatprep.mubr.f32.mxu0 0.0
  %6017 = vmatmul.mubr.f32.gmra.mrb[0].mxu0 %v5950
  %v6018 = vpop.f32.mrb[0].mxu0
  %v6019 = vadd.f32 0.0, %v6018
  %v6020 = vpop.f32.mrb[0].mxu0
  %6021 = vdwg.mxu0
  %v6023 = vsel %vm3357, %v5870, 0
  %6025 = vmatprep.subr.mxu0 0.0
  %6026 = vmatpush1.xpose.msra.mxu0 %v6023
  %6027 = vmatprep.subr.mxu0 0.0
  %6028 = vmatpush1.xpose.msra.mxu0 0.0
  %6029 = vmatprep.subr.mxu0 0.0
  %6030 = vmatpush1.xpose.msra.mxu0 0.0
  %6031 = vmatprep.subr.mxu0 0.0
  %6032 = vmatpush1.xpose.msra.mxu0 0.0
  %6033 = vmatprep.subr.mxu0 0.0
  %6034 = vmatpush1.xpose.msra.mxu0 0.0
  %6035 = vmatprep.subr.mxu0 0.0
  %6036 = vmatpush1.xpose.msra.mxu0 0.0
  %6037 = vmatprep.subr.mxu0 0.0
  %6038 = vmatpush1.xpose.msra.mxu0 0.0
  %6039 = vmatprep.subr.mxu0 0.0
  %6040 = vmatpush1.xpose.msra.mxu0 0.0
  %6041 = vmatprep.subr.mxu0 0.0
  %6042 = vmatpush1.xpose.msra.mxu0 0.0
  %6043 = vmatprep.subr.mxu0 0.0
  %6044 = vmatpush1.xpose.msra.mxu0 0.0
  %6045 = vmatprep.subr.mxu0 0.0
  %6046 = vmatpush1.xpose.msra.mxu0 0.0
  %6047 = vmatprep.subr.mxu0 0.0
  %6048 = vmatpush1.xpose.msra.mxu0 0.0
  %6049 = vmatprep.subr.mxu0 0.0
  %6050 = vmatpush1.xpose.msra.mxu0 0.0
  %6051 = vmatprep.subr.mxu0 0.0
  %6052 = vmatpush1.xpose.msra.mxu0 0.0
  %6053 = vmatprep.subr.mxu0 0.0
  %6054 = vmatpush1.xpose.msra.mxu0 0.0
  %6055 = vmatprep.subr.mxu0 0.0
  %6056 = vmatpush1.xpose.msra.mxu0 0.0
  %6057 = vmatprep.subr.mxu0 0.0
  %6058 = vmatpush1.xpose.msra.mxu0 0.0
  %6059 = vmatprep.subr.mxu0 0.0
  %6060 = vmatpush1.xpose.msra.mxu0 0.0
  %6061 = vmatprep.subr.mxu0 0.0
  %6062 = vmatpush1.xpose.msra.mxu0 0.0
  %6063 = vmatprep.subr.mxu0 0.0
  %6064 = vmatpush1.xpose.msra.mxu0 0.0
  %6065 = vmatprep.subr.mxu0 0.0
  %6066 = vmatpush1.xpose.msra.mxu0 0.0
  %6067 = vmatprep.subr.mxu0 0.0
  %6068 = vmatpush1.xpose.msra.mxu0 0.0
  %6069 = vmatprep.subr.mxu0 0.0
  %6070 = vmatpush1.xpose.msra.mxu0 0.0
  %6071 = vmatprep.subr.mxu0 0.0
  %6072 = vmatpush1.xpose.msra.mxu0 0.0
  %6073 = vmatprep.subr.mxu0 0.0
  %6074 = vmatpush1.xpose.msra.mxu0 0.0
  %6075 = vmatprep.subr.mxu0 0.0
  %6076 = vmatpush1.xpose.msra.mxu0 0.0
  %6077 = vmatprep.subr.mxu0 0.0
  %6078 = vmatpush1.xpose.msra.mxu0 0.0
  %6079 = vmatprep.subr.mxu0 0.0
  %6080 = vmatpush1.xpose.msra.mxu0 0.0
  %6081 = vmatprep.subr.mxu0 0.0
  %6082 = vmatpush1.xpose.msra.mxu0 0.0
  %6083 = vmatprep.subr.mxu0 0.0
  %6084 = vmatpush1.xpose.msra.mxu0 0.0
  %6085 = vmatprep.subr.mxu0 0.0
  %6086 = vmatpush1.xpose.msra.mxu0 0.0
  %6087 = vmatprep.subr.mxu0 0.0
  %6088 = vmatpush1.xpose.msra.mxu0 0.0
  %6089 = vmatprep.mubr.f32.mxu0 0.0
  %6090 = vmatmul.mubr.f32.gmra.mrb[0].mxu0 %v6023
  %v6091 = vpop.f32.mrb[0].mxu0
  %v6092 = vadd.f32 0.0, %v6091
  %v6093 = vpop.f32.mrb[0].mxu0
  %6094 = vdwg.mxu0
  %v6096 = vsel %vm3357, %v5871, 0
  %6098 = vmatprep.subr.mxu0 0.0
  %6099 = vmatpush1.xpose.msra.mxu0 %v6096
  %6100 = vmatprep.subr.mxu0 0.0
  %6101 = vmatpush1.xpose.msra.mxu0 0.0
  %6102 = vmatprep.subr.mxu0 0.0
  %6103 = vmatpush1.xpose.msra.mxu0 0.0
  %6104 = vmatprep.subr.mxu0 0.0
  %6105 = vmatpush1.xpose.msra.mxu0 0.0
  %6106 = vmatprep.subr.mxu0 0.0
  %6107 = vmatpush1.xpose.msra.mxu0 0.0
  %6108 = vmatprep.subr.mxu0 0.0
  %6109 = vmatpush1.xpose.msra.mxu0 0.0
  %6110 = vmatprep.subr.mxu0 0.0
  %6111 = vmatpush1.xpose.msra.mxu0 0.0
  %6112 = vmatprep.subr.mxu0 0.0
  %6113 = vmatpush1.xpose.msra.mxu0 0.0
  %6114 = vmatprep.subr.mxu0 0.0
  %6115 = vmatpush1.xpose.msra.mxu0 0.0
  %6116 = vmatprep.subr.mxu0 0.0
  %6117 = vmatpush1.xpose.msra.mxu0 0.0
  %6118 = vmatprep.subr.mxu0 0.0
  %6119 = vmatpush1.xpose.msra.mxu0 0.0
  %6120 = vmatprep.subr.mxu0 0.0
  %6121 = vmatpush1.xpose.msra.mxu0 0.0
  %6122 = vmatprep.subr.mxu0 0.0
  %6123 = vmatpush1.xpose.msra.mxu0 0.0
  %6124 = vmatprep.subr.mxu0 0.0
  %6125 = vmatpush1.xpose.msra.mxu0 0.0
  %6126 = vmatprep.subr.mxu0 0.0
  %6127 = vmatpush1.xpose.msra.mxu0 0.0
  %6128 = vmatprep.subr.mxu0 0.0
  %6129 = vmatpush1.xpose.msra.mxu0 0.0
  %6130 = vmatprep.subr.mxu0 0.0
  %6131 = vmatpush1.xpose.msra.mxu0 0.0
  %6132 = vmatprep.subr.mxu0 0.0
  %6133 = vmatpush1.xpose.msra.mxu0 0.0
  %6134 = vmatprep.subr.mxu0 0.0
  %6135 = vmatpush1.xpose.msra.mxu0 0.0
  %6136 = vmatprep.subr.mxu0 0.0
  %6137 = vmatpush1.xpose.msra.mxu0 0.0
  %6138 = vmatprep.subr.mxu0 0.0
  %6139 = vmatpush1.xpose.msra.mxu0 0.0
  %6140 = vmatprep.subr.mxu0 0.0
  %6141 = vmatpush1.xpose.msra.mxu0 0.0
  %6142 = vmatprep.subr.mxu0 0.0
  %6143 = vmatpush1.xpose.msra.mxu0 0.0
  %6144 = vmatprep.subr.mxu0 0.0
  %6145 = vmatpush1.xpose.msra.mxu0 0.0
  %6146 = vmatprep.subr.mxu0 0.0
  %6147 = vmatpush1.xpose.msra.mxu0 0.0
  %6148 = vmatprep.subr.mxu0 0.0
  %6149 = vmatpush1.xpose.msra.mxu0 0.0
  %6150 = vmatprep.subr.mxu0 0.0
  %6151 = vmatpush1.xpose.msra.mxu0 0.0
  %6152 = vmatprep.subr.mxu0 0.0
  %6153 = vmatpush1.xpose.msra.mxu0 0.0
  %6154 = vmatprep.subr.mxu0 0.0
  %6155 = vmatpush1.xpose.msra.mxu0 0.0
  %6156 = vmatprep.subr.mxu0 0.0
  %6157 = vmatpush1.xpose.msra.mxu0 0.0
  %6158 = vmatprep.subr.mxu0 0.0
  %6159 = vmatpush1.xpose.msra.mxu0 0.0
  %6160 = vmatprep.subr.mxu0 0.0
  %6161 = vmatpush1.xpose.msra.mxu0 0.0
  %6162 = vmatprep.mubr.f32.mxu0 0.0
  %6163 = vmatmul.mubr.f32.gmra.mrb[0].mxu0 %v6096
  %v6164 = vpop.f32.mrb[0].mxu0
  %v6165 = vadd.f32 0.0, %v6164
  %v6166 = vpop.f32.mrb[0].mxu0
  %6167 = vdwg.mxu0
  %v6169 = vsel %vm3357, %v5872, 0
  %6171 = vmatprep.subr.mxu0 0.0
  %6172 = vmatpush1.xpose.msra.mxu0 %v6169
  %6173 = vmatprep.subr.mxu0 0.0
  %6174 = vmatpush1.xpose.msra.mxu0 0.0
  %6175 = vmatprep.subr.mxu0 0.0
  %6176 = vmatpush1.xpose.msra.mxu0 0.0
  %6177 = vmatprep.subr.mxu0 0.0
  %6178 = vmatpush1.xpose.msra.mxu0 0.0
  %6179 = vmatprep.subr.mxu0 0.0
  %6180 = vmatpush1.xpose.msra.mxu0 0.0
  %6181 = vmatprep.subr.mxu0 0.0
  %6182 = vmatpush1.xpose.msra.mxu0 0.0
  %6183 = vmatprep.subr.mxu0 0.0
  %6184 = vmatpush1.xpose.msra.mxu0 0.0
  %6185 = vmatprep.subr.mxu0 0.0
  %6186 = vmatpush1.xpose.msra.mxu0 0.0
  %6187 = vmatprep.subr.mxu0 0.0
  %6188 = vmatpush1.xpose.msra.mxu0 0.0
  %6189 = vmatprep.subr.mxu0 0.0
  %6190 = vmatpush1.xpose.msra.mxu0 0.0
  %6191 = vmatprep.subr.mxu0 0.0
  %6192 = vmatpush1.xpose.msra.mxu0 0.0
  %6193 = vmatprep.subr.mxu0 0.0
  %6194 = vmatpush1.xpose.msra.mxu0 0.0
  %6195 = vmatprep.subr.mxu0 0.0
  %6196 = vmatpush1.xpose.msra.mxu0 0.0
  %6197 = vmatprep.subr.mxu0 0.0
  %6198 = vmatpush1.xpose.msra.mxu0 0.0
  %6199 = vmatprep.subr.mxu0 0.0
  %6200 = vmatpush1.xpose.msra.mxu0 0.0
  %6201 = vmatprep.subr.mxu0 0.0
  %6202 = vmatpush1.xpose.msra.mxu0 0.0
  %6203 = vmatprep.subr.mxu0 0.0
  %6204 = vmatpush1.xpose.msra.mxu0 0.0
  %6205 = vmatprep.subr.mxu0 0.0
  %6206 = vmatpush1.xpose.msra.mxu0 0.0
  %6207 = vmatprep.subr.mxu0 0.0
  %6208 = vmatpush1.xpose.msra.mxu0 0.0
  %6209 = vmatprep.subr.mxu0 0.0
  %6210 = vmatpush1.xpose.msra.mxu0 0.0
  %6211 = vmatprep.subr.mxu0 0.0
  %6212 = vmatpush1.xpose.msra.mxu0 0.0
  %6213 = vmatprep.subr.mxu0 0.0
  %6214 = vmatpush1.xpose.msra.mxu0 0.0
  %6215 = vmatprep.subr.mxu0 0.0
  %6216 = vmatpush1.xpose.msra.mxu0 0.0
  %6217 = vmatprep.subr.mxu0 0.0
  %6218 = vmatpush1.xpose.msra.mxu0 0.0
  %6219 = vmatprep.subr.mxu0 0.0
  %6220 = vmatpush1.xpose.msra.mxu0 0.0
  %6221 = vmatprep.subr.mxu0 0.0
  %6222 = vmatpush1.xpose.msra.mxu0 0.0
  %6223 = vmatprep.subr.mxu0 0.0
  %6224 = vmatpush1.xpose.msra.mxu0 0.0
  %6225 = vmatprep.subr.mxu0 0.0
  %6226 = vmatpush1.xpose.msra.mxu0 0.0
  %6227 = vmatprep.subr.mxu0 0.0
  %6228 = vmatpush1.xpose.msra.mxu0 0.0
  %6229 = vmatprep.subr.mxu0 0.0
  %6230 = vmatpush1.xpose.msra.mxu0 0.0
  %6231 = vmatprep.subr.mxu0 0.0
  %6232 = vmatpush1.xpose.msra.mxu0 0.0
  %6233 = vmatprep.subr.mxu0 0.0
  %6234 = vmatpush1.xpose.msra.mxu0 0.0
  %6235 = vmatprep.mubr.f32.mxu0 0.0
  %6236 = vmatmul.mubr.f32.gmra.mrb[0].mxu0 %v6169
  %v6237 = vpop.f32.mrb[0].mxu0
  %v6238 = vadd.f32 0.0, %v6237
  %v6239 = vpop.f32.mrb[0].mxu0
  %6240 = vdwg.mxu0
  %v6242 = vsel %vm3357, %v5873, 0
  %6244 = vmatprep.subr.mxu0 0.0
  %6245 = vmatpush1.xpose.msra.mxu0 %v6242
  %6246 = vmatprep.subr.mxu0 0.0
  %6247 = vmatpush1.xpose.msra.mxu0 0.0
  %6248 = vmatprep.subr.mxu0 0.0
  %6249 = vmatpush1.xpose.msra.mxu0 0.0
  %6250 = vmatprep.subr.mxu0 0.0
  %6251 = vmatpush1.xpose.msra.mxu0 0.0
  %6252 = vmatprep.subr.mxu0 0.0
  %6253 = vmatpush1.xpose.msra.mxu0 0.0
  %6254 = vmatprep.subr.mxu0 0.0
  %6255 = vmatpush1.xpose.msra.mxu0 0.0
  %6256 = vmatprep.subr.mxu0 0.0
  %6257 = vmatpush1.xpose.msra.mxu0 0.0
  %6258 = vmatprep.subr.mxu0 0.0
  %6259 = vmatpush1.xpose.msra.mxu0 0.0
  %6260 = vmatprep.subr.mxu0 0.0
  %6261 = vmatpush1.xpose.msra.mxu0 0.0
  %6262 = vmatprep.subr.mxu0 0.0
  %6263 = vmatpush1.xpose.msra.mxu0 0.0
  %6264 = vmatprep.subr.mxu0 0.0
  %6265 = vmatpush1.xpose.msra.mxu0 0.0
  %6266 = vmatprep.subr.mxu0 0.0
  %6267 = vmatpush1.xpose.msra.mxu0 0.0
  %6268 = vmatprep.subr.mxu0 0.0
  %6269 = vmatpush1.xpose.msra.mxu0 0.0
  %6270 = vmatprep.subr.mxu0 0.0
  %6271 = vmatpush1.xpose.msra.mxu0 0.0
  %6272 = vmatprep.subr.mxu0 0.0
  %6273 = vmatpush1.xpose.msra.mxu0 0.0
  %6274 = vmatprep.subr.mxu0 0.0
  %6275 = vmatpush1.xpose.msra.mxu0 0.0
  %6276 = vmatprep.subr.mxu0 0.0
  %6277 = vmatpush1.xpose.msra.mxu0 0.0
  %6278 = vmatprep.subr.mxu0 0.0
  %6279 = vmatpush1.xpose.msra.mxu0 0.0
  %6280 = vmatprep.subr.mxu0 0.0
  %6281 = vmatpush1.xpose.msra.mxu0 0.0
  %6282 = vmatprep.subr.mxu0 0.0
  %6283 = vmatpush1.xpose.msra.mxu0 0.0
  %6284 = vmatprep.subr.mxu0 0.0
  %6285 = vmatpush1.xpose.msra.mxu0 0.0
  %6286 = vmatprep.subr.mxu0 0.0
  %6287 = vmatpush1.xpose.msra.mxu0 0.0
  %6288 = vmatprep.subr.mxu0 0.0
  %6289 = vmatpush1.xpose.msra.mxu0 0.0
  %6290 = vmatprep.subr.mxu0 0.0
  %6291 = vmatpush1.xpose.msra.mxu0 0.0
  %6292 = vmatprep.subr.mxu0 0.0
  %6293 = vmatpush1.xpose.msra.mxu0 0.0
  %6294 = vmatprep.subr.mxu0 0.0
  %6295 = vmatpush1.xpose.msra.mxu0 0.0
  %6296 = vmatprep.subr.mxu0 0.0
  %6297 = vmatpush1.xpose.msra.mxu0 0.0
  %6298 = vmatprep.subr.mxu0 0.0
  %6299 = vmatpush1.xpose.msra.mxu0 0.0
  %6300 = vmatprep.subr.mxu0 0.0
  %6301 = vmatpush1.xpose.msra.mxu0 0.0
  %6302 = vmatprep.subr.mxu0 0.0
  %6303 = vmatpush1.xpose.msra.mxu0 0.0
  %6304 = vmatprep.subr.mxu0 0.0
  %6305 = vmatpush1.xpose.msra.mxu0 0.0
  %6306 = vmatprep.subr.mxu0 0.0
  %6307 = vmatpush1.xpose.msra.mxu0 0.0
  %6308 = vmatprep.mubr.f32.mxu0 0.0
  %6309 = vmatmul.mubr.f32.gmra.mrb[0].mxu0 %v6242
  %v6310 = vpop.f32.mrb[0].mxu0
  %v6311 = vadd.f32 0.0, %v6310
  %v6312 = vpop.f32.mrb[0].mxu0
  %6313 = vdwg.mxu0
  %v6315 = vsel %vm3357, %v5874, 0
  %6317 = vmatprep.subr.mxu0 0.0
  %6318 = vmatpush1.xpose.msra.mxu0 %v6315
  %6319 = vmatprep.subr.mxu0 0.0
  %6320 = vmatpush1.xpose.msra.mxu0 0.0
  %6321 = vmatprep.subr.mxu0 0.0
  %6322 = vmatpush1.xpose.msra.mxu0 0.0
  %6323 = vmatprep.subr.mxu0 0.0
  %6324 = vmatpush1.xpose.msra.mxu0 0.0
  %6325 = vmatprep.subr.mxu0 0.0
  %6326 = vmatpush1.xpose.msra.mxu0 0.0
  %6327 = vmatprep.subr.mxu0 0.0
  %6328 = vmatpush1.xpose.msra.mxu0 0.0
  %6329 = vmatprep.subr.mxu0 0.0
  %6330 = vmatpush1.xpose.msra.mxu0 0.0
  %6331 = vmatprep.subr.mxu0 0.0
  %6332 = vmatpush1.xpose.msra.mxu0 0.0
  %6333 = vmatprep.subr.mxu0 0.0
  %6334 = vmatpush1.xpose.msra.mxu0 0.0
  %6335 = vmatprep.subr.mxu0 0.0
  %6336 = vmatpush1.xpose.msra.mxu0 0.0
  %6337 = vmatprep.subr.mxu0 0.0
  %6338 = vmatpush1.xpose.msra.mxu0 0.0
  %6339 = vmatprep.subr.mxu0 0.0
  %6340 = vmatpush1.xpose.msra.mxu0 0.0
  %6341 = vmatprep.subr.mxu0 0.0
  %6342 = vmatpush1.xpose.msra.mxu0 0.0
  %6343 = vmatprep.subr.mxu0 0.0
  %6344 = vmatpush1.xpose.msra.mxu0 0.0
  %6345 = vmatprep.subr.mxu0 0.0
  %6346 = vmatpush1.xpose.msra.mxu0 0.0
  %6347 = vmatprep.subr.mxu0 0.0
  %6348 = vmatpush1.xpose.msra.mxu0 0.0
  %6349 = vmatprep.subr.mxu0 0.0
  %6350 = vmatpush1.xpose.msra.mxu0 0.0
  %6351 = vmatprep.subr.mxu0 0.0
  %6352 = vmatpush1.xpose.msra.mxu0 0.0
  %6353 = vmatprep.subr.mxu0 0.0
  %6354 = vmatpush1.xpose.msra.mxu0 0.0
  %6355 = vmatprep.subr.mxu0 0.0
  %6356 = vmatpush1.xpose.msra.mxu0 0.0
  %6357 = vmatprep.subr.mxu0 0.0
  %6358 = vmatpush1.xpose.msra.mxu0 0.0
  %6359 = vmatprep.subr.mxu0 0.0
  %6360 = vmatpush1.xpose.msra.mxu0 0.0
  %6361 = vmatprep.subr.mxu0 0.0
  %6362 = vmatpush1.xpose.msra.mxu0 0.0
  %6363 = vmatprep.subr.mxu0 0.0
  %6364 = vmatpush1.xpose.msra.mxu0 0.0
  %6365 = vmatprep.subr.mxu0 0.0
  %6366 = vmatpush1.xpose.msra.mxu0 0.0
  %6367 = vmatprep.subr.mxu0 0.0
  %6368 = vmatpush1.xpose.msra.mxu0 0.0
  %6369 = vmatprep.subr.mxu0 0.0
  %6370 = vmatpush1.xpose.msra.mxu0 0.0
  %6371 = vmatprep.subr.mxu0 0.0
  %6372 = vmatpush1.xpose.msra.mxu0 0.0
  %6373 = vmatprep.subr.mxu0 0.0
  %6374 = vmatpush1.xpose.msra.mxu0 0.0
  %6375 = vmatprep.subr.mxu0 0.0
  %6376 = vmatpush1.xpose.msra.mxu0 0.0
  %6377 = vmatprep.subr.mxu0 0.0
  %6378 = vmatpush1.xpose.msra.mxu0 0.0
  %6379 = vmatprep.subr.mxu0 0.0
  %6380 = vmatpush1.xpose.msra.mxu0 0.0
  %6381 = vmatprep.mubr.f32.mxu0 0.0
  %6382 = vmatmul.mubr.f32.gmra.mrb[0].mxu0 %v6315
  %v6383 = vpop.f32.mrb[0].mxu0
  %v6384 = vadd.f32 0.0, %v6383
  %v6385 = vpop.f32.mrb[0].mxu0
  %6386 = vdwg.mxu0
  %v6388 = vsel %vm3357, %v5875, 0
  %6390 = vmatprep.subr.mxu0 0.0
  %6391 = vmatpush1.xpose.msra.mxu0 %v6388
  %6392 = vmatprep.subr.mxu0 0.0
  %6393 = vmatpush1.xpose.msra.mxu0 0.0
  %6394 = vmatprep.subr.mxu0 0.0
  %6395 = vmatpush1.xpose.msra.mxu0 0.0
  %6396 = vmatprep.subr.mxu0 0.0
  %6397 = vmatpush1.xpose.msra.mxu0 0.0
  %6398 = vmatprep.subr.mxu0 0.0
  %6399 = vmatpush1.xpose.msra.mxu0 0.0
  %6400 = vmatprep.subr.mxu0 0.0
  %6401 = vmatpush1.xpose.msra.mxu0 0.0
  %6402 = vmatprep.subr.mxu0 0.0
  %6403 = vmatpush1.xpose.msra.mxu0 0.0
  %6404 = vmatprep.subr.mxu0 0.0
  %6405 = vmatpush1.xpose.msra.mxu0 0.0
  %6406 = vmatprep.subr.mxu0 0.0
  %6407 = vmatpush1.xpose.msra.mxu0 0.0
  %6408 = vmatprep.subr.mxu0 0.0
  %6409 = vmatpush1.xpose.msra.mxu0 0.0
  %6410 = vmatprep.subr.mxu0 0.0
  %6411 = vmatpush1.xpose.msra.mxu0 0.0
  %6412 = vmatprep.subr.mxu0 0.0
  %6413 = vmatpush1.xpose.msra.mxu0 0.0
  %6414 = vmatprep.subr.mxu0 0.0
  %6415 = vmatpush1.xpose.msra.mxu0 0.0
  %6416 = vmatprep.subr.mxu0 0.0
  %6417 = vmatpush1.xpose.msra.mxu0 0.0
  %6418 = vmatprep.subr.mxu0 0.0
  %6419 = vmatpush1.xpose.msra.mxu0 0.0
  %6420 = vmatprep.subr.mxu0 0.0
  %6421 = vmatpush1.xpose.msra.mxu0 0.0
  %6422 = vmatprep.subr.mxu0 0.0
  %6423 = vmatpush1.xpose.msra.mxu0 0.0
  %6424 = vmatprep.subr.mxu0 0.0
  %6425 = vmatpush1.xpose.msra.mxu0 0.0
  %6426 = vmatprep.subr.mxu0 0.0
  %6427 = vmatpush1.xpose.msra.mxu0 0.0
  %6428 = vmatprep.subr.mxu0 0.0
  %6429 = vmatpush1.xpose.msra.mxu0 0.0
  %6430 = vmatprep.subr.mxu0 0.0
  %6431 = vmatpush1.xpose.msra.mxu0 0.0
  %6432 = vmatprep.subr.mxu0 0.0
  %6433 = vmatpush1.xpose.msra.mxu0 0.0
  %6434 = vmatprep.subr.mxu0 0.0
  %6435 = vmatpush1.xpose.msra.mxu0 0.0
  %6436 = vmatprep.subr.mxu0 0.0
  %6437 = vmatpush1.xpose.msra.mxu0 0.0
  %6438 = vmatprep.subr.mxu0 0.0
  %6439 = vmatpush1.xpose.msra.mxu0 0.0
  %6440 = vmatprep.subr.mxu0 0.0
  %6441 = vmatpush1.xpose.msra.mxu0 0.0
  %6442 = vmatprep.subr.mxu0 0.0
  %6443 = vmatpush1.xpose.msra.mxu0 0.0
  %6444 = vmatprep.subr.mxu0 0.0
  %6445 = vmatpush1.xpose.msra.mxu0 0.0
  %6446 = vmatprep.subr.mxu0 0.0
  %6447 = vmatpush1.xpose.msra.mxu0 0.0
  %6448 = vmatprep.subr.mxu0 0.0
  %6449 = vmatpush1.xpose.msra.mxu0 0.0
  %6450 = vmatprep.subr.mxu0 0.0
  %6451 = vmatpush1.xpose.msra.mxu0 0.0
  %6452 = vmatprep.subr.mxu0 0.0
  %6453 = vmatpush1.xpose.msra.mxu0 0.0
  %6454 = vmatprep.mubr.f32.mxu0 0.0
  %6455 = vmatmul.mubr.f32.gmra.mrb[0].mxu0 %v6388
  %v6456 = vpop.f32.mrb[0].mxu0
  %v6457 = vadd.f32 0.0, %v6456
  %v6458 = vpop.f32.mrb[0].mxu0
  %6459 = vdwg.mxu0
  %v6460 = vmul.f32 %v5764, %v5946
  %v6461 = vmul.f32 %v5765, %v6019
  %v6462 = vmul.f32 %v5766, %v6092
  %v6463 = vmul.f32 %v5767, %v6165
  %v6464 = vmul.f32 %v5768, %v6238
  %v6465 = vmul.f32 %v5769, %v6311
  %v6466 = vmul.f32 %v5770, %v6384
  %v6467 = vmul.f32 %v5771, %v6457
  %v6468 = vrot.slane %v77, 3
  %v6470 = vmul.f32 %v6460, %v6468
  %v6471 = vmul.f32 %v6461, %v6468
  %v6472 = vmul.f32 %v6462, %v6468
  %v6473 = vmul.f32 %v6463, %v6468
  %v6474 = vmul.f32 %v6464, %v6468
  %v6475 = vmul.f32 %v6465, %v6468
  %v6476 = vmul.f32 %v6466, %v6468
  %v6477 = vmul.f32 %v6467, %v6468
  %6486 = vrot.lane.b32.xlu0 %v3366, 2
  %v6487 = vpop.permute.xlu0 %6486
  %6488 = vrot.lane.b32.xlu0 %v3375, 2
  %v6489 = vpop.permute.xlu0 %6488
  %6490 = vrot.lane.b32.xlu0 %v3384, 2
  %v6491 = vpop.permute.xlu0 %6490
  %6492 = vrot.lane.b32.xlu0 %v3393, 2
  %v6493 = vpop.permute.xlu0 %6492
  %6494 = vrot.lane.b32.xlu0 %v3402, 2
  %v6495 = vpop.permute.xlu0 %6494
  %6496 = vrot.lane.b32.xlu0 %v3411, 2
  %v6497 = vpop.permute.xlu0 %6496
  %6498 = vrot.lane.b32.xlu0 %v3420, 2
  %v6499 = vpop.permute.xlu0 %6498
  %6500 = vrot.lane.b32.xlu0 %v3429, 2
  %v6501 = vpop.permute.xlu0 %6500
  %v6510 = vsel %vm3357, %v4917, %v5706
  %v6511 = vsel %vm3357, %v4919, %v5713
  %v6512 = vsel %vm3357, %v4921, %v5720
  %v6513 = vsel %vm3357, %v4923, %v5727
  %v6514 = vsel %vm3357, %v4925, %v5734
  %v6515 = vsel %vm3357, %v4927, %v5741
  %v6516 = vsel %vm3357, %v4929, %v5748
  %v6517 = vsel %vm3357, %v4931, %v5755
  %vm6518 = vcmask 15360
  %v6519 = vsel %vm6518, %v6510, %v6487
  %v6520 = vsel %vm6518, %v6511, %v6489
  %v6521 = vsel %vm6518, %v6512, %v6491
  %v6522 = vsel %vm6518, %v6513, %v6493
  %v6523 = vsel %vm6518, %v6514, %v6495
  %v6524 = vsel %vm6518, %v6515, %v6497
  %v6525 = vsel %vm6518, %v6516, %v6499
  %v6526 = vsel %vm6518, %v6517, %v6501
  %v6527 = vcombine.low %v2480, %v2482
  %v6529 = vunpack.c.l.s4 1983009808
  %v6530 = vunpack.c.0.s8 %v6529
  %v6531 = vlaneseq
  %v6532 = vshrl.u32 %v6531, 7
  %v6533 = vsub.s32 %v6530, %v6532
  %v6534 = vrot.slane %v6527, %v6533
  %v6535 = vcombine.low %v2481, %v2483
  %v6537 = vunpack.c.l.s4 1983009808
  %v6538 = vunpack.c.0.s8 %v6537
  %v6539 = vlaneseq
  %v6540 = vshrl.u32 %v6539, 7
  %v6541 = vsub.s32 %v6538, %v6540
  %v6542 = vrot.slane %v6535, %v6541
  %v6543 = vcombine.low %v6534, %v6542
  %v6544 = vcombine.high %v6534, %v6542
  %v6546 = vunpack.c.l.s4 1934713408
  %v6547 = vunpack.c.0.s8 %v6546
  %v6548 = vlaneseq
  %v6549 = vshrl.u32 %v6548, 7
  %v6550 = vsub.s32 %v6547, %v6549
  %v6551 = vrot.slane %v6543, %v6550
  %v6553 = vunpack.c.l.s4 1934713408
  %v6554 = vunpack.c.0.s8 %v6553
  %v6555 = vlaneseq
  %v6556 = vshrl.u32 %v6555, 7
  %v6557 = vsub.s32 %v6554, %v6556
  %v6558 = vrot.slane %v6544, %v6557
  %v6559 = vcombine.high %v6551, 0.0
  %v6560 = vcombine.high %v6558, 0.0
  %v6561 = vcombine.low %v2484, %v2486
  %v6563 = vunpack.c.l.s4 1983009808
  %v6564 = vunpack.c.0.s8 %v6563
  %v6565 = vlaneseq
  %v6566 = vshrl.u32 %v6565, 7
  %v6567 = vsub.s32 %v6564, %v6566
  %v6568 = vrot.slane %v6561, %v6567
  %v6569 = vcombine.low %v2485, %v2487
  %v6571 = vunpack.c.l.s4 1983009808
  %v6572 = vunpack.c.0.s8 %v6571
  %v6573 = vlaneseq
  %v6574 = vshrl.u32 %v6573, 7
  %v6575 = vsub.s32 %v6572, %v6574
  %v6576 = vrot.slane %v6569, %v6575
  %v6577 = vcombine.low %v6568, %v6576
  %v6578 = vcombine.high %v6568, %v6576
  %v6580 = vunpack.c.l.s4 1934713408
  %v6581 = vunpack.c.0.s8 %v6580
  %v6582 = vlaneseq
  %v6583 = vshrl.u32 %v6582, 7
  %v6584 = vsub.s32 %v6581, %v6583
  %v6585 = vrot.slane %v6577, %v6584
  %v6587 = vunpack.c.l.s4 1934713408
  %v6588 = vunpack.c.0.s8 %v6587
  %v6589 = vlaneseq
  %v6590 = vshrl.u32 %v6589, 7
  %v6591 = vsub.s32 %v6588, %v6590
  %v6592 = vrot.slane %v6578, %v6591
  %v6593 = vcombine.high %v6585, 0.0
  %v6594 = vcombine.high %v6592, 0.0
  %v6597 = vcombine.low %v6551, %v6585
  %v6601 = vcombine.low %v6559, %v6593
  %6602 = vrot.lane.b32.xlu0 %v6601, 8
  %v6603 = vpop.permute.xlu0 %6602
  %v6607 = vcombine.low %v6558, %v6592
  %6608 = vrot.lane.b32.xlu0 %v6607, 16
  %v6609 = vpop.permute.xlu0 %6608
  %v6613 = vcombine.low %v6560, %v6594
  %6614 = vrot.lane.b32.xlu0 %v6613, 24
  %v6615 = vpop.permute.xlu0 %6614
  %vm6617 = vcmask 64512
  %v6618 = vsel %vm6617, %v6597, %v6603
  %v6619 = vsel %vm1081, %v6618, %v6609
  %vm6620 = vcmask 195584
  %v6621 = vsel %vm6620, %v6619, %v6615
  %v6622 = vcombine.low %v6470, %v6472
  %v6624 = vunpack.c.l.s4 1983009808
  %v6625 = vunpack.c.0.s8 %v6624
  %v6626 = vlaneseq
  %v6627 = vshrl.u32 %v6626, 7
  %v6628 = vsub.s32 %v6625, %v6627
  %v6629 = vrot.slane %v6622, %v6628
  %v6630 = vcombine.low %v6471, %v6473
  %v6632 = vunpack.c.l.s4 1983009808
  %v6633 = vunpack.c.0.s8 %v6632
  %v6634 = vlaneseq
  %v6635 = vshrl.u32 %v6634, 7
  %v6636 = vsub.s32 %v6633, %v6635
  %v6637 = vrot.slane %v6630, %v6636
  %v6638 = vcombine.low %v6474, %v6476
  %v6640 = vunpack.c.l.s4 1983009808
  %v6641 = vunpack.c.0.s8 %v6640
  %v6642 = vlaneseq
  %v6643 = vshrl.u32 %v6642, 7
  %v6644 = vsub.s32 %v6641, %v6643
  %v6645 = vrot.slane %v6638, %v6644
  %v6646 = vcombine.low %v6475, %v6477
  %v6648 = vunpack.c.l.s4 1983009808
  %v6649 = vunpack.c.0.s8 %v6648
  %v6650 = vlaneseq
  %v6651 = vshrl.u32 %v6650, 7
  %v6652 = vsub.s32 %v6649, %v6651
  %v6653 = vrot.slane %v6646, %v6652
  %v6654 = vcombine.low %v6629, %v6637
  %v6655 = vcombine.high %v6629, %v6637
  %v6657 = vunpack.c.l.s4 1934713408
  %v6658 = vunpack.c.0.s8 %v6657
  %v6659 = vlaneseq
  %v6660 = vshrl.u32 %v6659, 7
  %v6661 = vsub.s32 %v6658, %v6660
  %v6662 = vrot.slane %v6654, %v6661
  %v6664 = vunpack.c.l.s4 1934713408
  %v6665 = vunpack.c.0.s8 %v6664
  %v6666 = vlaneseq
  %v6667 = vshrl.u32 %v6666, 7
  %v6668 = vsub.s32 %v6665, %v6667
  %v6669 = vrot.slane %v6655, %v6668
  %v6670 = vcombine.low %v6645, %v6653
  %v6671 = vcombine.high %v6645, %v6653
  %v6673 = vunpack.c.l.s4 1934713408
  %v6674 = vunpack.c.0.s8 %v6673
  %v6675 = vlaneseq
  %v6676 = vshrl.u32 %v6675, 7
  %v6677 = vsub.s32 %v6674, %v6676
  %v6678 = vrot.slane %v6670, %v6677
  %v6680 = vunpack.c.l.s4 1934713408
  %v6681 = vunpack.c.0.s8 %v6680
  %v6682 = vlaneseq
  %v6683 = vshrl.u32 %v6682, 7
  %v6684 = vsub.s32 %v6681, %v6683
  %v6685 = vrot.slane %v6671, %v6684
  %v6686 = vcombine.low %v6662, %v6678
  %v6687 = vcombine.high %v6662, %v6678
  %v6688 = vcombine.low %v6669, %v6685
  %v6689 = vcombine.high %v6669, %v6685
  %6691 = vrot.lane.b32.xlu0 %v6687, 4
  %v6692 = vpop.permute.xlu0 %6691
  %6695 = vrot.lane.b32.xlu0 %v6688, 8
  %v6696 = vpop.permute.xlu0 %6695
  %6699 = vrot.lane.b32.xlu0 %v6689, 12
  %v6700 = vpop.permute.xlu0 %6699
  %v6702 = vsel %vm181, %v6686, %v6692
  %v6703 = vsel %vm6617, %v6702, %v6696
  %vm6704 = vcmask 97280
  %v6705 = vsel %vm6704, %v6703, %v6700
  %6707 = vrot.lane.b32.xlu0 %v6705, 32
  %v6708 = vpop.permute.xlu0 %6707
  %v6710 = vadd.s32 %v2561, 4294967248
  %v6711 = vlaneseq
  %v6712 = vshrl.u32 %v6711, 7
  %v6713 = vsub.s32 %v6710, %v6712
  %v6714 = vrot.slane %v2538, %v6713
  %v6715 = vlaneseq
  %v6716 = vshrl.u32 %v6715, 7
  %v6717 = vsub.s32 %v6710, %v6716
  %v6718 = vrot.slane %v2541, %v6717
  %v6719 = vlaneseq
  %v6720 = vshrl.u32 %v6719, 7
  %v6721 = vsub.s32 %v6710, %v6720
  %v6722 = vrot.slane %v2544, %v6721
  %v6723 = vlaneseq
  %v6724 = vshrl.u32 %v6723, 7
  %v6725 = vsub.s32 %v6710, %v6724
  %v6726 = vrot.slane %v2547, %v6725
  %v6727 = vlaneseq
  %v6728 = vshrl.u32 %v6727, 7
  %v6729 = vsub.s32 %v6710, %v6728
  %v6730 = vrot.slane %v2550, %v6729
  %v6731 = vlaneseq
  %v6732 = vshrl.u32 %v6731, 7
  %v6733 = vsub.s32 %v6710, %v6732
  %v6734 = vrot.slane %v2553, %v6733
  %v6735 = vlaneseq
  %v6736 = vshrl.u32 %v6735, 7
  %v6737 = vsub.s32 %v6710, %v6736
  %v6738 = vrot.slane %v2556, %v6737
  %v6739 = vlaneseq
  %v6740 = vshrl.u32 %v6739, 7
  %v6741 = vsub.s32 %v6710, %v6740
  %v6742 = vrot.slane %v2559, %v6741
  %v6743 = vsel %vm2594, %v6718, %v6714
  %v6744 = vsel %vm2596, %v6722, %v6743
  %v6745 = vsel %vm2598, %v6726, %v6744
  %v6746 = vsel %vm2600, %v6730, %v6745
  %v6747 = vsel %vm2602, %v6734, %v6746
  %v6748 = vsel %vm2604, %v6738, %v6747
  %v6749 = vsel %vm2606, %v6742, %v6748
  %v6759 = vrot.slane %v6520, 7
  %v6760 = vsel %vm2594, %v6759, %v6519
  %v6761 = vrot.slane %v6521, 6
  %v6762 = vsel %vm2596, %v6761, %v6760
  %v6763 = vrot.slane %v6522, 5
  %v6764 = vsel %vm2598, %v6763, %v6762
  %v6765 = vrot.slane %v6523, 4
  %v6766 = vsel %vm2600, %v6765, %v6764
  %v6767 = vrot.slane %v6524, 3
  %v6768 = vsel %vm2602, %v6767, %v6766
  %v6769 = vrot.slane %v6525, 2
  %v6770 = vsel %vm2604, %v6769, %v6768
  %v6771 = vrot.slane %v6526, 1
  %v6772 = vsel %vm2606, %v6771, %v6770
  %6773 = vrot.lane.b32.xlu0 %v6772, 52
  %v6774 = vpop.permute.xlu0 %6773
  %v6776 = vsel %vm615, %v6621, %v6708
  %vm6777 = vcmask 392192
  %v6778 = vsel %vm6777, %v6776, %v6749
  %vm6779 = vcmask 424960
  %v6780 = vsel %vm6779, %v6778, %v6774
  %v6782 = vcombine.high %v6780, %v6780
  %v6784 = vunpack.c.l.s4 1966171168
  %v6785 = vunpack.c.0.s8 %v6784
  %v6786 = vlaneseq
  %v6787 = vshrl.u32 %v6786, 7
  %v6788 = vsub.s32 %v6785, %v6787
  %v6789 = vrot.slane %v6780, %v6788
  %v6791 = vunpack.c.l.s4 1966171168
  %v6792 = vunpack.c.0.s8 %v6791
  %v6793 = vlaneseq
  %v6794 = vshrl.u32 %v6793, 7
  %v6795 = vsub.s32 %v6792, %v6794
  %v6796 = vrot.slane %v6782, %v6795
  %v6797 = vcombine.high %v6789, %v6789
  %v6798 = vcombine.high %v6796, %v6796
  %v6800 = vunpack.c.l.s4 1966171168
  %v6801 = vunpack.c.0.s8 %v6800
  %v6802 = vlaneseq
  %v6803 = vshrl.u32 %v6802, 7
  %v6804 = vsub.s32 %v6801, %v6803
  %v6805 = vrot.slane %v6789, %v6804
  %v6807 = vunpack.c.l.s4 1966171168
  %v6808 = vunpack.c.0.s8 %v6807
  %v6809 = vlaneseq
  %v6810 = vshrl.u32 %v6809, 7
  %v6811 = vsub.s32 %v6808, %v6810
  %v6812 = vrot.slane %v6796, %v6811
  %v6814 = vunpack.c.l.s4 1966171168
  %v6815 = vunpack.c.0.s8 %v6814
  %v6816 = vlaneseq
  %v6817 = vshrl.u32 %v6816, 7
  %v6818 = vsub.s32 %v6815, %v6817
  %v6819 = vrot.slane %v6797, %v6818
  %v6821 = vunpack.c.l.s4 1966171168
  %v6822 = vunpack.c.0.s8 %v6821
  %v6823 = vlaneseq
  %v6824 = vshrl.u32 %v6823, 7
  %v6825 = vsub.s32 %v6822, %v6824
  %v6826 = vrot.slane %v6798, %v6825
  %v6827 = vcombine.high %v6805, %v6805
  %v6828 = vcombine.high %v6812, %v6812
  %v6829 = vcombine.high %v6819, %v6819
  %v6830 = vcombine.high %v6826, %v6826
  %vm6839 = vcmask 442368
  %6840 = vst.msk [vmem:[%s4] sm:$0x1] %vm6839, %v6805
  %6841 = vst.msk [vmem:[%s4 + $0x1] sm:$0x1] %vm6839, %v6819
  %6842 = vst.msk [vmem:[%s4 + $0x2] sm:$0x1] %vm6839, %v6827
  %6843 = vst.msk [vmem:[%s4 + $0x3] sm:$0x1] %vm6839, %v6829
  %6844 = vst.msk [vmem:[%s4 + $0x4] sm:$0x1] %vm6839, %v6812
  %6845 = vst.msk [vmem:[%s4 + $0x5] sm:$0x1] %vm6839, %v6826
  %6846 = vst.msk [vmem:[%s4 + $0x6] sm:$0x1] %vm6839, %v6828
  %6847 = vst.msk [vmem:[%s4 + $0x7] sm:$0x1] %vm6839, %v6830
  // Predicated region
  $region18: #{_lambda_.1} parent=0 // pred_check
    _
  $region19: #{_lambda_.1} parent=0 // pred_check_branch
    %6849 = sbr.rel (0) target = $region21
  $region20: #{_lambda_.1} parent=0 // pred_region
    _
  $region21: #{_lambda_.1} parent=0 // pred_fallthru
    _
  // Predicated region
  $region22: #{_lambda_.1} parent=0 // pred_check
    _
  $region23: #{_lambda_.1} parent=0 // pred_check_branch
    %6851 = sbr.rel (0) target = $region25
  $region24: #{_lambda_.1} parent=0 // pred_region
    _
  $region25: #{_lambda_.1} parent=0 // pred_fallthru
    _

</llo_original>
